<compile_context>
chip_gen: v7x
topology: tpu7x:2x2x1
jax: 0.10.0
libtpu: 0.0.40
codegen_flags: <defaults>
</compile_context>

<pallas_src>
import jax
import jax.numpy as jnp
import numpy as np
from jax.experimental import pallas as pl
from jax.experimental.pallas import tpu as pltpu


def _round_up(n, m):
    return ((n + m - 1) // m) * m


def _spectral_mix_kernel(x_ref, w_ref, o_ref):
    """Complex channel mixing for a block of spectral modes (MXU path).

    x_ref : [2, TM, Bp, Cip]   (re/im, modes, batch, in-channels)
    w_ref : [2, TM, Cip, Cop]  (re/im, modes, in-channels, out-channels)
    o_ref : [2, TM, Bp, Cop]
    out[m, b, o] = sum_i x[m, b, i] * w[m, i, o]   (complex multiply)
    """
    xr = x_ref[0]
    xi = x_ref[1]
    wr = w_ref[0]
    wi = w_ref[1]
    # 4 batched fp32 matmuls on the MXU; accumulate in fp32.
    rr = jnp.einsum('mbi,mio->mbo', xr, wr, preferred_element_type=jnp.float32)
    ii = jnp.einsum('mbi,mio->mbo', xi, wi, preferred_element_type=jnp.float32)
    ri = jnp.einsum('mbi,mio->mbo', xr, wi, preferred_element_type=jnp.float32)
    ir = jnp.einsum('mbi,mio->mbo', xi, wr, preferred_element_type=jnp.float32)
    o_ref[0] = rr - ii
    o_ref[1] = ri + ir


def _spectral_mix_pallas(x_pack, w_pack):
    """x_pack: [2, Mtot, B, Cin], w_pack: [2, Mtot, Cin, Cout] (float32).

    Returns [2, Mtot, B, Cout] float32.
    """
    _, Mtot, B, Cin = x_pack.shape
    Cout = w_pack.shape[-1]

    # Pad batch / channel edges to multiples of 8 (clean sublane layout,
    # MXU-friendly matmul edges).  Zero padding does not change the result.
    Bp = _round_up(B, 8)
    Cip = _round_up(Cin, 8)
    Cop = _round_up(Cout, 8)

    # Mode-block size from a conservative VMEM budget: x + w + out tiles,
    # double-buffered, must stay well under the scoped limit on every
    # generation (incl. v7x's 64 MiB physical VMEM).
    bytes_per_mode = 2 * (Bp * Cip + Cip * Cop + Bp * Cop) * 4  # re+im, fp32
    vmem_budget = 8 * 1024 * 1024                               # double-buffered total
    tm = max(1, min(Mtot, vmem_budget // (2 * bytes_per_mode)))
    Mp = _round_up(Mtot, tm)                                    # pad modes to a multiple of tm

    x_p = jnp.pad(x_pack, ((0, 0), (0, Mp - Mtot), (0, Bp - B), (0, Cip - Cin)))
    w_p = jnp.pad(w_pack, ((0, 0), (0, Mp - Mtot), (0, Cip - Cin), (0, Cop - Cout)))

    grid = (Mp // tm,)
    out = pl.pallas_call(
        _spectral_mix_kernel,
        out_shape=jax.ShapeDtypeStruct((2, Mp, Bp, Cop), jnp.float32),
        grid_spec=pltpu.PrefetchScalarGridSpec(
            num_scalar_prefetch=0,
            grid=grid,
            in_specs=[
                pl.BlockSpec((2, tm, Bp, Cip), lambda m: (0, m, 0, 0)),
                pl.BlockSpec((2, tm, Cip, Cop), lambda m: (0, m, 0, 0)),
            ],
            out_specs=pl.BlockSpec((2, tm, Bp, Cop), lambda m: (0, m, 0, 0)),
        ),
        compiler_params=pltpu.CompilerParams(
            dimension_semantics=("parallel",),   # mode blocks are independent
            vmem_limit_bytes=32 * 1024 * 1024,
        ),
    )(x_p, w_p)
    return out[:, :Mtot, :B, :Cout]


def fourier_layer_forward(x, w1r, w1i, w2r, w2i, modes1, modes2):
    """Forward pass of FourierLayer.  x: [B, C_in, H, W] float32."""
    B, Cin, H, W = x.shape
    Cout = w1r.shape[1]
    Wf = W // 2 + 1
    M = modes1 * modes2
    Mtot = 2 * M

    x_ft = jnp.fft.rfft2(x)                                   # [B, Cin, H, Wf] complex64

    # Gather the two spectral corners and fuse them along the mode axis.
    low = x_ft[:, :, :modes1, :modes2].reshape(B, Cin, M)
    high = x_ft[:, :, H - modes1:, :modes2].reshape(B, Cin, M)
    xc = jnp.concatenate([low, high], axis=-1)                # [B, Cin, 2M] complex
    xr = jnp.real(xc).astype(jnp.float32)
    xi = jnp.imag(xc).astype(jnp.float32)
    # -> [2(re/im), 2M, B, Cin]
    x_pack = jnp.stack([xr, xi], axis=0).transpose(0, 3, 1, 2)

    wr = jnp.concatenate([w1r.reshape(Cin, Cout, M),
                          w2r.reshape(Cin, Cout, M)], axis=-1)  # [Cin, Cout, 2M]
    wi = jnp.concatenate([w1i.reshape(Cin, Cout, M),
                          w2i.reshape(Cin, Cout, M)], axis=-1)
    # -> [2(re/im), 2M, Cin, Cout]
    w_pack = jnp.stack([wr, wi], axis=0).transpose(0, 3, 1, 2)

    out_pack = _spectral_mix_pallas(x_pack, w_pack)           # [2, 2M, B, Cout]

    o = (out_pack[0] + 1j * out_pack[1]).astype(jnp.complex64)  # [2M, B, Cout]
    o = o.transpose(1, 2, 0)                                    # [B, Cout, 2M]
    out_low = o[..., :M].reshape(B, Cout, modes1, modes2)
    out_high = o[..., M:].reshape(B, Cout, modes1, modes2)

    out_ft = jnp.zeros((B, Cout, H, Wf), dtype=jnp.complex64)
    out_ft = out_ft.at[:, :, :modes1, :modes2].set(out_low)
    out_ft = out_ft.at[:, :, H - modes1:, :modes2].set(out_high)

    return jnp.fft.irfft2(out_ft, s=(H, W))                   # [B, Cout, H, W] float32


def _fourier_layer_reference(x, w1r, w1i, w2r, w2i, modes1, modes2):
    """Pure-JAX reference (matches the PyTorch module) for validation."""
    B, Cin, H, W = x.shape
    Cout = w1r.shape[1]
    Wf = W // 2 + 1
    x_ft = jnp.fft.rfft2(x)
    w1 = (w1r + 1j * w1i).astype(jnp.complex64)
    w2 = (w2r + 1j * w2i).astype(jnp.complex64)
    out_ft = jnp.zeros((B, Cout, H, Wf), dtype=jnp.complex64)
    out_ft = out_ft.at[:, :, :modes1, :modes2].set(
        jnp.einsum('bixy,ioxy->boxy', x_ft[:, :, :modes1, :modes2], w1))
    out_ft = out_ft.at[:, :, H - modes1:, :modes2].set(
        jnp.einsum('bixy,ioxy->boxy', x_ft[:, :, H - modes1:, :modes2], w2))
    return jnp.fft.irfft2(out_ft, s=(H, W))


def init_weights(key, in_channels, out_channels, modes1, modes2):
    """Deterministic kaiming_normal-style init for complex weights.

    torch fan_in for a (Cin, Cout, m1, m2) tensor = Cout * m1 * m2,
    gain(relu) = sqrt(2), std = gain / sqrt(fan_in).
    """
    fan_in = out_channels * modes1 * modes2
    std = float(np.sqrt(2.0) / np.sqrt(fan_in))
    shape = (in_channels, out_channels, modes1, modes2)
    k1, k2, k3, k4 = jax.random.split(key, 4)
    w1r = std * jax.random.normal(k1, shape, dtype=jnp.float32)
    w1i = std * jax.random.normal(k2, shape, dtype=jnp.float32)
    w2r = std * jax.random.normal(k3, shape, dtype=jnp.float32)
    w2i = std * jax.random.normal(k4, shape, dtype=jnp.float32)
    return w1r, w1i, w2r, w2i


if __name__ == "__main__":
    B, C, H, W = 2, 4, 16, 16
    modes1, modes2 = 4, 4

    key = jax.random.PRNGKey(0)
    kx, kw = jax.random.split(key)
    x = jax.random.normal(kx, (B, C, H, W), dtype=jnp.float32)
    w1r, w1i, w2r, w2i = init_weights(kw, C, C, modes1, modes2)

    fwd = jax.jit(lambda xx: fourier_layer_forward(xx, w1r, w1i, w2r, w2i,
                                                   modes1, modes2))
    out = fwd(x)
    jax.block_until_ready(out)

    ref = _fourier_layer_reference(x, w1r, w1i, w2r, w2i, modes1, modes2)
    jax.block_until_ready(ref)

    assert out.shape == (B, C, H, W)
    assert out.dtype == jnp.float32
    np.testing.assert_allclose(np.asarray(out), np.asarray(ref),
                               rtol=1e-3, atol=1e-4)
    print("KERNEL_OK")
</pallas_src>

<mosaic_0001>
module attributes {stable_mosaic.version = 11 : i64} {
  func.func @_spectral_mix_kernel(%arg0: i32, %arg1: memref<2x32x8x8xf32, #tpu.memory_space<vmem>>, %arg2: memref<2x32x8x8xf32, #tpu.memory_space<vmem>>, %arg3: memref<2x32x8x8xf32, #tpu.memory_space<vmem>>) attributes {dimension_semantics = [#tpu.dimension_semantics<parallel>], iteration_bounds = array<i64: 1>, scalar_prefetch = 0 : i64, scratch_operands = 0 : i64, tpu.core_type = #tpu.core_type<tc>, window_params = [{transform_indices = @transform_0, window_bounds = array<i64: 2, 32, 8, 8>}, {transform_indices = @transform_1, window_bounds = array<i64: 2, 32, 8, 8>}, {transform_indices = @transform_2, window_bounds = array<i64: 2, 32, 8, 8>}]} {
    %c0 = arith.constant 0 : index
    %c0_0 = arith.constant 0 : index
    %c0_1 = arith.constant 0 : index
    %c0_2 = arith.constant 0 : index
    %0 = vector.load %arg1[%c0, %c0_0, %c0_1, %c0_2] : memref<2x32x8x8xf32, #tpu.memory_space<vmem>>, vector<1x32x8x8xf32>
    %1 = vector.shape_cast %0 : vector<1x32x8x8xf32> to vector<32x8x8xf32>
    %c1 = arith.constant 1 : index
    %c0_3 = arith.constant 0 : index
    %c0_4 = arith.constant 0 : index
    %c0_5 = arith.constant 0 : index
    %2 = vector.load %arg1[%c1, %c0_3, %c0_4, %c0_5] : memref<2x32x8x8xf32, #tpu.memory_space<vmem>>, vector<1x32x8x8xf32>
    %3 = vector.shape_cast %2 : vector<1x32x8x8xf32> to vector<32x8x8xf32>
    %c0_6 = arith.constant 0 : index
    %c0_7 = arith.constant 0 : index
    %c0_8 = arith.constant 0 : index
    %c0_9 = arith.constant 0 : index
    %4 = vector.load %arg2[%c0_6, %c0_7, %c0_8, %c0_9] : memref<2x32x8x8xf32, #tpu.memory_space<vmem>>, vector<1x32x8x8xf32>
    %5 = vector.shape_cast %4 : vector<1x32x8x8xf32> to vector<32x8x8xf32>
    %c1_10 = arith.constant 1 : index
    %c0_11 = arith.constant 0 : index
    %c0_12 = arith.constant 0 : index
    %c0_13 = arith.constant 0 : index
    %6 = vector.load %arg2[%c1_10, %c0_11, %c0_12, %c0_13] : memref<2x32x8x8xf32, #tpu.memory_space<vmem>>, vector<1x32x8x8xf32>
    %7 = vector.shape_cast %6 : vector<1x32x8x8xf32> to vector<32x8x8xf32>
    "tpu.trace_start"() <{level = 10 : i32, message = "mbi,mio->mbo"}> : () -> ()
    %cst = arith.constant dense<0.000000e+00> : vector<32x8x8xf32>
    %8 = tpu.matmul %1, %5, %cst {dimension_numbers = #tpu.dot_dimension_numbers<[2], [1], [1], [2], [0, 0, 0, 1, 1, 2], [0], [0]>} : vector<32x8x8xf32>, vector<32x8x8xf32>, vector<32x8x8xf32> -> vector<32x8x8xf32>
    %cst_14 = arith.constant dense<0.000000e+00> : vector<32x8x8xf32>
    %9 = tpu.matmul %3, %7, %cst_14 {dimension_numbers = #tpu.dot_dimension_numbers<[2], [1], [1], [2], [0, 0, 0, 1, 1, 2], [0], [0]>} : vector<32x8x8xf32>, vector<32x8x8xf32>, vector<32x8x8xf32> -> vector<32x8x8xf32>
    %cst_15 = arith.constant dense<0.000000e+00> : vector<32x8x8xf32>
    %10 = tpu.matmul %1, %7, %cst_15 {dimension_numbers = #tpu.dot_dimension_numbers<[2], [1], [1], [2], [0, 0, 0, 1, 1, 2], [0], [0]>} : vector<32x8x8xf32>, vector<32x8x8xf32>, vector<32x8x8xf32> -> vector<32x8x8xf32>
    %cst_16 = arith.constant dense<0.000000e+00> : vector<32x8x8xf32>
    %11 = tpu.matmul %3, %5, %cst_16 {dimension_numbers = #tpu.dot_dimension_numbers<[2], [1], [1], [2], [0, 0, 0, 1, 1, 2], [0], [0]>} : vector<32x8x8xf32>, vector<32x8x8xf32>, vector<32x8x8xf32> -> vector<32x8x8xf32>
    "tpu.trace_stop"() : () -> ()
    %12 = arith.subf %8, %9 : vector<32x8x8xf32>
    %c0_17 = arith.constant 0 : index
    %c0_18 = arith.constant 0 : index
    %c0_19 = arith.constant 0 : index
    %c0_20 = arith.constant 0 : index
    %13 = vector.load %arg3[%c0_17, %c0_18, %c0_19, %c0_20] : memref<2x32x8x8xf32, #tpu.memory_space<vmem>>, vector<1x32x8x8xf32>
    %14 = vector.shape_cast %13 : vector<1x32x8x8xf32> to vector<32x8x8xf32>
    %15 = vector.shape_cast %12 : vector<32x8x8xf32> to vector<1x32x8x8xf32>
    tpu.vector_store %arg3[%c0_17, %c0_18, %c0_19, %c0_20], %15 {strides = array<i32>} : memref<2x32x8x8xf32, #tpu.memory_space<vmem>>, vector<1x32x8x8xf32>,
    %16 = arith.addf %10, %11 : vector<32x8x8xf32>
    %c1_21 = arith.constant 1 : index
    %c0_22 = arith.constant 0 : index
    %c0_23 = arith.constant 0 : index
    %c0_24 = arith.constant 0 : index
    %17 = vector.load %arg3[%c1_21, %c0_22, %c0_23, %c0_24] : memref<2x32x8x8xf32, #tpu.memory_space<vmem>>, vector<1x32x8x8xf32>
    %18 = vector.shape_cast %17 : vector<1x32x8x8xf32> to vector<32x8x8xf32>
    %19 = vector.shape_cast %16 : vector<32x8x8xf32> to vector<1x32x8x8xf32>
    tpu.vector_store %arg3[%c1_21, %c0_22, %c0_23, %c0_24], %19 {strides = array<i32>} : memref<2x32x8x8xf32, #tpu.memory_space<vmem>>, vector<1x32x8x8xf32>,
    return
  }
  func.func @transform_0(%arg0: i32) -> (i32, i32, i32, i32) {
    %c0_i32 = arith.constant 0 : i32
    %c0_i32_0 = arith.constant 0 : i32
    %c0_i32_1 = arith.constant 0 : i32
    %c0_i32_2 = arith.constant 0 : i32
    return %c0_i32, %arg0, %c0_i32_0, %c0_i32_1 : i32, i32, i32, i32
  }
  func.func @transform_1(%arg0: i32) -> (i32, i32, i32, i32) {
    %c0_i32 = arith.constant 0 : i32
    %c0_i32_0 = arith.constant 0 : i32
    %c0_i32_1 = arith.constant 0 : i32
    %c0_i32_2 = arith.constant 0 : i32
    return %c0_i32, %arg0, %c0_i32_0, %c0_i32_1 : i32, i32, i32, i32
  }
  func.func @transform_2(%arg0: i32) -> (i32, i32, i32, i32) {
    %c0_i32 = arith.constant 0 : i32
    %c0_i32_0 = arith.constant 0 : i32
    %c0_i32_1 = arith.constant 0 : i32
    %c0_i32_2 = arith.constant 0 : i32
    return %c0_i32, %arg0, %c0_i32_0, %c0_i32_1 : i32, i32, i32, i32
  }
}

</mosaic_0001>

<llo_original>
// kernel: reverse.1
$region0: #{reverse.1}
  %s0 = inlined_call_operand.vmem [shape: f32[2,4,16,7], index: 0, kind: input, shape index: {}]
  %s1 = inlined_call_operand.vmem [shape: f32[2,4,16,7], index: 1, kind: output, shape index: {}]
  $region1: #{reverse.1} parent=0
    #allocation0 [shape = 'u8[65536]{0}', space=vmem, size = 0x10000, scoped, tag = 'operand span for operand 0']
    #allocation1 [shape = 'u8[32768]{0}', space=vmem, size = 0x8000, scoped, tag = 'operand span for operand 1']
    %s2 = scalar_lea.vmem [#allocation0], 8
    // Predicated region
    $region2: #{reverse.1} parent=1 // pred_check
      _
    $region3: #{reverse.1} parent=1 // pred_check_branch
      %4 = sbr.rel (0) target = $region5
    $region4: #{reverse.1} parent=1 // pred_region
      // Predicated region
      $region6: #{reverse.1} parent=4 // pred_check
        _
      $region7: #{reverse.1} parent=4 // pred_check_branch
        %6 = sbr.rel (0) target = $region9
      $region8: #{reverse.1} parent=4 // pred_region
        // Predicated region
        $region21: #{reverse.1} parent=8 // pred_check
          _
        $region22: #{reverse.1} parent=8 // pred_check_branch
          %35 = sbr.rel (0) target = $region24
        $region23: #{reverse.1} parent=8 // pred_region
          loop: start=0, step=1, limit=1
          $region25: #{reverse.1} parent=23 // loop_pre_header
            _
          $region26: #{reverse.1} parent=23 // loop_header
            %s37 = sphi 0, %s41
            %p38 = scmp.ge.s32.totalorder %s37, 1
            %s42 = sphi %s0, %s0
            %s43 = sphi %s2, %s2
          $region27: #{reverse.1} parent=23 // loop_header_branch
            %40 = sbr.rel (%p38) target = $region31
          $region28: #{reverse.1} parent=23 // loop_body
            %v44 = vld [vmem:[%s42] sm:$0xff]
            %45 = vst [vmem:[%s43] sm:$0xff] %v44
            %v46 = vld [vmem:[%s42 + $0x8] sm:$0xff]
            %47 = vst [vmem:[%s43 + $0x10] sm:$0xff] %v46
            %v48 = vld [vmem:[%s42 + $0x10] sm:$0xff]
            %49 = vst [vmem:[%s43 + $0x20] sm:$0xff] %v48
            %v50 = vld [vmem:[%s42 + $0x18] sm:$0xff]
            %51 = vst [vmem:[%s43 + $0x30] sm:$0xff] %v50
            %v52 = vld [vmem:[%s42 + $0x20] sm:$0xff]
            %53 = vst [vmem:[%s43 + $0x40] sm:$0xff] %v52
            %v54 = vld [vmem:[%s42 + $0x28] sm:$0xff]
            %55 = vst [vmem:[%s43 + $0x50] sm:$0xff] %v54
            %v56 = vld [vmem:[%s42 + $0x30] sm:$0xff]
            %57 = vst [vmem:[%s43 + $0x60] sm:$0xff] %v56
            %v58 = vld [vmem:[%s42 + $0x38] sm:$0xff]
            %59 = vst [vmem:[%s43 + $0x70] sm:$0xff] %v58
          $region29: #{reverse.1} parent=23 // loop_footer
            %s41 = sadd.s32 1, %s37
          $region30: #{reverse.1} parent=23 // loop_footer_branch
            %36 = sbr.rel target = $region26
          $region31: #{reverse.1} parent=23 // loop_exit
            _
        $region24: #{reverse.1} parent=8 // pred_fallthru
          _
        // Predicated region
        $region32: #{reverse.1} parent=8 // pred_check
          _
        $region33: #{reverse.1} parent=8 // pred_check_branch
          %61 = sbr.rel target = $region35
        $region34: #{reverse.1} parent=8 // pred_region
          _
        $region35: #{reverse.1} parent=8 // pred_fallthru
          _
      $region9: #{reverse.1} parent=4 // pred_fallthru
        _
      // Predicated region
      $region10: #{reverse.1} parent=4 // pred_check
        _
      $region11: #{reverse.1} parent=4 // pred_check_branch
        %8 = sbr.rel target = $region13
      $region12: #{reverse.1} parent=4 // pred_region
        loop: start=0, step=1, limit=1
        $region14: #{reverse.1} parent=12 // loop_pre_header
          _
        $region15: #{reverse.1} parent=12 // loop_header
          %s11 = sphi 0, %s15
          %p12 = scmp.ge.s32.totalorder %s11, 1
          %s16 = sphi %s0, %s0
          %s17 = sphi %s2, %s2
        $region16: #{reverse.1} parent=12 // loop_header_branch
          %14 = sbr.rel (%p12) target = $region20
        $region17: #{reverse.1} parent=12 // loop_body
          %v18 = vld [vmem:[%s16] sm:$0xff]
          %19 = vst [vmem:[%s17] sm:$0xff] %v18
          %v20 = vld [vmem:[%s16 + $0x8] sm:$0xff]
          %21 = vst [vmem:[%s17 + $0x10] sm:$0xff] %v20
          %v22 = vld [vmem:[%s16 + $0x10] sm:$0xff]
          %23 = vst [vmem:[%s17 + $0x20] sm:$0xff] %v22
          %v24 = vld [vmem:[%s16 + $0x18] sm:$0xff]
          %25 = vst [vmem:[%s17 + $0x30] sm:$0xff] %v24
          %v26 = vld [vmem:[%s16 + $0x20] sm:$0xff]
          %27 = vst [vmem:[%s17 + $0x40] sm:$0xff] %v26
          %v28 = vld [vmem:[%s16 + $0x28] sm:$0xff]
          %29 = vst [vmem:[%s17 + $0x50] sm:$0xff] %v28
          %v30 = vld [vmem:[%s16 + $0x30] sm:$0xff]
          %31 = vst [vmem:[%s17 + $0x60] sm:$0xff] %v30
          %v32 = vld [vmem:[%s16 + $0x38] sm:$0xff]
          %33 = vst [vmem:[%s17 + $0x70] sm:$0xff] %v32
        $region18: #{reverse.1} parent=12 // loop_footer
          %s15 = sadd.s32 1, %s11
        $region19: #{reverse.1} parent=12 // loop_footer_branch
          %10 = sbr.rel target = $region15
        $region20: #{reverse.1} parent=12 // loop_exit
          _
      $region13: #{reverse.1} parent=4 // pred_fallthru
        _
    $region5: #{reverse.1} parent=1 // pred_fallthru
      _
    %62 = vnop
    %s63 = scalar_lea.vmem [#allocation0], 7
    %v64 = vld [vmem:[%s63] ss:$-1 sm:$0xff]
    %v65 = vrot.slane %v64, 1
    %66 = vst [vmem:[#allocation1] sm:$0xff] %v65
    %s67 = scalar_lea.vmem [#allocation0], 8
    %s68 = scalar_lea.vmem %s67, 7 [#allocation0]
    %v69 = vld [vmem:[%s68] ss:$-1 sm:$0xff]
    %v70 = vrot.slane %v69, 1
    %v71 = vlaneseq
    %v72 = vshrl.u32 %v71, 7
    %vm73 = vcmp.lt.s32.totalorder %v72, 7
    %74 = vst.msk [vmem:[#allocation1] sm:$0xff] %vm73, %v70
    %s75 = scalar_lea.vmem [#allocation1], 8
    %s76 = scalar_lea.vmem [#allocation0], 16
    %s77 = scalar_lea.vmem %s76, 7 [#allocation0]
    %v78 = vld [vmem:[%s77] ss:$-1 sm:$0xff]
    %v79 = vrot.slane %v78, 1
    %80 = vst [vmem:[%s75] sm:$0xff] %v79
    %s81 = scalar_lea.vmem %s76, 8 [#allocation0]
    %s82 = scalar_lea.vmem %s81, 7 [#allocation0]
    %v83 = vld [vmem:[%s82] ss:$-1 sm:$0xff]
    %v84 = vrot.slane %v83, 1
    %v85 = vlaneseq
    %v86 = vshrl.u32 %v85, 7
    %vm87 = vcmp.lt.s32.totalorder %v86, 7
    %88 = vst.msk [vmem:[%s75] sm:$0xff] %vm87, %v84
    %s89 = scalar_lea.vmem [#allocation1], 16
    %s90 = scalar_lea.vmem [#allocation0], 32
    %s91 = scalar_lea.vmem %s90, 7 [#allocation0]
    %v92 = vld [vmem:[%s91] ss:$-1 sm:$0xff]
    %v93 = vrot.slane %v92, 1
    %94 = vst [vmem:[%s89] sm:$0xff] %v93
    %s95 = scalar_lea.vmem %s90, 8 [#allocation0]
    %s96 = scalar_lea.vmem %s95, 7 [#allocation0]
    %v97 = vld [vmem:[%s96] ss:$-1 sm:$0xff]
    %v98 = vrot.slane %v97, 1
    %v99 = vlaneseq
    %v100 = vshrl.u32 %v99, 7
    %vm101 = vcmp.lt.s32.totalorder %v100, 7
    %102 = vst.msk [vmem:[%s89] sm:$0xff] %vm101, %v98
    %s103 = scalar_lea.vmem [#allocation1], 24
    %s104 = scalar_lea.vmem [#allocation0], 48
    %s105 = scalar_lea.vmem %s104, 7 [#allocation0]
    %v106 = vld [vmem:[%s105] ss:$-1 sm:$0xff]
    %v107 = vrot.slane %v106, 1
    %108 = vst [vmem:[%s103] sm:$0xff] %v107
    %s109 = scalar_lea.vmem %s104, 8 [#allocation0]
    %s110 = scalar_lea.vmem %s109, 7 [#allocation0]
    %v111 = vld [vmem:[%s110] ss:$-1 sm:$0xff]
    %v112 = vrot.slane %v111, 1
    %v113 = vlaneseq
    %v114 = vshrl.u32 %v113, 7
    %vm115 = vcmp.lt.s32.totalorder %v114, 7
    %116 = vst.msk [vmem:[%s103] sm:$0xff] %vm115, %v112
    %s117 = scalar_lea.vmem [#allocation1], 32
    %s118 = scalar_lea.vmem [#allocation0], 64
    %s119 = scalar_lea.vmem %s118, 7 [#allocation0]
    %v120 = vld [vmem:[%s119] ss:$-1 sm:$0xff]
    %v121 = vrot.slane %v120, 1
    %122 = vst [vmem:[%s117] sm:$0xff] %v121
    %s123 = scalar_lea.vmem %s118, 8 [#allocation0]
    %s124 = scalar_lea.vmem %s123, 7 [#allocation0]
    %v125 = vld [vmem:[%s124] ss:$-1 sm:$0xff]
    %v126 = vrot.slane %v125, 1
    %v127 = vlaneseq
    %v128 = vshrl.u32 %v127, 7
    %vm129 = vcmp.lt.s32.totalorder %v128, 7
    %130 = vst.msk [vmem:[%s117] sm:$0xff] %vm129, %v126
    %s131 = scalar_lea.vmem [#allocation1], 40
    %s132 = scalar_lea.vmem [#allocation0], 80
    %s133 = scalar_lea.vmem %s132, 7 [#allocation0]
    %v134 = vld [vmem:[%s133] ss:$-1 sm:$0xff]
    %v135 = vrot.slane %v134, 1
    %136 = vst [vmem:[%s131] sm:$0xff] %v135
    %s137 = scalar_lea.vmem %s132, 8 [#allocation0]
    %s138 = scalar_lea.vmem %s137, 7 [#allocation0]
    %v139 = vld [vmem:[%s138] ss:$-1 sm:$0xff]
    %v140 = vrot.slane %v139, 1
    %v141 = vlaneseq
    %v142 = vshrl.u32 %v141, 7
    %vm143 = vcmp.lt.s32.totalorder %v142, 7
    %144 = vst.msk [vmem:[%s131] sm:$0xff] %vm143, %v140
    %s145 = scalar_lea.vmem [#allocation1], 48
    %s146 = scalar_lea.vmem [#allocation0], 96
    %s147 = scalar_lea.vmem %s146, 7 [#allocation0]
    %v148 = vld [vmem:[%s147] ss:$-1 sm:$0xff]
    %v149 = vrot.slane %v148, 1
    %150 = vst [vmem:[%s145] sm:$0xff] %v149
    %s151 = scalar_lea.vmem %s146, 8 [#allocation0]
    %s152 = scalar_lea.vmem %s151, 7 [#allocation0]
    %v153 = vld [vmem:[%s152] ss:$-1 sm:$0xff]
    %v154 = vrot.slane %v153, 1
    %v155 = vlaneseq
    %v156 = vshrl.u32 %v155, 7
    %vm157 = vcmp.lt.s32.totalorder %v156, 7
    %158 = vst.msk [vmem:[%s145] sm:$0xff] %vm157, %v154
    %s159 = scalar_lea.vmem [#allocation1], 56
    %s160 = scalar_lea.vmem [#allocation0], 112
    %s161 = scalar_lea.vmem %s160, 7 [#allocation0]
    %v162 = vld [vmem:[%s161] ss:$-1 sm:$0xff]
    %v163 = vrot.slane %v162, 1
    %164 = vst [vmem:[%s159] sm:$0xff] %v163
    %s165 = scalar_lea.vmem %s160, 8 [#allocation0]
    %s166 = scalar_lea.vmem %s165, 7 [#allocation0]
    %v167 = vld [vmem:[%s166] ss:$-1 sm:$0xff]
    %v168 = vrot.slane %v167, 1
    %v169 = vlaneseq
    %v170 = vshrl.u32 %v169, 7
    %vm171 = vcmp.lt.s32.totalorder %v170, 7
    %172 = vst.msk [vmem:[%s159] sm:$0xff] %vm171, %v168
    // Predicated region
    $region36: #{reverse.1} parent=1 // pred_check
      _
    $region37: #{reverse.1} parent=1 // pred_check_branch
      %174 = sbr.rel (0) target = $region39
    $region38: #{reverse.1} parent=1 // pred_region
      // Predicated region
      $region40: #{reverse.1} parent=38 // pred_check
        _
      $region41: #{reverse.1} parent=38 // pred_check_branch
        %176 = sbr.rel (0) target = $region43
      $region42: #{reverse.1} parent=38 // pred_region
        // Predicated region
        $region55: #{reverse.1} parent=42 // pred_check
          _
        $region56: #{reverse.1} parent=42 // pred_check_branch
          %205 = sbr.rel (0) target = $region58
        $region57: #{reverse.1} parent=42 // pred_region
          loop: start=0, step=1, limit=1
          $region59: #{reverse.1} parent=57 // loop_pre_header
            _
          $region60: #{reverse.1} parent=57 // loop_header
            %s207 = sphi 0, %s211
            %p208 = scmp.ge.s32.totalorder %s207, 1
            %s212 = sphi [#allocation1], [#allocation1]
            %s213 = sphi %s1, %s1
          $region61: #{reverse.1} parent=57 // loop_header_branch
            %210 = sbr.rel (%p208) target = $region65
          $region62: #{reverse.1} parent=57 // loop_body
            %v214 = vld [vmem:[%s212] sm:$0xff]
            %215 = vst [vmem:[%s213] sm:$0xff] %v214
            %v216 = vld [vmem:[%s212 + $0x8] sm:$0xff]
            %217 = vst [vmem:[%s213 + $0x8] sm:$0xff] %v216
            %v218 = vld [vmem:[%s212 + $0x10] sm:$0xff]
            %219 = vst [vmem:[%s213 + $0x10] sm:$0xff] %v218
            %v220 = vld [vmem:[%s212 + $0x18] sm:$0xff]
            %221 = vst [vmem:[%s213 + $0x18] sm:$0xff] %v220
            %v222 = vld [vmem:[%s212 + $0x20] sm:$0xff]
            %223 = vst [vmem:[%s213 + $0x20] sm:$0xff] %v222
            %v224 = vld [vmem:[%s212 + $0x28] sm:$0xff]
            %225 = vst [vmem:[%s213 + $0x28] sm:$0xff] %v224
            %v226 = vld [vmem:[%s212 + $0x30] sm:$0xff]
            %227 = vst [vmem:[%s213 + $0x30] sm:$0xff] %v226
            %v228 = vld [vmem:[%s212 + $0x38] sm:$0xff]
            %229 = vst [vmem:[%s213 + $0x38] sm:$0xff] %v228
          $region63: #{reverse.1} parent=57 // loop_footer
            %s211 = sadd.s32 1, %s207
          $region64: #{reverse.1} parent=57 // loop_footer_branch
            %206 = sbr.rel target = $region60
          $region65: #{reverse.1} parent=57 // loop_exit
            _
        $region58: #{reverse.1} parent=42 // pred_fallthru
          _
        // Predicated region
        $region66: #{reverse.1} parent=42 // pred_check
          _
        $region67: #{reverse.1} parent=42 // pred_check_branch
          %231 = sbr.rel target = $region69
        $region68: #{reverse.1} parent=42 // pred_region
          _
        $region69: #{reverse.1} parent=42 // pred_fallthru
          _
      $region43: #{reverse.1} parent=38 // pred_fallthru
        _
      // Predicated region
      $region44: #{reverse.1} parent=38 // pred_check
        _
      $region45: #{reverse.1} parent=38 // pred_check_branch
        %178 = sbr.rel target = $region47
      $region46: #{reverse.1} parent=38 // pred_region
        loop: start=0, step=1, limit=1
        $region48: #{reverse.1} parent=46 // loop_pre_header
          _
        $region49: #{reverse.1} parent=46 // loop_header
          %s181 = sphi 0, %s185
          %p182 = scmp.ge.s32.totalorder %s181, 1
          %s186 = sphi [#allocation1], [#allocation1]
          %s187 = sphi %s1, %s1
        $region50: #{reverse.1} parent=46 // loop_header_branch
          %184 = sbr.rel (%p182) target = $region54
        $region51: #{reverse.1} parent=46 // loop_body
          %v188 = vld [vmem:[%s186] sm:$0xff]
          %189 = vst [vmem:[%s187] sm:$0xff] %v188
          %v190 = vld [vmem:[%s186 + $0x8] sm:$0xff]
          %191 = vst [vmem:[%s187 + $0x8] sm:$0xff] %v190
          %v192 = vld [vmem:[%s186 + $0x10] sm:$0xff]
          %193 = vst [vmem:[%s187 + $0x10] sm:$0xff] %v192
          %v194 = vld [vmem:[%s186 + $0x18] sm:$0xff]
          %195 = vst [vmem:[%s187 + $0x18] sm:$0xff] %v194
          %v196 = vld [vmem:[%s186 + $0x20] sm:$0xff]
          %197 = vst [vmem:[%s187 + $0x20] sm:$0xff] %v196
          %v198 = vld [vmem:[%s186 + $0x28] sm:$0xff]
          %199 = vst [vmem:[%s187 + $0x28] sm:$0xff] %v198
          %v200 = vld [vmem:[%s186 + $0x30] sm:$0xff]
          %201 = vst [vmem:[%s187 + $0x30] sm:$0xff] %v200
          %v202 = vld [vmem:[%s186 + $0x38] sm:$0xff]
          %203 = vst [vmem:[%s187 + $0x38] sm:$0xff] %v202
        $region52: #{reverse.1} parent=46 // loop_footer
          %s185 = sadd.s32 1, %s181
        $region53: #{reverse.1} parent=46 // loop_footer_branch
          %180 = sbr.rel target = $region49
        $region54: #{reverse.1} parent=46 // loop_exit
          _
      $region47: #{reverse.1} parent=38 // pred_fallthru
        _
    $region39: #{reverse.1} parent=1 // pred_fallthru
      _
    %232 = vnop

// kernel: _lambda_.1
$region0: #{_lambda_.1}
  #allocation0 [shape = 'u32[]', space=smem, size = 0x4, offset = 0x4, fixed_abs, tag = 'smem constant byte address 0x4 - core index']
  #allocation1 [shape = 'u32[144,128]{1,0:T(1,128)}', space=vmem, size = 0x12000, scoped, tag = 'internal scratch']
  %s0 = inlined_call_operand.vmem [shape: f32[2,32,8,8], index: 0, kind: input, shape index: {}]
  %s1 = inlined_call_operand.vmem [shape: f32[2,32,8,8], index: 1, kind: input, shape index: {}]
  %s2 = inlined_call_operand.vmem [shape: f32[2,32,8,8], index: 2, kind: output, shape index: {}]
  %s3 = sld [smem:[#allocation0]]
  $region18: #{_lambda_.1} parent=0
    _
  %s5 = ssub.s32 1, %s3
  %s6 = scalar_select 0, %s5, %s3
  // Predicated region
  $region2: #{_lambda_.1} parent=0 // pred_check
    _
  $region3: #{_lambda_.1} parent=0 // pred_check_branch
    %8 = sbr.rel (0) target = $region5
  $region4: #{_lambda_.1} parent=0 // pred_region
    _
  $region5: #{_lambda_.1} parent=0 // pred_fallthru
    _
  // Predicated region
  $region6: #{_lambda_.1} parent=0 // pred_check
    _
  $region7: #{_lambda_.1} parent=0 // pred_check_branch
    %10 = sbr.rel (0) target = $region9
  $region8: #{_lambda_.1} parent=0 // pred_region
    _
  $region9: #{_lambda_.1} parent=0 // pred_fallthru
    _
  %v11 = vld [vmem:[%s0] sm:$0xff]
  %v12 = vld [vmem:[%s0 + $0x8] sm:$0xff]
  %v13 = vld [vmem:[%s0 + $0x10] sm:$0xff]
  %v14 = vld [vmem:[%s0 + $0x18] sm:$0xff]
  %v15 = vld [vmem:[%s0 + $0x20] sm:$0xff]
  %v16 = vld [vmem:[%s0 + $0x28] sm:$0xff]
  %v17 = vld [vmem:[%s0 + $0x30] sm:$0xff]
  %v18 = vld [vmem:[%s0 + $0x38] sm:$0xff]
  %v19 = vld [vmem:[%s0 + $0x40] sm:$0xff]
  %v20 = vld [vmem:[%s0 + $0x48] sm:$0xff]
  %v21 = vld [vmem:[%s0 + $0x50] sm:$0xff]
  %v22 = vld [vmem:[%s0 + $0x58] sm:$0xff]
  %v23 = vld [vmem:[%s0 + $0x60] sm:$0xff]
  %v24 = vld [vmem:[%s0 + $0x68] sm:$0xff]
  %v25 = vld [vmem:[%s0 + $0x70] sm:$0xff]
  %v26 = vld [vmem:[%s0 + $0x78] sm:$0xff]
  %v27 = vld [vmem:[%s0 + $0x80] sm:$0xff]
  %v28 = vld [vmem:[%s0 + $0x88] sm:$0xff]
  %v29 = vld [vmem:[%s0 + $0x90] sm:$0xff]
  %v30 = vld [vmem:[%s0 + $0x98] sm:$0xff]
  %v31 = vld [vmem:[%s0 + $0xa0] sm:$0xff]
  %v32 = vld [vmem:[%s0 + $0xa8] sm:$0xff]
  %v33 = vld [vmem:[%s0 + $0xb0] sm:$0xff]
  %v34 = vld [vmem:[%s0 + $0xb8] sm:$0xff]
  %v35 = vld [vmem:[%s0 + $0xc0] sm:$0xff]
  %v36 = vld [vmem:[%s0 + $0xc8] sm:$0xff]
  %v37 = vld [vmem:[%s0 + $0xd0] sm:$0xff]
  %v38 = vld [vmem:[%s0 + $0xd8] sm:$0xff]
  %v39 = vld [vmem:[%s0 + $0xe0] sm:$0xff]
  %v40 = vld [vmem:[%s0 + $0xe8] sm:$0xff]
  %v41 = vld [vmem:[%s0 + $0xf0] sm:$0xff]
  %v42 = vld [vmem:[%s0 + $0xf8] sm:$0xff]
  %s43 = scalar_lea.vmem %s0, 256
  %v44 = vld [vmem:[%s43] sm:$0xff]
  %v45 = vld [vmem:[%s43 + $0x8] sm:$0xff]
  %v46 = vld [vmem:[%s43 + $0x10] sm:$0xff]
  %v47 = vld [vmem:[%s43 + $0x18] sm:$0xff]
  %v48 = vld [vmem:[%s43 + $0x20] sm:$0xff]
  %v49 = vld [vmem:[%s43 + $0x28] sm:$0xff]
  %v50 = vld [vmem:[%s43 + $0x30] sm:$0xff]
  %v51 = vld [vmem:[%s43 + $0x38] sm:$0xff]
  %v52 = vld [vmem:[%s43 + $0x40] sm:$0xff]
  %v53 = vld [vmem:[%s43 + $0x48] sm:$0xff]
  %v54 = vld [vmem:[%s43 + $0x50] sm:$0xff]
  %v55 = vld [vmem:[%s43 + $0x58] sm:$0xff]
  %v56 = vld [vmem:[%s43 + $0x60] sm:$0xff]
  %v57 = vld [vmem:[%s43 + $0x68] sm:$0xff]
  %v58 = vld [vmem:[%s43 + $0x70] sm:$0xff]
  %v59 = vld [vmem:[%s43 + $0x78] sm:$0xff]
  %v60 = vld [vmem:[%s43 + $0x80] sm:$0xff]
  %v61 = vld [vmem:[%s43 + $0x88] sm:$0xff]
  %v62 = vld [vmem:[%s43 + $0x90] sm:$0xff]
  %v63 = vld [vmem:[%s43 + $0x98] sm:$0xff]
  %v64 = vld [vmem:[%s43 + $0xa0] sm:$0xff]
  %v65 = vld [vmem:[%s43 + $0xa8] sm:$0xff]
  %v66 = vld [vmem:[%s43 + $0xb0] sm:$0xff]
  %v67 = vld [vmem:[%s43 + $0xb8] sm:$0xff]
  %v68 = vld [vmem:[%s43 + $0xc0] sm:$0xff]
  %v69 = vld [vmem:[%s43 + $0xc8] sm:$0xff]
  %v70 = vld [vmem:[%s43 + $0xd0] sm:$0xff]
  %v71 = vld [vmem:[%s43 + $0xd8] sm:$0xff]
  %v72 = vld [vmem:[%s43 + $0xe0] sm:$0xff]
  %v73 = vld [vmem:[%s43 + $0xe8] sm:$0xff]
  %v74 = vld [vmem:[%s43 + $0xf0] sm:$0xff]
  %v75 = vld [vmem:[%s43 + $0xf8] sm:$0xff]
  %v76 = vld [vmem:[%s1] sm:$0xff]
  %v77 = vld [vmem:[%s1 + $0x8] sm:$0xff]
  %v78 = vld [vmem:[%s1 + $0x10] sm:$0xff]
  %v79 = vld [vmem:[%s1 + $0x18] sm:$0xff]
  %v80 = vld [vmem:[%s1 + $0x20] sm:$0xff]
  %v81 = vld [vmem:[%s1 + $0x28] sm:$0xff]
  %v82 = vld [vmem:[%s1 + $0x30] sm:$0xff]
  %v83 = vld [vmem:[%s1 + $0x38] sm:$0xff]
  %v84 = vld [vmem:[%s1 + $0x40] sm:$0xff]
  %v85 = vld [vmem:[%s1 + $0x48] sm:$0xff]
  %v86 = vld [vmem:[%s1 + $0x50] sm:$0xff]
  %v87 = vld [vmem:[%s1 + $0x58] sm:$0xff]
  %v88 = vld [vmem:[%s1 + $0x60] sm:$0xff]
  %v89 = vld [vmem:[%s1 + $0x68] sm:$0xff]
  %v90 = vld [vmem:[%s1 + $0x70] sm:$0xff]
  %v91 = vld [vmem:[%s1 + $0x78] sm:$0xff]
  %v92 = vld [vmem:[%s1 + $0x80] sm:$0xff]
  %v93 = vld [vmem:[%s1 + $0x88] sm:$0xff]
  %v94 = vld [vmem:[%s1 + $0x90] sm:$0xff]
  %v95 = vld [vmem:[%s1 + $0x98] sm:$0xff]
  %v96 = vld [vmem:[%s1 + $0xa0] sm:$0xff]
  %v97 = vld [vmem:[%s1 + $0xa8] sm:$0xff]
  %v98 = vld [vmem:[%s1 + $0xb0] sm:$0xff]
  %v99 = vld [vmem:[%s1 + $0xb8] sm:$0xff]
  %v100 = vld [vmem:[%s1 + $0xc0] sm:$0xff]
  %v101 = vld [vmem:[%s1 + $0xc8] sm:$0xff]
  %v102 = vld [vmem:[%s1 + $0xd0] sm:$0xff]
  %v103 = vld [vmem:[%s1 + $0xd8] sm:$0xff]
  %v104 = vld [vmem:[%s1 + $0xe0] sm:$0xff]
  %v105 = vld [vmem:[%s1 + $0xe8] sm:$0xff]
  %v106 = vld [vmem:[%s1 + $0xf0] sm:$0xff]
  %v107 = vld [vmem:[%s1 + $0xf8] sm:$0xff]
  %s108 = scalar_lea.vmem %s1, 256
  %v109 = vld [vmem:[%s108] sm:$0xff]
  %v110 = vld [vmem:[%s108 + $0x8] sm:$0xff]
  %v111 = vld [vmem:[%s108 + $0x10] sm:$0xff]
  %v112 = vld [vmem:[%s108 + $0x18] sm:$0xff]
  %v113 = vld [vmem:[%s108 + $0x20] sm:$0xff]
  %v114 = vld [vmem:[%s108 + $0x28] sm:$0xff]
  %v115 = vld [vmem:[%s108 + $0x30] sm:$0xff]
  %v116 = vld [vmem:[%s108 + $0x38] sm:$0xff]
  %v117 = vld [vmem:[%s108 + $0x40] sm:$0xff]
  %v118 = vld [vmem:[%s108 + $0x48] sm:$0xff]
  %v119 = vld [vmem:[%s108 + $0x50] sm:$0xff]
  %v120 = vld [vmem:[%s108 + $0x58] sm:$0xff]
  %v121 = vld [vmem:[%s108 + $0x60] sm:$0xff]
  %v122 = vld [vmem:[%s108 + $0x68] sm:$0xff]
  %v123 = vld [vmem:[%s108 + $0x70] sm:$0xff]
  %v124 = vld [vmem:[%s108 + $0x78] sm:$0xff]
  %v125 = vld [vmem:[%s108 + $0x80] sm:$0xff]
  %v126 = vld [vmem:[%s108 + $0x88] sm:$0xff]
  %v127 = vld [vmem:[%s108 + $0x90] sm:$0xff]
  %v128 = vld [vmem:[%s108 + $0x98] sm:$0xff]
  %v129 = vld [vmem:[%s108 + $0xa0] sm:$0xff]
  %v130 = vld [vmem:[%s108 + $0xa8] sm:$0xff]
  %v131 = vld [vmem:[%s108 + $0xb0] sm:$0xff]
  %v132 = vld [vmem:[%s108 + $0xb8] sm:$0xff]
  %v133 = vld [vmem:[%s108 + $0xc0] sm:$0xff]
  %v134 = vld [vmem:[%s108 + $0xc8] sm:$0xff]
  %v135 = vld [vmem:[%s108 + $0xd0] sm:$0xff]
  %v136 = vld [vmem:[%s108 + $0xd8] sm:$0xff]
  %v137 = vld [vmem:[%s108 + $0xe0] sm:$0xff]
  %v138 = vld [vmem:[%s108 + $0xe8] sm:$0xff]
  %v139 = vld [vmem:[%s108 + $0xf0] sm:$0xff]
  %v140 = vld [vmem:[%s108 + $0xf8] sm:$0xff]
  %vm141 = vcmask 64512
  %v143 = vsel %vm141, %v11, 0
  %145 = vmatprep.subr.mxu0 0.0
  %146 = vmatpush1.msra.mxu0 %v76
  %147 = vmatprep.subr.mxu0 0.0
  %148 = vmatpush1.msra.mxu0 0.0
  %149 = vmatprep.subr.mxu0 0.0
  %150 = vmatpush1.msra.mxu0 0.0
  %151 = vmatprep.subr.mxu0 0.0
  %152 = vmatpush1.msra.mxu0 0.0
  %153 = vmatprep.subr.mxu0 0.0
  %154 = vmatpush1.msra.mxu0 0.0
  %155 = vmatprep.subr.mxu0 0.0
  %156 = vmatpush1.msra.mxu0 0.0
  %157 = vmatprep.subr.mxu0 0.0
  %158 = vmatpush1.msra.mxu0 0.0
  %159 = vmatprep.subr.mxu0 0.0
  %160 = vmatpush1.msra.mxu0 0.0
  %161 = vmatprep.subr.mxu0 0.0
  %162 = vmatpush1.msra.mxu0 0.0
  %163 = vmatprep.subr.mxu0 0.0
  %164 = vmatpush1.msra.mxu0 0.0
  %165 = vmatprep.subr.mxu0 0.0
  %166 = vmatpush1.msra.mxu0 0.0
  %167 = vmatprep.subr.mxu0 0.0
  %168 = vmatpush1.msra.mxu0 0.0
  %169 = vmatprep.subr.mxu0 0.0
  %170 = vmatpush1.msra.mxu0 0.0
  %171 = vmatprep.subr.mxu0 0.0
  %172 = vmatpush1.msra.mxu0 0.0
  %173 = vmatprep.subr.mxu0 0.0
  %174 = vmatpush1.msra.mxu0 0.0
  %175 = vmatprep.subr.mxu0 0.0
  %176 = vmatpush1.msra.mxu0 0.0
  %177 = vmatprep.subr.mxu0 0.0
  %178 = vmatpush1.msra.mxu0 0.0
  %179 = vmatprep.subr.mxu0 0.0
  %180 = vmatpush1.msra.mxu0 0.0
  %181 = vmatprep.subr.mxu0 0.0
  %182 = vmatpush1.msra.mxu0 0.0
  %183 = vmatprep.subr.mxu0 0.0
  %184 = vmatpush1.msra.mxu0 0.0
  %185 = vmatprep.subr.mxu0 0.0
  %186 = vmatpush1.msra.mxu0 0.0
  %187 = vmatprep.subr.mxu0 0.0
  %188 = vmatpush1.msra.mxu0 0.0
  %189 = vmatprep.subr.mxu0 0.0
  %190 = vmatpush1.msra.mxu0 0.0
  %191 = vmatprep.subr.mxu0 0.0
  %192 = vmatpush1.msra.mxu0 0.0
  %193 = vmatprep.subr.mxu0 0.0
  %194 = vmatpush1.msra.mxu0 0.0
  %195 = vmatprep.subr.mxu0 0.0
  %196 = vmatpush1.msra.mxu0 0.0
  %197 = vmatprep.subr.mxu0 0.0
  %198 = vmatpush1.msra.mxu0 0.0
  %199 = vmatprep.subr.mxu0 0.0
  %200 = vmatpush1.msra.mxu0 0.0
  %201 = vmatprep.subr.mxu0 0.0
  %202 = vmatpush1.msra.mxu0 0.0
  %203 = vmatprep.subr.mxu0 0.0
  %204 = vmatpush1.msra.mxu0 0.0
  %205 = vmatprep.subr.mxu0 0.0
  %206 = vmatpush1.msra.mxu0 0.0
  %207 = vmatprep.subr.mxu0 0.0
  %208 = vmatpush1.msra.mxu0 0.0
  %209 = vmatprep.mubr.f32.mxu0 0.0
  %210 = vmatmul.mubr.f32.gmra.mrb[0].mxu0 %v143
  %v211 = vpop.f32.mrb[0].mxu0
  %v212 = vadd.f32 0.0, %v211
  %v213 = vpop.f32.mrb[0].mxu0
  %214 = vdwg.mxu0
  %v216 = vsel %vm141, %v12, 0
  %218 = vmatprep.subr.mxu0 0.0
  %219 = vmatpush1.msra.mxu0 %v77
  %220 = vmatprep.subr.mxu0 0.0
  %221 = vmatpush1.msra.mxu0 0.0
  %222 = vmatprep.subr.mxu0 0.0
  %223 = vmatpush1.msra.mxu0 0.0
  %224 = vmatprep.subr.mxu0 0.0
  %225 = vmatpush1.msra.mxu0 0.0
  %226 = vmatprep.subr.mxu0 0.0
  %227 = vmatpush1.msra.mxu0 0.0
  %228 = vmatprep.subr.mxu0 0.0
  %229 = vmatpush1.msra.mxu0 0.0
  %230 = vmatprep.subr.mxu0 0.0
  %231 = vmatpush1.msra.mxu0 0.0
  %232 = vmatprep.subr.mxu0 0.0
  %233 = vmatpush1.msra.mxu0 0.0
  %234 = vmatprep.subr.mxu0 0.0
  %235 = vmatpush1.msra.mxu0 0.0
  %236 = vmatprep.subr.mxu0 0.0
  %237 = vmatpush1.msra.mxu0 0.0
  %238 = vmatprep.subr.mxu0 0.0
  %239 = vmatpush1.msra.mxu0 0.0
  %240 = vmatprep.subr.mxu0 0.0
  %241 = vmatpush1.msra.mxu0 0.0
  %242 = vmatprep.subr.mxu0 0.0
  %243 = vmatpush1.msra.mxu0 0.0
  %244 = vmatprep.subr.mxu0 0.0
  %245 = vmatpush1.msra.mxu0 0.0
  %246 = vmatprep.subr.mxu0 0.0
  %247 = vmatpush1.msra.mxu0 0.0
  %248 = vmatprep.subr.mxu0 0.0
  %249 = vmatpush1.msra.mxu0 0.0
  %250 = vmatprep.subr.mxu0 0.0
  %251 = vmatpush1.msra.mxu0 0.0
  %252 = vmatprep.subr.mxu0 0.0
  %253 = vmatpush1.msra.mxu0 0.0
  %254 = vmatprep.subr.mxu0 0.0
  %255 = vmatpush1.msra.mxu0 0.0
  %256 = vmatprep.subr.mxu0 0.0
  %257 = vmatpush1.msra.mxu0 0.0
  %258 = vmatprep.subr.mxu0 0.0
  %259 = vmatpush1.msra.mxu0 0.0
  %260 = vmatprep.subr.mxu0 0.0
  %261 = vmatpush1.msra.mxu0 0.0
  %262 = vmatprep.subr.mxu0 0.0
  %263 = vmatpush1.msra.mxu0 0.0
  %264 = vmatprep.subr.mxu0 0.0
  %265 = vmatpush1.msra.mxu0 0.0
  %266 = vmatprep.subr.mxu0 0.0
  %267 = vmatpush1.msra.mxu0 0.0
  %268 = vmatprep.subr.mxu0 0.0
  %269 = vmatpush1.msra.mxu0 0.0
  %270 = vmatprep.subr.mxu0 0.0
  %271 = vmatpush1.msra.mxu0 0.0
  %272 = vmatprep.subr.mxu0 0.0
  %273 = vmatpush1.msra.mxu0 0.0
  %274 = vmatprep.subr.mxu0 0.0
  %275 = vmatpush1.msra.mxu0 0.0
  %276 = vmatprep.subr.mxu0 0.0
  %277 = vmatpush1.msra.mxu0 0.0
  %278 = vmatprep.subr.mxu0 0.0
  %279 = vmatpush1.msra.mxu0 0.0
  %280 = vmatprep.subr.mxu0 0.0
  %281 = vmatpush1.msra.mxu0 0.0
  %282 = vmatprep.mubr.f32.mxu0 0.0
  %283 = vmatmul.mubr.f32.gmra.mrb[0].mxu0 %v216
  %v284 = vpop.f32.mrb[0].mxu0
  %v285 = vadd.f32 0.0, %v284
  %v286 = vpop.f32.mrb[0].mxu0
  %287 = vdwg.mxu0
  %v289 = vsel %vm141, %v13, 0
  %291 = vmatprep.subr.mxu0 0.0
  %292 = vmatpush1.msra.mxu0 %v78
  %293 = vmatprep.subr.mxu0 0.0
  %294 = vmatpush1.msra.mxu0 0.0
  %295 = vmatprep.subr.mxu0 0.0
  %296 = vmatpush1.msra.mxu0 0.0
  %297 = vmatprep.subr.mxu0 0.0
  %298 = vmatpush1.msra.mxu0 0.0
  %299 = vmatprep.subr.mxu0 0.0
  %300 = vmatpush1.msra.mxu0 0.0
  %301 = vmatprep.subr.mxu0 0.0
  %302 = vmatpush1.msra.mxu0 0.0
  %303 = vmatprep.subr.mxu0 0.0
  %304 = vmatpush1.msra.mxu0 0.0
  %305 = vmatprep.subr.mxu0 0.0
  %306 = vmatpush1.msra.mxu0 0.0
  %307 = vmatprep.subr.mxu0 0.0
  %308 = vmatpush1.msra.mxu0 0.0
  %309 = vmatprep.subr.mxu0 0.0
  %310 = vmatpush1.msra.mxu0 0.0
  %311 = vmatprep.subr.mxu0 0.0
  %312 = vmatpush1.msra.mxu0 0.0
  %313 = vmatprep.subr.mxu0 0.0
  %314 = vmatpush1.msra.mxu0 0.0
  %315 = vmatprep.subr.mxu0 0.0
  %316 = vmatpush1.msra.mxu0 0.0
  %317 = vmatprep.subr.mxu0 0.0
  %318 = vmatpush1.msra.mxu0 0.0
  %319 = vmatprep.subr.mxu0 0.0
  %320 = vmatpush1.msra.mxu0 0.0
  %321 = vmatprep.subr.mxu0 0.0
  %322 = vmatpush1.msra.mxu0 0.0
  %323 = vmatprep.subr.mxu0 0.0
  %324 = vmatpush1.msra.mxu0 0.0
  %325 = vmatprep.subr.mxu0 0.0
  %326 = vmatpush1.msra.mxu0 0.0
  %327 = vmatprep.subr.mxu0 0.0
  %328 = vmatpush1.msra.mxu0 0.0
  %329 = vmatprep.subr.mxu0 0.0
  %330 = vmatpush1.msra.mxu0 0.0
  %331 = vmatprep.subr.mxu0 0.0
  %332 = vmatpush1.msra.mxu0 0.0
  %333 = vmatprep.subr.mxu0 0.0
  %334 = vmatpush1.msra.mxu0 0.0
  %335 = vmatprep.subr.mxu0 0.0
  %336 = vmatpush1.msra.mxu0 0.0
  %337 = vmatprep.subr.mxu0 0.0
  %338 = vmatpush1.msra.mxu0 0.0
  %339 = vmatprep.subr.mxu0 0.0
  %340 = vmatpush1.msra.mxu0 0.0
  %341 = vmatprep.subr.mxu0 0.0
  %342 = vmatpush1.msra.mxu0 0.0
  %343 = vmatprep.subr.mxu0 0.0
  %344 = vmatpush1.msra.mxu0 0.0
  %345 = vmatprep.subr.mxu0 0.0
  %346 = vmatpush1.msra.mxu0 0.0
  %347 = vmatprep.subr.mxu0 0.0
  %348 = vmatpush1.msra.mxu0 0.0
  %349 = vmatprep.subr.mxu0 0.0
  %350 = vmatpush1.msra.mxu0 0.0
  %351 = vmatprep.subr.mxu0 0.0
  %352 = vmatpush1.msra.mxu0 0.0
  %353 = vmatprep.subr.mxu0 0.0
  %354 = vmatpush1.msra.mxu0 0.0
  %355 = vmatprep.mubr.f32.mxu0 0.0
  %356 = vmatmul.mubr.f32.gmra.mrb[0].mxu0 %v289
  %v357 = vpop.f32.mrb[0].mxu0
  %v358 = vadd.f32 0.0, %v357
  %v359 = vpop.f32.mrb[0].mxu0
  %360 = vdwg.mxu0
  %v362 = vsel %vm141, %v14, 0
  %364 = vmatprep.subr.mxu0 0.0
  %365 = vmatpush1.msra.mxu0 %v79
  %366 = vmatprep.subr.mxu0 0.0
  %367 = vmatpush1.msra.mxu0 0.0
  %368 = vmatprep.subr.mxu0 0.0
  %369 = vmatpush1.msra.mxu0 0.0
  %370 = vmatprep.subr.mxu0 0.0
  %371 = vmatpush1.msra.mxu0 0.0
  %372 = vmatprep.subr.mxu0 0.0
  %373 = vmatpush1.msra.mxu0 0.0
  %374 = vmatprep.subr.mxu0 0.0
  %375 = vmatpush1.msra.mxu0 0.0
  %376 = vmatprep.subr.mxu0 0.0
  %377 = vmatpush1.msra.mxu0 0.0
  %378 = vmatprep.subr.mxu0 0.0
  %379 = vmatpush1.msra.mxu0 0.0
  %380 = vmatprep.subr.mxu0 0.0
  %381 = vmatpush1.msra.mxu0 0.0
  %382 = vmatprep.subr.mxu0 0.0
  %383 = vmatpush1.msra.mxu0 0.0
  %384 = vmatprep.subr.mxu0 0.0
  %385 = vmatpush1.msra.mxu0 0.0
  %386 = vmatprep.subr.mxu0 0.0
  %387 = vmatpush1.msra.mxu0 0.0
  %388 = vmatprep.subr.mxu0 0.0
  %389 = vmatpush1.msra.mxu0 0.0
  %390 = vmatprep.subr.mxu0 0.0
  %391 = vmatpush1.msra.mxu0 0.0
  %392 = vmatprep.subr.mxu0 0.0
  %393 = vmatpush1.msra.mxu0 0.0
  %394 = vmatprep.subr.mxu0 0.0
  %395 = vmatpush1.msra.mxu0 0.0
  %396 = vmatprep.subr.mxu0 0.0
  %397 = vmatpush1.msra.mxu0 0.0
  %398 = vmatprep.subr.mxu0 0.0
  %399 = vmatpush1.msra.mxu0 0.0
  %400 = vmatprep.subr.mxu0 0.0
  %401 = vmatpush1.msra.mxu0 0.0
  %402 = vmatprep.subr.mxu0 0.0
  %403 = vmatpush1.msra.mxu0 0.0
  %404 = vmatprep.subr.mxu0 0.0
  %405 = vmatpush1.msra.mxu0 0.0
  %406 = vmatprep.subr.mxu0 0.0
  %407 = vmatpush1.msra.mxu0 0.0
  %408 = vmatprep.subr.mxu0 0.0
  %409 = vmatpush1.msra.mxu0 0.0
  %410 = vmatprep.subr.mxu0 0.0
  %411 = vmatpush1.msra.mxu0 0.0
  %412 = vmatprep.subr.mxu0 0.0
  %413 = vmatpush1.msra.mxu0 0.0
  %414 = vmatprep.subr.mxu0 0.0
  %415 = vmatpush1.msra.mxu0 0.0
  %416 = vmatprep.subr.mxu0 0.0
  %417 = vmatpush1.msra.mxu0 0.0
  %418 = vmatprep.subr.mxu0 0.0
  %419 = vmatpush1.msra.mxu0 0.0
  %420 = vmatprep.subr.mxu0 0.0
  %421 = vmatpush1.msra.mxu0 0.0
  %422 = vmatprep.subr.mxu0 0.0
  %423 = vmatpush1.msra.mxu0 0.0
  %424 = vmatprep.subr.mxu0 0.0
  %425 = vmatpush1.msra.mxu0 0.0
  %426 = vmatprep.subr.mxu0 0.0
  %427 = vmatpush1.msra.mxu0 0.0
  %428 = vmatprep.mubr.f32.mxu0 0.0
  %429 = vmatmul.mubr.f32.gmra.mrb[0].mxu0 %v362
  %v430 = vpop.f32.mrb[0].mxu0
  %v431 = vadd.f32 0.0, %v430
  %v432 = vpop.f32.mrb[0].mxu0
  %433 = vdwg.mxu0
  %v435 = vsel %vm141, %v15, 0
  %437 = vmatprep.subr.mxu0 0.0
  %438 = vmatpush1.msra.mxu0 %v80
  %439 = vmatprep.subr.mxu0 0.0
  %440 = vmatpush1.msra.mxu0 0.0
  %441 = vmatprep.subr.mxu0 0.0
  %442 = vmatpush1.msra.mxu0 0.0
  %443 = vmatprep.subr.mxu0 0.0
  %444 = vmatpush1.msra.mxu0 0.0
  %445 = vmatprep.subr.mxu0 0.0
  %446 = vmatpush1.msra.mxu0 0.0
  %447 = vmatprep.subr.mxu0 0.0
  %448 = vmatpush1.msra.mxu0 0.0
  %449 = vmatprep.subr.mxu0 0.0
  %450 = vmatpush1.msra.mxu0 0.0
  %451 = vmatprep.subr.mxu0 0.0
  %452 = vmatpush1.msra.mxu0 0.0
  %453 = vmatprep.subr.mxu0 0.0
  %454 = vmatpush1.msra.mxu0 0.0
  %455 = vmatprep.subr.mxu0 0.0
  %456 = vmatpush1.msra.mxu0 0.0
  %457 = vmatprep.subr.mxu0 0.0
  %458 = vmatpush1.msra.mxu0 0.0
  %459 = vmatprep.subr.mxu0 0.0
  %460 = vmatpush1.msra.mxu0 0.0
  %461 = vmatprep.subr.mxu0 0.0
  %462 = vmatpush1.msra.mxu0 0.0
  %463 = vmatprep.subr.mxu0 0.0
  %464 = vmatpush1.msra.mxu0 0.0
  %465 = vmatprep.subr.mxu0 0.0
  %466 = vmatpush1.msra.mxu0 0.0
  %467 = vmatprep.subr.mxu0 0.0
  %468 = vmatpush1.msra.mxu0 0.0
  %469 = vmatprep.subr.mxu0 0.0
  %470 = vmatpush1.msra.mxu0 0.0
  %471 = vmatprep.subr.mxu0 0.0
  %472 = vmatpush1.msra.mxu0 0.0
  %473 = vmatprep.subr.mxu0 0.0
  %474 = vmatpush1.msra.mxu0 0.0
  %475 = vmatprep.subr.mxu0 0.0
  %476 = vmatpush1.msra.mxu0 0.0
  %477 = vmatprep.subr.mxu0 0.0
  %478 = vmatpush1.msra.mxu0 0.0
  %479 = vmatprep.subr.mxu0 0.0
  %480 = vmatpush1.msra.mxu0 0.0
  %481 = vmatprep.subr.mxu0 0.0
  %482 = vmatpush1.msra.mxu0 0.0
  %483 = vmatprep.subr.mxu0 0.0
  %484 = vmatpush1.msra.mxu0 0.0
  %485 = vmatprep.subr.mxu0 0.0
  %486 = vmatpush1.msra.mxu0 0.0
  %487 = vmatprep.subr.mxu0 0.0
  %488 = vmatpush1.msra.mxu0 0.0
  %489 = vmatprep.subr.mxu0 0.0
  %490 = vmatpush1.msra.mxu0 0.0
  %491 = vmatprep.subr.mxu0 0.0
  %492 = vmatpush1.msra.mxu0 0.0
  %493 = vmatprep.subr.mxu0 0.0
  %494 = vmatpush1.msra.mxu0 0.0
  %495 = vmatprep.subr.mxu0 0.0
  %496 = vmatpush1.msra.mxu0 0.0
  %497 = vmatprep.subr.mxu0 0.0
  %498 = vmatpush1.msra.mxu0 0.0
  %499 = vmatprep.subr.mxu0 0.0
  %500 = vmatpush1.msra.mxu0 0.0
  %501 = vmatprep.mubr.f32.mxu0 0.0
  %502 = vmatmul.mubr.f32.gmra.mrb[0].mxu0 %v435
  %v503 = vpop.f32.mrb[0].mxu0
  %v504 = vadd.f32 0.0, %v503
  %v505 = vpop.f32.mrb[0].mxu0
  %506 = vdwg.mxu0
  %v508 = vsel %vm141, %v16, 0
  %510 = vmatprep.subr.mxu0 0.0
  %511 = vmatpush1.msra.mxu0 %v81
  %512 = vmatprep.subr.mxu0 0.0
  %513 = vmatpush1.msra.mxu0 0.0
  %514 = vmatprep.subr.mxu0 0.0
  %515 = vmatpush1.msra.mxu0 0.0
  %516 = vmatprep.subr.mxu0 0.0
  %517 = vmatpush1.msra.mxu0 0.0
  %518 = vmatprep.subr.mxu0 0.0
  %519 = vmatpush1.msra.mxu0 0.0
  %520 = vmatprep.subr.mxu0 0.0
  %521 = vmatpush1.msra.mxu0 0.0
  %522 = vmatprep.subr.mxu0 0.0
  %523 = vmatpush1.msra.mxu0 0.0
  %524 = vmatprep.subr.mxu0 0.0
  %525 = vmatpush1.msra.mxu0 0.0
  %526 = vmatprep.subr.mxu0 0.0
  %527 = vmatpush1.msra.mxu0 0.0
  %528 = vmatprep.subr.mxu0 0.0
  %529 = vmatpush1.msra.mxu0 0.0
  %530 = vmatprep.subr.mxu0 0.0
  %531 = vmatpush1.msra.mxu0 0.0
  %532 = vmatprep.subr.mxu0 0.0
  %533 = vmatpush1.msra.mxu0 0.0
  %534 = vmatprep.subr.mxu0 0.0
  %535 = vmatpush1.msra.mxu0 0.0
  %536 = vmatprep.subr.mxu0 0.0
  %537 = vmatpush1.msra.mxu0 0.0
  %538 = vmatprep.subr.mxu0 0.0
  %539 = vmatpush1.msra.mxu0 0.0
  %540 = vmatprep.subr.mxu0 0.0
  %541 = vmatpush1.msra.mxu0 0.0
  %542 = vmatprep.subr.mxu0 0.0
  %543 = vmatpush1.msra.mxu0 0.0
  %544 = vmatprep.subr.mxu0 0.0
  %545 = vmatpush1.msra.mxu0 0.0
  %546 = vmatprep.subr.mxu0 0.0
  %547 = vmatpush1.msra.mxu0 0.0
  %548 = vmatprep.subr.mxu0 0.0
  %549 = vmatpush1.msra.mxu0 0.0
  %550 = vmatprep.subr.mxu0 0.0
  %551 = vmatpush1.msra.mxu0 0.0
  %552 = vmatprep.subr.mxu0 0.0
  %553 = vmatpush1.msra.mxu0 0.0
  %554 = vmatprep.subr.mxu0 0.0
  %555 = vmatpush1.msra.mxu0 0.0
  %556 = vmatprep.subr.mxu0 0.0
  %557 = vmatpush1.msra.mxu0 0.0
  %558 = vmatprep.subr.mxu0 0.0
  %559 = vmatpush1.msra.mxu0 0.0
  %560 = vmatprep.subr.mxu0 0.0
  %561 = vmatpush1.msra.mxu0 0.0
  %562 = vmatprep.subr.mxu0 0.0
  %563 = vmatpush1.msra.mxu0 0.0
  %564 = vmatprep.subr.mxu0 0.0
  %565 = vmatpush1.msra.mxu0 0.0
  %566 = vmatprep.subr.mxu0 0.0
  %567 = vmatpush1.msra.mxu0 0.0
  %568 = vmatprep.subr.mxu0 0.0
  %569 = vmatpush1.msra.mxu0 0.0
  %570 = vmatprep.subr.mxu0 0.0
  %571 = vmatpush1.msra.mxu0 0.0
  %572 = vmatprep.subr.mxu0 0.0
  %573 = vmatpush1.msra.mxu0 0.0
  %574 = vmatprep.mubr.f32.mxu0 0.0
  %575 = vmatmul.mubr.f32.gmra.mrb[0].mxu0 %v508
  %v576 = vpop.f32.mrb[0].mxu0
  %v577 = vadd.f32 0.0, %v576
  %v578 = vpop.f32.mrb[0].mxu0
  %579 = vdwg.mxu0
  %v581 = vsel %vm141, %v17, 0
  %583 = vmatprep.subr.mxu0 0.0
  %584 = vmatpush1.msra.mxu0 %v82
  %585 = vmatprep.subr.mxu0 0.0
  %586 = vmatpush1.msra.mxu0 0.0
  %587 = vmatprep.subr.mxu0 0.0
  %588 = vmatpush1.msra.mxu0 0.0
  %589 = vmatprep.subr.mxu0 0.0
  %590 = vmatpush1.msra.mxu0 0.0
  %591 = vmatprep.subr.mxu0 0.0
  %592 = vmatpush1.msra.mxu0 0.0
  %593 = vmatprep.subr.mxu0 0.0
  %594 = vmatpush1.msra.mxu0 0.0
  %595 = vmatprep.subr.mxu0 0.0
  %596 = vmatpush1.msra.mxu0 0.0
  %597 = vmatprep.subr.mxu0 0.0
  %598 = vmatpush1.msra.mxu0 0.0
  %599 = vmatprep.subr.mxu0 0.0
  %600 = vmatpush1.msra.mxu0 0.0
  %601 = vmatprep.subr.mxu0 0.0
  %602 = vmatpush1.msra.mxu0 0.0
  %603 = vmatprep.subr.mxu0 0.0
  %604 = vmatpush1.msra.mxu0 0.0
  %605 = vmatprep.subr.mxu0 0.0
  %606 = vmatpush1.msra.mxu0 0.0
  %607 = vmatprep.subr.mxu0 0.0
  %608 = vmatpush1.msra.mxu0 0.0
  %609 = vmatprep.subr.mxu0 0.0
  %610 = vmatpush1.msra.mxu0 0.0
  %611 = vmatprep.subr.mxu0 0.0
  %612 = vmatpush1.msra.mxu0 0.0
  %613 = vmatprep.subr.mxu0 0.0
  %614 = vmatpush1.msra.mxu0 0.0
  %615 = vmatprep.subr.mxu0 0.0
  %616 = vmatpush1.msra.mxu0 0.0
  %617 = vmatprep.subr.mxu0 0.0
  %618 = vmatpush1.msra.mxu0 0.0
  %619 = vmatprep.subr.mxu0 0.0
  %620 = vmatpush1.msra.mxu0 0.0
  %621 = vmatprep.subr.mxu0 0.0
  %622 = vmatpush1.msra.mxu0 0.0
  %623 = vmatprep.subr.mxu0 0.0
  %624 = vmatpush1.msra.mxu0 0.0
  %625 = vmatprep.subr.mxu0 0.0
  %626 = vmatpush1.msra.mxu0 0.0
  %627 = vmatprep.subr.mxu0 0.0
  %628 = vmatpush1.msra.mxu0 0.0
  %629 = vmatprep.subr.mxu0 0.0
  %630 = vmatpush1.msra.mxu0 0.0
  %631 = vmatprep.subr.mxu0 0.0
  %632 = vmatpush1.msra.mxu0 0.0
  %633 = vmatprep.subr.mxu0 0.0
  %634 = vmatpush1.msra.mxu0 0.0
  %635 = vmatprep.subr.mxu0 0.0
  %636 = vmatpush1.msra.mxu0 0.0
  %637 = vmatprep.subr.mxu0 0.0
  %638 = vmatpush1.msra.mxu0 0.0
  %639 = vmatprep.subr.mxu0 0.0
  %640 = vmatpush1.msra.mxu0 0.0
  %641 = vmatprep.subr.mxu0 0.0
  %642 = vmatpush1.msra.mxu0 0.0
  %643 = vmatprep.subr.mxu0 0.0
  %644 = vmatpush1.msra.mxu0 0.0
  %645 = vmatprep.subr.mxu0 0.0
  %646 = vmatpush1.msra.mxu0 0.0
  %647 = vmatprep.mubr.f32.mxu0 0.0
  %648 = vmatmul.mubr.f32.gmra.mrb[0].mxu0 %v581
  %v649 = vpop.f32.mrb[0].mxu0
  %v650 = vadd.f32 0.0, %v649
  %v651 = vpop.f32.mrb[0].mxu0
  %652 = vdwg.mxu0
  %v654 = vsel %vm141, %v18, 0
  %656 = vmatprep.subr.mxu0 0.0
  %657 = vmatpush1.msra.mxu0 %v83
  %658 = vmatprep.subr.mxu0 0.0
  %659 = vmatpush1.msra.mxu0 0.0
  %660 = vmatprep.subr.mxu0 0.0
  %661 = vmatpush1.msra.mxu0 0.0
  %662 = vmatprep.subr.mxu0 0.0
  %663 = vmatpush1.msra.mxu0 0.0
  %664 = vmatprep.subr.mxu0 0.0
  %665 = vmatpush1.msra.mxu0 0.0
  %666 = vmatprep.subr.mxu0 0.0
  %667 = vmatpush1.msra.mxu0 0.0
  %668 = vmatprep.subr.mxu0 0.0
  %669 = vmatpush1.msra.mxu0 0.0
  %670 = vmatprep.subr.mxu0 0.0
  %671 = vmatpush1.msra.mxu0 0.0
  %672 = vmatprep.subr.mxu0 0.0
  %673 = vmatpush1.msra.mxu0 0.0
  %674 = vmatprep.subr.mxu0 0.0
  %675 = vmatpush1.msra.mxu0 0.0
  %676 = vmatprep.subr.mxu0 0.0
  %677 = vmatpush1.msra.mxu0 0.0
  %678 = vmatprep.subr.mxu0 0.0
  %679 = vmatpush1.msra.mxu0 0.0
  %680 = vmatprep.subr.mxu0 0.0
  %681 = vmatpush1.msra.mxu0 0.0
  %682 = vmatprep.subr.mxu0 0.0
  %683 = vmatpush1.msra.mxu0 0.0
  %684 = vmatprep.subr.mxu0 0.0
  %685 = vmatpush1.msra.mxu0 0.0
  %686 = vmatprep.subr.mxu0 0.0
  %687 = vmatpush1.msra.mxu0 0.0
  %688 = vmatprep.subr.mxu0 0.0
  %689 = vmatpush1.msra.mxu0 0.0
  %690 = vmatprep.subr.mxu0 0.0
  %691 = vmatpush1.msra.mxu0 0.0
  %692 = vmatprep.subr.mxu0 0.0
  %693 = vmatpush1.msra.mxu0 0.0
  %694 = vmatprep.subr.mxu0 0.0
  %695 = vmatpush1.msra.mxu0 0.0
  %696 = vmatprep.subr.mxu0 0.0
  %697 = vmatpush1.msra.mxu0 0.0
  %698 = vmatprep.subr.mxu0 0.0
  %699 = vmatpush1.msra.mxu0 0.0
  %700 = vmatprep.subr.mxu0 0.0
  %701 = vmatpush1.msra.mxu0 0.0
  %702 = vmatprep.subr.mxu0 0.0
  %703 = vmatpush1.msra.mxu0 0.0
  %704 = vmatprep.subr.mxu0 0.0
  %705 = vmatpush1.msra.mxu0 0.0
  %706 = vmatprep.subr.mxu0 0.0
  %707 = vmatpush1.msra.mxu0 0.0
  %708 = vmatprep.subr.mxu0 0.0
  %709 = vmatpush1.msra.mxu0 0.0
  %710 = vmatprep.subr.mxu0 0.0
  %711 = vmatpush1.msra.mxu0 0.0
  %712 = vmatprep.subr.mxu0 0.0
  %713 = vmatpush1.msra.mxu0 0.0
  %714 = vmatprep.subr.mxu0 0.0
  %715 = vmatpush1.msra.mxu0 0.0
  %716 = vmatprep.subr.mxu0 0.0
  %717 = vmatpush1.msra.mxu0 0.0
  %718 = vmatprep.subr.mxu0 0.0
  %719 = vmatpush1.msra.mxu0 0.0
  %720 = vmatprep.mubr.f32.mxu0 0.0
  %721 = vmatmul.mubr.f32.gmra.mrb[0].mxu0 %v654
  %v722 = vpop.f32.mrb[0].mxu0
  %v723 = vadd.f32 0.0, %v722
  %v724 = vpop.f32.mrb[0].mxu0
  %725 = vdwg.mxu0
  %v727 = vsel %vm141, %v19, 0
  %729 = vmatprep.subr.mxu0 0.0
  %730 = vmatpush1.msra.mxu0 %v84
  %731 = vmatprep.subr.mxu0 0.0
  %732 = vmatpush1.msra.mxu0 0.0
  %733 = vmatprep.subr.mxu0 0.0
  %734 = vmatpush1.msra.mxu0 0.0
  %735 = vmatprep.subr.mxu0 0.0
  %736 = vmatpush1.msra.mxu0 0.0
  %737 = vmatprep.subr.mxu0 0.0
  %738 = vmatpush1.msra.mxu0 0.0
  %739 = vmatprep.subr.mxu0 0.0
  %740 = vmatpush1.msra.mxu0 0.0
  %741 = vmatprep.subr.mxu0 0.0
  %742 = vmatpush1.msra.mxu0 0.0
  %743 = vmatprep.subr.mxu0 0.0
  %744 = vmatpush1.msra.mxu0 0.0
  %745 = vmatprep.subr.mxu0 0.0
  %746 = vmatpush1.msra.mxu0 0.0
  %747 = vmatprep.subr.mxu0 0.0
  %748 = vmatpush1.msra.mxu0 0.0
  %749 = vmatprep.subr.mxu0 0.0
  %750 = vmatpush1.msra.mxu0 0.0
  %751 = vmatprep.subr.mxu0 0.0
  %752 = vmatpush1.msra.mxu0 0.0
  %753 = vmatprep.subr.mxu0 0.0
  %754 = vmatpush1.msra.mxu0 0.0
  %755 = vmatprep.subr.mxu0 0.0
  %756 = vmatpush1.msra.mxu0 0.0
  %757 = vmatprep.subr.mxu0 0.0
  %758 = vmatpush1.msra.mxu0 0.0
  %759 = vmatprep.subr.mxu0 0.0
  %760 = vmatpush1.msra.mxu0 0.0
  %761 = vmatprep.subr.mxu0 0.0
  %762 = vmatpush1.msra.mxu0 0.0
  %763 = vmatprep.subr.mxu0 0.0
  %764 = vmatpush1.msra.mxu0 0.0
  %765 = vmatprep.subr.mxu0 0.0
  %766 = vmatpush1.msra.mxu0 0.0
  %767 = vmatprep.subr.mxu0 0.0
  %768 = vmatpush1.msra.mxu0 0.0
  %769 = vmatprep.subr.mxu0 0.0
  %770 = vmatpush1.msra.mxu0 0.0
  %771 = vmatprep.subr.mxu0 0.0
  %772 = vmatpush1.msra.mxu0 0.0
  %773 = vmatprep.subr.mxu0 0.0
  %774 = vmatpush1.msra.mxu0 0.0
  %775 = vmatprep.subr.mxu0 0.0
  %776 = vmatpush1.msra.mxu0 0.0
  %777 = vmatprep.subr.mxu0 0.0
  %778 = vmatpush1.msra.mxu0 0.0
  %779 = vmatprep.subr.mxu0 0.0
  %780 = vmatpush1.msra.mxu0 0.0
  %781 = vmatprep.subr.mxu0 0.0
  %782 = vmatpush1.msra.mxu0 0.0
  %783 = vmatprep.subr.mxu0 0.0
  %784 = vmatpush1.msra.mxu0 0.0
  %785 = vmatprep.subr.mxu0 0.0
  %786 = vmatpush1.msra.mxu0 0.0
  %787 = vmatprep.subr.mxu0 0.0
  %788 = vmatpush1.msra.mxu0 0.0
  %789 = vmatprep.subr.mxu0 0.0
  %790 = vmatpush1.msra.mxu0 0.0
  %791 = vmatprep.subr.mxu0 0.0
  %792 = vmatpush1.msra.mxu0 0.0
  %793 = vmatprep.mubr.f32.mxu0 0.0
  %794 = vmatmul.mubr.f32.gmra.mrb[0].mxu0 %v727
  %v795 = vpop.f32.mrb[0].mxu0
  %v796 = vadd.f32 0.0, %v795
  %v797 = vpop.f32.mrb[0].mxu0
  %798 = vdwg.mxu0
  %v800 = vsel %vm141, %v20, 0
  %802 = vmatprep.subr.mxu0 0.0
  %803 = vmatpush1.msra.mxu0 %v85
  %804 = vmatprep.subr.mxu0 0.0
  %805 = vmatpush1.msra.mxu0 0.0
  %806 = vmatprep.subr.mxu0 0.0
  %807 = vmatpush1.msra.mxu0 0.0
  %808 = vmatprep.subr.mxu0 0.0
  %809 = vmatpush1.msra.mxu0 0.0
  %810 = vmatprep.subr.mxu0 0.0
  %811 = vmatpush1.msra.mxu0 0.0
  %812 = vmatprep.subr.mxu0 0.0
  %813 = vmatpush1.msra.mxu0 0.0
  %814 = vmatprep.subr.mxu0 0.0
  %815 = vmatpush1.msra.mxu0 0.0
  %816 = vmatprep.subr.mxu0 0.0
  %817 = vmatpush1.msra.mxu0 0.0
  %818 = vmatprep.subr.mxu0 0.0
  %819 = vmatpush1.msra.mxu0 0.0
  %820 = vmatprep.subr.mxu0 0.0
  %821 = vmatpush1.msra.mxu0 0.0
  %822 = vmatprep.subr.mxu0 0.0
  %823 = vmatpush1.msra.mxu0 0.0
  %824 = vmatprep.subr.mxu0 0.0
  %825 = vmatpush1.msra.mxu0 0.0
  %826 = vmatprep.subr.mxu0 0.0
  %827 = vmatpush1.msra.mxu0 0.0
  %828 = vmatprep.subr.mxu0 0.0
  %829 = vmatpush1.msra.mxu0 0.0
  %830 = vmatprep.subr.mxu0 0.0
  %831 = vmatpush1.msra.mxu0 0.0
  %832 = vmatprep.subr.mxu0 0.0
  %833 = vmatpush1.msra.mxu0 0.0
  %834 = vmatprep.subr.mxu0 0.0
  %835 = vmatpush1.msra.mxu0 0.0
  %836 = vmatprep.subr.mxu0 0.0
  %837 = vmatpush1.msra.mxu0 0.0
  %838 = vmatprep.subr.mxu0 0.0
  %839 = vmatpush1.msra.mxu0 0.0
  %840 = vmatprep.subr.mxu0 0.0
  %841 = vmatpush1.msra.mxu0 0.0
  %842 = vmatprep.subr.mxu0 0.0
  %843 = vmatpush1.msra.mxu0 0.0
  %844 = vmatprep.subr.mxu0 0.0
  %845 = vmatpush1.msra.mxu0 0.0
  %846 = vmatprep.subr.mxu0 0.0
  %847 = vmatpush1.msra.mxu0 0.0
  %848 = vmatprep.subr.mxu0 0.0
  %849 = vmatpush1.msra.mxu0 0.0
  %850 = vmatprep.subr.mxu0 0.0
  %851 = vmatpush1.msra.mxu0 0.0
  %852 = vmatprep.subr.mxu0 0.0
  %853 = vmatpush1.msra.mxu0 0.0
  %854 = vmatprep.subr.mxu0 0.0
  %855 = vmatpush1.msra.mxu0 0.0
  %856 = vmatprep.subr.mxu0 0.0
  %857 = vmatpush1.msra.mxu0 0.0
  %858 = vmatprep.subr.mxu0 0.0
  %859 = vmatpush1.msra.mxu0 0.0
  %860 = vmatprep.subr.mxu0 0.0
  %861 = vmatpush1.msra.mxu0 0.0
  %862 = vmatprep.subr.mxu0 0.0
  %863 = vmatpush1.msra.mxu0 0.0
  %864 = vmatprep.subr.mxu0 0.0
  %865 = vmatpush1.msra.mxu0 0.0
  %866 = vmatprep.mubr.f32.mxu0 0.0
  %867 = vmatmul.mubr.f32.gmra.mrb[0].mxu0 %v800
  %v868 = vpop.f32.mrb[0].mxu0
  %v869 = vadd.f32 0.0, %v868
  %v870 = vpop.f32.mrb[0].mxu0
  %871 = vdwg.mxu0
  %v873 = vsel %vm141, %v21, 0
  %875 = vmatprep.subr.mxu0 0.0
  %876 = vmatpush1.msra.mxu0 %v86
  %877 = vmatprep.subr.mxu0 0.0
  %878 = vmatpush1.msra.mxu0 0.0
  %879 = vmatprep.subr.mxu0 0.0
  %880 = vmatpush1.msra.mxu0 0.0
  %881 = vmatprep.subr.mxu0 0.0
  %882 = vmatpush1.msra.mxu0 0.0
  %883 = vmatprep.subr.mxu0 0.0
  %884 = vmatpush1.msra.mxu0 0.0
  %885 = vmatprep.subr.mxu0 0.0
  %886 = vmatpush1.msra.mxu0 0.0
  %887 = vmatprep.subr.mxu0 0.0
  %888 = vmatpush1.msra.mxu0 0.0
  %889 = vmatprep.subr.mxu0 0.0
  %890 = vmatpush1.msra.mxu0 0.0
  %891 = vmatprep.subr.mxu0 0.0
  %892 = vmatpush1.msra.mxu0 0.0
  %893 = vmatprep.subr.mxu0 0.0
  %894 = vmatpush1.msra.mxu0 0.0
  %895 = vmatprep.subr.mxu0 0.0
  %896 = vmatpush1.msra.mxu0 0.0
  %897 = vmatprep.subr.mxu0 0.0
  %898 = vmatpush1.msra.mxu0 0.0
  %899 = vmatprep.subr.mxu0 0.0
  %900 = vmatpush1.msra.mxu0 0.0
  %901 = vmatprep.subr.mxu0 0.0
  %902 = vmatpush1.msra.mxu0 0.0
  %903 = vmatprep.subr.mxu0 0.0
  %904 = vmatpush1.msra.mxu0 0.0
  %905 = vmatprep.subr.mxu0 0.0
  %906 = vmatpush1.msra.mxu0 0.0
  %907 = vmatprep.subr.mxu0 0.0
  %908 = vmatpush1.msra.mxu0 0.0
  %909 = vmatprep.subr.mxu0 0.0
  %910 = vmatpush1.msra.mxu0 0.0
  %911 = vmatprep.subr.mxu0 0.0
  %912 = vmatpush1.msra.mxu0 0.0
  %913 = vmatprep.subr.mxu0 0.0
  %914 = vmatpush1.msra.mxu0 0.0
  %915 = vmatprep.subr.mxu0 0.0
  %916 = vmatpush1.msra.mxu0 0.0
  %917 = vmatprep.subr.mxu0 0.0
  %918 = vmatpush1.msra.mxu0 0.0
  %919 = vmatprep.subr.mxu0 0.0
  %920 = vmatpush1.msra.mxu0 0.0
  %921 = vmatprep.subr.mxu0 0.0
  %922 = vmatpush1.msra.mxu0 0.0
  %923 = vmatprep.subr.mxu0 0.0
  %924 = vmatpush1.msra.mxu0 0.0
  %925 = vmatprep.subr.mxu0 0.0
  %926 = vmatpush1.msra.mxu0 0.0
  %927 = vmatprep.subr.mxu0 0.0
  %928 = vmatpush1.msra.mxu0 0.0
  %929 = vmatprep.subr.mxu0 0.0
  %930 = vmatpush1.msra.mxu0 0.0
  %931 = vmatprep.subr.mxu0 0.0
  %932 = vmatpush1.msra.mxu0 0.0
  %933 = vmatprep.subr.mxu0 0.0
  %934 = vmatpush1.msra.mxu0 0.0
  %935 = vmatprep.subr.mxu0 0.0
  %936 = vmatpush1.msra.mxu0 0.0
  %937 = vmatprep.subr.mxu0 0.0
  %938 = vmatpush1.msra.mxu0 0.0
  %939 = vmatprep.mubr.f32.mxu0 0.0
  %940 = vmatmul.mubr.f32.gmra.mrb[0].mxu0 %v873
  %v941 = vpop.f32.mrb[0].mxu0
  %v942 = vadd.f32 0.0, %v941
  %v943 = vpop.f32.mrb[0].mxu0
  %944 = vdwg.mxu0
  %v946 = vsel %vm141, %v22, 0
  %948 = vmatprep.subr.mxu0 0.0
  %949 = vmatpush1.msra.mxu0 %v87
  %950 = vmatprep.subr.mxu0 0.0
  %951 = vmatpush1.msra.mxu0 0.0
  %952 = vmatprep.subr.mxu0 0.0
  %953 = vmatpush1.msra.mxu0 0.0
  %954 = vmatprep.subr.mxu0 0.0
  %955 = vmatpush1.msra.mxu0 0.0
  %956 = vmatprep.subr.mxu0 0.0
  %957 = vmatpush1.msra.mxu0 0.0
  %958 = vmatprep.subr.mxu0 0.0
  %959 = vmatpush1.msra.mxu0 0.0
  %960 = vmatprep.subr.mxu0 0.0
  %961 = vmatpush1.msra.mxu0 0.0
  %962 = vmatprep.subr.mxu0 0.0
  %963 = vmatpush1.msra.mxu0 0.0
  %964 = vmatprep.subr.mxu0 0.0
  %965 = vmatpush1.msra.mxu0 0.0
  %966 = vmatprep.subr.mxu0 0.0
  %967 = vmatpush1.msra.mxu0 0.0
  %968 = vmatprep.subr.mxu0 0.0
  %969 = vmatpush1.msra.mxu0 0.0
  %970 = vmatprep.subr.mxu0 0.0
  %971 = vmatpush1.msra.mxu0 0.0
  %972 = vmatprep.subr.mxu0 0.0
  %973 = vmatpush1.msra.mxu0 0.0
  %974 = vmatprep.subr.mxu0 0.0
  %975 = vmatpush1.msra.mxu0 0.0
  %976 = vmatprep.subr.mxu0 0.0
  %977 = vmatpush1.msra.mxu0 0.0
  %978 = vmatprep.subr.mxu0 0.0
  %979 = vmatpush1.msra.mxu0 0.0
  %980 = vmatprep.subr.mxu0 0.0
  %981 = vmatpush1.msra.mxu0 0.0
  %982 = vmatprep.subr.mxu0 0.0
  %983 = vmatpush1.msra.mxu0 0.0
  %984 = vmatprep.subr.mxu0 0.0
  %985 = vmatpush1.msra.mxu0 0.0
  %986 = vmatprep.subr.mxu0 0.0
  %987 = vmatpush1.msra.mxu0 0.0
  %988 = vmatprep.subr.mxu0 0.0
  %989 = vmatpush1.msra.mxu0 0.0
  %990 = vmatprep.subr.mxu0 0.0
  %991 = vmatpush1.msra.mxu0 0.0
  %992 = vmatprep.subr.mxu0 0.0
  %993 = vmatpush1.msra.mxu0 0.0
  %994 = vmatprep.subr.mxu0 0.0
  %995 = vmatpush1.msra.mxu0 0.0
  %996 = vmatprep.subr.mxu0 0.0
  %997 = vmatpush1.msra.mxu0 0.0
  %998 = vmatprep.subr.mxu0 0.0
  %999 = vmatpush1.msra.mxu0 0.0
  %1000 = vmatprep.subr.mxu0 0.0
  %1001 = vmatpush1.msra.mxu0 0.0
  %1002 = vmatprep.subr.mxu0 0.0
  %1003 = vmatpush1.msra.mxu0 0.0
  %1004 = vmatprep.subr.mxu0 0.0
  %1005 = vmatpush1.msra.mxu0 0.0
  %1006 = vmatprep.subr.mxu0 0.0
  %1007 = vmatpush1.msra.mxu0 0.0
  %1008 = vmatprep.subr.mxu0 0.0
  %1009 = vmatpush1.msra.mxu0 0.0
  %1010 = vmatprep.subr.mxu0 0.0
  %1011 = vmatpush1.msra.mxu0 0.0
  %1012 = vmatprep.mubr.f32.mxu0 0.0
  %1013 = vmatmul.mubr.f32.gmra.mrb[0].mxu0 %v946
  %v1014 = vpop.f32.mrb[0].mxu0
  %v1015 = vadd.f32 0.0, %v1014
  %v1016 = vpop.f32.mrb[0].mxu0
  %1017 = vdwg.mxu0
  %v1019 = vsel %vm141, %v23, 0
  %1021 = vmatprep.subr.mxu0 0.0
  %1022 = vmatpush1.msra.mxu0 %v88
  %1023 = vmatprep.subr.mxu0 0.0
  %1024 = vmatpush1.msra.mxu0 0.0
  %1025 = vmatprep.subr.mxu0 0.0
  %1026 = vmatpush1.msra.mxu0 0.0
  %1027 = vmatprep.subr.mxu0 0.0
  %1028 = vmatpush1.msra.mxu0 0.0
  %1029 = vmatprep.subr.mxu0 0.0
  %1030 = vmatpush1.msra.mxu0 0.0
  %1031 = vmatprep.subr.mxu0 0.0
  %1032 = vmatpush1.msra.mxu0 0.0
  %1033 = vmatprep.subr.mxu0 0.0
  %1034 = vmatpush1.msra.mxu0 0.0
  %1035 = vmatprep.subr.mxu0 0.0
  %1036 = vmatpush1.msra.mxu0 0.0
  %1037 = vmatprep.subr.mxu0 0.0
  %1038 = vmatpush1.msra.mxu0 0.0
  %1039 = vmatprep.subr.mxu0 0.0
  %1040 = vmatpush1.msra.mxu0 0.0
  %1041 = vmatprep.subr.mxu0 0.0
  %1042 = vmatpush1.msra.mxu0 0.0
  %1043 = vmatprep.subr.mxu0 0.0
  %1044 = vmatpush1.msra.mxu0 0.0
  %1045 = vmatprep.subr.mxu0 0.0
  %1046 = vmatpush1.msra.mxu0 0.0
  %1047 = vmatprep.subr.mxu0 0.0
  %1048 = vmatpush1.msra.mxu0 0.0
  %1049 = vmatprep.subr.mxu0 0.0
  %1050 = vmatpush1.msra.mxu0 0.0
  %1051 = vmatprep.subr.mxu0 0.0
  %1052 = vmatpush1.msra.mxu0 0.0
  %1053 = vmatprep.subr.mxu0 0.0
  %1054 = vmatpush1.msra.mxu0 0.0
  %1055 = vmatprep.subr.mxu0 0.0
  %1056 = vmatpush1.msra.mxu0 0.0
  %1057 = vmatprep.subr.mxu0 0.0
  %1058 = vmatpush1.msra.mxu0 0.0
  %1059 = vmatprep.subr.mxu0 0.0
  %1060 = vmatpush1.msra.mxu0 0.0
  %1061 = vmatprep.subr.mxu0 0.0
  %1062 = vmatpush1.msra.mxu0 0.0
  %1063 = vmatprep.subr.mxu0 0.0
  %1064 = vmatpush1.msra.mxu0 0.0
  %1065 = vmatprep.subr.mxu0 0.0
  %1066 = vmatpush1.msra.mxu0 0.0
  %1067 = vmatprep.subr.mxu0 0.0
  %1068 = vmatpush1.msra.mxu0 0.0
  %1069 = vmatprep.subr.mxu0 0.0
  %1070 = vmatpush1.msra.mxu0 0.0
  %1071 = vmatprep.subr.mxu0 0.0
  %1072 = vmatpush1.msra.mxu0 0.0
  %1073 = vmatprep.subr.mxu0 0.0
  %1074 = vmatpush1.msra.mxu0 0.0
  %1075 = vmatprep.subr.mxu0 0.0
  %1076 = vmatpush1.msra.mxu0 0.0
  %1077 = vmatprep.subr.mxu0 0.0
  %1078 = vmatpush1.msra.mxu0 0.0
  %1079 = vmatprep.subr.mxu0 0.0
  %1080 = vmatpush1.msra.mxu0 0.0
  %1081 = vmatprep.subr.mxu0 0.0
  %1082 = vmatpush1.msra.mxu0 0.0
  %1083 = vmatprep.subr.mxu0 0.0
  %1084 = vmatpush1.msra.mxu0 0.0
  %1085 = vmatprep.mubr.f32.mxu0 0.0
  %1086 = vmatmul.mubr.f32.gmra.mrb[0].mxu0 %v1019
  %v1087 = vpop.f32.mrb[0].mxu0
  %v1088 = vadd.f32 0.0, %v1087
  %v1089 = vpop.f32.mrb[0].mxu0
  %1090 = vdwg.mxu0
  %v1092 = vsel %vm141, %v24, 0
  %1094 = vmatprep.subr.mxu0 0.0
  %1095 = vmatpush1.msra.mxu0 %v89
  %1096 = vmatprep.subr.mxu0 0.0
  %1097 = vmatpush1.msra.mxu0 0.0
  %1098 = vmatprep.subr.mxu0 0.0
  %1099 = vmatpush1.msra.mxu0 0.0
  %1100 = vmatprep.subr.mxu0 0.0
  %1101 = vmatpush1.msra.mxu0 0.0
  %1102 = vmatprep.subr.mxu0 0.0
  %1103 = vmatpush1.msra.mxu0 0.0
  %1104 = vmatprep.subr.mxu0 0.0
  %1105 = vmatpush1.msra.mxu0 0.0
  %1106 = vmatprep.subr.mxu0 0.0
  %1107 = vmatpush1.msra.mxu0 0.0
  %1108 = vmatprep.subr.mxu0 0.0
  %1109 = vmatpush1.msra.mxu0 0.0
  %1110 = vmatprep.subr.mxu0 0.0
  %1111 = vmatpush1.msra.mxu0 0.0
  %1112 = vmatprep.subr.mxu0 0.0
  %1113 = vmatpush1.msra.mxu0 0.0
  %1114 = vmatprep.subr.mxu0 0.0
  %1115 = vmatpush1.msra.mxu0 0.0
  %1116 = vmatprep.subr.mxu0 0.0
  %1117 = vmatpush1.msra.mxu0 0.0
  %1118 = vmatprep.subr.mxu0 0.0
  %1119 = vmatpush1.msra.mxu0 0.0
  %1120 = vmatprep.subr.mxu0 0.0
  %1121 = vmatpush1.msra.mxu0 0.0
  %1122 = vmatprep.subr.mxu0 0.0
  %1123 = vmatpush1.msra.mxu0 0.0
  %1124 = vmatprep.subr.mxu0 0.0
  %1125 = vmatpush1.msra.mxu0 0.0
  %1126 = vmatprep.subr.mxu0 0.0
  %1127 = vmatpush1.msra.mxu0 0.0
  %1128 = vmatprep.subr.mxu0 0.0
  %1129 = vmatpush1.msra.mxu0 0.0
  %1130 = vmatprep.subr.mxu0 0.0
  %1131 = vmatpush1.msra.mxu0 0.0
  %1132 = vmatprep.subr.mxu0 0.0
  %1133 = vmatpush1.msra.mxu0 0.0
  %1134 = vmatprep.subr.mxu0 0.0
  %1135 = vmatpush1.msra.mxu0 0.0
  %1136 = vmatprep.subr.mxu0 0.0
  %1137 = vmatpush1.msra.mxu0 0.0
  %1138 = vmatprep.subr.mxu0 0.0
  %1139 = vmatpush1.msra.mxu0 0.0
  %1140 = vmatprep.subr.mxu0 0.0
  %1141 = vmatpush1.msra.mxu0 0.0
  %1142 = vmatprep.subr.mxu0 0.0
  %1143 = vmatpush1.msra.mxu0 0.0
  %1144 = vmatprep.subr.mxu0 0.0
  %1145 = vmatpush1.msra.mxu0 0.0
  %1146 = vmatprep.subr.mxu0 0.0
  %1147 = vmatpush1.msra.mxu0 0.0
  %1148 = vmatprep.subr.mxu0 0.0
  %1149 = vmatpush1.msra.mxu0 0.0
  %1150 = vmatprep.subr.mxu0 0.0
  %1151 = vmatpush1.msra.mxu0 0.0
  %1152 = vmatprep.subr.mxu0 0.0
  %1153 = vmatpush1.msra.mxu0 0.0
  %1154 = vmatprep.subr.mxu0 0.0
  %1155 = vmatpush1.msra.mxu0 0.0
  %1156 = vmatprep.subr.mxu0 0.0
  %1157 = vmatpush1.msra.mxu0 0.0
  %1158 = vmatprep.mubr.f32.mxu0 0.0
  %1159 = vmatmul.mubr.f32.gmra.mrb[0].mxu0 %v1092
  %v1160 = vpop.f32.mrb[0].mxu0
  %v1161 = vadd.f32 0.0, %v1160
  %v1162 = vpop.f32.mrb[0].mxu0
  %1163 = vdwg.mxu0
  %v1165 = vsel %vm141, %v25, 0
  %1167 = vmatprep.subr.mxu0 0.0
  %1168 = vmatpush1.msra.mxu0 %v90
  %1169 = vmatprep.subr.mxu0 0.0
  %1170 = vmatpush1.msra.mxu0 0.0
  %1171 = vmatprep.subr.mxu0 0.0
  %1172 = vmatpush1.msra.mxu0 0.0
  %1173 = vmatprep.subr.mxu0 0.0
  %1174 = vmatpush1.msra.mxu0 0.0
  %1175 = vmatprep.subr.mxu0 0.0
  %1176 = vmatpush1.msra.mxu0 0.0
  %1177 = vmatprep.subr.mxu0 0.0
  %1178 = vmatpush1.msra.mxu0 0.0
  %1179 = vmatprep.subr.mxu0 0.0
  %1180 = vmatpush1.msra.mxu0 0.0
  %1181 = vmatprep.subr.mxu0 0.0
  %1182 = vmatpush1.msra.mxu0 0.0
  %1183 = vmatprep.subr.mxu0 0.0
  %1184 = vmatpush1.msra.mxu0 0.0
  %1185 = vmatprep.subr.mxu0 0.0
  %1186 = vmatpush1.msra.mxu0 0.0
  %1187 = vmatprep.subr.mxu0 0.0
  %1188 = vmatpush1.msra.mxu0 0.0
  %1189 = vmatprep.subr.mxu0 0.0
  %1190 = vmatpush1.msra.mxu0 0.0
  %1191 = vmatprep.subr.mxu0 0.0
  %1192 = vmatpush1.msra.mxu0 0.0
  %1193 = vmatprep.subr.mxu0 0.0
  %1194 = vmatpush1.msra.mxu0 0.0
  %1195 = vmatprep.subr.mxu0 0.0
  %1196 = vmatpush1.msra.mxu0 0.0
  %1197 = vmatprep.subr.mxu0 0.0
  %1198 = vmatpush1.msra.mxu0 0.0
  %1199 = vmatprep.subr.mxu0 0.0
  %1200 = vmatpush1.msra.mxu0 0.0
  %1201 = vmatprep.subr.mxu0 0.0
  %1202 = vmatpush1.msra.mxu0 0.0
  %1203 = vmatprep.subr.mxu0 0.0
  %1204 = vmatpush1.msra.mxu0 0.0
  %1205 = vmatprep.subr.mxu0 0.0
  %1206 = vmatpush1.msra.mxu0 0.0
  %1207 = vmatprep.subr.mxu0 0.0
  %1208 = vmatpush1.msra.mxu0 0.0
  %1209 = vmatprep.subr.mxu0 0.0
  %1210 = vmatpush1.msra.mxu0 0.0
  %1211 = vmatprep.subr.mxu0 0.0
  %1212 = vmatpush1.msra.mxu0 0.0
  %1213 = vmatprep.subr.mxu0 0.0
  %1214 = vmatpush1.msra.mxu0 0.0
  %1215 = vmatprep.subr.mxu0 0.0
  %1216 = vmatpush1.msra.mxu0 0.0
  %1217 = vmatprep.subr.mxu0 0.0
  %1218 = vmatpush1.msra.mxu0 0.0
  %1219 = vmatprep.subr.mxu0 0.0
  %1220 = vmatpush1.msra.mxu0 0.0
  %1221 = vmatprep.subr.mxu0 0.0
  %1222 = vmatpush1.msra.mxu0 0.0
  %1223 = vmatprep.subr.mxu0 0.0
  %1224 = vmatpush1.msra.mxu0 0.0
  %1225 = vmatprep.subr.mxu0 0.0
  %1226 = vmatpush1.msra.mxu0 0.0
  %1227 = vmatprep.subr.mxu0 0.0
  %1228 = vmatpush1.msra.mxu0 0.0
  %1229 = vmatprep.subr.mxu0 0.0
  %1230 = vmatpush1.msra.mxu0 0.0
  %1231 = vmatprep.mubr.f32.mxu0 0.0
  %1232 = vmatmul.mubr.f32.gmra.mrb[0].mxu0 %v1165
  %v1233 = vpop.f32.mrb[0].mxu0
  %v1234 = vadd.f32 0.0, %v1233
  %v1235 = vpop.f32.mrb[0].mxu0
  %1236 = vdwg.mxu0
  %v1238 = vsel %vm141, %v26, 0
  %1240 = vmatprep.subr.mxu0 0.0
  %1241 = vmatpush1.msra.mxu0 %v91
  %1242 = vmatprep.subr.mxu0 0.0
  %1243 = vmatpush1.msra.mxu0 0.0
  %1244 = vmatprep.subr.mxu0 0.0
  %1245 = vmatpush1.msra.mxu0 0.0
  %1246 = vmatprep.subr.mxu0 0.0
  %1247 = vmatpush1.msra.mxu0 0.0
  %1248 = vmatprep.subr.mxu0 0.0
  %1249 = vmatpush1.msra.mxu0 0.0
  %1250 = vmatprep.subr.mxu0 0.0
  %1251 = vmatpush1.msra.mxu0 0.0
  %1252 = vmatprep.subr.mxu0 0.0
  %1253 = vmatpush1.msra.mxu0 0.0
  %1254 = vmatprep.subr.mxu0 0.0
  %1255 = vmatpush1.msra.mxu0 0.0
  %1256 = vmatprep.subr.mxu0 0.0
  %1257 = vmatpush1.msra.mxu0 0.0
  %1258 = vmatprep.subr.mxu0 0.0
  %1259 = vmatpush1.msra.mxu0 0.0
  %1260 = vmatprep.subr.mxu0 0.0
  %1261 = vmatpush1.msra.mxu0 0.0
  %1262 = vmatprep.subr.mxu0 0.0
  %1263 = vmatpush1.msra.mxu0 0.0
  %1264 = vmatprep.subr.mxu0 0.0
  %1265 = vmatpush1.msra.mxu0 0.0
  %1266 = vmatprep.subr.mxu0 0.0
  %1267 = vmatpush1.msra.mxu0 0.0
  %1268 = vmatprep.subr.mxu0 0.0
  %1269 = vmatpush1.msra.mxu0 0.0
  %1270 = vmatprep.subr.mxu0 0.0
  %1271 = vmatpush1.msra.mxu0 0.0
  %1272 = vmatprep.subr.mxu0 0.0
  %1273 = vmatpush1.msra.mxu0 0.0
  %1274 = vmatprep.subr.mxu0 0.0
  %1275 = vmatpush1.msra.mxu0 0.0
  %1276 = vmatprep.subr.mxu0 0.0
  %1277 = vmatpush1.msra.mxu0 0.0
  %1278 = vmatprep.subr.mxu0 0.0
  %1279 = vmatpush1.msra.mxu0 0.0
  %1280 = vmatprep.subr.mxu0 0.0
  %1281 = vmatpush1.msra.mxu0 0.0
  %1282 = vmatprep.subr.mxu0 0.0
  %1283 = vmatpush1.msra.mxu0 0.0
  %1284 = vmatprep.subr.mxu0 0.0
  %1285 = vmatpush1.msra.mxu0 0.0
  %1286 = vmatprep.subr.mxu0 0.0
  %1287 = vmatpush1.msra.mxu0 0.0
  %1288 = vmatprep.subr.mxu0 0.0
  %1289 = vmatpush1.msra.mxu0 0.0
  %1290 = vmatprep.subr.mxu0 0.0
  %1291 = vmatpush1.msra.mxu0 0.0
  %1292 = vmatprep.subr.mxu0 0.0
  %1293 = vmatpush1.msra.mxu0 0.0
  %1294 = vmatprep.subr.mxu0 0.0
  %1295 = vmatpush1.msra.mxu0 0.0
  %1296 = vmatprep.subr.mxu0 0.0
  %1297 = vmatpush1.msra.mxu0 0.0
  %1298 = vmatprep.subr.mxu0 0.0
  %1299 = vmatpush1.msra.mxu0 0.0
  %1300 = vmatprep.subr.mxu0 0.0
  %1301 = vmatpush1.msra.mxu0 0.0
  %1302 = vmatprep.subr.mxu0 0.0
  %1303 = vmatpush1.msra.mxu0 0.0
  %1304 = vmatprep.mubr.f32.mxu0 0.0
  %1305 = vmatmul.mubr.f32.gmra.mrb[0].mxu0 %v1238
  %v1306 = vpop.f32.mrb[0].mxu0
  %v1307 = vadd.f32 0.0, %v1306
  %v1308 = vpop.f32.mrb[0].mxu0
  %1309 = vdwg.mxu0
  %v1311 = vsel %vm141, %v27, 0
  %1313 = vmatprep.subr.mxu0 0.0
  %1314 = vmatpush1.msra.mxu0 %v92
  %1315 = vmatprep.subr.mxu0 0.0
  %1316 = vmatpush1.msra.mxu0 0.0
  %1317 = vmatprep.subr.mxu0 0.0
  %1318 = vmatpush1.msra.mxu0 0.0
  %1319 = vmatprep.subr.mxu0 0.0
  %1320 = vmatpush1.msra.mxu0 0.0
  %1321 = vmatprep.subr.mxu0 0.0
  %1322 = vmatpush1.msra.mxu0 0.0
  %1323 = vmatprep.subr.mxu0 0.0
  %1324 = vmatpush1.msra.mxu0 0.0
  %1325 = vmatprep.subr.mxu0 0.0
  %1326 = vmatpush1.msra.mxu0 0.0
  %1327 = vmatprep.subr.mxu0 0.0
  %1328 = vmatpush1.msra.mxu0 0.0
  %1329 = vmatprep.subr.mxu0 0.0
  %1330 = vmatpush1.msra.mxu0 0.0
  %1331 = vmatprep.subr.mxu0 0.0
  %1332 = vmatpush1.msra.mxu0 0.0
  %1333 = vmatprep.subr.mxu0 0.0
  %1334 = vmatpush1.msra.mxu0 0.0
  %1335 = vmatprep.subr.mxu0 0.0
  %1336 = vmatpush1.msra.mxu0 0.0
  %1337 = vmatprep.subr.mxu0 0.0
  %1338 = vmatpush1.msra.mxu0 0.0
  %1339 = vmatprep.subr.mxu0 0.0
  %1340 = vmatpush1.msra.mxu0 0.0
  %1341 = vmatprep.subr.mxu0 0.0
  %1342 = vmatpush1.msra.mxu0 0.0
  %1343 = vmatprep.subr.mxu0 0.0
  %1344 = vmatpush1.msra.mxu0 0.0
  %1345 = vmatprep.subr.mxu0 0.0
  %1346 = vmatpush1.msra.mxu0 0.0
  %1347 = vmatprep.subr.mxu0 0.0
  %1348 = vmatpush1.msra.mxu0 0.0
  %1349 = vmatprep.subr.mxu0 0.0
  %1350 = vmatpush1.msra.mxu0 0.0
  %1351 = vmatprep.subr.mxu0 0.0
  %1352 = vmatpush1.msra.mxu0 0.0
  %1353 = vmatprep.subr.mxu0 0.0
  %1354 = vmatpush1.msra.mxu0 0.0
  %1355 = vmatprep.subr.mxu0 0.0
  %1356 = vmatpush1.msra.mxu0 0.0
  %1357 = vmatprep.subr.mxu0 0.0
  %1358 = vmatpush1.msra.mxu0 0.0
  %1359 = vmatprep.subr.mxu0 0.0
  %1360 = vmatpush1.msra.mxu0 0.0
  %1361 = vmatprep.subr.mxu0 0.0
  %1362 = vmatpush1.msra.mxu0 0.0
  %1363 = vmatprep.subr.mxu0 0.0
  %1364 = vmatpush1.msra.mxu0 0.0
  %1365 = vmatprep.subr.mxu0 0.0
  %1366 = vmatpush1.msra.mxu0 0.0
  %1367 = vmatprep.subr.mxu0 0.0
  %1368 = vmatpush1.msra.mxu0 0.0
  %1369 = vmatprep.subr.mxu0 0.0
  %1370 = vmatpush1.msra.mxu0 0.0
  %1371 = vmatprep.subr.mxu0 0.0
  %1372 = vmatpush1.msra.mxu0 0.0
  %1373 = vmatprep.subr.mxu0 0.0
  %1374 = vmatpush1.msra.mxu0 0.0
  %1375 = vmatprep.subr.mxu0 0.0
  %1376 = vmatpush1.msra.mxu0 0.0
  %1377 = vmatprep.mubr.f32.mxu0 0.0
  %1378 = vmatmul.mubr.f32.gmra.mrb[0].mxu0 %v1311
  %v1379 = vpop.f32.mrb[0].mxu0
  %v1380 = vadd.f32 0.0, %v1379
  %v1381 = vpop.f32.mrb[0].mxu0
  %1382 = vdwg.mxu0
  %v1384 = vsel %vm141, %v28, 0
  %1386 = vmatprep.subr.mxu0 0.0
  %1387 = vmatpush1.msra.mxu0 %v93
  %1388 = vmatprep.subr.mxu0 0.0
  %1389 = vmatpush1.msra.mxu0 0.0
  %1390 = vmatprep.subr.mxu0 0.0
  %1391 = vmatpush1.msra.mxu0 0.0
  %1392 = vmatprep.subr.mxu0 0.0
  %1393 = vmatpush1.msra.mxu0 0.0
  %1394 = vmatprep.subr.mxu0 0.0
  %1395 = vmatpush1.msra.mxu0 0.0
  %1396 = vmatprep.subr.mxu0 0.0
  %1397 = vmatpush1.msra.mxu0 0.0
  %1398 = vmatprep.subr.mxu0 0.0
  %1399 = vmatpush1.msra.mxu0 0.0
  %1400 = vmatprep.subr.mxu0 0.0
  %1401 = vmatpush1.msra.mxu0 0.0
  %1402 = vmatprep.subr.mxu0 0.0
  %1403 = vmatpush1.msra.mxu0 0.0
  %1404 = vmatprep.subr.mxu0 0.0
  %1405 = vmatpush1.msra.mxu0 0.0
  %1406 = vmatprep.subr.mxu0 0.0
  %1407 = vmatpush1.msra.mxu0 0.0
  %1408 = vmatprep.subr.mxu0 0.0
  %1409 = vmatpush1.msra.mxu0 0.0
  %1410 = vmatprep.subr.mxu0 0.0
  %1411 = vmatpush1.msra.mxu0 0.0
  %1412 = vmatprep.subr.mxu0 0.0
  %1413 = vmatpush1.msra.mxu0 0.0
  %1414 = vmatprep.subr.mxu0 0.0
  %1415 = vmatpush1.msra.mxu0 0.0
  %1416 = vmatprep.subr.mxu0 0.0
  %1417 = vmatpush1.msra.mxu0 0.0
  %1418 = vmatprep.subr.mxu0 0.0
  %1419 = vmatpush1.msra.mxu0 0.0
  %1420 = vmatprep.subr.mxu0 0.0
  %1421 = vmatpush1.msra.mxu0 0.0
  %1422 = vmatprep.subr.mxu0 0.0
  %1423 = vmatpush1.msra.mxu0 0.0
  %1424 = vmatprep.subr.mxu0 0.0
  %1425 = vmatpush1.msra.mxu0 0.0
  %1426 = vmatprep.subr.mxu0 0.0
  %1427 = vmatpush1.msra.mxu0 0.0
  %1428 = vmatprep.subr.mxu0 0.0
  %1429 = vmatpush1.msra.mxu0 0.0
  %1430 = vmatprep.subr.mxu0 0.0
  %1431 = vmatpush1.msra.mxu0 0.0
  %1432 = vmatprep.subr.mxu0 0.0
  %1433 = vmatpush1.msra.mxu0 0.0
  %1434 = vmatprep.subr.mxu0 0.0
  %1435 = vmatpush1.msra.mxu0 0.0
  %1436 = vmatprep.subr.mxu0 0.0
  %1437 = vmatpush1.msra.mxu0 0.0
  %1438 = vmatprep.subr.mxu0 0.0
  %1439 = vmatpush1.msra.mxu0 0.0
  %1440 = vmatprep.subr.mxu0 0.0
  %1441 = vmatpush1.msra.mxu0 0.0
  %1442 = vmatprep.subr.mxu0 0.0
  %1443 = vmatpush1.msra.mxu0 0.0
  %1444 = vmatprep.subr.mxu0 0.0
  %1445 = vmatpush1.msra.mxu0 0.0
  %1446 = vmatprep.subr.mxu0 0.0
  %1447 = vmatpush1.msra.mxu0 0.0
  %1448 = vmatprep.subr.mxu0 0.0
  %1449 = vmatpush1.msra.mxu0 0.0
  %1450 = vmatprep.mubr.f32.mxu0 0.0
  %1451 = vmatmul.mubr.f32.gmra.mrb[0].mxu0 %v1384
  %v1452 = vpop.f32.mrb[0].mxu0
  %v1453 = vadd.f32 0.0, %v1452
  %v1454 = vpop.f32.mrb[0].mxu0
  %1455 = vdwg.mxu0
  %v1457 = vsel %vm141, %v29, 0
  %1459 = vmatprep.subr.mxu0 0.0
  %1460 = vmatpush1.msra.mxu0 %v94
  %1461 = vmatprep.subr.mxu0 0.0
  %1462 = vmatpush1.msra.mxu0 0.0
  %1463 = vmatprep.subr.mxu0 0.0
  %1464 = vmatpush1.msra.mxu0 0.0
  %1465 = vmatprep.subr.mxu0 0.0
  %1466 = vmatpush1.msra.mxu0 0.0
  %1467 = vmatprep.subr.mxu0 0.0
  %1468 = vmatpush1.msra.mxu0 0.0
  %1469 = vmatprep.subr.mxu0 0.0
  %1470 = vmatpush1.msra.mxu0 0.0
  %1471 = vmatprep.subr.mxu0 0.0
  %1472 = vmatpush1.msra.mxu0 0.0
  %1473 = vmatprep.subr.mxu0 0.0
  %1474 = vmatpush1.msra.mxu0 0.0
  %1475 = vmatprep.subr.mxu0 0.0
  %1476 = vmatpush1.msra.mxu0 0.0
  %1477 = vmatprep.subr.mxu0 0.0
  %1478 = vmatpush1.msra.mxu0 0.0
  %1479 = vmatprep.subr.mxu0 0.0
  %1480 = vmatpush1.msra.mxu0 0.0
  %1481 = vmatprep.subr.mxu0 0.0
  %1482 = vmatpush1.msra.mxu0 0.0
  %1483 = vmatprep.subr.mxu0 0.0
  %1484 = vmatpush1.msra.mxu0 0.0
  %1485 = vmatprep.subr.mxu0 0.0
  %1486 = vmatpush1.msra.mxu0 0.0
  %1487 = vmatprep.subr.mxu0 0.0
  %1488 = vmatpush1.msra.mxu0 0.0
  %1489 = vmatprep.subr.mxu0 0.0
  %1490 = vmatpush1.msra.mxu0 0.0
  %1491 = vmatprep.subr.mxu0 0.0
  %1492 = vmatpush1.msra.mxu0 0.0
  %1493 = vmatprep.subr.mxu0 0.0
  %1494 = vmatpush1.msra.mxu0 0.0
  %1495 = vmatprep.subr.mxu0 0.0
  %1496 = vmatpush1.msra.mxu0 0.0
  %1497 = vmatprep.subr.mxu0 0.0
  %1498 = vmatpush1.msra.mxu0 0.0
  %1499 = vmatprep.subr.mxu0 0.0
  %1500 = vmatpush1.msra.mxu0 0.0
  %1501 = vmatprep.subr.mxu0 0.0
  %1502 = vmatpush1.msra.mxu0 0.0
  %1503 = vmatprep.subr.mxu0 0.0
  %1504 = vmatpush1.msra.mxu0 0.0
  %1505 = vmatprep.subr.mxu0 0.0
  %1506 = vmatpush1.msra.mxu0 0.0
  %1507 = vmatprep.subr.mxu0 0.0
  %1508 = vmatpush1.msra.mxu0 0.0
  %1509 = vmatprep.subr.mxu0 0.0
  %1510 = vmatpush1.msra.mxu0 0.0
  %1511 = vmatprep.subr.mxu0 0.0
  %1512 = vmatpush1.msra.mxu0 0.0
  %1513 = vmatprep.subr.mxu0 0.0
  %1514 = vmatpush1.msra.mxu0 0.0
  %1515 = vmatprep.subr.mxu0 0.0
  %1516 = vmatpush1.msra.mxu0 0.0
  %1517 = vmatprep.subr.mxu0 0.0
  %1518 = vmatpush1.msra.mxu0 0.0
  %1519 = vmatprep.subr.mxu0 0.0
  %1520 = vmatpush1.msra.mxu0 0.0
  %1521 = vmatprep.subr.mxu0 0.0
  %1522 = vmatpush1.msra.mxu0 0.0
  %1523 = vmatprep.mubr.f32.mxu0 0.0
  %1524 = vmatmul.mubr.f32.gmra.mrb[0].mxu0 %v1457
  %v1525 = vpop.f32.mrb[0].mxu0
  %v1526 = vadd.f32 0.0, %v1525
  %v1527 = vpop.f32.mrb[0].mxu0
  %1528 = vdwg.mxu0
  %v1530 = vsel %vm141, %v30, 0
  %1532 = vmatprep.subr.mxu0 0.0
  %1533 = vmatpush1.msra.mxu0 %v95
  %1534 = vmatprep.subr.mxu0 0.0
  %1535 = vmatpush1.msra.mxu0 0.0
  %1536 = vmatprep.subr.mxu0 0.0
  %1537 = vmatpush1.msra.mxu0 0.0
  %1538 = vmatprep.subr.mxu0 0.0
  %1539 = vmatpush1.msra.mxu0 0.0
  %1540 = vmatprep.subr.mxu0 0.0
  %1541 = vmatpush1.msra.mxu0 0.0
  %1542 = vmatprep.subr.mxu0 0.0
  %1543 = vmatpush1.msra.mxu0 0.0
  %1544 = vmatprep.subr.mxu0 0.0
  %1545 = vmatpush1.msra.mxu0 0.0
  %1546 = vmatprep.subr.mxu0 0.0
  %1547 = vmatpush1.msra.mxu0 0.0
  %1548 = vmatprep.subr.mxu0 0.0
  %1549 = vmatpush1.msra.mxu0 0.0
  %1550 = vmatprep.subr.mxu0 0.0
  %1551 = vmatpush1.msra.mxu0 0.0
  %1552 = vmatprep.subr.mxu0 0.0
  %1553 = vmatpush1.msra.mxu0 0.0
  %1554 = vmatprep.subr.mxu0 0.0
  %1555 = vmatpush1.msra.mxu0 0.0
  %1556 = vmatprep.subr.mxu0 0.0
  %1557 = vmatpush1.msra.mxu0 0.0
  %1558 = vmatprep.subr.mxu0 0.0
  %1559 = vmatpush1.msra.mxu0 0.0
  %1560 = vmatprep.subr.mxu0 0.0
  %1561 = vmatpush1.msra.mxu0 0.0
  %1562 = vmatprep.subr.mxu0 0.0
  %1563 = vmatpush1.msra.mxu0 0.0
  %1564 = vmatprep.subr.mxu0 0.0
  %1565 = vmatpush1.msra.mxu0 0.0
  %1566 = vmatprep.subr.mxu0 0.0
  %1567 = vmatpush1.msra.mxu0 0.0
  %1568 = vmatprep.subr.mxu0 0.0
  %1569 = vmatpush1.msra.mxu0 0.0
  %1570 = vmatprep.subr.mxu0 0.0
  %1571 = vmatpush1.msra.mxu0 0.0
  %1572 = vmatprep.subr.mxu0 0.0
  %1573 = vmatpush1.msra.mxu0 0.0
  %1574 = vmatprep.subr.mxu0 0.0
  %1575 = vmatpush1.msra.mxu0 0.0
  %1576 = vmatprep.subr.mxu0 0.0
  %1577 = vmatpush1.msra.mxu0 0.0
  %1578 = vmatprep.subr.mxu0 0.0
  %1579 = vmatpush1.msra.mxu0 0.0
  %1580 = vmatprep.subr.mxu0 0.0
  %1581 = vmatpush1.msra.mxu0 0.0
  %1582 = vmatprep.subr.mxu0 0.0
  %1583 = vmatpush1.msra.mxu0 0.0
  %1584 = vmatprep.subr.mxu0 0.0
  %1585 = vmatpush1.msra.mxu0 0.0
  %1586 = vmatprep.subr.mxu0 0.0
  %1587 = vmatpush1.msra.mxu0 0.0
  %1588 = vmatprep.subr.mxu0 0.0
  %1589 = vmatpush1.msra.mxu0 0.0
  %1590 = vmatprep.subr.mxu0 0.0
  %1591 = vmatpush1.msra.mxu0 0.0
  %1592 = vmatprep.subr.mxu0 0.0
  %1593 = vmatpush1.msra.mxu0 0.0
  %1594 = vmatprep.subr.mxu0 0.0
  %1595 = vmatpush1.msra.mxu0 0.0
  %1596 = vmatprep.mubr.f32.mxu0 0.0
  %1597 = vmatmul.mubr.f32.gmra.mrb[0].mxu0 %v1530
  %v1598 = vpop.f32.mrb[0].mxu0
  %v1599 = vadd.f32 0.0, %v1598
  %v1600 = vpop.f32.mrb[0].mxu0
  %1601 = vdwg.mxu0
  %v1603 = vsel %vm141, %v31, 0
  %1605 = vmatprep.subr.mxu0 0.0
  %1606 = vmatpush1.msra.mxu0 %v96
  %1607 = vmatprep.subr.mxu0 0.0
  %1608 = vmatpush1.msra.mxu0 0.0
  %1609 = vmatprep.subr.mxu0 0.0
  %1610 = vmatpush1.msra.mxu0 0.0
  %1611 = vmatprep.subr.mxu0 0.0
  %1612 = vmatpush1.msra.mxu0 0.0
  %1613 = vmatprep.subr.mxu0 0.0
  %1614 = vmatpush1.msra.mxu0 0.0
  %1615 = vmatprep.subr.mxu0 0.0
  %1616 = vmatpush1.msra.mxu0 0.0
  %1617 = vmatprep.subr.mxu0 0.0
  %1618 = vmatpush1.msra.mxu0 0.0
  %1619 = vmatprep.subr.mxu0 0.0
  %1620 = vmatpush1.msra.mxu0 0.0
  %1621 = vmatprep.subr.mxu0 0.0
  %1622 = vmatpush1.msra.mxu0 0.0
  %1623 = vmatprep.subr.mxu0 0.0
  %1624 = vmatpush1.msra.mxu0 0.0
  %1625 = vmatprep.subr.mxu0 0.0
  %1626 = vmatpush1.msra.mxu0 0.0
  %1627 = vmatprep.subr.mxu0 0.0
  %1628 = vmatpush1.msra.mxu0 0.0
  %1629 = vmatprep.subr.mxu0 0.0
  %1630 = vmatpush1.msra.mxu0 0.0
  %1631 = vmatprep.subr.mxu0 0.0
  %1632 = vmatpush1.msra.mxu0 0.0
  %1633 = vmatprep.subr.mxu0 0.0
  %1634 = vmatpush1.msra.mxu0 0.0
  %1635 = vmatprep.subr.mxu0 0.0
  %1636 = vmatpush1.msra.mxu0 0.0
  %1637 = vmatprep.subr.mxu0 0.0
  %1638 = vmatpush1.msra.mxu0 0.0
  %1639 = vmatprep.subr.mxu0 0.0
  %1640 = vmatpush1.msra.mxu0 0.0
  %1641 = vmatprep.subr.mxu0 0.0
  %1642 = vmatpush1.msra.mxu0 0.0
  %1643 = vmatprep.subr.mxu0 0.0
  %1644 = vmatpush1.msra.mxu0 0.0
  %1645 = vmatprep.subr.mxu0 0.0
  %1646 = vmatpush1.msra.mxu0 0.0
  %1647 = vmatprep.subr.mxu0 0.0
  %1648 = vmatpush1.msra.mxu0 0.0
  %1649 = vmatprep.subr.mxu0 0.0
  %1650 = vmatpush1.msra.mxu0 0.0
  %1651 = vmatprep.subr.mxu0 0.0
  %1652 = vmatpush1.msra.mxu0 0.0
  %1653 = vmatprep.subr.mxu0 0.0
  %1654 = vmatpush1.msra.mxu0 0.0
  %1655 = vmatprep.subr.mxu0 0.0
  %1656 = vmatpush1.msra.mxu0 0.0
  %1657 = vmatprep.subr.mxu0 0.0
  %1658 = vmatpush1.msra.mxu0 0.0
  %1659 = vmatprep.subr.mxu0 0.0
  %1660 = vmatpush1.msra.mxu0 0.0
  %1661 = vmatprep.subr.mxu0 0.0
  %1662 = vmatpush1.msra.mxu0 0.0
  %1663 = vmatprep.subr.mxu0 0.0
  %1664 = vmatpush1.msra.mxu0 0.0
  %1665 = vmatprep.subr.mxu0 0.0
  %1666 = vmatpush1.msra.mxu0 0.0
  %1667 = vmatprep.subr.mxu0 0.0
  %1668 = vmatpush1.msra.mxu0 0.0
  %1669 = vmatprep.mubr.f32.mxu0 0.0
  %1670 = vmatmul.mubr.f32.gmra.mrb[0].mxu0 %v1603
  %v1671 = vpop.f32.mrb[0].mxu0
  %v1672 = vadd.f32 0.0, %v1671
  %v1673 = vpop.f32.mrb[0].mxu0
  %1674 = vdwg.mxu0
  %v1676 = vsel %vm141, %v32, 0
  %1678 = vmatprep.subr.mxu0 0.0
  %1679 = vmatpush1.msra.mxu0 %v97
  %1680 = vmatprep.subr.mxu0 0.0
  %1681 = vmatpush1.msra.mxu0 0.0
  %1682 = vmatprep.subr.mxu0 0.0
  %1683 = vmatpush1.msra.mxu0 0.0
  %1684 = vmatprep.subr.mxu0 0.0
  %1685 = vmatpush1.msra.mxu0 0.0
  %1686 = vmatprep.subr.mxu0 0.0
  %1687 = vmatpush1.msra.mxu0 0.0
  %1688 = vmatprep.subr.mxu0 0.0
  %1689 = vmatpush1.msra.mxu0 0.0
  %1690 = vmatprep.subr.mxu0 0.0
  %1691 = vmatpush1.msra.mxu0 0.0
  %1692 = vmatprep.subr.mxu0 0.0
  %1693 = vmatpush1.msra.mxu0 0.0
  %1694 = vmatprep.subr.mxu0 0.0
  %1695 = vmatpush1.msra.mxu0 0.0
  %1696 = vmatprep.subr.mxu0 0.0
  %1697 = vmatpush1.msra.mxu0 0.0
  %1698 = vmatprep.subr.mxu0 0.0
  %1699 = vmatpush1.msra.mxu0 0.0
  %1700 = vmatprep.subr.mxu0 0.0
  %1701 = vmatpush1.msra.mxu0 0.0
  %1702 = vmatprep.subr.mxu0 0.0
  %1703 = vmatpush1.msra.mxu0 0.0
  %1704 = vmatprep.subr.mxu0 0.0
  %1705 = vmatpush1.msra.mxu0 0.0
  %1706 = vmatprep.subr.mxu0 0.0
  %1707 = vmatpush1.msra.mxu0 0.0
  %1708 = vmatprep.subr.mxu0 0.0
  %1709 = vmatpush1.msra.mxu0 0.0
  %1710 = vmatprep.subr.mxu0 0.0
  %1711 = vmatpush1.msra.mxu0 0.0
  %1712 = vmatprep.subr.mxu0 0.0
  %1713 = vmatpush1.msra.mxu0 0.0
  %1714 = vmatprep.subr.mxu0 0.0
  %1715 = vmatpush1.msra.mxu0 0.0
  %1716 = vmatprep.subr.mxu0 0.0
  %1717 = vmatpush1.msra.mxu0 0.0
  %1718 = vmatprep.subr.mxu0 0.0
  %1719 = vmatpush1.msra.mxu0 0.0
  %1720 = vmatprep.subr.mxu0 0.0
  %1721 = vmatpush1.msra.mxu0 0.0
  %1722 = vmatprep.subr.mxu0 0.0
  %1723 = vmatpush1.msra.mxu0 0.0
  %1724 = vmatprep.subr.mxu0 0.0
  %1725 = vmatpush1.msra.mxu0 0.0
  %1726 = vmatprep.subr.mxu0 0.0
  %1727 = vmatpush1.msra.mxu0 0.0
  %1728 = vmatprep.subr.mxu0 0.0
  %1729 = vmatpush1.msra.mxu0 0.0
  %1730 = vmatprep.subr.mxu0 0.0
  %1731 = vmatpush1.msra.mxu0 0.0
  %1732 = vmatprep.subr.mxu0 0.0
  %1733 = vmatpush1.msra.mxu0 0.0
  %1734 = vmatprep.subr.mxu0 0.0
  %1735 = vmatpush1.msra.mxu0 0.0
  %1736 = vmatprep.subr.mxu0 0.0
  %1737 = vmatpush1.msra.mxu0 0.0
  %1738 = vmatprep.subr.mxu0 0.0
  %1739 = vmatpush1.msra.mxu0 0.0
  %1740 = vmatprep.subr.mxu0 0.0
  %1741 = vmatpush1.msra.mxu0 0.0
  %1742 = vmatprep.mubr.f32.mxu0 0.0
  %1743 = vmatmul.mubr.f32.gmra.mrb[0].mxu0 %v1676
  %v1744 = vpop.f32.mrb[0].mxu0
  %v1745 = vadd.f32 0.0, %v1744
  %v1746 = vpop.f32.mrb[0].mxu0
  %1747 = vdwg.mxu0
  %v1749 = vsel %vm141, %v33, 0
  %1751 = vmatprep.subr.mxu0 0.0
  %1752 = vmatpush1.msra.mxu0 %v98
  %1753 = vmatprep.subr.mxu0 0.0
  %1754 = vmatpush1.msra.mxu0 0.0
  %1755 = vmatprep.subr.mxu0 0.0
  %1756 = vmatpush1.msra.mxu0 0.0
  %1757 = vmatprep.subr.mxu0 0.0
  %1758 = vmatpush1.msra.mxu0 0.0
  %1759 = vmatprep.subr.mxu0 0.0
  %1760 = vmatpush1.msra.mxu0 0.0
  %1761 = vmatprep.subr.mxu0 0.0
  %1762 = vmatpush1.msra.mxu0 0.0
  %1763 = vmatprep.subr.mxu0 0.0
  %1764 = vmatpush1.msra.mxu0 0.0
  %1765 = vmatprep.subr.mxu0 0.0
  %1766 = vmatpush1.msra.mxu0 0.0
  %1767 = vmatprep.subr.mxu0 0.0
  %1768 = vmatpush1.msra.mxu0 0.0
  %1769 = vmatprep.subr.mxu0 0.0
  %1770 = vmatpush1.msra.mxu0 0.0
  %1771 = vmatprep.subr.mxu0 0.0
  %1772 = vmatpush1.msra.mxu0 0.0
  %1773 = vmatprep.subr.mxu0 0.0
  %1774 = vmatpush1.msra.mxu0 0.0
  %1775 = vmatprep.subr.mxu0 0.0
  %1776 = vmatpush1.msra.mxu0 0.0
  %1777 = vmatprep.subr.mxu0 0.0
  %1778 = vmatpush1.msra.mxu0 0.0
  %1779 = vmatprep.subr.mxu0 0.0
  %1780 = vmatpush1.msra.mxu0 0.0
  %1781 = vmatprep.subr.mxu0 0.0
  %1782 = vmatpush1.msra.mxu0 0.0
  %1783 = vmatprep.subr.mxu0 0.0
  %1784 = vmatpush1.msra.mxu0 0.0
  %1785 = vmatprep.subr.mxu0 0.0
  %1786 = vmatpush1.msra.mxu0 0.0
  %1787 = vmatprep.subr.mxu0 0.0
  %1788 = vmatpush1.msra.mxu0 0.0
  %1789 = vmatprep.subr.mxu0 0.0
  %1790 = vmatpush1.msra.mxu0 0.0
  %1791 = vmatprep.subr.mxu0 0.0
  %1792 = vmatpush1.msra.mxu0 0.0
  %1793 = vmatprep.subr.mxu0 0.0
  %1794 = vmatpush1.msra.mxu0 0.0
  %1795 = vmatprep.subr.mxu0 0.0
  %1796 = vmatpush1.msra.mxu0 0.0
  %1797 = vmatprep.subr.mxu0 0.0
  %1798 = vmatpush1.msra.mxu0 0.0
  %1799 = vmatprep.subr.mxu0 0.0
  %1800 = vmatpush1.msra.mxu0 0.0
  %1801 = vmatprep.subr.mxu0 0.0
  %1802 = vmatpush1.msra.mxu0 0.0
  %1803 = vmatprep.subr.mxu0 0.0
  %1804 = vmatpush1.msra.mxu0 0.0
  %1805 = vmatprep.subr.mxu0 0.0
  %1806 = vmatpush1.msra.mxu0 0.0
  %1807 = vmatprep.subr.mxu0 0.0
  %1808 = vmatpush1.msra.mxu0 0.0
  %1809 = vmatprep.subr.mxu0 0.0
  %1810 = vmatpush1.msra.mxu0 0.0
  %1811 = vmatprep.subr.mxu0 0.0
  %1812 = vmatpush1.msra.mxu0 0.0
  %1813 = vmatprep.subr.mxu0 0.0
  %1814 = vmatpush1.msra.mxu0 0.0
  %1815 = vmatprep.mubr.f32.mxu0 0.0
  %1816 = vmatmul.mubr.f32.gmra.mrb[0].mxu0 %v1749
  %v1817 = vpop.f32.mrb[0].mxu0
  %v1818 = vadd.f32 0.0, %v1817
  %v1819 = vpop.f32.mrb[0].mxu0
  %1820 = vdwg.mxu0
  %v1822 = vsel %vm141, %v34, 0
  %1824 = vmatprep.subr.mxu0 0.0
  %1825 = vmatpush1.msra.mxu0 %v99
  %1826 = vmatprep.subr.mxu0 0.0
  %1827 = vmatpush1.msra.mxu0 0.0
  %1828 = vmatprep.subr.mxu0 0.0
  %1829 = vmatpush1.msra.mxu0 0.0
  %1830 = vmatprep.subr.mxu0 0.0
  %1831 = vmatpush1.msra.mxu0 0.0
  %1832 = vmatprep.subr.mxu0 0.0
  %1833 = vmatpush1.msra.mxu0 0.0
  %1834 = vmatprep.subr.mxu0 0.0
  %1835 = vmatpush1.msra.mxu0 0.0
  %1836 = vmatprep.subr.mxu0 0.0
  %1837 = vmatpush1.msra.mxu0 0.0
  %1838 = vmatprep.subr.mxu0 0.0
  %1839 = vmatpush1.msra.mxu0 0.0
  %1840 = vmatprep.subr.mxu0 0.0
  %1841 = vmatpush1.msra.mxu0 0.0
  %1842 = vmatprep.subr.mxu0 0.0
  %1843 = vmatpush1.msra.mxu0 0.0
  %1844 = vmatprep.subr.mxu0 0.0
  %1845 = vmatpush1.msra.mxu0 0.0
  %1846 = vmatprep.subr.mxu0 0.0
  %1847 = vmatpush1.msra.mxu0 0.0
  %1848 = vmatprep.subr.mxu0 0.0
  %1849 = vmatpush1.msra.mxu0 0.0
  %1850 = vmatprep.subr.mxu0 0.0
  %1851 = vmatpush1.msra.mxu0 0.0
  %1852 = vmatprep.subr.mxu0 0.0
  %1853 = vmatpush1.msra.mxu0 0.0
  %1854 = vmatprep.subr.mxu0 0.0
  %1855 = vmatpush1.msra.mxu0 0.0
  %1856 = vmatprep.subr.mxu0 0.0
  %1857 = vmatpush1.msra.mxu0 0.0
  %1858 = vmatprep.subr.mxu0 0.0
  %1859 = vmatpush1.msra.mxu0 0.0
  %1860 = vmatprep.subr.mxu0 0.0
  %1861 = vmatpush1.msra.mxu0 0.0
  %1862 = vmatprep.subr.mxu0 0.0
  %1863 = vmatpush1.msra.mxu0 0.0
  %1864 = vmatprep.subr.mxu0 0.0
  %1865 = vmatpush1.msra.mxu0 0.0
  %1866 = vmatprep.subr.mxu0 0.0
  %1867 = vmatpush1.msra.mxu0 0.0
  %1868 = vmatprep.subr.mxu0 0.0
  %1869 = vmatpush1.msra.mxu0 0.0
  %1870 = vmatprep.subr.mxu0 0.0
  %1871 = vmatpush1.msra.mxu0 0.0
  %1872 = vmatprep.subr.mxu0 0.0
  %1873 = vmatpush1.msra.mxu0 0.0
  %1874 = vmatprep.subr.mxu0 0.0
  %1875 = vmatpush1.msra.mxu0 0.0
  %1876 = vmatprep.subr.mxu0 0.0
  %1877 = vmatpush1.msra.mxu0 0.0
  %1878 = vmatprep.subr.mxu0 0.0
  %1879 = vmatpush1.msra.mxu0 0.0
  %1880 = vmatprep.subr.mxu0 0.0
  %1881 = vmatpush1.msra.mxu0 0.0
  %1882 = vmatprep.subr.mxu0 0.0
  %1883 = vmatpush1.msra.mxu0 0.0
  %1884 = vmatprep.subr.mxu0 0.0
  %1885 = vmatpush1.msra.mxu0 0.0
  %1886 = vmatprep.subr.mxu0 0.0
  %1887 = vmatpush1.msra.mxu0 0.0
  %1888 = vmatprep.mubr.f32.mxu0 0.0
  %1889 = vmatmul.mubr.f32.gmra.mrb[0].mxu0 %v1822
  %v1890 = vpop.f32.mrb[0].mxu0
  %v1891 = vadd.f32 0.0, %v1890
  %v1892 = vpop.f32.mrb[0].mxu0
  %1893 = vdwg.mxu0
  %v1895 = vsel %vm141, %v35, 0
  %1897 = vmatprep.subr.mxu0 0.0
  %1898 = vmatpush1.msra.mxu0 %v100
  %1899 = vmatprep.subr.mxu0 0.0
  %1900 = vmatpush1.msra.mxu0 0.0
  %1901 = vmatprep.subr.mxu0 0.0
  %1902 = vmatpush1.msra.mxu0 0.0
  %1903 = vmatprep.subr.mxu0 0.0
  %1904 = vmatpush1.msra.mxu0 0.0
  %1905 = vmatprep.subr.mxu0 0.0
  %1906 = vmatpush1.msra.mxu0 0.0
  %1907 = vmatprep.subr.mxu0 0.0
  %1908 = vmatpush1.msra.mxu0 0.0
  %1909 = vmatprep.subr.mxu0 0.0
  %1910 = vmatpush1.msra.mxu0 0.0
  %1911 = vmatprep.subr.mxu0 0.0
  %1912 = vmatpush1.msra.mxu0 0.0
  %1913 = vmatprep.subr.mxu0 0.0
  %1914 = vmatpush1.msra.mxu0 0.0
  %1915 = vmatprep.subr.mxu0 0.0
  %1916 = vmatpush1.msra.mxu0 0.0
  %1917 = vmatprep.subr.mxu0 0.0
  %1918 = vmatpush1.msra.mxu0 0.0
  %1919 = vmatprep.subr.mxu0 0.0
  %1920 = vmatpush1.msra.mxu0 0.0
  %1921 = vmatprep.subr.mxu0 0.0
  %1922 = vmatpush1.msra.mxu0 0.0
  %1923 = vmatprep.subr.mxu0 0.0
  %1924 = vmatpush1.msra.mxu0 0.0
  %1925 = vmatprep.subr.mxu0 0.0
  %1926 = vmatpush1.msra.mxu0 0.0
  %1927 = vmatprep.subr.mxu0 0.0
  %1928 = vmatpush1.msra.mxu0 0.0
  %1929 = vmatprep.subr.mxu0 0.0
  %1930 = vmatpush1.msra.mxu0 0.0
  %1931 = vmatprep.subr.mxu0 0.0
  %1932 = vmatpush1.msra.mxu0 0.0
  %1933 = vmatprep.subr.mxu0 0.0
  %1934 = vmatpush1.msra.mxu0 0.0
  %1935 = vmatprep.subr.mxu0 0.0
  %1936 = vmatpush1.msra.mxu0 0.0
  %1937 = vmatprep.subr.mxu0 0.0
  %1938 = vmatpush1.msra.mxu0 0.0
  %1939 = vmatprep.subr.mxu0 0.0
  %1940 = vmatpush1.msra.mxu0 0.0
  %1941 = vmatprep.subr.mxu0 0.0
  %1942 = vmatpush1.msra.mxu0 0.0
  %1943 = vmatprep.subr.mxu0 0.0
  %1944 = vmatpush1.msra.mxu0 0.0
  %1945 = vmatprep.subr.mxu0 0.0
  %1946 = vmatpush1.msra.mxu0 0.0
  %1947 = vmatprep.subr.mxu0 0.0
  %1948 = vmatpush1.msra.mxu0 0.0
  %1949 = vmatprep.subr.mxu0 0.0
  %1950 = vmatpush1.msra.mxu0 0.0
  %1951 = vmatprep.subr.mxu0 0.0
  %1952 = vmatpush1.msra.mxu0 0.0
  %1953 = vmatprep.subr.mxu0 0.0
  %1954 = vmatpush1.msra.mxu0 0.0
  %1955 = vmatprep.subr.mxu0 0.0
  %1956 = vmatpush1.msra.mxu0 0.0
  %1957 = vmatprep.subr.mxu0 0.0
  %1958 = vmatpush1.msra.mxu0 0.0
  %1959 = vmatprep.subr.mxu0 0.0
  %1960 = vmatpush1.msra.mxu0 0.0
  %1961 = vmatprep.mubr.f32.mxu0 0.0
  %1962 = vmatmul.mubr.f32.gmra.mrb[0].mxu0 %v1895
  %v1963 = vpop.f32.mrb[0].mxu0
  %v1964 = vadd.f32 0.0, %v1963
  %v1965 = vpop.f32.mrb[0].mxu0
  %1966 = vdwg.mxu0
  %v1968 = vsel %vm141, %v36, 0
  %1970 = vmatprep.subr.mxu0 0.0
  %1971 = vmatpush1.msra.mxu0 %v101
  %1972 = vmatprep.subr.mxu0 0.0
  %1973 = vmatpush1.msra.mxu0 0.0
  %1974 = vmatprep.subr.mxu0 0.0
  %1975 = vmatpush1.msra.mxu0 0.0
  %1976 = vmatprep.subr.mxu0 0.0
  %1977 = vmatpush1.msra.mxu0 0.0
  %1978 = vmatprep.subr.mxu0 0.0
  %1979 = vmatpush1.msra.mxu0 0.0
  %1980 = vmatprep.subr.mxu0 0.0
  %1981 = vmatpush1.msra.mxu0 0.0
  %1982 = vmatprep.subr.mxu0 0.0
  %1983 = vmatpush1.msra.mxu0 0.0
  %1984 = vmatprep.subr.mxu0 0.0
  %1985 = vmatpush1.msra.mxu0 0.0
  %1986 = vmatprep.subr.mxu0 0.0
  %1987 = vmatpush1.msra.mxu0 0.0
  %1988 = vmatprep.subr.mxu0 0.0
  %1989 = vmatpush1.msra.mxu0 0.0
  %1990 = vmatprep.subr.mxu0 0.0
  %1991 = vmatpush1.msra.mxu0 0.0
  %1992 = vmatprep.subr.mxu0 0.0
  %1993 = vmatpush1.msra.mxu0 0.0
  %1994 = vmatprep.subr.mxu0 0.0
  %1995 = vmatpush1.msra.mxu0 0.0
  %1996 = vmatprep.subr.mxu0 0.0
  %1997 = vmatpush1.msra.mxu0 0.0
  %1998 = vmatprep.subr.mxu0 0.0
  %1999 = vmatpush1.msra.mxu0 0.0
  %2000 = vmatprep.subr.mxu0 0.0
  %2001 = vmatpush1.msra.mxu0 0.0
  %2002 = vmatprep.subr.mxu0 0.0
  %2003 = vmatpush1.msra.mxu0 0.0
  %2004 = vmatprep.subr.mxu0 0.0
  %2005 = vmatpush1.msra.mxu0 0.0
  %2006 = vmatprep.subr.mxu0 0.0
  %2007 = vmatpush1.msra.mxu0 0.0
  %2008 = vmatprep.subr.mxu0 0.0
  %2009 = vmatpush1.msra.mxu0 0.0
  %2010 = vmatprep.subr.mxu0 0.0
  %2011 = vmatpush1.msra.mxu0 0.0
  %2012 = vmatprep.subr.mxu0 0.0
  %2013 = vmatpush1.msra.mxu0 0.0
  %2014 = vmatprep.subr.mxu0 0.0
  %2015 = vmatpush1.msra.mxu0 0.0
  %2016 = vmatprep.subr.mxu0 0.0
  %2017 = vmatpush1.msra.mxu0 0.0
  %2018 = vmatprep.subr.mxu0 0.0
  %2019 = vmatpush1.msra.mxu0 0.0
  %2020 = vmatprep.subr.mxu0 0.0
  %2021 = vmatpush1.msra.mxu0 0.0
  %2022 = vmatprep.subr.mxu0 0.0
  %2023 = vmatpush1.msra.mxu0 0.0
  %2024 = vmatprep.subr.mxu0 0.0
  %2025 = vmatpush1.msra.mxu0 0.0
  %2026 = vmatprep.subr.mxu0 0.0
  %2027 = vmatpush1.msra.mxu0 0.0
  %2028 = vmatprep.subr.mxu0 0.0
  %2029 = vmatpush1.msra.mxu0 0.0
  %2030 = vmatprep.subr.mxu0 0.0
  %2031 = vmatpush1.msra.mxu0 0.0
  %2032 = vmatprep.subr.mxu0 0.0
  %2033 = vmatpush1.msra.mxu0 0.0
  %2034 = vmatprep.mubr.f32.mxu0 0.0
  %2035 = vmatmul.mubr.f32.gmra.mrb[0].mxu0 %v1968
  %v2036 = vpop.f32.mrb[0].mxu0
  %v2037 = vadd.f32 0.0, %v2036
  %v2038 = vpop.f32.mrb[0].mxu0
  %2039 = vdwg.mxu0
  %v2041 = vsel %vm141, %v37, 0
  %2043 = vmatprep.subr.mxu0 0.0
  %2044 = vmatpush1.msra.mxu0 %v102
  %2045 = vmatprep.subr.mxu0 0.0
  %2046 = vmatpush1.msra.mxu0 0.0
  %2047 = vmatprep.subr.mxu0 0.0
  %2048 = vmatpush1.msra.mxu0 0.0
  %2049 = vmatprep.subr.mxu0 0.0
  %2050 = vmatpush1.msra.mxu0 0.0
  %2051 = vmatprep.subr.mxu0 0.0
  %2052 = vmatpush1.msra.mxu0 0.0
  %2053 = vmatprep.subr.mxu0 0.0
  %2054 = vmatpush1.msra.mxu0 0.0
  %2055 = vmatprep.subr.mxu0 0.0
  %2056 = vmatpush1.msra.mxu0 0.0
  %2057 = vmatprep.subr.mxu0 0.0
  %2058 = vmatpush1.msra.mxu0 0.0
  %2059 = vmatprep.subr.mxu0 0.0
  %2060 = vmatpush1.msra.mxu0 0.0
  %2061 = vmatprep.subr.mxu0 0.0
  %2062 = vmatpush1.msra.mxu0 0.0
  %2063 = vmatprep.subr.mxu0 0.0
  %2064 = vmatpush1.msra.mxu0 0.0
  %2065 = vmatprep.subr.mxu0 0.0
  %2066 = vmatpush1.msra.mxu0 0.0
  %2067 = vmatprep.subr.mxu0 0.0
  %2068 = vmatpush1.msra.mxu0 0.0
  %2069 = vmatprep.subr.mxu0 0.0
  %2070 = vmatpush1.msra.mxu0 0.0
  %2071 = vmatprep.subr.mxu0 0.0
  %2072 = vmatpush1.msra.mxu0 0.0
  %2073 = vmatprep.subr.mxu0 0.0
  %2074 = vmatpush1.msra.mxu0 0.0
  %2075 = vmatprep.subr.mxu0 0.0
  %2076 = vmatpush1.msra.mxu0 0.0
  %2077 = vmatprep.subr.mxu0 0.0
  %2078 = vmatpush1.msra.mxu0 0.0
  %2079 = vmatprep.subr.mxu0 0.0
  %2080 = vmatpush1.msra.mxu0 0.0
  %2081 = vmatprep.subr.mxu0 0.0
  %2082 = vmatpush1.msra.mxu0 0.0
  %2083 = vmatprep.subr.mxu0 0.0
  %2084 = vmatpush1.msra.mxu0 0.0
  %2085 = vmatprep.subr.mxu0 0.0
  %2086 = vmatpush1.msra.mxu0 0.0
  %2087 = vmatprep.subr.mxu0 0.0
  %2088 = vmatpush1.msra.mxu0 0.0
  %2089 = vmatprep.subr.mxu0 0.0
  %2090 = vmatpush1.msra.mxu0 0.0
  %2091 = vmatprep.subr.mxu0 0.0
  %2092 = vmatpush1.msra.mxu0 0.0
  %2093 = vmatprep.subr.mxu0 0.0
  %2094 = vmatpush1.msra.mxu0 0.0
  %2095 = vmatprep.subr.mxu0 0.0
  %2096 = vmatpush1.msra.mxu0 0.0
  %2097 = vmatprep.subr.mxu0 0.0
  %2098 = vmatpush1.msra.mxu0 0.0
  %2099 = vmatprep.subr.mxu0 0.0
  %2100 = vmatpush1.msra.mxu0 0.0
  %2101 = vmatprep.subr.mxu0 0.0
  %2102 = vmatpush1.msra.mxu0 0.0
  %2103 = vmatprep.subr.mxu0 0.0
  %2104 = vmatpush1.msra.mxu0 0.0
  %2105 = vmatprep.subr.mxu0 0.0
  %2106 = vmatpush1.msra.mxu0 0.0
  %2107 = vmatprep.mubr.f32.mxu0 0.0
  %2108 = vmatmul.mubr.f32.gmra.mrb[0].mxu0 %v2041
  %v2109 = vpop.f32.mrb[0].mxu0
  %v2110 = vadd.f32 0.0, %v2109
  %v2111 = vpop.f32.mrb[0].mxu0
  %2112 = vdwg.mxu0
  %v2114 = vsel %vm141, %v38, 0
  %2116 = vmatprep.subr.mxu0 0.0
  %2117 = vmatpush1.msra.mxu0 %v103
  %2118 = vmatprep.subr.mxu0 0.0
  %2119 = vmatpush1.msra.mxu0 0.0
  %2120 = vmatprep.subr.mxu0 0.0
  %2121 = vmatpush1.msra.mxu0 0.0
  %2122 = vmatprep.subr.mxu0 0.0
  %2123 = vmatpush1.msra.mxu0 0.0
  %2124 = vmatprep.subr.mxu0 0.0
  %2125 = vmatpush1.msra.mxu0 0.0
  %2126 = vmatprep.subr.mxu0 0.0
  %2127 = vmatpush1.msra.mxu0 0.0
  %2128 = vmatprep.subr.mxu0 0.0
  %2129 = vmatpush1.msra.mxu0 0.0
  %2130 = vmatprep.subr.mxu0 0.0
  %2131 = vmatpush1.msra.mxu0 0.0
  %2132 = vmatprep.subr.mxu0 0.0
  %2133 = vmatpush1.msra.mxu0 0.0
  %2134 = vmatprep.subr.mxu0 0.0
  %2135 = vmatpush1.msra.mxu0 0.0
  %2136 = vmatprep.subr.mxu0 0.0
  %2137 = vmatpush1.msra.mxu0 0.0
  %2138 = vmatprep.subr.mxu0 0.0
  %2139 = vmatpush1.msra.mxu0 0.0
  %2140 = vmatprep.subr.mxu0 0.0
  %2141 = vmatpush1.msra.mxu0 0.0
  %2142 = vmatprep.subr.mxu0 0.0
  %2143 = vmatpush1.msra.mxu0 0.0
  %2144 = vmatprep.subr.mxu0 0.0
  %2145 = vmatpush1.msra.mxu0 0.0
  %2146 = vmatprep.subr.mxu0 0.0
  %2147 = vmatpush1.msra.mxu0 0.0
  %2148 = vmatprep.subr.mxu0 0.0
  %2149 = vmatpush1.msra.mxu0 0.0
  %2150 = vmatprep.subr.mxu0 0.0
  %2151 = vmatpush1.msra.mxu0 0.0
  %2152 = vmatprep.subr.mxu0 0.0
  %2153 = vmatpush1.msra.mxu0 0.0
  %2154 = vmatprep.subr.mxu0 0.0
  %2155 = vmatpush1.msra.mxu0 0.0
  %2156 = vmatprep.subr.mxu0 0.0
  %2157 = vmatpush1.msra.mxu0 0.0
  %2158 = vmatprep.subr.mxu0 0.0
  %2159 = vmatpush1.msra.mxu0 0.0
  %2160 = vmatprep.subr.mxu0 0.0
  %2161 = vmatpush1.msra.mxu0 0.0
  %2162 = vmatprep.subr.mxu0 0.0
  %2163 = vmatpush1.msra.mxu0 0.0
  %2164 = vmatprep.subr.mxu0 0.0
  %2165 = vmatpush1.msra.mxu0 0.0
  %2166 = vmatprep.subr.mxu0 0.0
  %2167 = vmatpush1.msra.mxu0 0.0
  %2168 = vmatprep.subr.mxu0 0.0
  %2169 = vmatpush1.msra.mxu0 0.0
  %2170 = vmatprep.subr.mxu0 0.0
  %2171 = vmatpush1.msra.mxu0 0.0
  %2172 = vmatprep.subr.mxu0 0.0
  %2173 = vmatpush1.msra.mxu0 0.0
  %2174 = vmatprep.subr.mxu0 0.0
  %2175 = vmatpush1.msra.mxu0 0.0
  %2176 = vmatprep.subr.mxu0 0.0
  %2177 = vmatpush1.msra.mxu0 0.0
  %2178 = vmatprep.subr.mxu0 0.0
  %2179 = vmatpush1.msra.mxu0 0.0
  %2180 = vmatprep.mubr.f32.mxu0 0.0
  %2181 = vmatmul.mubr.f32.gmra.mrb[0].mxu0 %v2114
  %v2182 = vpop.f32.mrb[0].mxu0
  %v2183 = vadd.f32 0.0, %v2182
  %v2184 = vpop.f32.mrb[0].mxu0
  %2185 = vdwg.mxu0
  %v2187 = vsel %vm141, %v39, 0
  %2189 = vmatprep.subr.mxu0 0.0
  %2190 = vmatpush1.msra.mxu0 %v104
  %2191 = vmatprep.subr.mxu0 0.0
  %2192 = vmatpush1.msra.mxu0 0.0
  %2193 = vmatprep.subr.mxu0 0.0
  %2194 = vmatpush1.msra.mxu0 0.0
  %2195 = vmatprep.subr.mxu0 0.0
  %2196 = vmatpush1.msra.mxu0 0.0
  %2197 = vmatprep.subr.mxu0 0.0
  %2198 = vmatpush1.msra.mxu0 0.0
  %2199 = vmatprep.subr.mxu0 0.0
  %2200 = vmatpush1.msra.mxu0 0.0
  %2201 = vmatprep.subr.mxu0 0.0
  %2202 = vmatpush1.msra.mxu0 0.0
  %2203 = vmatprep.subr.mxu0 0.0
  %2204 = vmatpush1.msra.mxu0 0.0
  %2205 = vmatprep.subr.mxu0 0.0
  %2206 = vmatpush1.msra.mxu0 0.0
  %2207 = vmatprep.subr.mxu0 0.0
  %2208 = vmatpush1.msra.mxu0 0.0
  %2209 = vmatprep.subr.mxu0 0.0
  %2210 = vmatpush1.msra.mxu0 0.0
  %2211 = vmatprep.subr.mxu0 0.0
  %2212 = vmatpush1.msra.mxu0 0.0
  %2213 = vmatprep.subr.mxu0 0.0
  %2214 = vmatpush1.msra.mxu0 0.0
  %2215 = vmatprep.subr.mxu0 0.0
  %2216 = vmatpush1.msra.mxu0 0.0
  %2217 = vmatprep.subr.mxu0 0.0
  %2218 = vmatpush1.msra.mxu0 0.0
  %2219 = vmatprep.subr.mxu0 0.0
  %2220 = vmatpush1.msra.mxu0 0.0
  %2221 = vmatprep.subr.mxu0 0.0
  %2222 = vmatpush1.msra.mxu0 0.0
  %2223 = vmatprep.subr.mxu0 0.0
  %2224 = vmatpush1.msra.mxu0 0.0
  %2225 = vmatprep.subr.mxu0 0.0
  %2226 = vmatpush1.msra.mxu0 0.0
  %2227 = vmatprep.subr.mxu0 0.0
  %2228 = vmatpush1.msra.mxu0 0.0
  %2229 = vmatprep.subr.mxu0 0.0
  %2230 = vmatpush1.msra.mxu0 0.0
  %2231 = vmatprep.subr.mxu0 0.0
  %2232 = vmatpush1.msra.mxu0 0.0
  %2233 = vmatprep.subr.mxu0 0.0
  %2234 = vmatpush1.msra.mxu0 0.0
  %2235 = vmatprep.subr.mxu0 0.0
  %2236 = vmatpush1.msra.mxu0 0.0
  %2237 = vmatprep.subr.mxu0 0.0
  %2238 = vmatpush1.msra.mxu0 0.0
  %2239 = vmatprep.subr.mxu0 0.0
  %2240 = vmatpush1.msra.mxu0 0.0
  %2241 = vmatprep.subr.mxu0 0.0
  %2242 = vmatpush1.msra.mxu0 0.0
  %2243 = vmatprep.subr.mxu0 0.0
  %2244 = vmatpush1.msra.mxu0 0.0
  %2245 = vmatprep.subr.mxu0 0.0
  %2246 = vmatpush1.msra.mxu0 0.0
  %2247 = vmatprep.subr.mxu0 0.0
  %2248 = vmatpush1.msra.mxu0 0.0
  %2249 = vmatprep.subr.mxu0 0.0
  %2250 = vmatpush1.msra.mxu0 0.0
  %2251 = vmatprep.subr.mxu0 0.0
  %2252 = vmatpush1.msra.mxu0 0.0
  %2253 = vmatprep.mubr.f32.mxu0 0.0
  %2254 = vmatmul.mubr.f32.gmra.mrb[0].mxu0 %v2187
  %v2255 = vpop.f32.mrb[0].mxu0
  %v2256 = vadd.f32 0.0, %v2255
  %v2257 = vpop.f32.mrb[0].mxu0
  %2258 = vdwg.mxu0
  %v2260 = vsel %vm141, %v40, 0
  %2262 = vmatprep.subr.mxu0 0.0
  %2263 = vmatpush1.msra.mxu0 %v105
  %2264 = vmatprep.subr.mxu0 0.0
  %2265 = vmatpush1.msra.mxu0 0.0
  %2266 = vmatprep.subr.mxu0 0.0
  %2267 = vmatpush1.msra.mxu0 0.0
  %2268 = vmatprep.subr.mxu0 0.0
  %2269 = vmatpush1.msra.mxu0 0.0
  %2270 = vmatprep.subr.mxu0 0.0
  %2271 = vmatpush1.msra.mxu0 0.0
  %2272 = vmatprep.subr.mxu0 0.0
  %2273 = vmatpush1.msra.mxu0 0.0
  %2274 = vmatprep.subr.mxu0 0.0
  %2275 = vmatpush1.msra.mxu0 0.0
  %2276 = vmatprep.subr.mxu0 0.0
  %2277 = vmatpush1.msra.mxu0 0.0
  %2278 = vmatprep.subr.mxu0 0.0
  %2279 = vmatpush1.msra.mxu0 0.0
  %2280 = vmatprep.subr.mxu0 0.0
  %2281 = vmatpush1.msra.mxu0 0.0
  %2282 = vmatprep.subr.mxu0 0.0
  %2283 = vmatpush1.msra.mxu0 0.0
  %2284 = vmatprep.subr.mxu0 0.0
  %2285 = vmatpush1.msra.mxu0 0.0
  %2286 = vmatprep.subr.mxu0 0.0
  %2287 = vmatpush1.msra.mxu0 0.0
  %2288 = vmatprep.subr.mxu0 0.0
  %2289 = vmatpush1.msra.mxu0 0.0
  %2290 = vmatprep.subr.mxu0 0.0
  %2291 = vmatpush1.msra.mxu0 0.0
  %2292 = vmatprep.subr.mxu0 0.0
  %2293 = vmatpush1.msra.mxu0 0.0
  %2294 = vmatprep.subr.mxu0 0.0
  %2295 = vmatpush1.msra.mxu0 0.0
  %2296 = vmatprep.subr.mxu0 0.0
  %2297 = vmatpush1.msra.mxu0 0.0
  %2298 = vmatprep.subr.mxu0 0.0
  %2299 = vmatpush1.msra.mxu0 0.0
  %2300 = vmatprep.subr.mxu0 0.0
  %2301 = vmatpush1.msra.mxu0 0.0
  %2302 = vmatprep.subr.mxu0 0.0
  %2303 = vmatpush1.msra.mxu0 0.0
  %2304 = vmatprep.subr.mxu0 0.0
  %2305 = vmatpush1.msra.mxu0 0.0
  %2306 = vmatprep.subr.mxu0 0.0
  %2307 = vmatpush1.msra.mxu0 0.0
  %2308 = vmatprep.subr.mxu0 0.0
  %2309 = vmatpush1.msra.mxu0 0.0
  %2310 = vmatprep.subr.mxu0 0.0
  %2311 = vmatpush1.msra.mxu0 0.0
  %2312 = vmatprep.subr.mxu0 0.0
  %2313 = vmatpush1.msra.mxu0 0.0
  %2314 = vmatprep.subr.mxu0 0.0
  %2315 = vmatpush1.msra.mxu0 0.0
  %2316 = vmatprep.subr.mxu0 0.0
  %2317 = vmatpush1.msra.mxu0 0.0
  %2318 = vmatprep.subr.mxu0 0.0
  %2319 = vmatpush1.msra.mxu0 0.0
  %2320 = vmatprep.subr.mxu0 0.0
  %2321 = vmatpush1.msra.mxu0 0.0
  %2322 = vmatprep.subr.mxu0 0.0
  %2323 = vmatpush1.msra.mxu0 0.0
  %2324 = vmatprep.subr.mxu0 0.0
  %2325 = vmatpush1.msra.mxu0 0.0
  %2326 = vmatprep.mubr.f32.mxu0 0.0
  %2327 = vmatmul.mubr.f32.gmra.mrb[0].mxu0 %v2260
  %v2328 = vpop.f32.mrb[0].mxu0
  %v2329 = vadd.f32 0.0, %v2328
  %v2330 = vpop.f32.mrb[0].mxu0
  %2331 = vdwg.mxu0
  %v2333 = vsel %vm141, %v41, 0
  %2335 = vmatprep.subr.mxu0 0.0
  %2336 = vmatpush1.msra.mxu0 %v106
  %2337 = vmatprep.subr.mxu0 0.0
  %2338 = vmatpush1.msra.mxu0 0.0
  %2339 = vmatprep.subr.mxu0 0.0
  %2340 = vmatpush1.msra.mxu0 0.0
  %2341 = vmatprep.subr.mxu0 0.0
  %2342 = vmatpush1.msra.mxu0 0.0
  %2343 = vmatprep.subr.mxu0 0.0
  %2344 = vmatpush1.msra.mxu0 0.0
  %2345 = vmatprep.subr.mxu0 0.0
  %2346 = vmatpush1.msra.mxu0 0.0
  %2347 = vmatprep.subr.mxu0 0.0
  %2348 = vmatpush1.msra.mxu0 0.0
  %2349 = vmatprep.subr.mxu0 0.0
  %2350 = vmatpush1.msra.mxu0 0.0
  %2351 = vmatprep.subr.mxu0 0.0
  %2352 = vmatpush1.msra.mxu0 0.0
  %2353 = vmatprep.subr.mxu0 0.0
  %2354 = vmatpush1.msra.mxu0 0.0
  %2355 = vmatprep.subr.mxu0 0.0
  %2356 = vmatpush1.msra.mxu0 0.0
  %2357 = vmatprep.subr.mxu0 0.0
  %2358 = vmatpush1.msra.mxu0 0.0
  %2359 = vmatprep.subr.mxu0 0.0
  %2360 = vmatpush1.msra.mxu0 0.0
  %2361 = vmatprep.subr.mxu0 0.0
  %2362 = vmatpush1.msra.mxu0 0.0
  %2363 = vmatprep.subr.mxu0 0.0
  %2364 = vmatpush1.msra.mxu0 0.0
  %2365 = vmatprep.subr.mxu0 0.0
  %2366 = vmatpush1.msra.mxu0 0.0
  %2367 = vmatprep.subr.mxu0 0.0
  %2368 = vmatpush1.msra.mxu0 0.0
  %2369 = vmatprep.subr.mxu0 0.0
  %2370 = vmatpush1.msra.mxu0 0.0
  %2371 = vmatprep.subr.mxu0 0.0
  %2372 = vmatpush1.msra.mxu0 0.0
  %2373 = vmatprep.subr.mxu0 0.0
  %2374 = vmatpush1.msra.mxu0 0.0
  %2375 = vmatprep.subr.mxu0 0.0
  %2376 = vmatpush1.msra.mxu0 0.0
  %2377 = vmatprep.subr.mxu0 0.0
  %2378 = vmatpush1.msra.mxu0 0.0
  %2379 = vmatprep.subr.mxu0 0.0
  %2380 = vmatpush1.msra.mxu0 0.0
  %2381 = vmatprep.subr.mxu0 0.0
  %2382 = vmatpush1.msra.mxu0 0.0
  %2383 = vmatprep.subr.mxu0 0.0
  %2384 = vmatpush1.msra.mxu0 0.0
  %2385 = vmatprep.subr.mxu0 0.0
  %2386 = vmatpush1.msra.mxu0 0.0
  %2387 = vmatprep.subr.mxu0 0.0
  %2388 = vmatpush1.msra.mxu0 0.0
  %2389 = vmatprep.subr.mxu0 0.0
  %2390 = vmatpush1.msra.mxu0 0.0
  %2391 = vmatprep.subr.mxu0 0.0
  %2392 = vmatpush1.msra.mxu0 0.0
  %2393 = vmatprep.subr.mxu0 0.0
  %2394 = vmatpush1.msra.mxu0 0.0
  %2395 = vmatprep.subr.mxu0 0.0
  %2396 = vmatpush1.msra.mxu0 0.0
  %2397 = vmatprep.subr.mxu0 0.0
  %2398 = vmatpush1.msra.mxu0 0.0
  %2399 = vmatprep.mubr.f32.mxu0 0.0
  %2400 = vmatmul.mubr.f32.gmra.mrb[0].mxu0 %v2333
  %v2401 = vpop.f32.mrb[0].mxu0
  %v2402 = vadd.f32 0.0, %v2401
  %v2403 = vpop.f32.mrb[0].mxu0
  %2404 = vdwg.mxu0
  %v2406 = vsel %vm141, %v42, 0
  %2408 = vmatprep.subr.mxu0 0.0
  %2409 = vmatpush1.msra.mxu0 %v107
  %2410 = vmatprep.subr.mxu0 0.0
  %2411 = vmatpush1.msra.mxu0 0.0
  %2412 = vmatprep.subr.mxu0 0.0
  %2413 = vmatpush1.msra.mxu0 0.0
  %2414 = vmatprep.subr.mxu0 0.0
  %2415 = vmatpush1.msra.mxu0 0.0
  %2416 = vmatprep.subr.mxu0 0.0
  %2417 = vmatpush1.msra.mxu0 0.0
  %2418 = vmatprep.subr.mxu0 0.0
  %2419 = vmatpush1.msra.mxu0 0.0
  %2420 = vmatprep.subr.mxu0 0.0
  %2421 = vmatpush1.msra.mxu0 0.0
  %2422 = vmatprep.subr.mxu0 0.0
  %2423 = vmatpush1.msra.mxu0 0.0
  %2424 = vmatprep.subr.mxu0 0.0
  %2425 = vmatpush1.msra.mxu0 0.0
  %2426 = vmatprep.subr.mxu0 0.0
  %2427 = vmatpush1.msra.mxu0 0.0
  %2428 = vmatprep.subr.mxu0 0.0
  %2429 = vmatpush1.msra.mxu0 0.0
  %2430 = vmatprep.subr.mxu0 0.0
  %2431 = vmatpush1.msra.mxu0 0.0
  %2432 = vmatprep.subr.mxu0 0.0
  %2433 = vmatpush1.msra.mxu0 0.0
  %2434 = vmatprep.subr.mxu0 0.0
  %2435 = vmatpush1.msra.mxu0 0.0
  %2436 = vmatprep.subr.mxu0 0.0
  %2437 = vmatpush1.msra.mxu0 0.0
  %2438 = vmatprep.subr.mxu0 0.0
  %2439 = vmatpush1.msra.mxu0 0.0
  %2440 = vmatprep.subr.mxu0 0.0
  %2441 = vmatpush1.msra.mxu0 0.0
  %2442 = vmatprep.subr.mxu0 0.0
  %2443 = vmatpush1.msra.mxu0 0.0
  %2444 = vmatprep.subr.mxu0 0.0
  %2445 = vmatpush1.msra.mxu0 0.0
  %2446 = vmatprep.subr.mxu0 0.0
  %2447 = vmatpush1.msra.mxu0 0.0
  %2448 = vmatprep.subr.mxu0 0.0
  %2449 = vmatpush1.msra.mxu0 0.0
  %2450 = vmatprep.subr.mxu0 0.0
  %2451 = vmatpush1.msra.mxu0 0.0
  %2452 = vmatprep.subr.mxu0 0.0
  %2453 = vmatpush1.msra.mxu0 0.0
  %2454 = vmatprep.subr.mxu0 0.0
  %2455 = vmatpush1.msra.mxu0 0.0
  %2456 = vmatprep.subr.mxu0 0.0
  %2457 = vmatpush1.msra.mxu0 0.0
  %2458 = vmatprep.subr.mxu0 0.0
  %2459 = vmatpush1.msra.mxu0 0.0
  %2460 = vmatprep.subr.mxu0 0.0
  %2461 = vmatpush1.msra.mxu0 0.0
  %2462 = vmatprep.subr.mxu0 0.0
  %2463 = vmatpush1.msra.mxu0 0.0
  %2464 = vmatprep.subr.mxu0 0.0
  %2465 = vmatpush1.msra.mxu0 0.0
  %2466 = vmatprep.subr.mxu0 0.0
  %2467 = vmatpush1.msra.mxu0 0.0
  %2468 = vmatprep.subr.mxu0 0.0
  %2469 = vmatpush1.msra.mxu0 0.0
  %2470 = vmatprep.subr.mxu0 0.0
  %2471 = vmatpush1.msra.mxu0 0.0
  %2472 = vmatprep.mubr.f32.mxu0 0.0
  %2473 = vmatmul.mubr.f32.gmra.mrb[0].mxu0 %v2406
  %v2474 = vpop.f32.mrb[0].mxu0
  %v2475 = vadd.f32 0.0, %v2474
  %v2476 = vpop.f32.mrb[0].mxu0
  %2477 = vdwg.mxu0
  %v2479 = vsel %vm141, %v44, 0
  %2481 = vmatprep.subr.mxu0 0.0
  %2482 = vmatpush1.msra.mxu0 %v109
  %2483 = vmatprep.subr.mxu0 0.0
  %2484 = vmatpush1.msra.mxu0 0.0
  %2485 = vmatprep.subr.mxu0 0.0
  %2486 = vmatpush1.msra.mxu0 0.0
  %2487 = vmatprep.subr.mxu0 0.0
  %2488 = vmatpush1.msra.mxu0 0.0
  %2489 = vmatprep.subr.mxu0 0.0
  %2490 = vmatpush1.msra.mxu0 0.0
  %2491 = vmatprep.subr.mxu0 0.0
  %2492 = vmatpush1.msra.mxu0 0.0
  %2493 = vmatprep.subr.mxu0 0.0
  %2494 = vmatpush1.msra.mxu0 0.0
  %2495 = vmatprep.subr.mxu0 0.0
  %2496 = vmatpush1.msra.mxu0 0.0
  %2497 = vmatprep.subr.mxu0 0.0
  %2498 = vmatpush1.msra.mxu0 0.0
  %2499 = vmatprep.subr.mxu0 0.0
  %2500 = vmatpush1.msra.mxu0 0.0
  %2501 = vmatprep.subr.mxu0 0.0
  %2502 = vmatpush1.msra.mxu0 0.0
  %2503 = vmatprep.subr.mxu0 0.0
  %2504 = vmatpush1.msra.mxu0 0.0
  %2505 = vmatprep.subr.mxu0 0.0
  %2506 = vmatpush1.msra.mxu0 0.0
  %2507 = vmatprep.subr.mxu0 0.0
  %2508 = vmatpush1.msra.mxu0 0.0
  %2509 = vmatprep.subr.mxu0 0.0
  %2510 = vmatpush1.msra.mxu0 0.0
  %2511 = vmatprep.subr.mxu0 0.0
  %2512 = vmatpush1.msra.mxu0 0.0
  %2513 = vmatprep.subr.mxu0 0.0
  %2514 = vmatpush1.msra.mxu0 0.0
  %2515 = vmatprep.subr.mxu0 0.0
  %2516 = vmatpush1.msra.mxu0 0.0
  %2517 = vmatprep.subr.mxu0 0.0
  %2518 = vmatpush1.msra.mxu0 0.0
  %2519 = vmatprep.subr.mxu0 0.0
  %2520 = vmatpush1.msra.mxu0 0.0
  %2521 = vmatprep.subr.mxu0 0.0
  %2522 = vmatpush1.msra.mxu0 0.0
  %2523 = vmatprep.subr.mxu0 0.0
  %2524 = vmatpush1.msra.mxu0 0.0
  %2525 = vmatprep.subr.mxu0 0.0
  %2526 = vmatpush1.msra.mxu0 0.0
  %2527 = vmatprep.subr.mxu0 0.0
  %2528 = vmatpush1.msra.mxu0 0.0
  %2529 = vmatprep.subr.mxu0 0.0
  %2530 = vmatpush1.msra.mxu0 0.0
  %2531 = vmatprep.subr.mxu0 0.0
  %2532 = vmatpush1.msra.mxu0 0.0
  %2533 = vmatprep.subr.mxu0 0.0
  %2534 = vmatpush1.msra.mxu0 0.0
  %2535 = vmatprep.subr.mxu0 0.0
  %2536 = vmatpush1.msra.mxu0 0.0
  %2537 = vmatprep.subr.mxu0 0.0
  %2538 = vmatpush1.msra.mxu0 0.0
  %2539 = vmatprep.subr.mxu0 0.0
  %2540 = vmatpush1.msra.mxu0 0.0
  %2541 = vmatprep.subr.mxu0 0.0
  %2542 = vmatpush1.msra.mxu0 0.0
  %2543 = vmatprep.subr.mxu0 0.0
  %2544 = vmatpush1.msra.mxu0 0.0
  %2545 = vmatprep.mubr.f32.mxu0 0.0
  %2546 = vmatmul.mubr.f32.gmra.mrb[0].mxu0 %v2479
  %v2547 = vpop.f32.mrb[0].mxu0
  %v2548 = vadd.f32 0.0, %v2547
  %v2549 = vpop.f32.mrb[0].mxu0
  %2550 = vdwg.mxu0
  %v2552 = vsel %vm141, %v45, 0
  %2554 = vmatprep.subr.mxu0 0.0
  %2555 = vmatpush1.msra.mxu0 %v110
  %2556 = vmatprep.subr.mxu0 0.0
  %2557 = vmatpush1.msra.mxu0 0.0
  %2558 = vmatprep.subr.mxu0 0.0
  %2559 = vmatpush1.msra.mxu0 0.0
  %2560 = vmatprep.subr.mxu0 0.0
  %2561 = vmatpush1.msra.mxu0 0.0
  %2562 = vmatprep.subr.mxu0 0.0
  %2563 = vmatpush1.msra.mxu0 0.0
  %2564 = vmatprep.subr.mxu0 0.0
  %2565 = vmatpush1.msra.mxu0 0.0
  %2566 = vmatprep.subr.mxu0 0.0
  %2567 = vmatpush1.msra.mxu0 0.0
  %2568 = vmatprep.subr.mxu0 0.0
  %2569 = vmatpush1.msra.mxu0 0.0
  %2570 = vmatprep.subr.mxu0 0.0
  %2571 = vmatpush1.msra.mxu0 0.0
  %2572 = vmatprep.subr.mxu0 0.0
  %2573 = vmatpush1.msra.mxu0 0.0
  %2574 = vmatprep.subr.mxu0 0.0
  %2575 = vmatpush1.msra.mxu0 0.0
  %2576 = vmatprep.subr.mxu0 0.0
  %2577 = vmatpush1.msra.mxu0 0.0
  %2578 = vmatprep.subr.mxu0 0.0
  %2579 = vmatpush1.msra.mxu0 0.0
  %2580 = vmatprep.subr.mxu0 0.0
  %2581 = vmatpush1.msra.mxu0 0.0
  %2582 = vmatprep.subr.mxu0 0.0
  %2583 = vmatpush1.msra.mxu0 0.0
  %2584 = vmatprep.subr.mxu0 0.0
  %2585 = vmatpush1.msra.mxu0 0.0
  %2586 = vmatprep.subr.mxu0 0.0
  %2587 = vmatpush1.msra.mxu0 0.0
  %2588 = vmatprep.subr.mxu0 0.0
  %2589 = vmatpush1.msra.mxu0 0.0
  %2590 = vmatprep.subr.mxu0 0.0
  %2591 = vmatpush1.msra.mxu0 0.0
  %2592 = vmatprep.subr.mxu0 0.0
  %2593 = vmatpush1.msra.mxu0 0.0
  %2594 = vmatprep.subr.mxu0 0.0
  %2595 = vmatpush1.msra.mxu0 0.0
  %2596 = vmatprep.subr.mxu0 0.0
  %2597 = vmatpush1.msra.mxu0 0.0
  %2598 = vmatprep.subr.mxu0 0.0
  %2599 = vmatpush1.msra.mxu0 0.0
  %2600 = vmatprep.subr.mxu0 0.0
  %2601 = vmatpush1.msra.mxu0 0.0
  %2602 = vmatprep.subr.mxu0 0.0
  %2603 = vmatpush1.msra.mxu0 0.0
  %2604 = vmatprep.subr.mxu0 0.0
  %2605 = vmatpush1.msra.mxu0 0.0
  %2606 = vmatprep.subr.mxu0 0.0
  %2607 = vmatpush1.msra.mxu0 0.0
  %2608 = vmatprep.subr.mxu0 0.0
  %2609 = vmatpush1.msra.mxu0 0.0
  %2610 = vmatprep.subr.mxu0 0.0
  %2611 = vmatpush1.msra.mxu0 0.0
  %2612 = vmatprep.subr.mxu0 0.0
  %2613 = vmatpush1.msra.mxu0 0.0
  %2614 = vmatprep.subr.mxu0 0.0
  %2615 = vmatpush1.msra.mxu0 0.0
  %2616 = vmatprep.subr.mxu0 0.0
  %2617 = vmatpush1.msra.mxu0 0.0
  %2618 = vmatprep.mubr.f32.mxu0 0.0
  %2619 = vmatmul.mubr.f32.gmra.mrb[0].mxu0 %v2552
  %v2620 = vpop.f32.mrb[0].mxu0
  %v2621 = vadd.f32 0.0, %v2620
  %v2622 = vpop.f32.mrb[0].mxu0
  %2623 = vdwg.mxu0
  %v2625 = vsel %vm141, %v46, 0
  %2627 = vmatprep.subr.mxu0 0.0
  %2628 = vmatpush1.msra.mxu0 %v111
  %2629 = vmatprep.subr.mxu0 0.0
  %2630 = vmatpush1.msra.mxu0 0.0
  %2631 = vmatprep.subr.mxu0 0.0
  %2632 = vmatpush1.msra.mxu0 0.0
  %2633 = vmatprep.subr.mxu0 0.0
  %2634 = vmatpush1.msra.mxu0 0.0
  %2635 = vmatprep.subr.mxu0 0.0
  %2636 = vmatpush1.msra.mxu0 0.0
  %2637 = vmatprep.subr.mxu0 0.0
  %2638 = vmatpush1.msra.mxu0 0.0
  %2639 = vmatprep.subr.mxu0 0.0
  %2640 = vmatpush1.msra.mxu0 0.0
  %2641 = vmatprep.subr.mxu0 0.0
  %2642 = vmatpush1.msra.mxu0 0.0
  %2643 = vmatprep.subr.mxu0 0.0
  %2644 = vmatpush1.msra.mxu0 0.0
  %2645 = vmatprep.subr.mxu0 0.0
  %2646 = vmatpush1.msra.mxu0 0.0
  %2647 = vmatprep.subr.mxu0 0.0
  %2648 = vmatpush1.msra.mxu0 0.0
  %2649 = vmatprep.subr.mxu0 0.0
  %2650 = vmatpush1.msra.mxu0 0.0
  %2651 = vmatprep.subr.mxu0 0.0
  %2652 = vmatpush1.msra.mxu0 0.0
  %2653 = vmatprep.subr.mxu0 0.0
  %2654 = vmatpush1.msra.mxu0 0.0
  %2655 = vmatprep.subr.mxu0 0.0
  %2656 = vmatpush1.msra.mxu0 0.0
  %2657 = vmatprep.subr.mxu0 0.0
  %2658 = vmatpush1.msra.mxu0 0.0
  %2659 = vmatprep.subr.mxu0 0.0
  %2660 = vmatpush1.msra.mxu0 0.0
  %2661 = vmatprep.subr.mxu0 0.0
  %2662 = vmatpush1.msra.mxu0 0.0
  %2663 = vmatprep.subr.mxu0 0.0
  %2664 = vmatpush1.msra.mxu0 0.0
  %2665 = vmatprep.subr.mxu0 0.0
  %2666 = vmatpush1.msra.mxu0 0.0
  %2667 = vmatprep.subr.mxu0 0.0
  %2668 = vmatpush1.msra.mxu0 0.0
  %2669 = vmatprep.subr.mxu0 0.0
  %2670 = vmatpush1.msra.mxu0 0.0
  %2671 = vmatprep.subr.mxu0 0.0
  %2672 = vmatpush1.msra.mxu0 0.0
  %2673 = vmatprep.subr.mxu0 0.0
  %2674 = vmatpush1.msra.mxu0 0.0
  %2675 = vmatprep.subr.mxu0 0.0
  %2676 = vmatpush1.msra.mxu0 0.0
  %2677 = vmatprep.subr.mxu0 0.0
  %2678 = vmatpush1.msra.mxu0 0.0
  %2679 = vmatprep.subr.mxu0 0.0
  %2680 = vmatpush1.msra.mxu0 0.0
  %2681 = vmatprep.subr.mxu0 0.0
  %2682 = vmatpush1.msra.mxu0 0.0
  %2683 = vmatprep.subr.mxu0 0.0
  %2684 = vmatpush1.msra.mxu0 0.0
  %2685 = vmatprep.subr.mxu0 0.0
  %2686 = vmatpush1.msra.mxu0 0.0
  %2687 = vmatprep.subr.mxu0 0.0
  %2688 = vmatpush1.msra.mxu0 0.0
  %2689 = vmatprep.subr.mxu0 0.0
  %2690 = vmatpush1.msra.mxu0 0.0
  %2691 = vmatprep.mubr.f32.mxu0 0.0
  %2692 = vmatmul.mubr.f32.gmra.mrb[0].mxu0 %v2625
  %v2693 = vpop.f32.mrb[0].mxu0
  %v2694 = vadd.f32 0.0, %v2693
  %v2695 = vpop.f32.mrb[0].mxu0
  %2696 = vdwg.mxu0
  %v2698 = vsel %vm141, %v47, 0
  %2700 = vmatprep.subr.mxu0 0.0
  %2701 = vmatpush1.msra.mxu0 %v112
  %2702 = vmatprep.subr.mxu0 0.0
  %2703 = vmatpush1.msra.mxu0 0.0
  %2704 = vmatprep.subr.mxu0 0.0
  %2705 = vmatpush1.msra.mxu0 0.0
  %2706 = vmatprep.subr.mxu0 0.0
  %2707 = vmatpush1.msra.mxu0 0.0
  %2708 = vmatprep.subr.mxu0 0.0
  %2709 = vmatpush1.msra.mxu0 0.0
  %2710 = vmatprep.subr.mxu0 0.0
  %2711 = vmatpush1.msra.mxu0 0.0
  %2712 = vmatprep.subr.mxu0 0.0
  %2713 = vmatpush1.msra.mxu0 0.0
  %2714 = vmatprep.subr.mxu0 0.0
  %2715 = vmatpush1.msra.mxu0 0.0
  %2716 = vmatprep.subr.mxu0 0.0
  %2717 = vmatpush1.msra.mxu0 0.0
  %2718 = vmatprep.subr.mxu0 0.0
  %2719 = vmatpush1.msra.mxu0 0.0
  %2720 = vmatprep.subr.mxu0 0.0
  %2721 = vmatpush1.msra.mxu0 0.0
  %2722 = vmatprep.subr.mxu0 0.0
  %2723 = vmatpush1.msra.mxu0 0.0
  %2724 = vmatprep.subr.mxu0 0.0
  %2725 = vmatpush1.msra.mxu0 0.0
  %2726 = vmatprep.subr.mxu0 0.0
  %2727 = vmatpush1.msra.mxu0 0.0
  %2728 = vmatprep.subr.mxu0 0.0
  %2729 = vmatpush1.msra.mxu0 0.0
  %2730 = vmatprep.subr.mxu0 0.0
  %2731 = vmatpush1.msra.mxu0 0.0
  %2732 = vmatprep.subr.mxu0 0.0
  %2733 = vmatpush1.msra.mxu0 0.0
  %2734 = vmatprep.subr.mxu0 0.0
  %2735 = vmatpush1.msra.mxu0 0.0
  %2736 = vmatprep.subr.mxu0 0.0
  %2737 = vmatpush1.msra.mxu0 0.0
  %2738 = vmatprep.subr.mxu0 0.0
  %2739 = vmatpush1.msra.mxu0 0.0
  %2740 = vmatprep.subr.mxu0 0.0
  %2741 = vmatpush1.msra.mxu0 0.0
  %2742 = vmatprep.subr.mxu0 0.0
  %2743 = vmatpush1.msra.mxu0 0.0
  %2744 = vmatprep.subr.mxu0 0.0
  %2745 = vmatpush1.msra.mxu0 0.0
  %2746 = vmatprep.subr.mxu0 0.0
  %2747 = vmatpush1.msra.mxu0 0.0
  %2748 = vmatprep.subr.mxu0 0.0
  %2749 = vmatpush1.msra.mxu0 0.0
  %2750 = vmatprep.subr.mxu0 0.0
  %2751 = vmatpush1.msra.mxu0 0.0
  %2752 = vmatprep.subr.mxu0 0.0
  %2753 = vmatpush1.msra.mxu0 0.0
  %2754 = vmatprep.subr.mxu0 0.0
  %2755 = vmatpush1.msra.mxu0 0.0
  %2756 = vmatprep.subr.mxu0 0.0
  %2757 = vmatpush1.msra.mxu0 0.0
  %2758 = vmatprep.subr.mxu0 0.0
  %2759 = vmatpush1.msra.mxu0 0.0
  %2760 = vmatprep.subr.mxu0 0.0
  %2761 = vmatpush1.msra.mxu0 0.0
  %2762 = vmatprep.subr.mxu0 0.0
  %2763 = vmatpush1.msra.mxu0 0.0
  %2764 = vmatprep.mubr.f32.mxu0 0.0
  %2765 = vmatmul.mubr.f32.gmra.mrb[0].mxu0 %v2698
  %v2766 = vpop.f32.mrb[0].mxu0
  %v2767 = vadd.f32 0.0, %v2766
  %v2768 = vpop.f32.mrb[0].mxu0
  %2769 = vdwg.mxu0
  %v2771 = vsel %vm141, %v48, 0
  %2773 = vmatprep.subr.mxu0 0.0
  %2774 = vmatpush1.msra.mxu0 %v113
  %2775 = vmatprep.subr.mxu0 0.0
  %2776 = vmatpush1.msra.mxu0 0.0
  %2777 = vmatprep.subr.mxu0 0.0
  %2778 = vmatpush1.msra.mxu0 0.0
  %2779 = vmatprep.subr.mxu0 0.0
  %2780 = vmatpush1.msra.mxu0 0.0
  %2781 = vmatprep.subr.mxu0 0.0
  %2782 = vmatpush1.msra.mxu0 0.0
  %2783 = vmatprep.subr.mxu0 0.0
  %2784 = vmatpush1.msra.mxu0 0.0
  %2785 = vmatprep.subr.mxu0 0.0
  %2786 = vmatpush1.msra.mxu0 0.0
  %2787 = vmatprep.subr.mxu0 0.0
  %2788 = vmatpush1.msra.mxu0 0.0
  %2789 = vmatprep.subr.mxu0 0.0
  %2790 = vmatpush1.msra.mxu0 0.0
  %2791 = vmatprep.subr.mxu0 0.0
  %2792 = vmatpush1.msra.mxu0 0.0
  %2793 = vmatprep.subr.mxu0 0.0
  %2794 = vmatpush1.msra.mxu0 0.0
  %2795 = vmatprep.subr.mxu0 0.0
  %2796 = vmatpush1.msra.mxu0 0.0
  %2797 = vmatprep.subr.mxu0 0.0
  %2798 = vmatpush1.msra.mxu0 0.0
  %2799 = vmatprep.subr.mxu0 0.0
  %2800 = vmatpush1.msra.mxu0 0.0
  %2801 = vmatprep.subr.mxu0 0.0
  %2802 = vmatpush1.msra.mxu0 0.0
  %2803 = vmatprep.subr.mxu0 0.0
  %2804 = vmatpush1.msra.mxu0 0.0
  %2805 = vmatprep.subr.mxu0 0.0
  %2806 = vmatpush1.msra.mxu0 0.0
  %2807 = vmatprep.subr.mxu0 0.0
  %2808 = vmatpush1.msra.mxu0 0.0
  %2809 = vmatprep.subr.mxu0 0.0
  %2810 = vmatpush1.msra.mxu0 0.0
  %2811 = vmatprep.subr.mxu0 0.0
  %2812 = vmatpush1.msra.mxu0 0.0
  %2813 = vmatprep.subr.mxu0 0.0
  %2814 = vmatpush1.msra.mxu0 0.0
  %2815 = vmatprep.subr.mxu0 0.0
  %2816 = vmatpush1.msra.mxu0 0.0
  %2817 = vmatprep.subr.mxu0 0.0
  %2818 = vmatpush1.msra.mxu0 0.0
  %2819 = vmatprep.subr.mxu0 0.0
  %2820 = vmatpush1.msra.mxu0 0.0
  %2821 = vmatprep.subr.mxu0 0.0
  %2822 = vmatpush1.msra.mxu0 0.0
  %2823 = vmatprep.subr.mxu0 0.0
  %2824 = vmatpush1.msra.mxu0 0.0
  %2825 = vmatprep.subr.mxu0 0.0
  %2826 = vmatpush1.msra.mxu0 0.0
  %2827 = vmatprep.subr.mxu0 0.0
  %2828 = vmatpush1.msra.mxu0 0.0
  %2829 = vmatprep.subr.mxu0 0.0
  %2830 = vmatpush1.msra.mxu0 0.0
  %2831 = vmatprep.subr.mxu0 0.0
  %2832 = vmatpush1.msra.mxu0 0.0
  %2833 = vmatprep.subr.mxu0 0.0
  %2834 = vmatpush1.msra.mxu0 0.0
  %2835 = vmatprep.subr.mxu0 0.0
  %2836 = vmatpush1.msra.mxu0 0.0
  %2837 = vmatprep.mubr.f32.mxu0 0.0
  %2838 = vmatmul.mubr.f32.gmra.mrb[0].mxu0 %v2771
  %v2839 = vpop.f32.mrb[0].mxu0
  %v2840 = vadd.f32 0.0, %v2839
  %v2841 = vpop.f32.mrb[0].mxu0
  %2842 = vdwg.mxu0
  %v2844 = vsel %vm141, %v49, 0
  %2846 = vmatprep.subr.mxu0 0.0
  %2847 = vmatpush1.msra.mxu0 %v114
  %2848 = vmatprep.subr.mxu0 0.0
  %2849 = vmatpush1.msra.mxu0 0.0
  %2850 = vmatprep.subr.mxu0 0.0
  %2851 = vmatpush1.msra.mxu0 0.0
  %2852 = vmatprep.subr.mxu0 0.0
  %2853 = vmatpush1.msra.mxu0 0.0
  %2854 = vmatprep.subr.mxu0 0.0
  %2855 = vmatpush1.msra.mxu0 0.0
  %2856 = vmatprep.subr.mxu0 0.0
  %2857 = vmatpush1.msra.mxu0 0.0
  %2858 = vmatprep.subr.mxu0 0.0
  %2859 = vmatpush1.msra.mxu0 0.0
  %2860 = vmatprep.subr.mxu0 0.0
  %2861 = vmatpush1.msra.mxu0 0.0
  %2862 = vmatprep.subr.mxu0 0.0
  %2863 = vmatpush1.msra.mxu0 0.0
  %2864 = vmatprep.subr.mxu0 0.0
  %2865 = vmatpush1.msra.mxu0 0.0
  %2866 = vmatprep.subr.mxu0 0.0
  %2867 = vmatpush1.msra.mxu0 0.0
  %2868 = vmatprep.subr.mxu0 0.0
  %2869 = vmatpush1.msra.mxu0 0.0
  %2870 = vmatprep.subr.mxu0 0.0
  %2871 = vmatpush1.msra.mxu0 0.0
  %2872 = vmatprep.subr.mxu0 0.0
  %2873 = vmatpush1.msra.mxu0 0.0
  %2874 = vmatprep.subr.mxu0 0.0
  %2875 = vmatpush1.msra.mxu0 0.0
  %2876 = vmatprep.subr.mxu0 0.0
  %2877 = vmatpush1.msra.mxu0 0.0
  %2878 = vmatprep.subr.mxu0 0.0
  %2879 = vmatpush1.msra.mxu0 0.0
  %2880 = vmatprep.subr.mxu0 0.0
  %2881 = vmatpush1.msra.mxu0 0.0
  %2882 = vmatprep.subr.mxu0 0.0
  %2883 = vmatpush1.msra.mxu0 0.0
  %2884 = vmatprep.subr.mxu0 0.0
  %2885 = vmatpush1.msra.mxu0 0.0
  %2886 = vmatprep.subr.mxu0 0.0
  %2887 = vmatpush1.msra.mxu0 0.0
  %2888 = vmatprep.subr.mxu0 0.0
  %2889 = vmatpush1.msra.mxu0 0.0
  %2890 = vmatprep.subr.mxu0 0.0
  %2891 = vmatpush1.msra.mxu0 0.0
  %2892 = vmatprep.subr.mxu0 0.0
  %2893 = vmatpush1.msra.mxu0 0.0
  %2894 = vmatprep.subr.mxu0 0.0
  %2895 = vmatpush1.msra.mxu0 0.0
  %2896 = vmatprep.subr.mxu0 0.0
  %2897 = vmatpush1.msra.mxu0 0.0
  %2898 = vmatprep.subr.mxu0 0.0
  %2899 = vmatpush1.msra.mxu0 0.0
  %2900 = vmatprep.subr.mxu0 0.0
  %2901 = vmatpush1.msra.mxu0 0.0
  %2902 = vmatprep.subr.mxu0 0.0
  %2903 = vmatpush1.msra.mxu0 0.0
  %2904 = vmatprep.subr.mxu0 0.0
  %2905 = vmatpush1.msra.mxu0 0.0
  %2906 = vmatprep.subr.mxu0 0.0
  %2907 = vmatpush1.msra.mxu0 0.0
  %2908 = vmatprep.subr.mxu0 0.0
  %2909 = vmatpush1.msra.mxu0 0.0
  %2910 = vmatprep.mubr.f32.mxu0 0.0
  %2911 = vmatmul.mubr.f32.gmra.mrb[0].mxu0 %v2844
  %v2912 = vpop.f32.mrb[0].mxu0
  %v2913 = vadd.f32 0.0, %v2912
  %v2914 = vpop.f32.mrb[0].mxu0
  %2915 = vdwg.mxu0
  %v2917 = vsel %vm141, %v50, 0
  %2919 = vmatprep.subr.mxu0 0.0
  %2920 = vmatpush1.msra.mxu0 %v115
  %2921 = vmatprep.subr.mxu0 0.0
  %2922 = vmatpush1.msra.mxu0 0.0
  %2923 = vmatprep.subr.mxu0 0.0
  %2924 = vmatpush1.msra.mxu0 0.0
  %2925 = vmatprep.subr.mxu0 0.0
  %2926 = vmatpush1.msra.mxu0 0.0
  %2927 = vmatprep.subr.mxu0 0.0
  %2928 = vmatpush1.msra.mxu0 0.0
  %2929 = vmatprep.subr.mxu0 0.0
  %2930 = vmatpush1.msra.mxu0 0.0
  %2931 = vmatprep.subr.mxu0 0.0
  %2932 = vmatpush1.msra.mxu0 0.0
  %2933 = vmatprep.subr.mxu0 0.0
  %2934 = vmatpush1.msra.mxu0 0.0
  %2935 = vmatprep.subr.mxu0 0.0
  %2936 = vmatpush1.msra.mxu0 0.0
  %2937 = vmatprep.subr.mxu0 0.0
  %2938 = vmatpush1.msra.mxu0 0.0
  %2939 = vmatprep.subr.mxu0 0.0
  %2940 = vmatpush1.msra.mxu0 0.0
  %2941 = vmatprep.subr.mxu0 0.0
  %2942 = vmatpush1.msra.mxu0 0.0
  %2943 = vmatprep.subr.mxu0 0.0
  %2944 = vmatpush1.msra.mxu0 0.0
  %2945 = vmatprep.subr.mxu0 0.0
  %2946 = vmatpush1.msra.mxu0 0.0
  %2947 = vmatprep.subr.mxu0 0.0
  %2948 = vmatpush1.msra.mxu0 0.0
  %2949 = vmatprep.subr.mxu0 0.0
  %2950 = vmatpush1.msra.mxu0 0.0
  %2951 = vmatprep.subr.mxu0 0.0
  %2952 = vmatpush1.msra.mxu0 0.0
  %2953 = vmatprep.subr.mxu0 0.0
  %2954 = vmatpush1.msra.mxu0 0.0
  %2955 = vmatprep.subr.mxu0 0.0
  %2956 = vmatpush1.msra.mxu0 0.0
  %2957 = vmatprep.subr.mxu0 0.0
  %2958 = vmatpush1.msra.mxu0 0.0
  %2959 = vmatprep.subr.mxu0 0.0
  %2960 = vmatpush1.msra.mxu0 0.0
  %2961 = vmatprep.subr.mxu0 0.0
  %2962 = vmatpush1.msra.mxu0 0.0
  %2963 = vmatprep.subr.mxu0 0.0
  %2964 = vmatpush1.msra.mxu0 0.0
  %2965 = vmatprep.subr.mxu0 0.0
  %2966 = vmatpush1.msra.mxu0 0.0
  %2967 = vmatprep.subr.mxu0 0.0
  %2968 = vmatpush1.msra.mxu0 0.0
  %2969 = vmatprep.subr.mxu0 0.0
  %2970 = vmatpush1.msra.mxu0 0.0
  %2971 = vmatprep.subr.mxu0 0.0
  %2972 = vmatpush1.msra.mxu0 0.0
  %2973 = vmatprep.subr.mxu0 0.0
  %2974 = vmatpush1.msra.mxu0 0.0
  %2975 = vmatprep.subr.mxu0 0.0
  %2976 = vmatpush1.msra.mxu0 0.0
  %2977 = vmatprep.subr.mxu0 0.0
  %2978 = vmatpush1.msra.mxu0 0.0
  %2979 = vmatprep.subr.mxu0 0.0
  %2980 = vmatpush1.msra.mxu0 0.0
  %2981 = vmatprep.subr.mxu0 0.0
  %2982 = vmatpush1.msra.mxu0 0.0
  %2983 = vmatprep.mubr.f32.mxu0 0.0
  %2984 = vmatmul.mubr.f32.gmra.mrb[0].mxu0 %v2917
  %v2985 = vpop.f32.mrb[0].mxu0
  %v2986 = vadd.f32 0.0, %v2985
  %v2987 = vpop.f32.mrb[0].mxu0
  %2988 = vdwg.mxu0
  %v2990 = vsel %vm141, %v51, 0
  %2992 = vmatprep.subr.mxu0 0.0
  %2993 = vmatpush1.msra.mxu0 %v116
  %2994 = vmatprep.subr.mxu0 0.0
  %2995 = vmatpush1.msra.mxu0 0.0
  %2996 = vmatprep.subr.mxu0 0.0
  %2997 = vmatpush1.msra.mxu0 0.0
  %2998 = vmatprep.subr.mxu0 0.0
  %2999 = vmatpush1.msra.mxu0 0.0
  %3000 = vmatprep.subr.mxu0 0.0
  %3001 = vmatpush1.msra.mxu0 0.0
  %3002 = vmatprep.subr.mxu0 0.0
  %3003 = vmatpush1.msra.mxu0 0.0
  %3004 = vmatprep.subr.mxu0 0.0
  %3005 = vmatpush1.msra.mxu0 0.0
  %3006 = vmatprep.subr.mxu0 0.0
  %3007 = vmatpush1.msra.mxu0 0.0
  %3008 = vmatprep.subr.mxu0 0.0
  %3009 = vmatpush1.msra.mxu0 0.0
  %3010 = vmatprep.subr.mxu0 0.0
  %3011 = vmatpush1.msra.mxu0 0.0
  %3012 = vmatprep.subr.mxu0 0.0
  %3013 = vmatpush1.msra.mxu0 0.0
  %3014 = vmatprep.subr.mxu0 0.0
  %3015 = vmatpush1.msra.mxu0 0.0
  %3016 = vmatprep.subr.mxu0 0.0
  %3017 = vmatpush1.msra.mxu0 0.0
  %3018 = vmatprep.subr.mxu0 0.0
  %3019 = vmatpush1.msra.mxu0 0.0
  %3020 = vmatprep.subr.mxu0 0.0
  %3021 = vmatpush1.msra.mxu0 0.0
  %3022 = vmatprep.subr.mxu0 0.0
  %3023 = vmatpush1.msra.mxu0 0.0
  %3024 = vmatprep.subr.mxu0 0.0
  %3025 = vmatpush1.msra.mxu0 0.0
  %3026 = vmatprep.subr.mxu0 0.0
  %3027 = vmatpush1.msra.mxu0 0.0
  %3028 = vmatprep.subr.mxu0 0.0
  %3029 = vmatpush1.msra.mxu0 0.0
  %3030 = vmatprep.subr.mxu0 0.0
  %3031 = vmatpush1.msra.mxu0 0.0
  %3032 = vmatprep.subr.mxu0 0.0
  %3033 = vmatpush1.msra.mxu0 0.0
  %3034 = vmatprep.subr.mxu0 0.0
  %3035 = vmatpush1.msra.mxu0 0.0
  %3036 = vmatprep.subr.mxu0 0.0
  %3037 = vmatpush1.msra.mxu0 0.0
  %3038 = vmatprep.subr.mxu0 0.0
  %3039 = vmatpush1.msra.mxu0 0.0
  %3040 = vmatprep.subr.mxu0 0.0
  %3041 = vmatpush1.msra.mxu0 0.0
  %3042 = vmatprep.subr.mxu0 0.0
  %3043 = vmatpush1.msra.mxu0 0.0
  %3044 = vmatprep.subr.mxu0 0.0
  %3045 = vmatpush1.msra.mxu0 0.0
  %3046 = vmatprep.subr.mxu0 0.0
  %3047 = vmatpush1.msra.mxu0 0.0
  %3048 = vmatprep.subr.mxu0 0.0
  %3049 = vmatpush1.msra.mxu0 0.0
  %3050 = vmatprep.subr.mxu0 0.0
  %3051 = vmatpush1.msra.mxu0 0.0
  %3052 = vmatprep.subr.mxu0 0.0
  %3053 = vmatpush1.msra.mxu0 0.0
  %3054 = vmatprep.subr.mxu0 0.0
  %3055 = vmatpush1.msra.mxu0 0.0
  %3056 = vmatprep.mubr.f32.mxu0 0.0
  %3057 = vmatmul.mubr.f32.gmra.mrb[0].mxu0 %v2990
  %v3058 = vpop.f32.mrb[0].mxu0
  %v3059 = vadd.f32 0.0, %v3058
  %v3060 = vpop.f32.mrb[0].mxu0
  %3061 = vdwg.mxu0
  %v3063 = vsel %vm141, %v52, 0
  %3065 = vmatprep.subr.mxu0 0.0
  %3066 = vmatpush1.msra.mxu0 %v117
  %3067 = vmatprep.subr.mxu0 0.0
  %3068 = vmatpush1.msra.mxu0 0.0
  %3069 = vmatprep.subr.mxu0 0.0
  %3070 = vmatpush1.msra.mxu0 0.0
  %3071 = vmatprep.subr.mxu0 0.0
  %3072 = vmatpush1.msra.mxu0 0.0
  %3073 = vmatprep.subr.mxu0 0.0
  %3074 = vmatpush1.msra.mxu0 0.0
  %3075 = vmatprep.subr.mxu0 0.0
  %3076 = vmatpush1.msra.mxu0 0.0
  %3077 = vmatprep.subr.mxu0 0.0
  %3078 = vmatpush1.msra.mxu0 0.0
  %3079 = vmatprep.subr.mxu0 0.0
  %3080 = vmatpush1.msra.mxu0 0.0
  %3081 = vmatprep.subr.mxu0 0.0
  %3082 = vmatpush1.msra.mxu0 0.0
  %3083 = vmatprep.subr.mxu0 0.0
  %3084 = vmatpush1.msra.mxu0 0.0
  %3085 = vmatprep.subr.mxu0 0.0
  %3086 = vmatpush1.msra.mxu0 0.0
  %3087 = vmatprep.subr.mxu0 0.0
  %3088 = vmatpush1.msra.mxu0 0.0
  %3089 = vmatprep.subr.mxu0 0.0
  %3090 = vmatpush1.msra.mxu0 0.0
  %3091 = vmatprep.subr.mxu0 0.0
  %3092 = vmatpush1.msra.mxu0 0.0
  %3093 = vmatprep.subr.mxu0 0.0
  %3094 = vmatpush1.msra.mxu0 0.0
  %3095 = vmatprep.subr.mxu0 0.0
  %3096 = vmatpush1.msra.mxu0 0.0
  %3097 = vmatprep.subr.mxu0 0.0
  %3098 = vmatpush1.msra.mxu0 0.0
  %3099 = vmatprep.subr.mxu0 0.0
  %3100 = vmatpush1.msra.mxu0 0.0
  %3101 = vmatprep.subr.mxu0 0.0
  %3102 = vmatpush1.msra.mxu0 0.0
  %3103 = vmatprep.subr.mxu0 0.0
  %3104 = vmatpush1.msra.mxu0 0.0
  %3105 = vmatprep.subr.mxu0 0.0
  %3106 = vmatpush1.msra.mxu0 0.0
  %3107 = vmatprep.subr.mxu0 0.0
  %3108 = vmatpush1.msra.mxu0 0.0
  %3109 = vmatprep.subr.mxu0 0.0
  %3110 = vmatpush1.msra.mxu0 0.0
  %3111 = vmatprep.subr.mxu0 0.0
  %3112 = vmatpush1.msra.mxu0 0.0
  %3113 = vmatprep.subr.mxu0 0.0
  %3114 = vmatpush1.msra.mxu0 0.0
  %3115 = vmatprep.subr.mxu0 0.0
  %3116 = vmatpush1.msra.mxu0 0.0
  %3117 = vmatprep.subr.mxu0 0.0
  %3118 = vmatpush1.msra.mxu0 0.0
  %3119 = vmatprep.subr.mxu0 0.0
  %3120 = vmatpush1.msra.mxu0 0.0
  %3121 = vmatprep.subr.mxu0 0.0
  %3122 = vmatpush1.msra.mxu0 0.0
  %3123 = vmatprep.subr.mxu0 0.0
  %3124 = vmatpush1.msra.mxu0 0.0
  %3125 = vmatprep.subr.mxu0 0.0
  %3126 = vmatpush1.msra.mxu0 0.0
  %3127 = vmatprep.subr.mxu0 0.0
  %3128 = vmatpush1.msra.mxu0 0.0
  %3129 = vmatprep.mubr.f32.mxu0 0.0
  %3130 = vmatmul.mubr.f32.gmra.mrb[0].mxu0 %v3063
  %v3131 = vpop.f32.mrb[0].mxu0
  %v3132 = vadd.f32 0.0, %v3131
  %v3133 = vpop.f32.mrb[0].mxu0
  %3134 = vdwg.mxu0
  %v3136 = vsel %vm141, %v53, 0
  %3138 = vmatprep.subr.mxu0 0.0
  %3139 = vmatpush1.msra.mxu0 %v118
  %3140 = vmatprep.subr.mxu0 0.0
  %3141 = vmatpush1.msra.mxu0 0.0
  %3142 = vmatprep.subr.mxu0 0.0
  %3143 = vmatpush1.msra.mxu0 0.0
  %3144 = vmatprep.subr.mxu0 0.0
  %3145 = vmatpush1.msra.mxu0 0.0
  %3146 = vmatprep.subr.mxu0 0.0
  %3147 = vmatpush1.msra.mxu0 0.0
  %3148 = vmatprep.subr.mxu0 0.0
  %3149 = vmatpush1.msra.mxu0 0.0
  %3150 = vmatprep.subr.mxu0 0.0
  %3151 = vmatpush1.msra.mxu0 0.0
  %3152 = vmatprep.subr.mxu0 0.0
  %3153 = vmatpush1.msra.mxu0 0.0
  %3154 = vmatprep.subr.mxu0 0.0
  %3155 = vmatpush1.msra.mxu0 0.0
  %3156 = vmatprep.subr.mxu0 0.0
  %3157 = vmatpush1.msra.mxu0 0.0
  %3158 = vmatprep.subr.mxu0 0.0
  %3159 = vmatpush1.msra.mxu0 0.0
  %3160 = vmatprep.subr.mxu0 0.0
  %3161 = vmatpush1.msra.mxu0 0.0
  %3162 = vmatprep.subr.mxu0 0.0
  %3163 = vmatpush1.msra.mxu0 0.0
  %3164 = vmatprep.subr.mxu0 0.0
  %3165 = vmatpush1.msra.mxu0 0.0
  %3166 = vmatprep.subr.mxu0 0.0
  %3167 = vmatpush1.msra.mxu0 0.0
  %3168 = vmatprep.subr.mxu0 0.0
  %3169 = vmatpush1.msra.mxu0 0.0
  %3170 = vmatprep.subr.mxu0 0.0
  %3171 = vmatpush1.msra.mxu0 0.0
  %3172 = vmatprep.subr.mxu0 0.0
  %3173 = vmatpush1.msra.mxu0 0.0
  %3174 = vmatprep.subr.mxu0 0.0
  %3175 = vmatpush1.msra.mxu0 0.0
  %3176 = vmatprep.subr.mxu0 0.0
  %3177 = vmatpush1.msra.mxu0 0.0
  %3178 = vmatprep.subr.mxu0 0.0
  %3179 = vmatpush1.msra.mxu0 0.0
  %3180 = vmatprep.subr.mxu0 0.0
  %3181 = vmatpush1.msra.mxu0 0.0
  %3182 = vmatprep.subr.mxu0 0.0
  %3183 = vmatpush1.msra.mxu0 0.0
  %3184 = vmatprep.subr.mxu0 0.0
  %3185 = vmatpush1.msra.mxu0 0.0
  %3186 = vmatprep.subr.mxu0 0.0
  %3187 = vmatpush1.msra.mxu0 0.0
  %3188 = vmatprep.subr.mxu0 0.0
  %3189 = vmatpush1.msra.mxu0 0.0
  %3190 = vmatprep.subr.mxu0 0.0
  %3191 = vmatpush1.msra.mxu0 0.0
  %3192 = vmatprep.subr.mxu0 0.0
  %3193 = vmatpush1.msra.mxu0 0.0
  %3194 = vmatprep.subr.mxu0 0.0
  %3195 = vmatpush1.msra.mxu0 0.0
  %3196 = vmatprep.subr.mxu0 0.0
  %3197 = vmatpush1.msra.mxu0 0.0
  %3198 = vmatprep.subr.mxu0 0.0
  %3199 = vmatpush1.msra.mxu0 0.0
  %3200 = vmatprep.subr.mxu0 0.0
  %3201 = vmatpush1.msra.mxu0 0.0
  %3202 = vmatprep.mubr.f32.mxu0 0.0
  %3203 = vmatmul.mubr.f32.gmra.mrb[0].mxu0 %v3136
  %v3204 = vpop.f32.mrb[0].mxu0
  %v3205 = vadd.f32 0.0, %v3204
  %v3206 = vpop.f32.mrb[0].mxu0
  %3207 = vdwg.mxu0
  %v3209 = vsel %vm141, %v54, 0
  %3211 = vmatprep.subr.mxu0 0.0
  %3212 = vmatpush1.msra.mxu0 %v119
  %3213 = vmatprep.subr.mxu0 0.0
  %3214 = vmatpush1.msra.mxu0 0.0
  %3215 = vmatprep.subr.mxu0 0.0
  %3216 = vmatpush1.msra.mxu0 0.0
  %3217 = vmatprep.subr.mxu0 0.0
  %3218 = vmatpush1.msra.mxu0 0.0
  %3219 = vmatprep.subr.mxu0 0.0
  %3220 = vmatpush1.msra.mxu0 0.0
  %3221 = vmatprep.subr.mxu0 0.0
  %3222 = vmatpush1.msra.mxu0 0.0
  %3223 = vmatprep.subr.mxu0 0.0
  %3224 = vmatpush1.msra.mxu0 0.0
  %3225 = vmatprep.subr.mxu0 0.0
  %3226 = vmatpush1.msra.mxu0 0.0
  %3227 = vmatprep.subr.mxu0 0.0
  %3228 = vmatpush1.msra.mxu0 0.0
  %3229 = vmatprep.subr.mxu0 0.0
  %3230 = vmatpush1.msra.mxu0 0.0
  %3231 = vmatprep.subr.mxu0 0.0
  %3232 = vmatpush1.msra.mxu0 0.0
  %3233 = vmatprep.subr.mxu0 0.0
  %3234 = vmatpush1.msra.mxu0 0.0
  %3235 = vmatprep.subr.mxu0 0.0
  %3236 = vmatpush1.msra.mxu0 0.0
  %3237 = vmatprep.subr.mxu0 0.0
  %3238 = vmatpush1.msra.mxu0 0.0
  %3239 = vmatprep.subr.mxu0 0.0
  %3240 = vmatpush1.msra.mxu0 0.0
  %3241 = vmatprep.subr.mxu0 0.0
  %3242 = vmatpush1.msra.mxu0 0.0
  %3243 = vmatprep.subr.mxu0 0.0
  %3244 = vmatpush1.msra.mxu0 0.0
  %3245 = vmatprep.subr.mxu0 0.0
  %3246 = vmatpush1.msra.mxu0 0.0
  %3247 = vmatprep.subr.mxu0 0.0
  %3248 = vmatpush1.msra.mxu0 0.0
  %3249 = vmatprep.subr.mxu0 0.0
  %3250 = vmatpush1.msra.mxu0 0.0
  %3251 = vmatprep.subr.mxu0 0.0
  %3252 = vmatpush1.msra.mxu0 0.0
  %3253 = vmatprep.subr.mxu0 0.0
  %3254 = vmatpush1.msra.mxu0 0.0
  %3255 = vmatprep.subr.mxu0 0.0
  %3256 = vmatpush1.msra.mxu0 0.0
  %3257 = vmatprep.subr.mxu0 0.0
  %3258 = vmatpush1.msra.mxu0 0.0
  %3259 = vmatprep.subr.mxu0 0.0
  %3260 = vmatpush1.msra.mxu0 0.0
  %3261 = vmatprep.subr.mxu0 0.0
  %3262 = vmatpush1.msra.mxu0 0.0
  %3263 = vmatprep.subr.mxu0 0.0
  %3264 = vmatpush1.msra.mxu0 0.0
  %3265 = vmatprep.subr.mxu0 0.0
  %3266 = vmatpush1.msra.mxu0 0.0
  %3267 = vmatprep.subr.mxu0 0.0
  %3268 = vmatpush1.msra.mxu0 0.0
  %3269 = vmatprep.subr.mxu0 0.0
  %3270 = vmatpush1.msra.mxu0 0.0
  %3271 = vmatprep.subr.mxu0 0.0
  %3272 = vmatpush1.msra.mxu0 0.0
  %3273 = vmatprep.subr.mxu0 0.0
  %3274 = vmatpush1.msra.mxu0 0.0
  %3275 = vmatprep.mubr.f32.mxu0 0.0
  %3276 = vmatmul.mubr.f32.gmra.mrb[0].mxu0 %v3209
  %v3277 = vpop.f32.mrb[0].mxu0
  %v3278 = vadd.f32 0.0, %v3277
  %v3279 = vpop.f32.mrb[0].mxu0
  %3280 = vdwg.mxu0
  %v3282 = vsel %vm141, %v55, 0
  %3284 = vmatprep.subr.mxu0 0.0
  %3285 = vmatpush1.msra.mxu0 %v120
  %3286 = vmatprep.subr.mxu0 0.0
  %3287 = vmatpush1.msra.mxu0 0.0
  %3288 = vmatprep.subr.mxu0 0.0
  %3289 = vmatpush1.msra.mxu0 0.0
  %3290 = vmatprep.subr.mxu0 0.0
  %3291 = vmatpush1.msra.mxu0 0.0
  %3292 = vmatprep.subr.mxu0 0.0
  %3293 = vmatpush1.msra.mxu0 0.0
  %3294 = vmatprep.subr.mxu0 0.0
  %3295 = vmatpush1.msra.mxu0 0.0
  %3296 = vmatprep.subr.mxu0 0.0
  %3297 = vmatpush1.msra.mxu0 0.0
  %3298 = vmatprep.subr.mxu0 0.0
  %3299 = vmatpush1.msra.mxu0 0.0
  %3300 = vmatprep.subr.mxu0 0.0
  %3301 = vmatpush1.msra.mxu0 0.0
  %3302 = vmatprep.subr.mxu0 0.0
  %3303 = vmatpush1.msra.mxu0 0.0
  %3304 = vmatprep.subr.mxu0 0.0
  %3305 = vmatpush1.msra.mxu0 0.0
  %3306 = vmatprep.subr.mxu0 0.0
  %3307 = vmatpush1.msra.mxu0 0.0
  %3308 = vmatprep.subr.mxu0 0.0
  %3309 = vmatpush1.msra.mxu0 0.0
  %3310 = vmatprep.subr.mxu0 0.0
  %3311 = vmatpush1.msra.mxu0 0.0
  %3312 = vmatprep.subr.mxu0 0.0
  %3313 = vmatpush1.msra.mxu0 0.0
  %3314 = vmatprep.subr.mxu0 0.0
  %3315 = vmatpush1.msra.mxu0 0.0
  %3316 = vmatprep.subr.mxu0 0.0
  %3317 = vmatpush1.msra.mxu0 0.0
  %3318 = vmatprep.subr.mxu0 0.0
  %3319 = vmatpush1.msra.mxu0 0.0
  %3320 = vmatprep.subr.mxu0 0.0
  %3321 = vmatpush1.msra.mxu0 0.0
  %3322 = vmatprep.subr.mxu0 0.0
  %3323 = vmatpush1.msra.mxu0 0.0
  %3324 = vmatprep.subr.mxu0 0.0
  %3325 = vmatpush1.msra.mxu0 0.0
  %3326 = vmatprep.subr.mxu0 0.0
  %3327 = vmatpush1.msra.mxu0 0.0
  %3328 = vmatprep.subr.mxu0 0.0
  %3329 = vmatpush1.msra.mxu0 0.0
  %3330 = vmatprep.subr.mxu0 0.0
  %3331 = vmatpush1.msra.mxu0 0.0
  %3332 = vmatprep.subr.mxu0 0.0
  %3333 = vmatpush1.msra.mxu0 0.0
  %3334 = vmatprep.subr.mxu0 0.0
  %3335 = vmatpush1.msra.mxu0 0.0
  %3336 = vmatprep.subr.mxu0 0.0
  %3337 = vmatpush1.msra.mxu0 0.0
  %3338 = vmatprep.subr.mxu0 0.0
  %3339 = vmatpush1.msra.mxu0 0.0
  %3340 = vmatprep.subr.mxu0 0.0
  %3341 = vmatpush1.msra.mxu0 0.0
  %3342 = vmatprep.subr.mxu0 0.0
  %3343 = vmatpush1.msra.mxu0 0.0
  %3344 = vmatprep.subr.mxu0 0.0
  %3345 = vmatpush1.msra.mxu0 0.0
  %3346 = vmatprep.subr.mxu0 0.0
  %3347 = vmatpush1.msra.mxu0 0.0
  %3348 = vmatprep.mubr.f32.mxu0 0.0
  %3349 = vmatmul.mubr.f32.gmra.mrb[0].mxu0 %v3282
  %v3350 = vpop.f32.mrb[0].mxu0
  %v3351 = vadd.f32 0.0, %v3350
  %v3352 = vpop.f32.mrb[0].mxu0
  %3353 = vdwg.mxu0
  %v3355 = vsel %vm141, %v56, 0
  %3357 = vmatprep.subr.mxu0 0.0
  %3358 = vmatpush1.msra.mxu0 %v121
  %3359 = vmatprep.subr.mxu0 0.0
  %3360 = vmatpush1.msra.mxu0 0.0
  %3361 = vmatprep.subr.mxu0 0.0
  %3362 = vmatpush1.msra.mxu0 0.0
  %3363 = vmatprep.subr.mxu0 0.0
  %3364 = vmatpush1.msra.mxu0 0.0
  %3365 = vmatprep.subr.mxu0 0.0
  %3366 = vmatpush1.msra.mxu0 0.0
  %3367 = vmatprep.subr.mxu0 0.0
  %3368 = vmatpush1.msra.mxu0 0.0
  %3369 = vmatprep.subr.mxu0 0.0
  %3370 = vmatpush1.msra.mxu0 0.0
  %3371 = vmatprep.subr.mxu0 0.0
  %3372 = vmatpush1.msra.mxu0 0.0
  %3373 = vmatprep.subr.mxu0 0.0
  %3374 = vmatpush1.msra.mxu0 0.0
  %3375 = vmatprep.subr.mxu0 0.0
  %3376 = vmatpush1.msra.mxu0 0.0
  %3377 = vmatprep.subr.mxu0 0.0
  %3378 = vmatpush1.msra.mxu0 0.0
  %3379 = vmatprep.subr.mxu0 0.0
  %3380 = vmatpush1.msra.mxu0 0.0
  %3381 = vmatprep.subr.mxu0 0.0
  %3382 = vmatpush1.msra.mxu0 0.0
  %3383 = vmatprep.subr.mxu0 0.0
  %3384 = vmatpush1.msra.mxu0 0.0
  %3385 = vmatprep.subr.mxu0 0.0
  %3386 = vmatpush1.msra.mxu0 0.0
  %3387 = vmatprep.subr.mxu0 0.0
  %3388 = vmatpush1.msra.mxu0 0.0
  %3389 = vmatprep.subr.mxu0 0.0
  %3390 = vmatpush1.msra.mxu0 0.0
  %3391 = vmatprep.subr.mxu0 0.0
  %3392 = vmatpush1.msra.mxu0 0.0
  %3393 = vmatprep.subr.mxu0 0.0
  %3394 = vmatpush1.msra.mxu0 0.0
  %3395 = vmatprep.subr.mxu0 0.0
  %3396 = vmatpush1.msra.mxu0 0.0
  %3397 = vmatprep.subr.mxu0 0.0
  %3398 = vmatpush1.msra.mxu0 0.0
  %3399 = vmatprep.subr.mxu0 0.0
  %3400 = vmatpush1.msra.mxu0 0.0
  %3401 = vmatprep.subr.mxu0 0.0
  %3402 = vmatpush1.msra.mxu0 0.0
  %3403 = vmatprep.subr.mxu0 0.0
  %3404 = vmatpush1.msra.mxu0 0.0
  %3405 = vmatprep.subr.mxu0 0.0
  %3406 = vmatpush1.msra.mxu0 0.0
  %3407 = vmatprep.subr.mxu0 0.0
  %3408 = vmatpush1.msra.mxu0 0.0
  %3409 = vmatprep.subr.mxu0 0.0
  %3410 = vmatpush1.msra.mxu0 0.0
  %3411 = vmatprep.subr.mxu0 0.0
  %3412 = vmatpush1.msra.mxu0 0.0
  %3413 = vmatprep.subr.mxu0 0.0
  %3414 = vmatpush1.msra.mxu0 0.0
  %3415 = vmatprep.subr.mxu0 0.0
  %3416 = vmatpush1.msra.mxu0 0.0
  %3417 = vmatprep.subr.mxu0 0.0
  %3418 = vmatpush1.msra.mxu0 0.0
  %3419 = vmatprep.subr.mxu0 0.0
  %3420 = vmatpush1.msra.mxu0 0.0
  %3421 = vmatprep.mubr.f32.mxu0 0.0
  %3422 = vmatmul.mubr.f32.gmra.mrb[0].mxu0 %v3355
  %v3423 = vpop.f32.mrb[0].mxu0
  %v3424 = vadd.f32 0.0, %v3423
  %v3425 = vpop.f32.mrb[0].mxu0
  %3426 = vdwg.mxu0
  %v3428 = vsel %vm141, %v57, 0
  %3430 = vmatprep.subr.mxu0 0.0
  %3431 = vmatpush1.msra.mxu0 %v122
  %3432 = vmatprep.subr.mxu0 0.0
  %3433 = vmatpush1.msra.mxu0 0.0
  %3434 = vmatprep.subr.mxu0 0.0
  %3435 = vmatpush1.msra.mxu0 0.0
  %3436 = vmatprep.subr.mxu0 0.0
  %3437 = vmatpush1.msra.mxu0 0.0
  %3438 = vmatprep.subr.mxu0 0.0
  %3439 = vmatpush1.msra.mxu0 0.0
  %3440 = vmatprep.subr.mxu0 0.0
  %3441 = vmatpush1.msra.mxu0 0.0
  %3442 = vmatprep.subr.mxu0 0.0
  %3443 = vmatpush1.msra.mxu0 0.0
  %3444 = vmatprep.subr.mxu0 0.0
  %3445 = vmatpush1.msra.mxu0 0.0
  %3446 = vmatprep.subr.mxu0 0.0
  %3447 = vmatpush1.msra.mxu0 0.0
  %3448 = vmatprep.subr.mxu0 0.0
  %3449 = vmatpush1.msra.mxu0 0.0
  %3450 = vmatprep.subr.mxu0 0.0
  %3451 = vmatpush1.msra.mxu0 0.0
  %3452 = vmatprep.subr.mxu0 0.0
  %3453 = vmatpush1.msra.mxu0 0.0
  %3454 = vmatprep.subr.mxu0 0.0
  %3455 = vmatpush1.msra.mxu0 0.0
  %3456 = vmatprep.subr.mxu0 0.0
  %3457 = vmatpush1.msra.mxu0 0.0
  %3458 = vmatprep.subr.mxu0 0.0
  %3459 = vmatpush1.msra.mxu0 0.0
  %3460 = vmatprep.subr.mxu0 0.0
  %3461 = vmatpush1.msra.mxu0 0.0
  %3462 = vmatprep.subr.mxu0 0.0
  %3463 = vmatpush1.msra.mxu0 0.0
  %3464 = vmatprep.subr.mxu0 0.0
  %3465 = vmatpush1.msra.mxu0 0.0
  %3466 = vmatprep.subr.mxu0 0.0
  %3467 = vmatpush1.msra.mxu0 0.0
  %3468 = vmatprep.subr.mxu0 0.0
  %3469 = vmatpush1.msra.mxu0 0.0
  %3470 = vmatprep.subr.mxu0 0.0
  %3471 = vmatpush1.msra.mxu0 0.0
  %3472 = vmatprep.subr.mxu0 0.0
  %3473 = vmatpush1.msra.mxu0 0.0
  %3474 = vmatprep.subr.mxu0 0.0
  %3475 = vmatpush1.msra.mxu0 0.0
  %3476 = vmatprep.subr.mxu0 0.0
  %3477 = vmatpush1.msra.mxu0 0.0
  %3478 = vmatprep.subr.mxu0 0.0
  %3479 = vmatpush1.msra.mxu0 0.0
  %3480 = vmatprep.subr.mxu0 0.0
  %3481 = vmatpush1.msra.mxu0 0.0
  %3482 = vmatprep.subr.mxu0 0.0
  %3483 = vmatpush1.msra.mxu0 0.0
  %3484 = vmatprep.subr.mxu0 0.0
  %3485 = vmatpush1.msra.mxu0 0.0
  %3486 = vmatprep.subr.mxu0 0.0
  %3487 = vmatpush1.msra.mxu0 0.0
  %3488 = vmatprep.subr.mxu0 0.0
  %3489 = vmatpush1.msra.mxu0 0.0
  %3490 = vmatprep.subr.mxu0 0.0
  %3491 = vmatpush1.msra.mxu0 0.0
  %3492 = vmatprep.subr.mxu0 0.0
  %3493 = vmatpush1.msra.mxu0 0.0
  %3494 = vmatprep.mubr.f32.mxu0 0.0
  %3495 = vmatmul.mubr.f32.gmra.mrb[0].mxu0 %v3428
  %v3496 = vpop.f32.mrb[0].mxu0
  %v3497 = vadd.f32 0.0, %v3496
  %v3498 = vpop.f32.mrb[0].mxu0
  %3499 = vdwg.mxu0
  %v3501 = vsel %vm141, %v58, 0
  %3503 = vmatprep.subr.mxu0 0.0
  %3504 = vmatpush1.msra.mxu0 %v123
  %3505 = vmatprep.subr.mxu0 0.0
  %3506 = vmatpush1.msra.mxu0 0.0
  %3507 = vmatprep.subr.mxu0 0.0
  %3508 = vmatpush1.msra.mxu0 0.0
  %3509 = vmatprep.subr.mxu0 0.0
  %3510 = vmatpush1.msra.mxu0 0.0
  %3511 = vmatprep.subr.mxu0 0.0
  %3512 = vmatpush1.msra.mxu0 0.0
  %3513 = vmatprep.subr.mxu0 0.0
  %3514 = vmatpush1.msra.mxu0 0.0
  %3515 = vmatprep.subr.mxu0 0.0
  %3516 = vmatpush1.msra.mxu0 0.0
  %3517 = vmatprep.subr.mxu0 0.0
  %3518 = vmatpush1.msra.mxu0 0.0
  %3519 = vmatprep.subr.mxu0 0.0
  %3520 = vmatpush1.msra.mxu0 0.0
  %3521 = vmatprep.subr.mxu0 0.0
  %3522 = vmatpush1.msra.mxu0 0.0
  %3523 = vmatprep.subr.mxu0 0.0
  %3524 = vmatpush1.msra.mxu0 0.0
  %3525 = vmatprep.subr.mxu0 0.0
  %3526 = vmatpush1.msra.mxu0 0.0
  %3527 = vmatprep.subr.mxu0 0.0
  %3528 = vmatpush1.msra.mxu0 0.0
  %3529 = vmatprep.subr.mxu0 0.0
  %3530 = vmatpush1.msra.mxu0 0.0
  %3531 = vmatprep.subr.mxu0 0.0
  %3532 = vmatpush1.msra.mxu0 0.0
  %3533 = vmatprep.subr.mxu0 0.0
  %3534 = vmatpush1.msra.mxu0 0.0
  %3535 = vmatprep.subr.mxu0 0.0
  %3536 = vmatpush1.msra.mxu0 0.0
  %3537 = vmatprep.subr.mxu0 0.0
  %3538 = vmatpush1.msra.mxu0 0.0
  %3539 = vmatprep.subr.mxu0 0.0
  %3540 = vmatpush1.msra.mxu0 0.0
  %3541 = vmatprep.subr.mxu0 0.0
  %3542 = vmatpush1.msra.mxu0 0.0
  %3543 = vmatprep.subr.mxu0 0.0
  %3544 = vmatpush1.msra.mxu0 0.0
  %3545 = vmatprep.subr.mxu0 0.0
  %3546 = vmatpush1.msra.mxu0 0.0
  %3547 = vmatprep.subr.mxu0 0.0
  %3548 = vmatpush1.msra.mxu0 0.0
  %3549 = vmatprep.subr.mxu0 0.0
  %3550 = vmatpush1.msra.mxu0 0.0
  %3551 = vmatprep.subr.mxu0 0.0
  %3552 = vmatpush1.msra.mxu0 0.0
  %3553 = vmatprep.subr.mxu0 0.0
  %3554 = vmatpush1.msra.mxu0 0.0
  %3555 = vmatprep.subr.mxu0 0.0
  %3556 = vmatpush1.msra.mxu0 0.0
  %3557 = vmatprep.subr.mxu0 0.0
  %3558 = vmatpush1.msra.mxu0 0.0
  %3559 = vmatprep.subr.mxu0 0.0
  %3560 = vmatpush1.msra.mxu0 0.0
  %3561 = vmatprep.subr.mxu0 0.0
  %3562 = vmatpush1.msra.mxu0 0.0
  %3563 = vmatprep.subr.mxu0 0.0
  %3564 = vmatpush1.msra.mxu0 0.0
  %3565 = vmatprep.subr.mxu0 0.0
  %3566 = vmatpush1.msra.mxu0 0.0
  %3567 = vmatprep.mubr.f32.mxu0 0.0
  %3568 = vmatmul.mubr.f32.gmra.mrb[0].mxu0 %v3501
  %v3569 = vpop.f32.mrb[0].mxu0
  %v3570 = vadd.f32 0.0, %v3569
  %v3571 = vpop.f32.mrb[0].mxu0
  %3572 = vdwg.mxu0
  %v3574 = vsel %vm141, %v59, 0
  %3576 = vmatprep.subr.mxu0 0.0
  %3577 = vmatpush1.msra.mxu0 %v124
  %3578 = vmatprep.subr.mxu0 0.0
  %3579 = vmatpush1.msra.mxu0 0.0
  %3580 = vmatprep.subr.mxu0 0.0
  %3581 = vmatpush1.msra.mxu0 0.0
  %3582 = vmatprep.subr.mxu0 0.0
  %3583 = vmatpush1.msra.mxu0 0.0
  %3584 = vmatprep.subr.mxu0 0.0
  %3585 = vmatpush1.msra.mxu0 0.0
  %3586 = vmatprep.subr.mxu0 0.0
  %3587 = vmatpush1.msra.mxu0 0.0
  %3588 = vmatprep.subr.mxu0 0.0
  %3589 = vmatpush1.msra.mxu0 0.0
  %3590 = vmatprep.subr.mxu0 0.0
  %3591 = vmatpush1.msra.mxu0 0.0
  %3592 = vmatprep.subr.mxu0 0.0
  %3593 = vmatpush1.msra.mxu0 0.0
  %3594 = vmatprep.subr.mxu0 0.0
  %3595 = vmatpush1.msra.mxu0 0.0
  %3596 = vmatprep.subr.mxu0 0.0
  %3597 = vmatpush1.msra.mxu0 0.0
  %3598 = vmatprep.subr.mxu0 0.0
  %3599 = vmatpush1.msra.mxu0 0.0
  %3600 = vmatprep.subr.mxu0 0.0
  %3601 = vmatpush1.msra.mxu0 0.0
  %3602 = vmatprep.subr.mxu0 0.0
  %3603 = vmatpush1.msra.mxu0 0.0
  %3604 = vmatprep.subr.mxu0 0.0
  %3605 = vmatpush1.msra.mxu0 0.0
  %3606 = vmatprep.subr.mxu0 0.0
  %3607 = vmatpush1.msra.mxu0 0.0
  %3608 = vmatprep.subr.mxu0 0.0
  %3609 = vmatpush1.msra.mxu0 0.0
  %3610 = vmatprep.subr.mxu0 0.0
  %3611 = vmatpush1.msra.mxu0 0.0
  %3612 = vmatprep.subr.mxu0 0.0
  %3613 = vmatpush1.msra.mxu0 0.0
  %3614 = vmatprep.subr.mxu0 0.0
  %3615 = vmatpush1.msra.mxu0 0.0
  %3616 = vmatprep.subr.mxu0 0.0
  %3617 = vmatpush1.msra.mxu0 0.0
  %3618 = vmatprep.subr.mxu0 0.0
  %3619 = vmatpush1.msra.mxu0 0.0
  %3620 = vmatprep.subr.mxu0 0.0
  %3621 = vmatpush1.msra.mxu0 0.0
  %3622 = vmatprep.subr.mxu0 0.0
  %3623 = vmatpush1.msra.mxu0 0.0
  %3624 = vmatprep.subr.mxu0 0.0
  %3625 = vmatpush1.msra.mxu0 0.0
  %3626 = vmatprep.subr.mxu0 0.0
  %3627 = vmatpush1.msra.mxu0 0.0
  %3628 = vmatprep.subr.mxu0 0.0
  %3629 = vmatpush1.msra.mxu0 0.0
  %3630 = vmatprep.subr.mxu0 0.0
  %3631 = vmatpush1.msra.mxu0 0.0
  %3632 = vmatprep.subr.mxu0 0.0
  %3633 = vmatpush1.msra.mxu0 0.0
  %3634 = vmatprep.subr.mxu0 0.0
  %3635 = vmatpush1.msra.mxu0 0.0
  %3636 = vmatprep.subr.mxu0 0.0
  %3637 = vmatpush1.msra.mxu0 0.0
  %3638 = vmatprep.subr.mxu0 0.0
  %3639 = vmatpush1.msra.mxu0 0.0
  %3640 = vmatprep.mubr.f32.mxu0 0.0
  %3641 = vmatmul.mubr.f32.gmra.mrb[0].mxu0 %v3574
  %v3642 = vpop.f32.mrb[0].mxu0
  %v3643 = vadd.f32 0.0, %v3642
  %v3644 = vpop.f32.mrb[0].mxu0
  %3645 = vdwg.mxu0
  %v3647 = vsel %vm141, %v60, 0
  %3649 = vmatprep.subr.mxu0 0.0
  %3650 = vmatpush1.msra.mxu0 %v125
  %3651 = vmatprep.subr.mxu0 0.0
  %3652 = vmatpush1.msra.mxu0 0.0
  %3653 = vmatprep.subr.mxu0 0.0
  %3654 = vmatpush1.msra.mxu0 0.0
  %3655 = vmatprep.subr.mxu0 0.0
  %3656 = vmatpush1.msra.mxu0 0.0
  %3657 = vmatprep.subr.mxu0 0.0
  %3658 = vmatpush1.msra.mxu0 0.0
  %3659 = vmatprep.subr.mxu0 0.0
  %3660 = vmatpush1.msra.mxu0 0.0
  %3661 = vmatprep.subr.mxu0 0.0
  %3662 = vmatpush1.msra.mxu0 0.0
  %3663 = vmatprep.subr.mxu0 0.0
  %3664 = vmatpush1.msra.mxu0 0.0
  %3665 = vmatprep.subr.mxu0 0.0
  %3666 = vmatpush1.msra.mxu0 0.0
  %3667 = vmatprep.subr.mxu0 0.0
  %3668 = vmatpush1.msra.mxu0 0.0
  %3669 = vmatprep.subr.mxu0 0.0
  %3670 = vmatpush1.msra.mxu0 0.0
  %3671 = vmatprep.subr.mxu0 0.0
  %3672 = vmatpush1.msra.mxu0 0.0
  %3673 = vmatprep.subr.mxu0 0.0
  %3674 = vmatpush1.msra.mxu0 0.0
  %3675 = vmatprep.subr.mxu0 0.0
  %3676 = vmatpush1.msra.mxu0 0.0
  %3677 = vmatprep.subr.mxu0 0.0
  %3678 = vmatpush1.msra.mxu0 0.0
  %3679 = vmatprep.subr.mxu0 0.0
  %3680 = vmatpush1.msra.mxu0 0.0
  %3681 = vmatprep.subr.mxu0 0.0
  %3682 = vmatpush1.msra.mxu0 0.0
  %3683 = vmatprep.subr.mxu0 0.0
  %3684 = vmatpush1.msra.mxu0 0.0
  %3685 = vmatprep.subr.mxu0 0.0
  %3686 = vmatpush1.msra.mxu0 0.0
  %3687 = vmatprep.subr.mxu0 0.0
  %3688 = vmatpush1.msra.mxu0 0.0
  %3689 = vmatprep.subr.mxu0 0.0
  %3690 = vmatpush1.msra.mxu0 0.0
  %3691 = vmatprep.subr.mxu0 0.0
  %3692 = vmatpush1.msra.mxu0 0.0
  %3693 = vmatprep.subr.mxu0 0.0
  %3694 = vmatpush1.msra.mxu0 0.0
  %3695 = vmatprep.subr.mxu0 0.0
  %3696 = vmatpush1.msra.mxu0 0.0
  %3697 = vmatprep.subr.mxu0 0.0
  %3698 = vmatpush1.msra.mxu0 0.0
  %3699 = vmatprep.subr.mxu0 0.0
  %3700 = vmatpush1.msra.mxu0 0.0
  %3701 = vmatprep.subr.mxu0 0.0
  %3702 = vmatpush1.msra.mxu0 0.0
  %3703 = vmatprep.subr.mxu0 0.0
  %3704 = vmatpush1.msra.mxu0 0.0
  %3705 = vmatprep.subr.mxu0 0.0
  %3706 = vmatpush1.msra.mxu0 0.0
  %3707 = vmatprep.subr.mxu0 0.0
  %3708 = vmatpush1.msra.mxu0 0.0
  %3709 = vmatprep.subr.mxu0 0.0
  %3710 = vmatpush1.msra.mxu0 0.0
  %3711 = vmatprep.subr.mxu0 0.0
  %3712 = vmatpush1.msra.mxu0 0.0
  %3713 = vmatprep.mubr.f32.mxu0 0.0
  %3714 = vmatmul.mubr.f32.gmra.mrb[0].mxu0 %v3647
  %v3715 = vpop.f32.mrb[0].mxu0
  %v3716 = vadd.f32 0.0, %v3715
  %v3717 = vpop.f32.mrb[0].mxu0
  %3718 = vdwg.mxu0
  %v3720 = vsel %vm141, %v61, 0
  %3722 = vmatprep.subr.mxu0 0.0
  %3723 = vmatpush1.msra.mxu0 %v126
  %3724 = vmatprep.subr.mxu0 0.0
  %3725 = vmatpush1.msra.mxu0 0.0
  %3726 = vmatprep.subr.mxu0 0.0
  %3727 = vmatpush1.msra.mxu0 0.0
  %3728 = vmatprep.subr.mxu0 0.0
  %3729 = vmatpush1.msra.mxu0 0.0
  %3730 = vmatprep.subr.mxu0 0.0
  %3731 = vmatpush1.msra.mxu0 0.0
  %3732 = vmatprep.subr.mxu0 0.0
  %3733 = vmatpush1.msra.mxu0 0.0
  %3734 = vmatprep.subr.mxu0 0.0
  %3735 = vmatpush1.msra.mxu0 0.0
  %3736 = vmatprep.subr.mxu0 0.0
  %3737 = vmatpush1.msra.mxu0 0.0
  %3738 = vmatprep.subr.mxu0 0.0
  %3739 = vmatpush1.msra.mxu0 0.0
  %3740 = vmatprep.subr.mxu0 0.0
  %3741 = vmatpush1.msra.mxu0 0.0
  %3742 = vmatprep.subr.mxu0 0.0
  %3743 = vmatpush1.msra.mxu0 0.0
  %3744 = vmatprep.subr.mxu0 0.0
  %3745 = vmatpush1.msra.mxu0 0.0
  %3746 = vmatprep.subr.mxu0 0.0
  %3747 = vmatpush1.msra.mxu0 0.0
  %3748 = vmatprep.subr.mxu0 0.0
  %3749 = vmatpush1.msra.mxu0 0.0
  %3750 = vmatprep.subr.mxu0 0.0
  %3751 = vmatpush1.msra.mxu0 0.0
  %3752 = vmatprep.subr.mxu0 0.0
  %3753 = vmatpush1.msra.mxu0 0.0
  %3754 = vmatprep.subr.mxu0 0.0
  %3755 = vmatpush1.msra.mxu0 0.0
  %3756 = vmatprep.subr.mxu0 0.0
  %3757 = vmatpush1.msra.mxu0 0.0
  %3758 = vmatprep.subr.mxu0 0.0
  %3759 = vmatpush1.msra.mxu0 0.0
  %3760 = vmatprep.subr.mxu0 0.0
  %3761 = vmatpush1.msra.mxu0 0.0
  %3762 = vmatprep.subr.mxu0 0.0
  %3763 = vmatpush1.msra.mxu0 0.0
  %3764 = vmatprep.subr.mxu0 0.0
  %3765 = vmatpush1.msra.mxu0 0.0
  %3766 = vmatprep.subr.mxu0 0.0
  %3767 = vmatpush1.msra.mxu0 0.0
  %3768 = vmatprep.subr.mxu0 0.0
  %3769 = vmatpush1.msra.mxu0 0.0
  %3770 = vmatprep.subr.mxu0 0.0
  %3771 = vmatpush1.msra.mxu0 0.0
  %3772 = vmatprep.subr.mxu0 0.0
  %3773 = vmatpush1.msra.mxu0 0.0
  %3774 = vmatprep.subr.mxu0 0.0
  %3775 = vmatpush1.msra.mxu0 0.0
  %3776 = vmatprep.subr.mxu0 0.0
  %3777 = vmatpush1.msra.mxu0 0.0
  %3778 = vmatprep.subr.mxu0 0.0
  %3779 = vmatpush1.msra.mxu0 0.0
  %3780 = vmatprep.subr.mxu0 0.0
  %3781 = vmatpush1.msra.mxu0 0.0
  %3782 = vmatprep.subr.mxu0 0.0
  %3783 = vmatpush1.msra.mxu0 0.0
  %3784 = vmatprep.subr.mxu0 0.0
  %3785 = vmatpush1.msra.mxu0 0.0
  %3786 = vmatprep.mubr.f32.mxu0 0.0
  %3787 = vmatmul.mubr.f32.gmra.mrb[0].mxu0 %v3720
  %v3788 = vpop.f32.mrb[0].mxu0
  %v3789 = vadd.f32 0.0, %v3788
  %v3790 = vpop.f32.mrb[0].mxu0
  %3791 = vdwg.mxu0
  %v3793 = vsel %vm141, %v62, 0
  %3795 = vmatprep.subr.mxu0 0.0
  %3796 = vmatpush1.msra.mxu0 %v127
  %3797 = vmatprep.subr.mxu0 0.0
  %3798 = vmatpush1.msra.mxu0 0.0
  %3799 = vmatprep.subr.mxu0 0.0
  %3800 = vmatpush1.msra.mxu0 0.0
  %3801 = vmatprep.subr.mxu0 0.0
  %3802 = vmatpush1.msra.mxu0 0.0
  %3803 = vmatprep.subr.mxu0 0.0
  %3804 = vmatpush1.msra.mxu0 0.0
  %3805 = vmatprep.subr.mxu0 0.0
  %3806 = vmatpush1.msra.mxu0 0.0
  %3807 = vmatprep.subr.mxu0 0.0
  %3808 = vmatpush1.msra.mxu0 0.0
  %3809 = vmatprep.subr.mxu0 0.0
  %3810 = vmatpush1.msra.mxu0 0.0
  %3811 = vmatprep.subr.mxu0 0.0
  %3812 = vmatpush1.msra.mxu0 0.0
  %3813 = vmatprep.subr.mxu0 0.0
  %3814 = vmatpush1.msra.mxu0 0.0
  %3815 = vmatprep.subr.mxu0 0.0
  %3816 = vmatpush1.msra.mxu0 0.0
  %3817 = vmatprep.subr.mxu0 0.0
  %3818 = vmatpush1.msra.mxu0 0.0
  %3819 = vmatprep.subr.mxu0 0.0
  %3820 = vmatpush1.msra.mxu0 0.0
  %3821 = vmatprep.subr.mxu0 0.0
  %3822 = vmatpush1.msra.mxu0 0.0
  %3823 = vmatprep.subr.mxu0 0.0
  %3824 = vmatpush1.msra.mxu0 0.0
  %3825 = vmatprep.subr.mxu0 0.0
  %3826 = vmatpush1.msra.mxu0 0.0
  %3827 = vmatprep.subr.mxu0 0.0
  %3828 = vmatpush1.msra.mxu0 0.0
  %3829 = vmatprep.subr.mxu0 0.0
  %3830 = vmatpush1.msra.mxu0 0.0
  %3831 = vmatprep.subr.mxu0 0.0
  %3832 = vmatpush1.msra.mxu0 0.0
  %3833 = vmatprep.subr.mxu0 0.0
  %3834 = vmatpush1.msra.mxu0 0.0
  %3835 = vmatprep.subr.mxu0 0.0
  %3836 = vmatpush1.msra.mxu0 0.0
  %3837 = vmatprep.subr.mxu0 0.0
  %3838 = vmatpush1.msra.mxu0 0.0
  %3839 = vmatprep.subr.mxu0 0.0
  %3840 = vmatpush1.msra.mxu0 0.0
  %3841 = vmatprep.subr.mxu0 0.0
  %3842 = vmatpush1.msra.mxu0 0.0
  %3843 = vmatprep.subr.mxu0 0.0
  %3844 = vmatpush1.msra.mxu0 0.0
  %3845 = vmatprep.subr.mxu0 0.0
  %3846 = vmatpush1.msra.mxu0 0.0
  %3847 = vmatprep.subr.mxu0 0.0
  %3848 = vmatpush1.msra.mxu0 0.0
  %3849 = vmatprep.subr.mxu0 0.0
  %3850 = vmatpush1.msra.mxu0 0.0
  %3851 = vmatprep.subr.mxu0 0.0
  %3852 = vmatpush1.msra.mxu0 0.0
  %3853 = vmatprep.subr.mxu0 0.0
  %3854 = vmatpush1.msra.mxu0 0.0
  %3855 = vmatprep.subr.mxu0 0.0
  %3856 = vmatpush1.msra.mxu0 0.0
  %3857 = vmatprep.subr.mxu0 0.0
  %3858 = vmatpush1.msra.mxu0 0.0
  %3859 = vmatprep.mubr.f32.mxu0 0.0
  %3860 = vmatmul.mubr.f32.gmra.mrb[0].mxu0 %v3793
  %v3861 = vpop.f32.mrb[0].mxu0
  %v3862 = vadd.f32 0.0, %v3861
  %v3863 = vpop.f32.mrb[0].mxu0
  %3864 = vdwg.mxu0
  %v3866 = vsel %vm141, %v63, 0
  %3868 = vmatprep.subr.mxu0 0.0
  %3869 = vmatpush1.msra.mxu0 %v128
  %3870 = vmatprep.subr.mxu0 0.0
  %3871 = vmatpush1.msra.mxu0 0.0
  %3872 = vmatprep.subr.mxu0 0.0
  %3873 = vmatpush1.msra.mxu0 0.0
  %3874 = vmatprep.subr.mxu0 0.0
  %3875 = vmatpush1.msra.mxu0 0.0
  %3876 = vmatprep.subr.mxu0 0.0
  %3877 = vmatpush1.msra.mxu0 0.0
  %3878 = vmatprep.subr.mxu0 0.0
  %3879 = vmatpush1.msra.mxu0 0.0
  %3880 = vmatprep.subr.mxu0 0.0
  %3881 = vmatpush1.msra.mxu0 0.0
  %3882 = vmatprep.subr.mxu0 0.0
  %3883 = vmatpush1.msra.mxu0 0.0
  %3884 = vmatprep.subr.mxu0 0.0
  %3885 = vmatpush1.msra.mxu0 0.0
  %3886 = vmatprep.subr.mxu0 0.0
  %3887 = vmatpush1.msra.mxu0 0.0
  %3888 = vmatprep.subr.mxu0 0.0
  %3889 = vmatpush1.msra.mxu0 0.0
  %3890 = vmatprep.subr.mxu0 0.0
  %3891 = vmatpush1.msra.mxu0 0.0
  %3892 = vmatprep.subr.mxu0 0.0
  %3893 = vmatpush1.msra.mxu0 0.0
  %3894 = vmatprep.subr.mxu0 0.0
  %3895 = vmatpush1.msra.mxu0 0.0
  %3896 = vmatprep.subr.mxu0 0.0
  %3897 = vmatpush1.msra.mxu0 0.0
  %3898 = vmatprep.subr.mxu0 0.0
  %3899 = vmatpush1.msra.mxu0 0.0
  %3900 = vmatprep.subr.mxu0 0.0
  %3901 = vmatpush1.msra.mxu0 0.0
  %3902 = vmatprep.subr.mxu0 0.0
  %3903 = vmatpush1.msra.mxu0 0.0
  %3904 = vmatprep.subr.mxu0 0.0
  %3905 = vmatpush1.msra.mxu0 0.0
  %3906 = vmatprep.subr.mxu0 0.0
  %3907 = vmatpush1.msra.mxu0 0.0
  %3908 = vmatprep.subr.mxu0 0.0
  %3909 = vmatpush1.msra.mxu0 0.0
  %3910 = vmatprep.subr.mxu0 0.0
  %3911 = vmatpush1.msra.mxu0 0.0
  %3912 = vmatprep.subr.mxu0 0.0
  %3913 = vmatpush1.msra.mxu0 0.0
  %3914 = vmatprep.subr.mxu0 0.0
  %3915 = vmatpush1.msra.mxu0 0.0
  %3916 = vmatprep.subr.mxu0 0.0
  %3917 = vmatpush1.msra.mxu0 0.0
  %3918 = vmatprep.subr.mxu0 0.0
  %3919 = vmatpush1.msra.mxu0 0.0
  %3920 = vmatprep.subr.mxu0 0.0
  %3921 = vmatpush1.msra.mxu0 0.0
  %3922 = vmatprep.subr.mxu0 0.0
  %3923 = vmatpush1.msra.mxu0 0.0
  %3924 = vmatprep.subr.mxu0 0.0
  %3925 = vmatpush1.msra.mxu0 0.0
  %3926 = vmatprep.subr.mxu0 0.0
  %3927 = vmatpush1.msra.mxu0 0.0
  %3928 = vmatprep.subr.mxu0 0.0
  %3929 = vmatpush1.msra.mxu0 0.0
  %3930 = vmatprep.subr.mxu0 0.0
  %3931 = vmatpush1.msra.mxu0 0.0
  %3932 = vmatprep.mubr.f32.mxu0 0.0
  %3933 = vmatmul.mubr.f32.gmra.mrb[0].mxu0 %v3866
  %v3934 = vpop.f32.mrb[0].mxu0
  %v3935 = vadd.f32 0.0, %v3934
  %v3936 = vpop.f32.mrb[0].mxu0
  %3937 = vdwg.mxu0
  %v3939 = vsel %vm141, %v64, 0
  %3941 = vmatprep.subr.mxu0 0.0
  %3942 = vmatpush1.msra.mxu0 %v129
  %3943 = vmatprep.subr.mxu0 0.0
  %3944 = vmatpush1.msra.mxu0 0.0
  %3945 = vmatprep.subr.mxu0 0.0
  %3946 = vmatpush1.msra.mxu0 0.0
  %3947 = vmatprep.subr.mxu0 0.0
  %3948 = vmatpush1.msra.mxu0 0.0
  %3949 = vmatprep.subr.mxu0 0.0
  %3950 = vmatpush1.msra.mxu0 0.0
  %3951 = vmatprep.subr.mxu0 0.0
  %3952 = vmatpush1.msra.mxu0 0.0
  %3953 = vmatprep.subr.mxu0 0.0
  %3954 = vmatpush1.msra.mxu0 0.0
  %3955 = vmatprep.subr.mxu0 0.0
  %3956 = vmatpush1.msra.mxu0 0.0
  %3957 = vmatprep.subr.mxu0 0.0
  %3958 = vmatpush1.msra.mxu0 0.0
  %3959 = vmatprep.subr.mxu0 0.0
  %3960 = vmatpush1.msra.mxu0 0.0
  %3961 = vmatprep.subr.mxu0 0.0
  %3962 = vmatpush1.msra.mxu0 0.0
  %3963 = vmatprep.subr.mxu0 0.0
  %3964 = vmatpush1.msra.mxu0 0.0
  %3965 = vmatprep.subr.mxu0 0.0
  %3966 = vmatpush1.msra.mxu0 0.0
  %3967 = vmatprep.subr.mxu0 0.0
  %3968 = vmatpush1.msra.mxu0 0.0
  %3969 = vmatprep.subr.mxu0 0.0
  %3970 = vmatpush1.msra.mxu0 0.0
  %3971 = vmatprep.subr.mxu0 0.0
  %3972 = vmatpush1.msra.mxu0 0.0
  %3973 = vmatprep.subr.mxu0 0.0
  %3974 = vmatpush1.msra.mxu0 0.0
  %3975 = vmatprep.subr.mxu0 0.0
  %3976 = vmatpush1.msra.mxu0 0.0
  %3977 = vmatprep.subr.mxu0 0.0
  %3978 = vmatpush1.msra.mxu0 0.0
  %3979 = vmatprep.subr.mxu0 0.0
  %3980 = vmatpush1.msra.mxu0 0.0
  %3981 = vmatprep.subr.mxu0 0.0
  %3982 = vmatpush1.msra.mxu0 0.0
  %3983 = vmatprep.subr.mxu0 0.0
  %3984 = vmatpush1.msra.mxu0 0.0
  %3985 = vmatprep.subr.mxu0 0.0
  %3986 = vmatpush1.msra.mxu0 0.0
  %3987 = vmatprep.subr.mxu0 0.0
  %3988 = vmatpush1.msra.mxu0 0.0
  %3989 = vmatprep.subr.mxu0 0.0
  %3990 = vmatpush1.msra.mxu0 0.0
  %3991 = vmatprep.subr.mxu0 0.0
  %3992 = vmatpush1.msra.mxu0 0.0
  %3993 = vmatprep.subr.mxu0 0.0
  %3994 = vmatpush1.msra.mxu0 0.0
  %3995 = vmatprep.subr.mxu0 0.0
  %3996 = vmatpush1.msra.mxu0 0.0
  %3997 = vmatprep.subr.mxu0 0.0
  %3998 = vmatpush1.msra.mxu0 0.0
  %3999 = vmatprep.subr.mxu0 0.0
  %4000 = vmatpush1.msra.mxu0 0.0
  %4001 = vmatprep.subr.mxu0 0.0
  %4002 = vmatpush1.msra.mxu0 0.0
  %4003 = vmatprep.subr.mxu0 0.0
  %4004 = vmatpush1.msra.mxu0 0.0
  %4005 = vmatprep.mubr.f32.mxu0 0.0
  %4006 = vmatmul.mubr.f32.gmra.mrb[0].mxu0 %v3939
  %v4007 = vpop.f32.mrb[0].mxu0
  %v4008 = vadd.f32 0.0, %v4007
  %v4009 = vpop.f32.mrb[0].mxu0
  %4010 = vdwg.mxu0
  %v4012 = vsel %vm141, %v65, 0
  %4014 = vmatprep.subr.mxu0 0.0
  %4015 = vmatpush1.msra.mxu0 %v130
  %4016 = vmatprep.subr.mxu0 0.0
  %4017 = vmatpush1.msra.mxu0 0.0
  %4018 = vmatprep.subr.mxu0 0.0
  %4019 = vmatpush1.msra.mxu0 0.0
  %4020 = vmatprep.subr.mxu0 0.0
  %4021 = vmatpush1.msra.mxu0 0.0
  %4022 = vmatprep.subr.mxu0 0.0
  %4023 = vmatpush1.msra.mxu0 0.0
  %4024 = vmatprep.subr.mxu0 0.0
  %4025 = vmatpush1.msra.mxu0 0.0
  %4026 = vmatprep.subr.mxu0 0.0
  %4027 = vmatpush1.msra.mxu0 0.0
  %4028 = vmatprep.subr.mxu0 0.0
  %4029 = vmatpush1.msra.mxu0 0.0
  %4030 = vmatprep.subr.mxu0 0.0
  %4031 = vmatpush1.msra.mxu0 0.0
  %4032 = vmatprep.subr.mxu0 0.0
  %4033 = vmatpush1.msra.mxu0 0.0
  %4034 = vmatprep.subr.mxu0 0.0
  %4035 = vmatpush1.msra.mxu0 0.0
  %4036 = vmatprep.subr.mxu0 0.0
  %4037 = vmatpush1.msra.mxu0 0.0
  %4038 = vmatprep.subr.mxu0 0.0
  %4039 = vmatpush1.msra.mxu0 0.0
  %4040 = vmatprep.subr.mxu0 0.0
  %4041 = vmatpush1.msra.mxu0 0.0
  %4042 = vmatprep.subr.mxu0 0.0
  %4043 = vmatpush1.msra.mxu0 0.0
  %4044 = vmatprep.subr.mxu0 0.0
  %4045 = vmatpush1.msra.mxu0 0.0
  %4046 = vmatprep.subr.mxu0 0.0
  %4047 = vmatpush1.msra.mxu0 0.0
  %4048 = vmatprep.subr.mxu0 0.0
  %4049 = vmatpush1.msra.mxu0 0.0
  %4050 = vmatprep.subr.mxu0 0.0
  %4051 = vmatpush1.msra.mxu0 0.0
  %4052 = vmatprep.subr.mxu0 0.0
  %4053 = vmatpush1.msra.mxu0 0.0
  %4054 = vmatprep.subr.mxu0 0.0
  %4055 = vmatpush1.msra.mxu0 0.0
  %4056 = vmatprep.subr.mxu0 0.0
  %4057 = vmatpush1.msra.mxu0 0.0
  %4058 = vmatprep.subr.mxu0 0.0
  %4059 = vmatpush1.msra.mxu0 0.0
  %4060 = vmatprep.subr.mxu0 0.0
  %4061 = vmatpush1.msra.mxu0 0.0
  %4062 = vmatprep.subr.mxu0 0.0
  %4063 = vmatpush1.msra.mxu0 0.0
  %4064 = vmatprep.subr.mxu0 0.0
  %4065 = vmatpush1.msra.mxu0 0.0
  %4066 = vmatprep.subr.mxu0 0.0
  %4067 = vmatpush1.msra.mxu0 0.0
  %4068 = vmatprep.subr.mxu0 0.0
  %4069 = vmatpush1.msra.mxu0 0.0
  %4070 = vmatprep.subr.mxu0 0.0
  %4071 = vmatpush1.msra.mxu0 0.0
  %4072 = vmatprep.subr.mxu0 0.0
  %4073 = vmatpush1.msra.mxu0 0.0
  %4074 = vmatprep.subr.mxu0 0.0
  %4075 = vmatpush1.msra.mxu0 0.0
  %4076 = vmatprep.subr.mxu0 0.0
  %4077 = vmatpush1.msra.mxu0 0.0
  %4078 = vmatprep.mubr.f32.mxu0 0.0
  %4079 = vmatmul.mubr.f32.gmra.mrb[0].mxu0 %v4012
  %v4080 = vpop.f32.mrb[0].mxu0
  %v4081 = vadd.f32 0.0, %v4080
  %v4082 = vpop.f32.mrb[0].mxu0
  %4083 = vdwg.mxu0
  %v4085 = vsel %vm141, %v66, 0
  %4087 = vmatprep.subr.mxu0 0.0
  %4088 = vmatpush1.msra.mxu0 %v131
  %4089 = vmatprep.subr.mxu0 0.0
  %4090 = vmatpush1.msra.mxu0 0.0
  %4091 = vmatprep.subr.mxu0 0.0
  %4092 = vmatpush1.msra.mxu0 0.0
  %4093 = vmatprep.subr.mxu0 0.0
  %4094 = vmatpush1.msra.mxu0 0.0
  %4095 = vmatprep.subr.mxu0 0.0
  %4096 = vmatpush1.msra.mxu0 0.0
  %4097 = vmatprep.subr.mxu0 0.0
  %4098 = vmatpush1.msra.mxu0 0.0
  %4099 = vmatprep.subr.mxu0 0.0
  %4100 = vmatpush1.msra.mxu0 0.0
  %4101 = vmatprep.subr.mxu0 0.0
  %4102 = vmatpush1.msra.mxu0 0.0
  %4103 = vmatprep.subr.mxu0 0.0
  %4104 = vmatpush1.msra.mxu0 0.0
  %4105 = vmatprep.subr.mxu0 0.0
  %4106 = vmatpush1.msra.mxu0 0.0
  %4107 = vmatprep.subr.mxu0 0.0
  %4108 = vmatpush1.msra.mxu0 0.0
  %4109 = vmatprep.subr.mxu0 0.0
  %4110 = vmatpush1.msra.mxu0 0.0
  %4111 = vmatprep.subr.mxu0 0.0
  %4112 = vmatpush1.msra.mxu0 0.0
  %4113 = vmatprep.subr.mxu0 0.0
  %4114 = vmatpush1.msra.mxu0 0.0
  %4115 = vmatprep.subr.mxu0 0.0
  %4116 = vmatpush1.msra.mxu0 0.0
  %4117 = vmatprep.subr.mxu0 0.0
  %4118 = vmatpush1.msra.mxu0 0.0
  %4119 = vmatprep.subr.mxu0 0.0
  %4120 = vmatpush1.msra.mxu0 0.0
  %4121 = vmatprep.subr.mxu0 0.0
  %4122 = vmatpush1.msra.mxu0 0.0
  %4123 = vmatprep.subr.mxu0 0.0
  %4124 = vmatpush1.msra.mxu0 0.0
  %4125 = vmatprep.subr.mxu0 0.0
  %4126 = vmatpush1.msra.mxu0 0.0
  %4127 = vmatprep.subr.mxu0 0.0
  %4128 = vmatpush1.msra.mxu0 0.0
  %4129 = vmatprep.subr.mxu0 0.0
  %4130 = vmatpush1.msra.mxu0 0.0
  %4131 = vmatprep.subr.mxu0 0.0
  %4132 = vmatpush1.msra.mxu0 0.0
  %4133 = vmatprep.subr.mxu0 0.0
  %4134 = vmatpush1.msra.mxu0 0.0
  %4135 = vmatprep.subr.mxu0 0.0
  %4136 = vmatpush1.msra.mxu0 0.0
  %4137 = vmatprep.subr.mxu0 0.0
  %4138 = vmatpush1.msra.mxu0 0.0
  %4139 = vmatprep.subr.mxu0 0.0
  %4140 = vmatpush1.msra.mxu0 0.0
  %4141 = vmatprep.subr.mxu0 0.0
  %4142 = vmatpush1.msra.mxu0 0.0
  %4143 = vmatprep.subr.mxu0 0.0
  %4144 = vmatpush1.msra.mxu0 0.0
  %4145 = vmatprep.subr.mxu0 0.0
  %4146 = vmatpush1.msra.mxu0 0.0
  %4147 = vmatprep.subr.mxu0 0.0
  %4148 = vmatpush1.msra.mxu0 0.0
  %4149 = vmatprep.subr.mxu0 0.0
  %4150 = vmatpush1.msra.mxu0 0.0
  %4151 = vmatprep.mubr.f32.mxu0 0.0
  %4152 = vmatmul.mubr.f32.gmra.mrb[0].mxu0 %v4085
  %v4153 = vpop.f32.mrb[0].mxu0
  %v4154 = vadd.f32 0.0, %v4153
  %v4155 = vpop.f32.mrb[0].mxu0
  %4156 = vdwg.mxu0
  %v4158 = vsel %vm141, %v67, 0
  %4160 = vmatprep.subr.mxu0 0.0
  %4161 = vmatpush1.msra.mxu0 %v132
  %4162 = vmatprep.subr.mxu0 0.0
  %4163 = vmatpush1.msra.mxu0 0.0
  %4164 = vmatprep.subr.mxu0 0.0
  %4165 = vmatpush1.msra.mxu0 0.0
  %4166 = vmatprep.subr.mxu0 0.0
  %4167 = vmatpush1.msra.mxu0 0.0
  %4168 = vmatprep.subr.mxu0 0.0
  %4169 = vmatpush1.msra.mxu0 0.0
  %4170 = vmatprep.subr.mxu0 0.0
  %4171 = vmatpush1.msra.mxu0 0.0
  %4172 = vmatprep.subr.mxu0 0.0
  %4173 = vmatpush1.msra.mxu0 0.0
  %4174 = vmatprep.subr.mxu0 0.0
  %4175 = vmatpush1.msra.mxu0 0.0
  %4176 = vmatprep.subr.mxu0 0.0
  %4177 = vmatpush1.msra.mxu0 0.0
  %4178 = vmatprep.subr.mxu0 0.0
  %4179 = vmatpush1.msra.mxu0 0.0
  %4180 = vmatprep.subr.mxu0 0.0
  %4181 = vmatpush1.msra.mxu0 0.0
  %4182 = vmatprep.subr.mxu0 0.0
  %4183 = vmatpush1.msra.mxu0 0.0
  %4184 = vmatprep.subr.mxu0 0.0
  %4185 = vmatpush1.msra.mxu0 0.0
  %4186 = vmatprep.subr.mxu0 0.0
  %4187 = vmatpush1.msra.mxu0 0.0
  %4188 = vmatprep.subr.mxu0 0.0
  %4189 = vmatpush1.msra.mxu0 0.0
  %4190 = vmatprep.subr.mxu0 0.0
  %4191 = vmatpush1.msra.mxu0 0.0
  %4192 = vmatprep.subr.mxu0 0.0
  %4193 = vmatpush1.msra.mxu0 0.0
  %4194 = vmatprep.subr.mxu0 0.0
  %4195 = vmatpush1.msra.mxu0 0.0
  %4196 = vmatprep.subr.mxu0 0.0
  %4197 = vmatpush1.msra.mxu0 0.0
  %4198 = vmatprep.subr.mxu0 0.0
  %4199 = vmatpush1.msra.mxu0 0.0
  %4200 = vmatprep.subr.mxu0 0.0
  %4201 = vmatpush1.msra.mxu0 0.0
  %4202 = vmatprep.subr.mxu0 0.0
  %4203 = vmatpush1.msra.mxu0 0.0
  %4204 = vmatprep.subr.mxu0 0.0
  %4205 = vmatpush1.msra.mxu0 0.0
  %4206 = vmatprep.subr.mxu0 0.0
  %4207 = vmatpush1.msra.mxu0 0.0
  %4208 = vmatprep.subr.mxu0 0.0
  %4209 = vmatpush1.msra.mxu0 0.0
  %4210 = vmatprep.subr.mxu0 0.0
  %4211 = vmatpush1.msra.mxu0 0.0
  %4212 = vmatprep.subr.mxu0 0.0
  %4213 = vmatpush1.msra.mxu0 0.0
  %4214 = vmatprep.subr.mxu0 0.0
  %4215 = vmatpush1.msra.mxu0 0.0
  %4216 = vmatprep.subr.mxu0 0.0
  %4217 = vmatpush1.msra.mxu0 0.0
  %4218 = vmatprep.subr.mxu0 0.0
  %4219 = vmatpush1.msra.mxu0 0.0
  %4220 = vmatprep.subr.mxu0 0.0
  %4221 = vmatpush1.msra.mxu0 0.0
  %4222 = vmatprep.subr.mxu0 0.0
  %4223 = vmatpush1.msra.mxu0 0.0
  %4224 = vmatprep.mubr.f32.mxu0 0.0
  %4225 = vmatmul.mubr.f32.gmra.mrb[0].mxu0 %v4158
  %v4226 = vpop.f32.mrb[0].mxu0
  %v4227 = vadd.f32 0.0, %v4226
  %v4228 = vpop.f32.mrb[0].mxu0
  %4229 = vdwg.mxu0
  %v4231 = vsel %vm141, %v68, 0
  %4233 = vmatprep.subr.mxu0 0.0
  %4234 = vmatpush1.msra.mxu0 %v133
  %4235 = vmatprep.subr.mxu0 0.0
  %4236 = vmatpush1.msra.mxu0 0.0
  %4237 = vmatprep.subr.mxu0 0.0
  %4238 = vmatpush1.msra.mxu0 0.0
  %4239 = vmatprep.subr.mxu0 0.0
  %4240 = vmatpush1.msra.mxu0 0.0
  %4241 = vmatprep.subr.mxu0 0.0
  %4242 = vmatpush1.msra.mxu0 0.0
  %4243 = vmatprep.subr.mxu0 0.0
  %4244 = vmatpush1.msra.mxu0 0.0
  %4245 = vmatprep.subr.mxu0 0.0
  %4246 = vmatpush1.msra.mxu0 0.0
  %4247 = vmatprep.subr.mxu0 0.0
  %4248 = vmatpush1.msra.mxu0 0.0
  %4249 = vmatprep.subr.mxu0 0.0
  %4250 = vmatpush1.msra.mxu0 0.0
  %4251 = vmatprep.subr.mxu0 0.0
  %4252 = vmatpush1.msra.mxu0 0.0
  %4253 = vmatprep.subr.mxu0 0.0
  %4254 = vmatpush1.msra.mxu0 0.0
  %4255 = vmatprep.subr.mxu0 0.0
  %4256 = vmatpush1.msra.mxu0 0.0
  %4257 = vmatprep.subr.mxu0 0.0
  %4258 = vmatpush1.msra.mxu0 0.0
  %4259 = vmatprep.subr.mxu0 0.0
  %4260 = vmatpush1.msra.mxu0 0.0
  %4261 = vmatprep.subr.mxu0 0.0
  %4262 = vmatpush1.msra.mxu0 0.0
  %4263 = vmatprep.subr.mxu0 0.0
  %4264 = vmatpush1.msra.mxu0 0.0
  %4265 = vmatprep.subr.mxu0 0.0
  %4266 = vmatpush1.msra.mxu0 0.0
  %4267 = vmatprep.subr.mxu0 0.0
  %4268 = vmatpush1.msra.mxu0 0.0
  %4269 = vmatprep.subr.mxu0 0.0
  %4270 = vmatpush1.msra.mxu0 0.0
  %4271 = vmatprep.subr.mxu0 0.0
  %4272 = vmatpush1.msra.mxu0 0.0
  %4273 = vmatprep.subr.mxu0 0.0
  %4274 = vmatpush1.msra.mxu0 0.0
  %4275 = vmatprep.subr.mxu0 0.0
  %4276 = vmatpush1.msra.mxu0 0.0
  %4277 = vmatprep.subr.mxu0 0.0
  %4278 = vmatpush1.msra.mxu0 0.0
  %4279 = vmatprep.subr.mxu0 0.0
  %4280 = vmatpush1.msra.mxu0 0.0
  %4281 = vmatprep.subr.mxu0 0.0
  %4282 = vmatpush1.msra.mxu0 0.0
  %4283 = vmatprep.subr.mxu0 0.0
  %4284 = vmatpush1.msra.mxu0 0.0
  %4285 = vmatprep.subr.mxu0 0.0
  %4286 = vmatpush1.msra.mxu0 0.0
  %4287 = vmatprep.subr.mxu0 0.0
  %4288 = vmatpush1.msra.mxu0 0.0
  %4289 = vmatprep.subr.mxu0 0.0
  %4290 = vmatpush1.msra.mxu0 0.0
  %4291 = vmatprep.subr.mxu0 0.0
  %4292 = vmatpush1.msra.mxu0 0.0
  %4293 = vmatprep.subr.mxu0 0.0
  %4294 = vmatpush1.msra.mxu0 0.0
  %4295 = vmatprep.subr.mxu0 0.0
  %4296 = vmatpush1.msra.mxu0 0.0
  %4297 = vmatprep.mubr.f32.mxu0 0.0
  %4298 = vmatmul.mubr.f32.gmra.mrb[0].mxu0 %v4231
  %v4299 = vpop.f32.mrb[0].mxu0
  %v4300 = vadd.f32 0.0, %v4299
  %v4301 = vpop.f32.mrb[0].mxu0
  %4302 = vdwg.mxu0
  %v4304 = vsel %vm141, %v69, 0
  %4306 = vmatprep.subr.mxu0 0.0
  %4307 = vmatpush1.msra.mxu0 %v134
  %4308 = vmatprep.subr.mxu0 0.0
  %4309 = vmatpush1.msra.mxu0 0.0
  %4310 = vmatprep.subr.mxu0 0.0
  %4311 = vmatpush1.msra.mxu0 0.0
  %4312 = vmatprep.subr.mxu0 0.0
  %4313 = vmatpush1.msra.mxu0 0.0
  %4314 = vmatprep.subr.mxu0 0.0
  %4315 = vmatpush1.msra.mxu0 0.0
  %4316 = vmatprep.subr.mxu0 0.0
  %4317 = vmatpush1.msra.mxu0 0.0
  %4318 = vmatprep.subr.mxu0 0.0
  %4319 = vmatpush1.msra.mxu0 0.0
  %4320 = vmatprep.subr.mxu0 0.0
  %4321 = vmatpush1.msra.mxu0 0.0
  %4322 = vmatprep.subr.mxu0 0.0
  %4323 = vmatpush1.msra.mxu0 0.0
  %4324 = vmatprep.subr.mxu0 0.0
  %4325 = vmatpush1.msra.mxu0 0.0
  %4326 = vmatprep.subr.mxu0 0.0
  %4327 = vmatpush1.msra.mxu0 0.0
  %4328 = vmatprep.subr.mxu0 0.0
  %4329 = vmatpush1.msra.mxu0 0.0
  %4330 = vmatprep.subr.mxu0 0.0
  %4331 = vmatpush1.msra.mxu0 0.0
  %4332 = vmatprep.subr.mxu0 0.0
  %4333 = vmatpush1.msra.mxu0 0.0
  %4334 = vmatprep.subr.mxu0 0.0
  %4335 = vmatpush1.msra.mxu0 0.0
  %4336 = vmatprep.subr.mxu0 0.0
  %4337 = vmatpush1.msra.mxu0 0.0
  %4338 = vmatprep.subr.mxu0 0.0
  %4339 = vmatpush1.msra.mxu0 0.0
  %4340 = vmatprep.subr.mxu0 0.0
  %4341 = vmatpush1.msra.mxu0 0.0
  %4342 = vmatprep.subr.mxu0 0.0
  %4343 = vmatpush1.msra.mxu0 0.0
  %4344 = vmatprep.subr.mxu0 0.0
  %4345 = vmatpush1.msra.mxu0 0.0
  %4346 = vmatprep.subr.mxu0 0.0
  %4347 = vmatpush1.msra.mxu0 0.0
  %4348 = vmatprep.subr.mxu0 0.0
  %4349 = vmatpush1.msra.mxu0 0.0
  %4350 = vmatprep.subr.mxu0 0.0
  %4351 = vmatpush1.msra.mxu0 0.0
  %4352 = vmatprep.subr.mxu0 0.0
  %4353 = vmatpush1.msra.mxu0 0.0
  %4354 = vmatprep.subr.mxu0 0.0
  %4355 = vmatpush1.msra.mxu0 0.0
  %4356 = vmatprep.subr.mxu0 0.0
  %4357 = vmatpush1.msra.mxu0 0.0
  %4358 = vmatprep.subr.mxu0 0.0
  %4359 = vmatpush1.msra.mxu0 0.0
  %4360 = vmatprep.subr.mxu0 0.0
  %4361 = vmatpush1.msra.mxu0 0.0
  %4362 = vmatprep.subr.mxu0 0.0
  %4363 = vmatpush1.msra.mxu0 0.0
  %4364 = vmatprep.subr.mxu0 0.0
  %4365 = vmatpush1.msra.mxu0 0.0
  %4366 = vmatprep.subr.mxu0 0.0
  %4367 = vmatpush1.msra.mxu0 0.0
  %4368 = vmatprep.subr.mxu0 0.0
  %4369 = vmatpush1.msra.mxu0 0.0
  %4370 = vmatprep.mubr.f32.mxu0 0.0
  %4371 = vmatmul.mubr.f32.gmra.mrb[0].mxu0 %v4304
  %v4372 = vpop.f32.mrb[0].mxu0
  %v4373 = vadd.f32 0.0, %v4372
  %v4374 = vpop.f32.mrb[0].mxu0
  %4375 = vdwg.mxu0
  %v4377 = vsel %vm141, %v70, 0
  %4379 = vmatprep.subr.mxu0 0.0
  %4380 = vmatpush1.msra.mxu0 %v135
  %4381 = vmatprep.subr.mxu0 0.0
  %4382 = vmatpush1.msra.mxu0 0.0
  %4383 = vmatprep.subr.mxu0 0.0
  %4384 = vmatpush1.msra.mxu0 0.0
  %4385 = vmatprep.subr.mxu0 0.0
  %4386 = vmatpush1.msra.mxu0 0.0
  %4387 = vmatprep.subr.mxu0 0.0
  %4388 = vmatpush1.msra.mxu0 0.0
  %4389 = vmatprep.subr.mxu0 0.0
  %4390 = vmatpush1.msra.mxu0 0.0
  %4391 = vmatprep.subr.mxu0 0.0
  %4392 = vmatpush1.msra.mxu0 0.0
  %4393 = vmatprep.subr.mxu0 0.0
  %4394 = vmatpush1.msra.mxu0 0.0
  %4395 = vmatprep.subr.mxu0 0.0
  %4396 = vmatpush1.msra.mxu0 0.0
  %4397 = vmatprep.subr.mxu0 0.0
  %4398 = vmatpush1.msra.mxu0 0.0
  %4399 = vmatprep.subr.mxu0 0.0
  %4400 = vmatpush1.msra.mxu0 0.0
  %4401 = vmatprep.subr.mxu0 0.0
  %4402 = vmatpush1.msra.mxu0 0.0
  %4403 = vmatprep.subr.mxu0 0.0
  %4404 = vmatpush1.msra.mxu0 0.0
  %4405 = vmatprep.subr.mxu0 0.0
  %4406 = vmatpush1.msra.mxu0 0.0
  %4407 = vmatprep.subr.mxu0 0.0
  %4408 = vmatpush1.msra.mxu0 0.0
  %4409 = vmatprep.subr.mxu0 0.0
  %4410 = vmatpush1.msra.mxu0 0.0
  %4411 = vmatprep.subr.mxu0 0.0
  %4412 = vmatpush1.msra.mxu0 0.0
  %4413 = vmatprep.subr.mxu0 0.0
  %4414 = vmatpush1.msra.mxu0 0.0
  %4415 = vmatprep.subr.mxu0 0.0
  %4416 = vmatpush1.msra.mxu0 0.0
  %4417 = vmatprep.subr.mxu0 0.0
  %4418 = vmatpush1.msra.mxu0 0.0
  %4419 = vmatprep.subr.mxu0 0.0
  %4420 = vmatpush1.msra.mxu0 0.0
  %4421 = vmatprep.subr.mxu0 0.0
  %4422 = vmatpush1.msra.mxu0 0.0
  %4423 = vmatprep.subr.mxu0 0.0
  %4424 = vmatpush1.msra.mxu0 0.0
  %4425 = vmatprep.subr.mxu0 0.0
  %4426 = vmatpush1.msra.mxu0 0.0
  %4427 = vmatprep.subr.mxu0 0.0
  %4428 = vmatpush1.msra.mxu0 0.0
  %4429 = vmatprep.subr.mxu0 0.0
  %4430 = vmatpush1.msra.mxu0 0.0
  %4431 = vmatprep.subr.mxu0 0.0
  %4432 = vmatpush1.msra.mxu0 0.0
  %4433 = vmatprep.subr.mxu0 0.0
  %4434 = vmatpush1.msra.mxu0 0.0
  %4435 = vmatprep.subr.mxu0 0.0
  %4436 = vmatpush1.msra.mxu0 0.0
  %4437 = vmatprep.subr.mxu0 0.0
  %4438 = vmatpush1.msra.mxu0 0.0
  %4439 = vmatprep.subr.mxu0 0.0
  %4440 = vmatpush1.msra.mxu0 0.0
  %4441 = vmatprep.subr.mxu0 0.0
  %4442 = vmatpush1.msra.mxu0 0.0
  %4443 = vmatprep.mubr.f32.mxu0 0.0
  %4444 = vmatmul.mubr.f32.gmra.mrb[0].mxu0 %v4377
  %v4445 = vpop.f32.mrb[0].mxu0
  %v4446 = vadd.f32 0.0, %v4445
  %v4447 = vpop.f32.mrb[0].mxu0
  %4448 = vdwg.mxu0
  %v4450 = vsel %vm141, %v71, 0
  %4452 = vmatprep.subr.mxu0 0.0
  %4453 = vmatpush1.msra.mxu0 %v136
  %4454 = vmatprep.subr.mxu0 0.0
  %4455 = vmatpush1.msra.mxu0 0.0
  %4456 = vmatprep.subr.mxu0 0.0
  %4457 = vmatpush1.msra.mxu0 0.0
  %4458 = vmatprep.subr.mxu0 0.0
  %4459 = vmatpush1.msra.mxu0 0.0
  %4460 = vmatprep.subr.mxu0 0.0
  %4461 = vmatpush1.msra.mxu0 0.0
  %4462 = vmatprep.subr.mxu0 0.0
  %4463 = vmatpush1.msra.mxu0 0.0
  %4464 = vmatprep.subr.mxu0 0.0
  %4465 = vmatpush1.msra.mxu0 0.0
  %4466 = vmatprep.subr.mxu0 0.0
  %4467 = vmatpush1.msra.mxu0 0.0
  %4468 = vmatprep.subr.mxu0 0.0
  %4469 = vmatpush1.msra.mxu0 0.0
  %4470 = vmatprep.subr.mxu0 0.0
  %4471 = vmatpush1.msra.mxu0 0.0
  %4472 = vmatprep.subr.mxu0 0.0
  %4473 = vmatpush1.msra.mxu0 0.0
  %4474 = vmatprep.subr.mxu0 0.0
  %4475 = vmatpush1.msra.mxu0 0.0
  %4476 = vmatprep.subr.mxu0 0.0
  %4477 = vmatpush1.msra.mxu0 0.0
  %4478 = vmatprep.subr.mxu0 0.0
  %4479 = vmatpush1.msra.mxu0 0.0
  %4480 = vmatprep.subr.mxu0 0.0
  %4481 = vmatpush1.msra.mxu0 0.0
  %4482 = vmatprep.subr.mxu0 0.0
  %4483 = vmatpush1.msra.mxu0 0.0
  %4484 = vmatprep.subr.mxu0 0.0
  %4485 = vmatpush1.msra.mxu0 0.0
  %4486 = vmatprep.subr.mxu0 0.0
  %4487 = vmatpush1.msra.mxu0 0.0
  %4488 = vmatprep.subr.mxu0 0.0
  %4489 = vmatpush1.msra.mxu0 0.0
  %4490 = vmatprep.subr.mxu0 0.0
  %4491 = vmatpush1.msra.mxu0 0.0
  %4492 = vmatprep.subr.mxu0 0.0
  %4493 = vmatpush1.msra.mxu0 0.0
  %4494 = vmatprep.subr.mxu0 0.0
  %4495 = vmatpush1.msra.mxu0 0.0
  %4496 = vmatprep.subr.mxu0 0.0
  %4497 = vmatpush1.msra.mxu0 0.0
  %4498 = vmatprep.subr.mxu0 0.0
  %4499 = vmatpush1.msra.mxu0 0.0
  %4500 = vmatprep.subr.mxu0 0.0
  %4501 = vmatpush1.msra.mxu0 0.0
  %4502 = vmatprep.subr.mxu0 0.0
  %4503 = vmatpush1.msra.mxu0 0.0
  %4504 = vmatprep.subr.mxu0 0.0
  %4505 = vmatpush1.msra.mxu0 0.0
  %4506 = vmatprep.subr.mxu0 0.0
  %4507 = vmatpush1.msra.mxu0 0.0
  %4508 = vmatprep.subr.mxu0 0.0
  %4509 = vmatpush1.msra.mxu0 0.0
  %4510 = vmatprep.subr.mxu0 0.0
  %4511 = vmatpush1.msra.mxu0 0.0
  %4512 = vmatprep.subr.mxu0 0.0
  %4513 = vmatpush1.msra.mxu0 0.0
  %4514 = vmatprep.subr.mxu0 0.0
  %4515 = vmatpush1.msra.mxu0 0.0
  %4516 = vmatprep.mubr.f32.mxu0 0.0
  %4517 = vmatmul.mubr.f32.gmra.mrb[0].mxu0 %v4450
  %v4518 = vpop.f32.mrb[0].mxu0
  %v4519 = vadd.f32 0.0, %v4518
  %v4520 = vpop.f32.mrb[0].mxu0
  %4521 = vdwg.mxu0
  %v4523 = vsel %vm141, %v72, 0
  %4525 = vmatprep.subr.mxu0 0.0
  %4526 = vmatpush1.msra.mxu0 %v137
  %4527 = vmatprep.subr.mxu0 0.0
  %4528 = vmatpush1.msra.mxu0 0.0
  %4529 = vmatprep.subr.mxu0 0.0
  %4530 = vmatpush1.msra.mxu0 0.0
  %4531 = vmatprep.subr.mxu0 0.0
  %4532 = vmatpush1.msra.mxu0 0.0
  %4533 = vmatprep.subr.mxu0 0.0
  %4534 = vmatpush1.msra.mxu0 0.0
  %4535 = vmatprep.subr.mxu0 0.0
  %4536 = vmatpush1.msra.mxu0 0.0
  %4537 = vmatprep.subr.mxu0 0.0
  %4538 = vmatpush1.msra.mxu0 0.0
  %4539 = vmatprep.subr.mxu0 0.0
  %4540 = vmatpush1.msra.mxu0 0.0
  %4541 = vmatprep.subr.mxu0 0.0
  %4542 = vmatpush1.msra.mxu0 0.0
  %4543 = vmatprep.subr.mxu0 0.0
  %4544 = vmatpush1.msra.mxu0 0.0
  %4545 = vmatprep.subr.mxu0 0.0
  %4546 = vmatpush1.msra.mxu0 0.0
  %4547 = vmatprep.subr.mxu0 0.0
  %4548 = vmatpush1.msra.mxu0 0.0
  %4549 = vmatprep.subr.mxu0 0.0
  %4550 = vmatpush1.msra.mxu0 0.0
  %4551 = vmatprep.subr.mxu0 0.0
  %4552 = vmatpush1.msra.mxu0 0.0
  %4553 = vmatprep.subr.mxu0 0.0
  %4554 = vmatpush1.msra.mxu0 0.0
  %4555 = vmatprep.subr.mxu0 0.0
  %4556 = vmatpush1.msra.mxu0 0.0
  %4557 = vmatprep.subr.mxu0 0.0
  %4558 = vmatpush1.msra.mxu0 0.0
  %4559 = vmatprep.subr.mxu0 0.0
  %4560 = vmatpush1.msra.mxu0 0.0
  %4561 = vmatprep.subr.mxu0 0.0
  %4562 = vmatpush1.msra.mxu0 0.0
  %4563 = vmatprep.subr.mxu0 0.0
  %4564 = vmatpush1.msra.mxu0 0.0
  %4565 = vmatprep.subr.mxu0 0.0
  %4566 = vmatpush1.msra.mxu0 0.0
  %4567 = vmatprep.subr.mxu0 0.0
  %4568 = vmatpush1.msra.mxu0 0.0
  %4569 = vmatprep.subr.mxu0 0.0
  %4570 = vmatpush1.msra.mxu0 0.0
  %4571 = vmatprep.subr.mxu0 0.0
  %4572 = vmatpush1.msra.mxu0 0.0
  %4573 = vmatprep.subr.mxu0 0.0
  %4574 = vmatpush1.msra.mxu0 0.0
  %4575 = vmatprep.subr.mxu0 0.0
  %4576 = vmatpush1.msra.mxu0 0.0
  %4577 = vmatprep.subr.mxu0 0.0
  %4578 = vmatpush1.msra.mxu0 0.0
  %4579 = vmatprep.subr.mxu0 0.0
  %4580 = vmatpush1.msra.mxu0 0.0
  %4581 = vmatprep.subr.mxu0 0.0
  %4582 = vmatpush1.msra.mxu0 0.0
  %4583 = vmatprep.subr.mxu0 0.0
  %4584 = vmatpush1.msra.mxu0 0.0
  %4585 = vmatprep.subr.mxu0 0.0
  %4586 = vmatpush1.msra.mxu0 0.0
  %4587 = vmatprep.subr.mxu0 0.0
  %4588 = vmatpush1.msra.mxu0 0.0
  %4589 = vmatprep.mubr.f32.mxu0 0.0
  %4590 = vmatmul.mubr.f32.gmra.mrb[0].mxu0 %v4523
  %v4591 = vpop.f32.mrb[0].mxu0
  %v4592 = vadd.f32 0.0, %v4591
  %v4593 = vpop.f32.mrb[0].mxu0
  %4594 = vdwg.mxu0
  %v4596 = vsel %vm141, %v73, 0
  %4598 = vmatprep.subr.mxu0 0.0
  %4599 = vmatpush1.msra.mxu0 %v138
  %4600 = vmatprep.subr.mxu0 0.0
  %4601 = vmatpush1.msra.mxu0 0.0
  %4602 = vmatprep.subr.mxu0 0.0
  %4603 = vmatpush1.msra.mxu0 0.0
  %4604 = vmatprep.subr.mxu0 0.0
  %4605 = vmatpush1.msra.mxu0 0.0
  %4606 = vmatprep.subr.mxu0 0.0
  %4607 = vmatpush1.msra.mxu0 0.0
  %4608 = vmatprep.subr.mxu0 0.0
  %4609 = vmatpush1.msra.mxu0 0.0
  %4610 = vmatprep.subr.mxu0 0.0
  %4611 = vmatpush1.msra.mxu0 0.0
  %4612 = vmatprep.subr.mxu0 0.0
  %4613 = vmatpush1.msra.mxu0 0.0
  %4614 = vmatprep.subr.mxu0 0.0
  %4615 = vmatpush1.msra.mxu0 0.0
  %4616 = vmatprep.subr.mxu0 0.0
  %4617 = vmatpush1.msra.mxu0 0.0
  %4618 = vmatprep.subr.mxu0 0.0
  %4619 = vmatpush1.msra.mxu0 0.0
  %4620 = vmatprep.subr.mxu0 0.0
  %4621 = vmatpush1.msra.mxu0 0.0
  %4622 = vmatprep.subr.mxu0 0.0
  %4623 = vmatpush1.msra.mxu0 0.0
  %4624 = vmatprep.subr.mxu0 0.0
  %4625 = vmatpush1.msra.mxu0 0.0
  %4626 = vmatprep.subr.mxu0 0.0
  %4627 = vmatpush1.msra.mxu0 0.0
  %4628 = vmatprep.subr.mxu0 0.0
  %4629 = vmatpush1.msra.mxu0 0.0
  %4630 = vmatprep.subr.mxu0 0.0
  %4631 = vmatpush1.msra.mxu0 0.0
  %4632 = vmatprep.subr.mxu0 0.0
  %4633 = vmatpush1.msra.mxu0 0.0
  %4634 = vmatprep.subr.mxu0 0.0
  %4635 = vmatpush1.msra.mxu0 0.0
  %4636 = vmatprep.subr.mxu0 0.0
  %4637 = vmatpush1.msra.mxu0 0.0
  %4638 = vmatprep.subr.mxu0 0.0
  %4639 = vmatpush1.msra.mxu0 0.0
  %4640 = vmatprep.subr.mxu0 0.0
  %4641 = vmatpush1.msra.mxu0 0.0
  %4642 = vmatprep.subr.mxu0 0.0
  %4643 = vmatpush1.msra.mxu0 0.0
  %4644 = vmatprep.subr.mxu0 0.0
  %4645 = vmatpush1.msra.mxu0 0.0
  %4646 = vmatprep.subr.mxu0 0.0
  %4647 = vmatpush1.msra.mxu0 0.0
  %4648 = vmatprep.subr.mxu0 0.0
  %4649 = vmatpush1.msra.mxu0 0.0
  %4650 = vmatprep.subr.mxu0 0.0
  %4651 = vmatpush1.msra.mxu0 0.0
  %4652 = vmatprep.subr.mxu0 0.0
  %4653 = vmatpush1.msra.mxu0 0.0
  %4654 = vmatprep.subr.mxu0 0.0
  %4655 = vmatpush1.msra.mxu0 0.0
  %4656 = vmatprep.subr.mxu0 0.0
  %4657 = vmatpush1.msra.mxu0 0.0
  %4658 = vmatprep.subr.mxu0 0.0
  %4659 = vmatpush1.msra.mxu0 0.0
  %4660 = vmatprep.subr.mxu0 0.0
  %4661 = vmatpush1.msra.mxu0 0.0
  %4662 = vmatprep.mubr.f32.mxu0 0.0
  %4663 = vmatmul.mubr.f32.gmra.mrb[0].mxu0 %v4596
  %v4664 = vpop.f32.mrb[0].mxu0
  %v4665 = vadd.f32 0.0, %v4664
  %v4666 = vpop.f32.mrb[0].mxu0
  %4667 = vdwg.mxu0
  %v4669 = vsel %vm141, %v74, 0
  %4671 = vmatprep.subr.mxu0 0.0
  %4672 = vmatpush1.msra.mxu0 %v139
  %4673 = vmatprep.subr.mxu0 0.0
  %4674 = vmatpush1.msra.mxu0 0.0
  %4675 = vmatprep.subr.mxu0 0.0
  %4676 = vmatpush1.msra.mxu0 0.0
  %4677 = vmatprep.subr.mxu0 0.0
  %4678 = vmatpush1.msra.mxu0 0.0
  %4679 = vmatprep.subr.mxu0 0.0
  %4680 = vmatpush1.msra.mxu0 0.0
  %4681 = vmatprep.subr.mxu0 0.0
  %4682 = vmatpush1.msra.mxu0 0.0
  %4683 = vmatprep.subr.mxu0 0.0
  %4684 = vmatpush1.msra.mxu0 0.0
  %4685 = vmatprep.subr.mxu0 0.0
  %4686 = vmatpush1.msra.mxu0 0.0
  %4687 = vmatprep.subr.mxu0 0.0
  %4688 = vmatpush1.msra.mxu0 0.0
  %4689 = vmatprep.subr.mxu0 0.0
  %4690 = vmatpush1.msra.mxu0 0.0
  %4691 = vmatprep.subr.mxu0 0.0
  %4692 = vmatpush1.msra.mxu0 0.0
  %4693 = vmatprep.subr.mxu0 0.0
  %4694 = vmatpush1.msra.mxu0 0.0
  %4695 = vmatprep.subr.mxu0 0.0
  %4696 = vmatpush1.msra.mxu0 0.0
  %4697 = vmatprep.subr.mxu0 0.0
  %4698 = vmatpush1.msra.mxu0 0.0
  %4699 = vmatprep.subr.mxu0 0.0
  %4700 = vmatpush1.msra.mxu0 0.0
  %4701 = vmatprep.subr.mxu0 0.0
  %4702 = vmatpush1.msra.mxu0 0.0
  %4703 = vmatprep.subr.mxu0 0.0
  %4704 = vmatpush1.msra.mxu0 0.0
  %4705 = vmatprep.subr.mxu0 0.0
  %4706 = vmatpush1.msra.mxu0 0.0
  %4707 = vmatprep.subr.mxu0 0.0
  %4708 = vmatpush1.msra.mxu0 0.0
  %4709 = vmatprep.subr.mxu0 0.0
  %4710 = vmatpush1.msra.mxu0 0.0
  %4711 = vmatprep.subr.mxu0 0.0
  %4712 = vmatpush1.msra.mxu0 0.0
  %4713 = vmatprep.subr.mxu0 0.0
  %4714 = vmatpush1.msra.mxu0 0.0
  %4715 = vmatprep.subr.mxu0 0.0
  %4716 = vmatpush1.msra.mxu0 0.0
  %4717 = vmatprep.subr.mxu0 0.0
  %4718 = vmatpush1.msra.mxu0 0.0
  %4719 = vmatprep.subr.mxu0 0.0
  %4720 = vmatpush1.msra.mxu0 0.0
  %4721 = vmatprep.subr.mxu0 0.0
  %4722 = vmatpush1.msra.mxu0 0.0
  %4723 = vmatprep.subr.mxu0 0.0
  %4724 = vmatpush1.msra.mxu0 0.0
  %4725 = vmatprep.subr.mxu0 0.0
  %4726 = vmatpush1.msra.mxu0 0.0
  %4727 = vmatprep.subr.mxu0 0.0
  %4728 = vmatpush1.msra.mxu0 0.0
  %4729 = vmatprep.subr.mxu0 0.0
  %4730 = vmatpush1.msra.mxu0 0.0
  %4731 = vmatprep.subr.mxu0 0.0
  %4732 = vmatpush1.msra.mxu0 0.0
  %4733 = vmatprep.subr.mxu0 0.0
  %4734 = vmatpush1.msra.mxu0 0.0
  %4735 = vmatprep.mubr.f32.mxu0 0.0
  %4736 = vmatmul.mubr.f32.gmra.mrb[0].mxu0 %v4669
  %v4737 = vpop.f32.mrb[0].mxu0
  %v4738 = vadd.f32 0.0, %v4737
  %v4739 = vpop.f32.mrb[0].mxu0
  %4740 = vdwg.mxu0
  %v4742 = vsel %vm141, %v75, 0
  %4744 = vmatprep.subr.mxu0 0.0
  %4745 = vmatpush1.msra.mxu0 %v140
  %4746 = vmatprep.subr.mxu0 0.0
  %4747 = vmatpush1.msra.mxu0 0.0
  %4748 = vmatprep.subr.mxu0 0.0
  %4749 = vmatpush1.msra.mxu0 0.0
  %4750 = vmatprep.subr.mxu0 0.0
  %4751 = vmatpush1.msra.mxu0 0.0
  %4752 = vmatprep.subr.mxu0 0.0
  %4753 = vmatpush1.msra.mxu0 0.0
  %4754 = vmatprep.subr.mxu0 0.0
  %4755 = vmatpush1.msra.mxu0 0.0
  %4756 = vmatprep.subr.mxu0 0.0
  %4757 = vmatpush1.msra.mxu0 0.0
  %4758 = vmatprep.subr.mxu0 0.0
  %4759 = vmatpush1.msra.mxu0 0.0
  %4760 = vmatprep.subr.mxu0 0.0
  %4761 = vmatpush1.msra.mxu0 0.0
  %4762 = vmatprep.subr.mxu0 0.0
  %4763 = vmatpush1.msra.mxu0 0.0
  %4764 = vmatprep.subr.mxu0 0.0
  %4765 = vmatpush1.msra.mxu0 0.0
  %4766 = vmatprep.subr.mxu0 0.0
  %4767 = vmatpush1.msra.mxu0 0.0
  %4768 = vmatprep.subr.mxu0 0.0
  %4769 = vmatpush1.msra.mxu0 0.0
  %4770 = vmatprep.subr.mxu0 0.0
  %4771 = vmatpush1.msra.mxu0 0.0
  %4772 = vmatprep.subr.mxu0 0.0
  %4773 = vmatpush1.msra.mxu0 0.0
  %4774 = vmatprep.subr.mxu0 0.0
  %4775 = vmatpush1.msra.mxu0 0.0
  %4776 = vmatprep.subr.mxu0 0.0
  %4777 = vmatpush1.msra.mxu0 0.0
  %4778 = vmatprep.subr.mxu0 0.0
  %4779 = vmatpush1.msra.mxu0 0.0
  %4780 = vmatprep.subr.mxu0 0.0
  %4781 = vmatpush1.msra.mxu0 0.0
  %4782 = vmatprep.subr.mxu0 0.0
  %4783 = vmatpush1.msra.mxu0 0.0
  %4784 = vmatprep.subr.mxu0 0.0
  %4785 = vmatpush1.msra.mxu0 0.0
  %4786 = vmatprep.subr.mxu0 0.0
  %4787 = vmatpush1.msra.mxu0 0.0
  %4788 = vmatprep.subr.mxu0 0.0
  %4789 = vmatpush1.msra.mxu0 0.0
  %4790 = vmatprep.subr.mxu0 0.0
  %4791 = vmatpush1.msra.mxu0 0.0
  %4792 = vmatprep.subr.mxu0 0.0
  %4793 = vmatpush1.msra.mxu0 0.0
  %4794 = vmatprep.subr.mxu0 0.0
  %4795 = vmatpush1.msra.mxu0 0.0
  %4796 = vmatprep.subr.mxu0 0.0
  %4797 = vmatpush1.msra.mxu0 0.0
  %4798 = vmatprep.subr.mxu0 0.0
  %4799 = vmatpush1.msra.mxu0 0.0
  %4800 = vmatprep.subr.mxu0 0.0
  %4801 = vmatpush1.msra.mxu0 0.0
  %4802 = vmatprep.subr.mxu0 0.0
  %4803 = vmatpush1.msra.mxu0 0.0
  %4804 = vmatprep.subr.mxu0 0.0
  %4805 = vmatpush1.msra.mxu0 0.0
  %4806 = vmatprep.subr.mxu0 0.0
  %4807 = vmatpush1.msra.mxu0 0.0
  %4808 = vmatprep.mubr.f32.mxu0 0.0
  %4809 = vmatmul.mubr.f32.gmra.mrb[0].mxu0 %v4742
  %v4810 = vpop.f32.mrb[0].mxu0
  %v4811 = vadd.f32 0.0, %v4810
  %v4812 = vpop.f32.mrb[0].mxu0
  %4813 = vdwg.mxu0
  %4814 = vmatprep.subr.mxu0 0.0
  %4815 = vmatpush1.msra.mxu0 %v76
  %4816 = vmatprep.subr.mxu0 0.0
  %4817 = vmatpush1.msra.mxu0 0.0
  %4818 = vmatprep.subr.mxu0 0.0
  %4819 = vmatpush1.msra.mxu0 0.0
  %4820 = vmatprep.subr.mxu0 0.0
  %4821 = vmatpush1.msra.mxu0 0.0
  %4822 = vmatprep.subr.mxu0 0.0
  %4823 = vmatpush1.msra.mxu0 0.0
  %4824 = vmatprep.subr.mxu0 0.0
  %4825 = vmatpush1.msra.mxu0 0.0
  %4826 = vmatprep.subr.mxu0 0.0
  %4827 = vmatpush1.msra.mxu0 0.0
  %4828 = vmatprep.subr.mxu0 0.0
  %4829 = vmatpush1.msra.mxu0 0.0
  %4830 = vmatprep.subr.mxu0 0.0
  %4831 = vmatpush1.msra.mxu0 0.0
  %4832 = vmatprep.subr.mxu0 0.0
  %4833 = vmatpush1.msra.mxu0 0.0
  %4834 = vmatprep.subr.mxu0 0.0
  %4835 = vmatpush1.msra.mxu0 0.0
  %4836 = vmatprep.subr.mxu0 0.0
  %4837 = vmatpush1.msra.mxu0 0.0
  %4838 = vmatprep.subr.mxu0 0.0
  %4839 = vmatpush1.msra.mxu0 0.0
  %4840 = vmatprep.subr.mxu0 0.0
  %4841 = vmatpush1.msra.mxu0 0.0
  %4842 = vmatprep.subr.mxu0 0.0
  %4843 = vmatpush1.msra.mxu0 0.0
  %4844 = vmatprep.subr.mxu0 0.0
  %4845 = vmatpush1.msra.mxu0 0.0
  %4846 = vmatprep.subr.mxu0 0.0
  %4847 = vmatpush1.msra.mxu0 0.0
  %4848 = vmatprep.subr.mxu0 0.0
  %4849 = vmatpush1.msra.mxu0 0.0
  %4850 = vmatprep.subr.mxu0 0.0
  %4851 = vmatpush1.msra.mxu0 0.0
  %4852 = vmatprep.subr.mxu0 0.0
  %4853 = vmatpush1.msra.mxu0 0.0
  %4854 = vmatprep.subr.mxu0 0.0
  %4855 = vmatpush1.msra.mxu0 0.0
  %4856 = vmatprep.subr.mxu0 0.0
  %4857 = vmatpush1.msra.mxu0 0.0
  %4858 = vmatprep.subr.mxu0 0.0
  %4859 = vmatpush1.msra.mxu0 0.0
  %4860 = vmatprep.subr.mxu0 0.0
  %4861 = vmatpush1.msra.mxu0 0.0
  %4862 = vmatprep.subr.mxu0 0.0
  %4863 = vmatpush1.msra.mxu0 0.0
  %4864 = vmatprep.subr.mxu0 0.0
  %4865 = vmatpush1.msra.mxu0 0.0
  %4866 = vmatprep.subr.mxu0 0.0
  %4867 = vmatpush1.msra.mxu0 0.0
  %4868 = vmatprep.subr.mxu0 0.0
  %4869 = vmatpush1.msra.mxu0 0.0
  %4870 = vmatprep.subr.mxu0 0.0
  %4871 = vmatpush1.msra.mxu0 0.0
  %4872 = vmatprep.subr.mxu0 0.0
  %4873 = vmatpush1.msra.mxu0 0.0
  %4874 = vmatprep.subr.mxu0 0.0
  %4875 = vmatpush1.msra.mxu0 0.0
  %4876 = vmatprep.subr.mxu0 0.0
  %4877 = vmatpush1.msra.mxu0 0.0
  %4878 = vmatprep.mubr.f32.mxu0 0.0
  %4879 = vmatmul.mubr.f32.gmra.mrb[0].mxu0 %v2479
  %v4880 = vpop.f32.mrb[0].mxu0
  %v4881 = vadd.f32 0.0, %v4880
  %v4882 = vpop.f32.mrb[0].mxu0
  %4883 = vdwg.mxu0
  %4884 = vmatprep.subr.mxu0 0.0
  %4885 = vmatpush1.msra.mxu0 %v77
  %4886 = vmatprep.subr.mxu0 0.0
  %4887 = vmatpush1.msra.mxu0 0.0
  %4888 = vmatprep.subr.mxu0 0.0
  %4889 = vmatpush1.msra.mxu0 0.0
  %4890 = vmatprep.subr.mxu0 0.0
  %4891 = vmatpush1.msra.mxu0 0.0
  %4892 = vmatprep.subr.mxu0 0.0
  %4893 = vmatpush1.msra.mxu0 0.0
  %4894 = vmatprep.subr.mxu0 0.0
  %4895 = vmatpush1.msra.mxu0 0.0
  %4896 = vmatprep.subr.mxu0 0.0
  %4897 = vmatpush1.msra.mxu0 0.0
  %4898 = vmatprep.subr.mxu0 0.0
  %4899 = vmatpush1.msra.mxu0 0.0
  %4900 = vmatprep.subr.mxu0 0.0
  %4901 = vmatpush1.msra.mxu0 0.0
  %4902 = vmatprep.subr.mxu0 0.0
  %4903 = vmatpush1.msra.mxu0 0.0
  %4904 = vmatprep.subr.mxu0 0.0
  %4905 = vmatpush1.msra.mxu0 0.0
  %4906 = vmatprep.subr.mxu0 0.0
  %4907 = vmatpush1.msra.mxu0 0.0
  %4908 = vmatprep.subr.mxu0 0.0
  %4909 = vmatpush1.msra.mxu0 0.0
  %4910 = vmatprep.subr.mxu0 0.0
  %4911 = vmatpush1.msra.mxu0 0.0
  %4912 = vmatprep.subr.mxu0 0.0
  %4913 = vmatpush1.msra.mxu0 0.0
  %4914 = vmatprep.subr.mxu0 0.0
  %4915 = vmatpush1.msra.mxu0 0.0
  %4916 = vmatprep.subr.mxu0 0.0
  %4917 = vmatpush1.msra.mxu0 0.0
  %4918 = vmatprep.subr.mxu0 0.0
  %4919 = vmatpush1.msra.mxu0 0.0
  %4920 = vmatprep.subr.mxu0 0.0
  %4921 = vmatpush1.msra.mxu0 0.0
  %4922 = vmatprep.subr.mxu0 0.0
  %4923 = vmatpush1.msra.mxu0 0.0
  %4924 = vmatprep.subr.mxu0 0.0
  %4925 = vmatpush1.msra.mxu0 0.0
  %4926 = vmatprep.subr.mxu0 0.0
  %4927 = vmatpush1.msra.mxu0 0.0
  %4928 = vmatprep.subr.mxu0 0.0
  %4929 = vmatpush1.msra.mxu0 0.0
  %4930 = vmatprep.subr.mxu0 0.0
  %4931 = vmatpush1.msra.mxu0 0.0
  %4932 = vmatprep.subr.mxu0 0.0
  %4933 = vmatpush1.msra.mxu0 0.0
  %4934 = vmatprep.subr.mxu0 0.0
  %4935 = vmatpush1.msra.mxu0 0.0
  %4936 = vmatprep.subr.mxu0 0.0
  %4937 = vmatpush1.msra.mxu0 0.0
  %4938 = vmatprep.subr.mxu0 0.0
  %4939 = vmatpush1.msra.mxu0 0.0
  %4940 = vmatprep.subr.mxu0 0.0
  %4941 = vmatpush1.msra.mxu0 0.0
  %4942 = vmatprep.subr.mxu0 0.0
  %4943 = vmatpush1.msra.mxu0 0.0
  %4944 = vmatprep.subr.mxu0 0.0
  %4945 = vmatpush1.msra.mxu0 0.0
  %4946 = vmatprep.subr.mxu0 0.0
  %4947 = vmatpush1.msra.mxu0 0.0
  %4948 = vmatprep.mubr.f32.mxu0 0.0
  %4949 = vmatmul.mubr.f32.gmra.mrb[0].mxu0 %v2552
  %v4950 = vpop.f32.mrb[0].mxu0
  %v4951 = vadd.f32 0.0, %v4950
  %v4952 = vpop.f32.mrb[0].mxu0
  %4953 = vdwg.mxu0
  %4954 = vmatprep.subr.mxu0 0.0
  %4955 = vmatpush1.msra.mxu0 %v78
  %4956 = vmatprep.subr.mxu0 0.0
  %4957 = vmatpush1.msra.mxu0 0.0
  %4958 = vmatprep.subr.mxu0 0.0
  %4959 = vmatpush1.msra.mxu0 0.0
  %4960 = vmatprep.subr.mxu0 0.0
  %4961 = vmatpush1.msra.mxu0 0.0
  %4962 = vmatprep.subr.mxu0 0.0
  %4963 = vmatpush1.msra.mxu0 0.0
  %4964 = vmatprep.subr.mxu0 0.0
  %4965 = vmatpush1.msra.mxu0 0.0
  %4966 = vmatprep.subr.mxu0 0.0
  %4967 = vmatpush1.msra.mxu0 0.0
  %4968 = vmatprep.subr.mxu0 0.0
  %4969 = vmatpush1.msra.mxu0 0.0
  %4970 = vmatprep.subr.mxu0 0.0
  %4971 = vmatpush1.msra.mxu0 0.0
  %4972 = vmatprep.subr.mxu0 0.0
  %4973 = vmatpush1.msra.mxu0 0.0
  %4974 = vmatprep.subr.mxu0 0.0
  %4975 = vmatpush1.msra.mxu0 0.0
  %4976 = vmatprep.subr.mxu0 0.0
  %4977 = vmatpush1.msra.mxu0 0.0
  %4978 = vmatprep.subr.mxu0 0.0
  %4979 = vmatpush1.msra.mxu0 0.0
  %4980 = vmatprep.subr.mxu0 0.0
  %4981 = vmatpush1.msra.mxu0 0.0
  %4982 = vmatprep.subr.mxu0 0.0
  %4983 = vmatpush1.msra.mxu0 0.0
  %4984 = vmatprep.subr.mxu0 0.0
  %4985 = vmatpush1.msra.mxu0 0.0
  %4986 = vmatprep.subr.mxu0 0.0
  %4987 = vmatpush1.msra.mxu0 0.0
  %4988 = vmatprep.subr.mxu0 0.0
  %4989 = vmatpush1.msra.mxu0 0.0
  %4990 = vmatprep.subr.mxu0 0.0
  %4991 = vmatpush1.msra.mxu0 0.0
  %4992 = vmatprep.subr.mxu0 0.0
  %4993 = vmatpush1.msra.mxu0 0.0
  %4994 = vmatprep.subr.mxu0 0.0
  %4995 = vmatpush1.msra.mxu0 0.0
  %4996 = vmatprep.subr.mxu0 0.0
  %4997 = vmatpush1.msra.mxu0 0.0
  %4998 = vmatprep.subr.mxu0 0.0
  %4999 = vmatpush1.msra.mxu0 0.0
  %5000 = vmatprep.subr.mxu0 0.0
  %5001 = vmatpush1.msra.mxu0 0.0
  %5002 = vmatprep.subr.mxu0 0.0
  %5003 = vmatpush1.msra.mxu0 0.0
  %5004 = vmatprep.subr.mxu0 0.0
  %5005 = vmatpush1.msra.mxu0 0.0
  %5006 = vmatprep.subr.mxu0 0.0
  %5007 = vmatpush1.msra.mxu0 0.0
  %5008 = vmatprep.subr.mxu0 0.0
  %5009 = vmatpush1.msra.mxu0 0.0
  %5010 = vmatprep.subr.mxu0 0.0
  %5011 = vmatpush1.msra.mxu0 0.0
  %5012 = vmatprep.subr.mxu0 0.0
  %5013 = vmatpush1.msra.mxu0 0.0
  %5014 = vmatprep.subr.mxu0 0.0
  %5015 = vmatpush1.msra.mxu0 0.0
  %5016 = vmatprep.subr.mxu0 0.0
  %5017 = vmatpush1.msra.mxu0 0.0
  %5018 = vmatprep.mubr.f32.mxu0 0.0
  %5019 = vmatmul.mubr.f32.gmra.mrb[0].mxu0 %v2625
  %v5020 = vpop.f32.mrb[0].mxu0
  %v5021 = vadd.f32 0.0, %v5020
  %v5022 = vpop.f32.mrb[0].mxu0
  %5023 = vdwg.mxu0
  %5024 = vmatprep.subr.mxu0 0.0
  %5025 = vmatpush1.msra.mxu0 %v79
  %5026 = vmatprep.subr.mxu0 0.0
  %5027 = vmatpush1.msra.mxu0 0.0
  %5028 = vmatprep.subr.mxu0 0.0
  %5029 = vmatpush1.msra.mxu0 0.0
  %5030 = vmatprep.subr.mxu0 0.0
  %5031 = vmatpush1.msra.mxu0 0.0
  %5032 = vmatprep.subr.mxu0 0.0
  %5033 = vmatpush1.msra.mxu0 0.0
  %5034 = vmatprep.subr.mxu0 0.0
  %5035 = vmatpush1.msra.mxu0 0.0
  %5036 = vmatprep.subr.mxu0 0.0
  %5037 = vmatpush1.msra.mxu0 0.0
  %5038 = vmatprep.subr.mxu0 0.0
  %5039 = vmatpush1.msra.mxu0 0.0
  %5040 = vmatprep.subr.mxu0 0.0
  %5041 = vmatpush1.msra.mxu0 0.0
  %5042 = vmatprep.subr.mxu0 0.0
  %5043 = vmatpush1.msra.mxu0 0.0
  %5044 = vmatprep.subr.mxu0 0.0
  %5045 = vmatpush1.msra.mxu0 0.0
  %5046 = vmatprep.subr.mxu0 0.0
  %5047 = vmatpush1.msra.mxu0 0.0
  %5048 = vmatprep.subr.mxu0 0.0
  %5049 = vmatpush1.msra.mxu0 0.0
  %5050 = vmatprep.subr.mxu0 0.0
  %5051 = vmatpush1.msra.mxu0 0.0
  %5052 = vmatprep.subr.mxu0 0.0
  %5053 = vmatpush1.msra.mxu0 0.0
  %5054 = vmatprep.subr.mxu0 0.0
  %5055 = vmatpush1.msra.mxu0 0.0
  %5056 = vmatprep.subr.mxu0 0.0
  %5057 = vmatpush1.msra.mxu0 0.0
  %5058 = vmatprep.subr.mxu0 0.0
  %5059 = vmatpush1.msra.mxu0 0.0
  %5060 = vmatprep.subr.mxu0 0.0
  %5061 = vmatpush1.msra.mxu0 0.0
  %5062 = vmatprep.subr.mxu0 0.0
  %5063 = vmatpush1.msra.mxu0 0.0
  %5064 = vmatprep.subr.mxu0 0.0
  %5065 = vmatpush1.msra.mxu0 0.0
  %5066 = vmatprep.subr.mxu0 0.0
  %5067 = vmatpush1.msra.mxu0 0.0
  %5068 = vmatprep.subr.mxu0 0.0
  %5069 = vmatpush1.msra.mxu0 0.0
  %5070 = vmatprep.subr.mxu0 0.0
  %5071 = vmatpush1.msra.mxu0 0.0
  %5072 = vmatprep.subr.mxu0 0.0
  %5073 = vmatpush1.msra.mxu0 0.0
  %5074 = vmatprep.subr.mxu0 0.0
  %5075 = vmatpush1.msra.mxu0 0.0
  %5076 = vmatprep.subr.mxu0 0.0
  %5077 = vmatpush1.msra.mxu0 0.0
  %5078 = vmatprep.subr.mxu0 0.0
  %5079 = vmatpush1.msra.mxu0 0.0
  %5080 = vmatprep.subr.mxu0 0.0
  %5081 = vmatpush1.msra.mxu0 0.0
  %5082 = vmatprep.subr.mxu0 0.0
  %5083 = vmatpush1.msra.mxu0 0.0
  %5084 = vmatprep.subr.mxu0 0.0
  %5085 = vmatpush1.msra.mxu0 0.0
  %5086 = vmatprep.subr.mxu0 0.0
  %5087 = vmatpush1.msra.mxu0 0.0
  %5088 = vmatprep.mubr.f32.mxu0 0.0
  %5089 = vmatmul.mubr.f32.gmra.mrb[0].mxu0 %v2698
  %v5090 = vpop.f32.mrb[0].mxu0
  %v5091 = vadd.f32 0.0, %v5090
  %v5092 = vpop.f32.mrb[0].mxu0
  %5093 = vdwg.mxu0
  %5094 = vmatprep.subr.mxu0 0.0
  %5095 = vmatpush1.msra.mxu0 %v80
  %5096 = vmatprep.subr.mxu0 0.0
  %5097 = vmatpush1.msra.mxu0 0.0
  %5098 = vmatprep.subr.mxu0 0.0
  %5099 = vmatpush1.msra.mxu0 0.0
  %5100 = vmatprep.subr.mxu0 0.0
  %5101 = vmatpush1.msra.mxu0 0.0
  %5102 = vmatprep.subr.mxu0 0.0
  %5103 = vmatpush1.msra.mxu0 0.0
  %5104 = vmatprep.subr.mxu0 0.0
  %5105 = vmatpush1.msra.mxu0 0.0
  %5106 = vmatprep.subr.mxu0 0.0
  %5107 = vmatpush1.msra.mxu0 0.0
  %5108 = vmatprep.subr.mxu0 0.0
  %5109 = vmatpush1.msra.mxu0 0.0
  %5110 = vmatprep.subr.mxu0 0.0
  %5111 = vmatpush1.msra.mxu0 0.0
  %5112 = vmatprep.subr.mxu0 0.0
  %5113 = vmatpush1.msra.mxu0 0.0
  %5114 = vmatprep.subr.mxu0 0.0
  %5115 = vmatpush1.msra.mxu0 0.0
  %5116 = vmatprep.subr.mxu0 0.0
  %5117 = vmatpush1.msra.mxu0 0.0
  %5118 = vmatprep.subr.mxu0 0.0
  %5119 = vmatpush1.msra.mxu0 0.0
  %5120 = vmatprep.subr.mxu0 0.0
  %5121 = vmatpush1.msra.mxu0 0.0
  %5122 = vmatprep.subr.mxu0 0.0
  %5123 = vmatpush1.msra.mxu0 0.0
  %5124 = vmatprep.subr.mxu0 0.0
  %5125 = vmatpush1.msra.mxu0 0.0
  %5126 = vmatprep.subr.mxu0 0.0
  %5127 = vmatpush1.msra.mxu0 0.0
  %5128 = vmatprep.subr.mxu0 0.0
  %5129 = vmatpush1.msra.mxu0 0.0
  %5130 = vmatprep.subr.mxu0 0.0
  %5131 = vmatpush1.msra.mxu0 0.0
  %5132 = vmatprep.subr.mxu0 0.0
  %5133 = vmatpush1.msra.mxu0 0.0
  %5134 = vmatprep.subr.mxu0 0.0
  %5135 = vmatpush1.msra.mxu0 0.0
  %5136 = vmatprep.subr.mxu0 0.0
  %5137 = vmatpush1.msra.mxu0 0.0
  %5138 = vmatprep.subr.mxu0 0.0
  %5139 = vmatpush1.msra.mxu0 0.0
  %5140 = vmatprep.subr.mxu0 0.0
  %5141 = vmatpush1.msra.mxu0 0.0
  %5142 = vmatprep.subr.mxu0 0.0
  %5143 = vmatpush1.msra.mxu0 0.0
  %5144 = vmatprep.subr.mxu0 0.0
  %5145 = vmatpush1.msra.mxu0 0.0
  %5146 = vmatprep.subr.mxu0 0.0
  %5147 = vmatpush1.msra.mxu0 0.0
  %5148 = vmatprep.subr.mxu0 0.0
  %5149 = vmatpush1.msra.mxu0 0.0
  %5150 = vmatprep.subr.mxu0 0.0
  %5151 = vmatpush1.msra.mxu0 0.0
  %5152 = vmatprep.subr.mxu0 0.0
  %5153 = vmatpush1.msra.mxu0 0.0
  %5154 = vmatprep.subr.mxu0 0.0
  %5155 = vmatpush1.msra.mxu0 0.0
  %5156 = vmatprep.subr.mxu0 0.0
  %5157 = vmatpush1.msra.mxu0 0.0
  %5158 = vmatprep.mubr.f32.mxu0 0.0
  %5159 = vmatmul.mubr.f32.gmra.mrb[0].mxu0 %v2771
  %v5160 = vpop.f32.mrb[0].mxu0
  %v5161 = vadd.f32 0.0, %v5160
  %v5162 = vpop.f32.mrb[0].mxu0
  %5163 = vdwg.mxu0
  %5164 = vmatprep.subr.mxu0 0.0
  %5165 = vmatpush1.msra.mxu0 %v81
  %5166 = vmatprep.subr.mxu0 0.0
  %5167 = vmatpush1.msra.mxu0 0.0
  %5168 = vmatprep.subr.mxu0 0.0
  %5169 = vmatpush1.msra.mxu0 0.0
  %5170 = vmatprep.subr.mxu0 0.0
  %5171 = vmatpush1.msra.mxu0 0.0
  %5172 = vmatprep.subr.mxu0 0.0
  %5173 = vmatpush1.msra.mxu0 0.0
  %5174 = vmatprep.subr.mxu0 0.0
  %5175 = vmatpush1.msra.mxu0 0.0
  %5176 = vmatprep.subr.mxu0 0.0
  %5177 = vmatpush1.msra.mxu0 0.0
  %5178 = vmatprep.subr.mxu0 0.0
  %5179 = vmatpush1.msra.mxu0 0.0
  %5180 = vmatprep.subr.mxu0 0.0
  %5181 = vmatpush1.msra.mxu0 0.0
  %5182 = vmatprep.subr.mxu0 0.0
  %5183 = vmatpush1.msra.mxu0 0.0
  %5184 = vmatprep.subr.mxu0 0.0
  %5185 = vmatpush1.msra.mxu0 0.0
  %5186 = vmatprep.subr.mxu0 0.0
  %5187 = vmatpush1.msra.mxu0 0.0
  %5188 = vmatprep.subr.mxu0 0.0
  %5189 = vmatpush1.msra.mxu0 0.0
  %5190 = vmatprep.subr.mxu0 0.0
  %5191 = vmatpush1.msra.mxu0 0.0
  %5192 = vmatprep.subr.mxu0 0.0
  %5193 = vmatpush1.msra.mxu0 0.0
  %5194 = vmatprep.subr.mxu0 0.0
  %5195 = vmatpush1.msra.mxu0 0.0
  %5196 = vmatprep.subr.mxu0 0.0
  %5197 = vmatpush1.msra.mxu0 0.0
  %5198 = vmatprep.subr.mxu0 0.0
  %5199 = vmatpush1.msra.mxu0 0.0
  %5200 = vmatprep.subr.mxu0 0.0
  %5201 = vmatpush1.msra.mxu0 0.0
  %5202 = vmatprep.subr.mxu0 0.0
  %5203 = vmatpush1.msra.mxu0 0.0
  %5204 = vmatprep.subr.mxu0 0.0
  %5205 = vmatpush1.msra.mxu0 0.0
  %5206 = vmatprep.subr.mxu0 0.0
  %5207 = vmatpush1.msra.mxu0 0.0
  %5208 = vmatprep.subr.mxu0 0.0
  %5209 = vmatpush1.msra.mxu0 0.0
  %5210 = vmatprep.subr.mxu0 0.0
  %5211 = vmatpush1.msra.mxu0 0.0
  %5212 = vmatprep.subr.mxu0 0.0
  %5213 = vmatpush1.msra.mxu0 0.0
  %5214 = vmatprep.subr.mxu0 0.0
  %5215 = vmatpush1.msra.mxu0 0.0
  %5216 = vmatprep.subr.mxu0 0.0
  %5217 = vmatpush1.msra.mxu0 0.0
  %5218 = vmatprep.subr.mxu0 0.0
  %5219 = vmatpush1.msra.mxu0 0.0
  %5220 = vmatprep.subr.mxu0 0.0
  %5221 = vmatpush1.msra.mxu0 0.0
  %5222 = vmatprep.subr.mxu0 0.0
  %5223 = vmatpush1.msra.mxu0 0.0
  %5224 = vmatprep.subr.mxu0 0.0
  %5225 = vmatpush1.msra.mxu0 0.0
  %5226 = vmatprep.subr.mxu0 0.0
  %5227 = vmatpush1.msra.mxu0 0.0
  %5228 = vmatprep.mubr.f32.mxu0 0.0
  %5229 = vmatmul.mubr.f32.gmra.mrb[0].mxu0 %v2844
  %v5230 = vpop.f32.mrb[0].mxu0
  %v5231 = vadd.f32 0.0, %v5230
  %v5232 = vpop.f32.mrb[0].mxu0
  %5233 = vdwg.mxu0
  %5234 = vmatprep.subr.mxu0 0.0
  %5235 = vmatpush1.msra.mxu0 %v82
  %5236 = vmatprep.subr.mxu0 0.0
  %5237 = vmatpush1.msra.mxu0 0.0
  %5238 = vmatprep.subr.mxu0 0.0
  %5239 = vmatpush1.msra.mxu0 0.0
  %5240 = vmatprep.subr.mxu0 0.0
  %5241 = vmatpush1.msra.mxu0 0.0
  %5242 = vmatprep.subr.mxu0 0.0
  %5243 = vmatpush1.msra.mxu0 0.0
  %5244 = vmatprep.subr.mxu0 0.0
  %5245 = vmatpush1.msra.mxu0 0.0
  %5246 = vmatprep.subr.mxu0 0.0
  %5247 = vmatpush1.msra.mxu0 0.0
  %5248 = vmatprep.subr.mxu0 0.0
  %5249 = vmatpush1.msra.mxu0 0.0
  %5250 = vmatprep.subr.mxu0 0.0
  %5251 = vmatpush1.msra.mxu0 0.0
  %5252 = vmatprep.subr.mxu0 0.0
  %5253 = vmatpush1.msra.mxu0 0.0
  %5254 = vmatprep.subr.mxu0 0.0
  %5255 = vmatpush1.msra.mxu0 0.0
  %5256 = vmatprep.subr.mxu0 0.0
  %5257 = vmatpush1.msra.mxu0 0.0
  %5258 = vmatprep.subr.mxu0 0.0
  %5259 = vmatpush1.msra.mxu0 0.0
  %5260 = vmatprep.subr.mxu0 0.0
  %5261 = vmatpush1.msra.mxu0 0.0
  %5262 = vmatprep.subr.mxu0 0.0
  %5263 = vmatpush1.msra.mxu0 0.0
  %5264 = vmatprep.subr.mxu0 0.0
  %5265 = vmatpush1.msra.mxu0 0.0
  %5266 = vmatprep.subr.mxu0 0.0
  %5267 = vmatpush1.msra.mxu0 0.0
  %5268 = vmatprep.subr.mxu0 0.0
  %5269 = vmatpush1.msra.mxu0 0.0
  %5270 = vmatprep.subr.mxu0 0.0
  %5271 = vmatpush1.msra.mxu0 0.0
  %5272 = vmatprep.subr.mxu0 0.0
  %5273 = vmatpush1.msra.mxu0 0.0
  %5274 = vmatprep.subr.mxu0 0.0
  %5275 = vmatpush1.msra.mxu0 0.0
  %5276 = vmatprep.subr.mxu0 0.0
  %5277 = vmatpush1.msra.mxu0 0.0
  %5278 = vmatprep.subr.mxu0 0.0
  %5279 = vmatpush1.msra.mxu0 0.0
  %5280 = vmatprep.subr.mxu0 0.0
  %5281 = vmatpush1.msra.mxu0 0.0
  %5282 = vmatprep.subr.mxu0 0.0
  %5283 = vmatpush1.msra.mxu0 0.0
  %5284 = vmatprep.subr.mxu0 0.0
  %5285 = vmatpush1.msra.mxu0 0.0
  %5286 = vmatprep.subr.mxu0 0.0
  %5287 = vmatpush1.msra.mxu0 0.0
  %5288 = vmatprep.subr.mxu0 0.0
  %5289 = vmatpush1.msra.mxu0 0.0
  %5290 = vmatprep.subr.mxu0 0.0
  %5291 = vmatpush1.msra.mxu0 0.0
  %5292 = vmatprep.subr.mxu0 0.0
  %5293 = vmatpush1.msra.mxu0 0.0
  %5294 = vmatprep.subr.mxu0 0.0
  %5295 = vmatpush1.msra.mxu0 0.0
  %5296 = vmatprep.subr.mxu0 0.0
  %5297 = vmatpush1.msra.mxu0 0.0
  %5298 = vmatprep.mubr.f32.mxu0 0.0
  %5299 = vmatmul.mubr.f32.gmra.mrb[0].mxu0 %v2917
  %v5300 = vpop.f32.mrb[0].mxu0
  %v5301 = vadd.f32 0.0, %v5300
  %v5302 = vpop.f32.mrb[0].mxu0
  %5303 = vdwg.mxu0
  %5304 = vmatprep.subr.mxu0 0.0
  %5305 = vmatpush1.msra.mxu0 %v83
  %5306 = vmatprep.subr.mxu0 0.0
  %5307 = vmatpush1.msra.mxu0 0.0
  %5308 = vmatprep.subr.mxu0 0.0
  %5309 = vmatpush1.msra.mxu0 0.0
  %5310 = vmatprep.subr.mxu0 0.0
  %5311 = vmatpush1.msra.mxu0 0.0
  %5312 = vmatprep.subr.mxu0 0.0
  %5313 = vmatpush1.msra.mxu0 0.0
  %5314 = vmatprep.subr.mxu0 0.0
  %5315 = vmatpush1.msra.mxu0 0.0
  %5316 = vmatprep.subr.mxu0 0.0
  %5317 = vmatpush1.msra.mxu0 0.0
  %5318 = vmatprep.subr.mxu0 0.0
  %5319 = vmatpush1.msra.mxu0 0.0
  %5320 = vmatprep.subr.mxu0 0.0
  %5321 = vmatpush1.msra.mxu0 0.0
  %5322 = vmatprep.subr.mxu0 0.0
  %5323 = vmatpush1.msra.mxu0 0.0
  %5324 = vmatprep.subr.mxu0 0.0
  %5325 = vmatpush1.msra.mxu0 0.0
  %5326 = vmatprep.subr.mxu0 0.0
  %5327 = vmatpush1.msra.mxu0 0.0
  %5328 = vmatprep.subr.mxu0 0.0
  %5329 = vmatpush1.msra.mxu0 0.0
  %5330 = vmatprep.subr.mxu0 0.0
  %5331 = vmatpush1.msra.mxu0 0.0
  %5332 = vmatprep.subr.mxu0 0.0
  %5333 = vmatpush1.msra.mxu0 0.0
  %5334 = vmatprep.subr.mxu0 0.0
  %5335 = vmatpush1.msra.mxu0 0.0
  %5336 = vmatprep.subr.mxu0 0.0
  %5337 = vmatpush1.msra.mxu0 0.0
  %5338 = vmatprep.subr.mxu0 0.0
  %5339 = vmatpush1.msra.mxu0 0.0
  %5340 = vmatprep.subr.mxu0 0.0
  %5341 = vmatpush1.msra.mxu0 0.0
  %5342 = vmatprep.subr.mxu0 0.0
  %5343 = vmatpush1.msra.mxu0 0.0
  %5344 = vmatprep.subr.mxu0 0.0
  %5345 = vmatpush1.msra.mxu0 0.0
  %5346 = vmatprep.subr.mxu0 0.0
  %5347 = vmatpush1.msra.mxu0 0.0
  %5348 = vmatprep.subr.mxu0 0.0
  %5349 = vmatpush1.msra.mxu0 0.0
  %5350 = vmatprep.subr.mxu0 0.0
  %5351 = vmatpush1.msra.mxu0 0.0
  %5352 = vmatprep.subr.mxu0 0.0
  %5353 = vmatpush1.msra.mxu0 0.0
  %5354 = vmatprep.subr.mxu0 0.0
  %5355 = vmatpush1.msra.mxu0 0.0
  %5356 = vmatprep.subr.mxu0 0.0
  %5357 = vmatpush1.msra.mxu0 0.0
  %5358 = vmatprep.subr.mxu0 0.0
  %5359 = vmatpush1.msra.mxu0 0.0
  %5360 = vmatprep.subr.mxu0 0.0
  %5361 = vmatpush1.msra.mxu0 0.0
  %5362 = vmatprep.subr.mxu0 0.0
  %5363 = vmatpush1.msra.mxu0 0.0
  %5364 = vmatprep.subr.mxu0 0.0
  %5365 = vmatpush1.msra.mxu0 0.0
  %5366 = vmatprep.subr.mxu0 0.0
  %5367 = vmatpush1.msra.mxu0 0.0
  %5368 = vmatprep.mubr.f32.mxu0 0.0
  %5369 = vmatmul.mubr.f32.gmra.mrb[0].mxu0 %v2990
  %v5370 = vpop.f32.mrb[0].mxu0
  %v5371 = vadd.f32 0.0, %v5370
  %v5372 = vpop.f32.mrb[0].mxu0
  %5373 = vdwg.mxu0
  %5374 = vmatprep.subr.mxu0 0.0
  %5375 = vmatpush1.msra.mxu0 %v84
  %5376 = vmatprep.subr.mxu0 0.0
  %5377 = vmatpush1.msra.mxu0 0.0
  %5378 = vmatprep.subr.mxu0 0.0
  %5379 = vmatpush1.msra.mxu0 0.0
  %5380 = vmatprep.subr.mxu0 0.0
  %5381 = vmatpush1.msra.mxu0 0.0
  %5382 = vmatprep.subr.mxu0 0.0
  %5383 = vmatpush1.msra.mxu0 0.0
  %5384 = vmatprep.subr.mxu0 0.0
  %5385 = vmatpush1.msra.mxu0 0.0
  %5386 = vmatprep.subr.mxu0 0.0
  %5387 = vmatpush1.msra.mxu0 0.0
  %5388 = vmatprep.subr.mxu0 0.0
  %5389 = vmatpush1.msra.mxu0 0.0
  %5390 = vmatprep.subr.mxu0 0.0
  %5391 = vmatpush1.msra.mxu0 0.0
  %5392 = vmatprep.subr.mxu0 0.0
  %5393 = vmatpush1.msra.mxu0 0.0
  %5394 = vmatprep.subr.mxu0 0.0
  %5395 = vmatpush1.msra.mxu0 0.0
  %5396 = vmatprep.subr.mxu0 0.0
  %5397 = vmatpush1.msra.mxu0 0.0
  %5398 = vmatprep.subr.mxu0 0.0
  %5399 = vmatpush1.msra.mxu0 0.0
  %5400 = vmatprep.subr.mxu0 0.0
  %5401 = vmatpush1.msra.mxu0 0.0
  %5402 = vmatprep.subr.mxu0 0.0
  %5403 = vmatpush1.msra.mxu0 0.0
  %5404 = vmatprep.subr.mxu0 0.0
  %5405 = vmatpush1.msra.mxu0 0.0
  %5406 = vmatprep.subr.mxu0 0.0
  %5407 = vmatpush1.msra.mxu0 0.0
  %5408 = vmatprep.subr.mxu0 0.0
  %5409 = vmatpush1.msra.mxu0 0.0
  %5410 = vmatprep.subr.mxu0 0.0
  %5411 = vmatpush1.msra.mxu0 0.0
  %5412 = vmatprep.subr.mxu0 0.0
  %5413 = vmatpush1.msra.mxu0 0.0
  %5414 = vmatprep.subr.mxu0 0.0
  %5415 = vmatpush1.msra.mxu0 0.0
  %5416 = vmatprep.subr.mxu0 0.0
  %5417 = vmatpush1.msra.mxu0 0.0
  %5418 = vmatprep.subr.mxu0 0.0
  %5419 = vmatpush1.msra.mxu0 0.0
  %5420 = vmatprep.subr.mxu0 0.0
  %5421 = vmatpush1.msra.mxu0 0.0
  %5422 = vmatprep.subr.mxu0 0.0
  %5423 = vmatpush1.msra.mxu0 0.0
  %5424 = vmatprep.subr.mxu0 0.0
  %5425 = vmatpush1.msra.mxu0 0.0
  %5426 = vmatprep.subr.mxu0 0.0
  %5427 = vmatpush1.msra.mxu0 0.0
  %5428 = vmatprep.subr.mxu0 0.0
  %5429 = vmatpush1.msra.mxu0 0.0
  %5430 = vmatprep.subr.mxu0 0.0
  %5431 = vmatpush1.msra.mxu0 0.0
  %5432 = vmatprep.subr.mxu0 0.0
  %5433 = vmatpush1.msra.mxu0 0.0
  %5434 = vmatprep.subr.mxu0 0.0
  %5435 = vmatpush1.msra.mxu0 0.0
  %5436 = vmatprep.subr.mxu0 0.0
  %5437 = vmatpush1.msra.mxu0 0.0
  %5438 = vmatprep.mubr.f32.mxu0 0.0
  %5439 = vmatmul.mubr.f32.gmra.mrb[0].mxu0 %v3063
  %v5440 = vpop.f32.mrb[0].mxu0
  %v5441 = vadd.f32 0.0, %v5440
  %v5442 = vpop.f32.mrb[0].mxu0
  %5443 = vdwg.mxu0
  %5444 = vmatprep.subr.mxu0 0.0
  %5445 = vmatpush1.msra.mxu0 %v85
  %5446 = vmatprep.subr.mxu0 0.0
  %5447 = vmatpush1.msra.mxu0 0.0
  %5448 = vmatprep.subr.mxu0 0.0
  %5449 = vmatpush1.msra.mxu0 0.0
  %5450 = vmatprep.subr.mxu0 0.0
  %5451 = vmatpush1.msra.mxu0 0.0
  %5452 = vmatprep.subr.mxu0 0.0
  %5453 = vmatpush1.msra.mxu0 0.0
  %5454 = vmatprep.subr.mxu0 0.0
  %5455 = vmatpush1.msra.mxu0 0.0
  %5456 = vmatprep.subr.mxu0 0.0
  %5457 = vmatpush1.msra.mxu0 0.0
  %5458 = vmatprep.subr.mxu0 0.0
  %5459 = vmatpush1.msra.mxu0 0.0
  %5460 = vmatprep.subr.mxu0 0.0
  %5461 = vmatpush1.msra.mxu0 0.0
  %5462 = vmatprep.subr.mxu0 0.0
  %5463 = vmatpush1.msra.mxu0 0.0
  %5464 = vmatprep.subr.mxu0 0.0
  %5465 = vmatpush1.msra.mxu0 0.0
  %5466 = vmatprep.subr.mxu0 0.0
  %5467 = vmatpush1.msra.mxu0 0.0
  %5468 = vmatprep.subr.mxu0 0.0
  %5469 = vmatpush1.msra.mxu0 0.0
  %5470 = vmatprep.subr.mxu0 0.0
  %5471 = vmatpush1.msra.mxu0 0.0
  %5472 = vmatprep.subr.mxu0 0.0
  %5473 = vmatpush1.msra.mxu0 0.0
  %5474 = vmatprep.subr.mxu0 0.0
  %5475 = vmatpush1.msra.mxu0 0.0
  %5476 = vmatprep.subr.mxu0 0.0
  %5477 = vmatpush1.msra.mxu0 0.0
  %5478 = vmatprep.subr.mxu0 0.0
  %5479 = vmatpush1.msra.mxu0 0.0
  %5480 = vmatprep.subr.mxu0 0.0
  %5481 = vmatpush1.msra.mxu0 0.0
  %5482 = vmatprep.subr.mxu0 0.0
  %5483 = vmatpush1.msra.mxu0 0.0
  %5484 = vmatprep.subr.mxu0 0.0
  %5485 = vmatpush1.msra.mxu0 0.0
  %5486 = vmatprep.subr.mxu0 0.0
  %5487 = vmatpush1.msra.mxu0 0.0
  %5488 = vmatprep.subr.mxu0 0.0
  %5489 = vmatpush1.msra.mxu0 0.0
  %5490 = vmatprep.subr.mxu0 0.0
  %5491 = vmatpush1.msra.mxu0 0.0
  %5492 = vmatprep.subr.mxu0 0.0
  %5493 = vmatpush1.msra.mxu0 0.0
  %5494 = vmatprep.subr.mxu0 0.0
  %5495 = vmatpush1.msra.mxu0 0.0
  %5496 = vmatprep.subr.mxu0 0.0
  %5497 = vmatpush1.msra.mxu0 0.0
  %5498 = vmatprep.subr.mxu0 0.0
  %5499 = vmatpush1.msra.mxu0 0.0
  %5500 = vmatprep.subr.mxu0 0.0
  %5501 = vmatpush1.msra.mxu0 0.0
  %5502 = vmatprep.subr.mxu0 0.0
  %5503 = vmatpush1.msra.mxu0 0.0
  %5504 = vmatprep.subr.mxu0 0.0
  %5505 = vmatpush1.msra.mxu0 0.0
  %5506 = vmatprep.subr.mxu0 0.0
  %5507 = vmatpush1.msra.mxu0 0.0
  %5508 = vmatprep.mubr.f32.mxu0 0.0
  %5509 = vmatmul.mubr.f32.gmra.mrb[0].mxu0 %v3136
  %v5510 = vpop.f32.mrb[0].mxu0
  %v5511 = vadd.f32 0.0, %v5510
  %v5512 = vpop.f32.mrb[0].mxu0
  %5513 = vdwg.mxu0
  %5514 = vmatprep.subr.mxu0 0.0
  %5515 = vmatpush1.msra.mxu0 %v86
  %5516 = vmatprep.subr.mxu0 0.0
  %5517 = vmatpush1.msra.mxu0 0.0
  %5518 = vmatprep.subr.mxu0 0.0
  %5519 = vmatpush1.msra.mxu0 0.0
  %5520 = vmatprep.subr.mxu0 0.0
  %5521 = vmatpush1.msra.mxu0 0.0
  %5522 = vmatprep.subr.mxu0 0.0
  %5523 = vmatpush1.msra.mxu0 0.0
  %5524 = vmatprep.subr.mxu0 0.0
  %5525 = vmatpush1.msra.mxu0 0.0
  %5526 = vmatprep.subr.mxu0 0.0
  %5527 = vmatpush1.msra.mxu0 0.0
  %5528 = vmatprep.subr.mxu0 0.0
  %5529 = vmatpush1.msra.mxu0 0.0
  %5530 = vmatprep.subr.mxu0 0.0
  %5531 = vmatpush1.msra.mxu0 0.0
  %5532 = vmatprep.subr.mxu0 0.0
  %5533 = vmatpush1.msra.mxu0 0.0
  %5534 = vmatprep.subr.mxu0 0.0
  %5535 = vmatpush1.msra.mxu0 0.0
  %5536 = vmatprep.subr.mxu0 0.0
  %5537 = vmatpush1.msra.mxu0 0.0
  %5538 = vmatprep.subr.mxu0 0.0
  %5539 = vmatpush1.msra.mxu0 0.0
  %5540 = vmatprep.subr.mxu0 0.0
  %5541 = vmatpush1.msra.mxu0 0.0
  %5542 = vmatprep.subr.mxu0 0.0
  %5543 = vmatpush1.msra.mxu0 0.0
  %5544 = vmatprep.subr.mxu0 0.0
  %5545 = vmatpush1.msra.mxu0 0.0
  %5546 = vmatprep.subr.mxu0 0.0
  %5547 = vmatpush1.msra.mxu0 0.0
  %5548 = vmatprep.subr.mxu0 0.0
  %5549 = vmatpush1.msra.mxu0 0.0
  %5550 = vmatprep.subr.mxu0 0.0
  %5551 = vmatpush1.msra.mxu0 0.0
  %5552 = vmatprep.subr.mxu0 0.0
  %5553 = vmatpush1.msra.mxu0 0.0
  %5554 = vmatprep.subr.mxu0 0.0
  %5555 = vmatpush1.msra.mxu0 0.0
  %5556 = vmatprep.subr.mxu0 0.0
  %5557 = vmatpush1.msra.mxu0 0.0
  %5558 = vmatprep.subr.mxu0 0.0
  %5559 = vmatpush1.msra.mxu0 0.0
  %5560 = vmatprep.subr.mxu0 0.0
  %5561 = vmatpush1.msra.mxu0 0.0
  %5562 = vmatprep.subr.mxu0 0.0
  %5563 = vmatpush1.msra.mxu0 0.0
  %5564 = vmatprep.subr.mxu0 0.0
  %5565 = vmatpush1.msra.mxu0 0.0
  %5566 = vmatprep.subr.mxu0 0.0
  %5567 = vmatpush1.msra.mxu0 0.0
  %5568 = vmatprep.subr.mxu0 0.0
  %5569 = vmatpush1.msra.mxu0 0.0
  %5570 = vmatprep.subr.mxu0 0.0
  %5571 = vmatpush1.msra.mxu0 0.0
  %5572 = vmatprep.subr.mxu0 0.0
  %5573 = vmatpush1.msra.mxu0 0.0
  %5574 = vmatprep.subr.mxu0 0.0
  %5575 = vmatpush1.msra.mxu0 0.0
  %5576 = vmatprep.subr.mxu0 0.0
  %5577 = vmatpush1.msra.mxu0 0.0
  %5578 = vmatprep.mubr.f32.mxu0 0.0
  %5579 = vmatmul.mubr.f32.gmra.mrb[0].mxu0 %v3209
  %v5580 = vpop.f32.mrb[0].mxu0
  %v5581 = vadd.f32 0.0, %v5580
  %v5582 = vpop.f32.mrb[0].mxu0
  %5583 = vdwg.mxu0
  %5584 = vmatprep.subr.mxu0 0.0
  %5585 = vmatpush1.msra.mxu0 %v87
  %5586 = vmatprep.subr.mxu0 0.0
  %5587 = vmatpush1.msra.mxu0 0.0
  %5588 = vmatprep.subr.mxu0 0.0
  %5589 = vmatpush1.msra.mxu0 0.0
  %5590 = vmatprep.subr.mxu0 0.0
  %5591 = vmatpush1.msra.mxu0 0.0
  %5592 = vmatprep.subr.mxu0 0.0
  %5593 = vmatpush1.msra.mxu0 0.0
  %5594 = vmatprep.subr.mxu0 0.0
  %5595 = vmatpush1.msra.mxu0 0.0
  %5596 = vmatprep.subr.mxu0 0.0
  %5597 = vmatpush1.msra.mxu0 0.0
  %5598 = vmatprep.subr.mxu0 0.0
  %5599 = vmatpush1.msra.mxu0 0.0
  %5600 = vmatprep.subr.mxu0 0.0
  %5601 = vmatpush1.msra.mxu0 0.0
  %5602 = vmatprep.subr.mxu0 0.0
  %5603 = vmatpush1.msra.mxu0 0.0
  %5604 = vmatprep.subr.mxu0 0.0
  %5605 = vmatpush1.msra.mxu0 0.0
  %5606 = vmatprep.subr.mxu0 0.0
  %5607 = vmatpush1.msra.mxu0 0.0
  %5608 = vmatprep.subr.mxu0 0.0
  %5609 = vmatpush1.msra.mxu0 0.0
  %5610 = vmatprep.subr.mxu0 0.0
  %5611 = vmatpush1.msra.mxu0 0.0
  %5612 = vmatprep.subr.mxu0 0.0
  %5613 = vmatpush1.msra.mxu0 0.0
  %5614 = vmatprep.subr.mxu0 0.0
  %5615 = vmatpush1.msra.mxu0 0.0
  %5616 = vmatprep.subr.mxu0 0.0
  %5617 = vmatpush1.msra.mxu0 0.0
  %5618 = vmatprep.subr.mxu0 0.0
  %5619 = vmatpush1.msra.mxu0 0.0
  %5620 = vmatprep.subr.mxu0 0.0
  %5621 = vmatpush1.msra.mxu0 0.0
  %5622 = vmatprep.subr.mxu0 0.0
  %5623 = vmatpush1.msra.mxu0 0.0
  %5624 = vmatprep.subr.mxu0 0.0
  %5625 = vmatpush1.msra.mxu0 0.0
  %5626 = vmatprep.subr.mxu0 0.0
  %5627 = vmatpush1.msra.mxu0 0.0
  %5628 = vmatprep.subr.mxu0 0.0
  %5629 = vmatpush1.msra.mxu0 0.0
  %5630 = vmatprep.subr.mxu0 0.0
  %5631 = vmatpush1.msra.mxu0 0.0
  %5632 = vmatprep.subr.mxu0 0.0
  %5633 = vmatpush1.msra.mxu0 0.0
  %5634 = vmatprep.subr.mxu0 0.0
  %5635 = vmatpush1.msra.mxu0 0.0
  %5636 = vmatprep.subr.mxu0 0.0
  %5637 = vmatpush1.msra.mxu0 0.0
  %5638 = vmatprep.subr.mxu0 0.0
  %5639 = vmatpush1.msra.mxu0 0.0
  %5640 = vmatprep.subr.mxu0 0.0
  %5641 = vmatpush1.msra.mxu0 0.0
  %5642 = vmatprep.subr.mxu0 0.0
  %5643 = vmatpush1.msra.mxu0 0.0
  %5644 = vmatprep.subr.mxu0 0.0
  %5645 = vmatpush1.msra.mxu0 0.0
  %5646 = vmatprep.subr.mxu0 0.0
  %5647 = vmatpush1.msra.mxu0 0.0
  %5648 = vmatprep.mubr.f32.mxu0 0.0
  %5649 = vmatmul.mubr.f32.gmra.mrb[0].mxu0 %v3282
  %v5650 = vpop.f32.mrb[0].mxu0
  %v5651 = vadd.f32 0.0, %v5650
  %v5652 = vpop.f32.mrb[0].mxu0
  %5653 = vdwg.mxu0
  %5654 = vmatprep.subr.mxu0 0.0
  %5655 = vmatpush1.msra.mxu0 %v88
  %5656 = vmatprep.subr.mxu0 0.0
  %5657 = vmatpush1.msra.mxu0 0.0
  %5658 = vmatprep.subr.mxu0 0.0
  %5659 = vmatpush1.msra.mxu0 0.0
  %5660 = vmatprep.subr.mxu0 0.0
  %5661 = vmatpush1.msra.mxu0 0.0
  %5662 = vmatprep.subr.mxu0 0.0
  %5663 = vmatpush1.msra.mxu0 0.0
  %5664 = vmatprep.subr.mxu0 0.0
  %5665 = vmatpush1.msra.mxu0 0.0
  %5666 = vmatprep.subr.mxu0 0.0
  %5667 = vmatpush1.msra.mxu0 0.0
  %5668 = vmatprep.subr.mxu0 0.0
  %5669 = vmatpush1.msra.mxu0 0.0
  %5670 = vmatprep.subr.mxu0 0.0
  %5671 = vmatpush1.msra.mxu0 0.0
  %5672 = vmatprep.subr.mxu0 0.0
  %5673 = vmatpush1.msra.mxu0 0.0
  %5674 = vmatprep.subr.mxu0 0.0
  %5675 = vmatpush1.msra.mxu0 0.0
  %5676 = vmatprep.subr.mxu0 0.0
  %5677 = vmatpush1.msra.mxu0 0.0
  %5678 = vmatprep.subr.mxu0 0.0
  %5679 = vmatpush1.msra.mxu0 0.0
  %5680 = vmatprep.subr.mxu0 0.0
  %5681 = vmatpush1.msra.mxu0 0.0
  %5682 = vmatprep.subr.mxu0 0.0
  %5683 = vmatpush1.msra.mxu0 0.0
  %5684 = vmatprep.subr.mxu0 0.0
  %5685 = vmatpush1.msra.mxu0 0.0
  %5686 = vmatprep.subr.mxu0 0.0
  %5687 = vmatpush1.msra.mxu0 0.0
  %5688 = vmatprep.subr.mxu0 0.0
  %5689 = vmatpush1.msra.mxu0 0.0
  %5690 = vmatprep.subr.mxu0 0.0
  %5691 = vmatpush1.msra.mxu0 0.0
  %5692 = vmatprep.subr.mxu0 0.0
  %5693 = vmatpush1.msra.mxu0 0.0
  %5694 = vmatprep.subr.mxu0 0.0
  %5695 = vmatpush1.msra.mxu0 0.0
  %5696 = vmatprep.subr.mxu0 0.0
  %5697 = vmatpush1.msra.mxu0 0.0
  %5698 = vmatprep.subr.mxu0 0.0
  %5699 = vmatpush1.msra.mxu0 0.0
  %5700 = vmatprep.subr.mxu0 0.0
  %5701 = vmatpush1.msra.mxu0 0.0
  %5702 = vmatprep.subr.mxu0 0.0
  %5703 = vmatpush1.msra.mxu0 0.0
  %5704 = vmatprep.subr.mxu0 0.0
  %5705 = vmatpush1.msra.mxu0 0.0
  %5706 = vmatprep.subr.mxu0 0.0
  %5707 = vmatpush1.msra.mxu0 0.0
  %5708 = vmatprep.subr.mxu0 0.0
  %5709 = vmatpush1.msra.mxu0 0.0
  %5710 = vmatprep.subr.mxu0 0.0
  %5711 = vmatpush1.msra.mxu0 0.0
  %5712 = vmatprep.subr.mxu0 0.0
  %5713 = vmatpush1.msra.mxu0 0.0
  %5714 = vmatprep.subr.mxu0 0.0
  %5715 = vmatpush1.msra.mxu0 0.0
  %5716 = vmatprep.subr.mxu0 0.0
  %5717 = vmatpush1.msra.mxu0 0.0
  %5718 = vmatprep.mubr.f32.mxu0 0.0
  %5719 = vmatmul.mubr.f32.gmra.mrb[0].mxu0 %v3355
  %v5720 = vpop.f32.mrb[0].mxu0
  %v5721 = vadd.f32 0.0, %v5720
  %v5722 = vpop.f32.mrb[0].mxu0
  %5723 = vdwg.mxu0
  %5724 = vmatprep.subr.mxu0 0.0
  %5725 = vmatpush1.msra.mxu0 %v89
  %5726 = vmatprep.subr.mxu0 0.0
  %5727 = vmatpush1.msra.mxu0 0.0
  %5728 = vmatprep.subr.mxu0 0.0
  %5729 = vmatpush1.msra.mxu0 0.0
  %5730 = vmatprep.subr.mxu0 0.0
  %5731 = vmatpush1.msra.mxu0 0.0
  %5732 = vmatprep.subr.mxu0 0.0
  %5733 = vmatpush1.msra.mxu0 0.0
  %5734 = vmatprep.subr.mxu0 0.0
  %5735 = vmatpush1.msra.mxu0 0.0
  %5736 = vmatprep.subr.mxu0 0.0
  %5737 = vmatpush1.msra.mxu0 0.0
  %5738 = vmatprep.subr.mxu0 0.0
  %5739 = vmatpush1.msra.mxu0 0.0
  %5740 = vmatprep.subr.mxu0 0.0
  %5741 = vmatpush1.msra.mxu0 0.0
  %5742 = vmatprep.subr.mxu0 0.0
  %5743 = vmatpush1.msra.mxu0 0.0
  %5744 = vmatprep.subr.mxu0 0.0
  %5745 = vmatpush1.msra.mxu0 0.0
  %5746 = vmatprep.subr.mxu0 0.0
  %5747 = vmatpush1.msra.mxu0 0.0
  %5748 = vmatprep.subr.mxu0 0.0
  %5749 = vmatpush1.msra.mxu0 0.0
  %5750 = vmatprep.subr.mxu0 0.0
  %5751 = vmatpush1.msra.mxu0 0.0
  %5752 = vmatprep.subr.mxu0 0.0
  %5753 = vmatpush1.msra.mxu0 0.0
  %5754 = vmatprep.subr.mxu0 0.0
  %5755 = vmatpush1.msra.mxu0 0.0
  %5756 = vmatprep.subr.mxu0 0.0
  %5757 = vmatpush1.msra.mxu0 0.0
  %5758 = vmatprep.subr.mxu0 0.0
  %5759 = vmatpush1.msra.mxu0 0.0
  %5760 = vmatprep.subr.mxu0 0.0
  %5761 = vmatpush1.msra.mxu0 0.0
  %5762 = vmatprep.subr.mxu0 0.0
  %5763 = vmatpush1.msra.mxu0 0.0
  %5764 = vmatprep.subr.mxu0 0.0
  %5765 = vmatpush1.msra.mxu0 0.0
  %5766 = vmatprep.subr.mxu0 0.0
  %5767 = vmatpush1.msra.mxu0 0.0
  %5768 = vmatprep.subr.mxu0 0.0
  %5769 = vmatpush1.msra.mxu0 0.0
  %5770 = vmatprep.subr.mxu0 0.0
  %5771 = vmatpush1.msra.mxu0 0.0
  %5772 = vmatprep.subr.mxu0 0.0
  %5773 = vmatpush1.msra.mxu0 0.0
  %5774 = vmatprep.subr.mxu0 0.0
  %5775 = vmatpush1.msra.mxu0 0.0
  %5776 = vmatprep.subr.mxu0 0.0
  %5777 = vmatpush1.msra.mxu0 0.0
  %5778 = vmatprep.subr.mxu0 0.0
  %5779 = vmatpush1.msra.mxu0 0.0
  %5780 = vmatprep.subr.mxu0 0.0
  %5781 = vmatpush1.msra.mxu0 0.0
  %5782 = vmatprep.subr.mxu0 0.0
  %5783 = vmatpush1.msra.mxu0 0.0
  %5784 = vmatprep.subr.mxu0 0.0
  %5785 = vmatpush1.msra.mxu0 0.0
  %5786 = vmatprep.subr.mxu0 0.0
  %5787 = vmatpush1.msra.mxu0 0.0
  %5788 = vmatprep.mubr.f32.mxu0 0.0
  %5789 = vmatmul.mubr.f32.gmra.mrb[0].mxu0 %v3428
  %v5790 = vpop.f32.mrb[0].mxu0
  %v5791 = vadd.f32 0.0, %v5790
  %v5792 = vpop.f32.mrb[0].mxu0
  %5793 = vdwg.mxu0
  %5794 = vmatprep.subr.mxu0 0.0
  %5795 = vmatpush1.msra.mxu0 %v90
  %5796 = vmatprep.subr.mxu0 0.0
  %5797 = vmatpush1.msra.mxu0 0.0
  %5798 = vmatprep.subr.mxu0 0.0
  %5799 = vmatpush1.msra.mxu0 0.0
  %5800 = vmatprep.subr.mxu0 0.0
  %5801 = vmatpush1.msra.mxu0 0.0
  %5802 = vmatprep.subr.mxu0 0.0
  %5803 = vmatpush1.msra.mxu0 0.0
  %5804 = vmatprep.subr.mxu0 0.0
  %5805 = vmatpush1.msra.mxu0 0.0
  %5806 = vmatprep.subr.mxu0 0.0
  %5807 = vmatpush1.msra.mxu0 0.0
  %5808 = vmatprep.subr.mxu0 0.0
  %5809 = vmatpush1.msra.mxu0 0.0
  %5810 = vmatprep.subr.mxu0 0.0
  %5811 = vmatpush1.msra.mxu0 0.0
  %5812 = vmatprep.subr.mxu0 0.0
  %5813 = vmatpush1.msra.mxu0 0.0
  %5814 = vmatprep.subr.mxu0 0.0
  %5815 = vmatpush1.msra.mxu0 0.0
  %5816 = vmatprep.subr.mxu0 0.0
  %5817 = vmatpush1.msra.mxu0 0.0
  %5818 = vmatprep.subr.mxu0 0.0
  %5819 = vmatpush1.msra.mxu0 0.0
  %5820 = vmatprep.subr.mxu0 0.0
  %5821 = vmatpush1.msra.mxu0 0.0
  %5822 = vmatprep.subr.mxu0 0.0
  %5823 = vmatpush1.msra.mxu0 0.0
  %5824 = vmatprep.subr.mxu0 0.0
  %5825 = vmatpush1.msra.mxu0 0.0
  %5826 = vmatprep.subr.mxu0 0.0
  %5827 = vmatpush1.msra.mxu0 0.0
  %5828 = vmatprep.subr.mxu0 0.0
  %5829 = vmatpush1.msra.mxu0 0.0
  %5830 = vmatprep.subr.mxu0 0.0
  %5831 = vmatpush1.msra.mxu0 0.0
  %5832 = vmatprep.subr.mxu0 0.0
  %5833 = vmatpush1.msra.mxu0 0.0
  %5834 = vmatprep.subr.mxu0 0.0
  %5835 = vmatpush1.msra.mxu0 0.0
  %5836 = vmatprep.subr.mxu0 0.0
  %5837 = vmatpush1.msra.mxu0 0.0
  %5838 = vmatprep.subr.mxu0 0.0
  %5839 = vmatpush1.msra.mxu0 0.0
  %5840 = vmatprep.subr.mxu0 0.0
  %5841 = vmatpush1.msra.mxu0 0.0
  %5842 = vmatprep.subr.mxu0 0.0
  %5843 = vmatpush1.msra.mxu0 0.0
  %5844 = vmatprep.subr.mxu0 0.0
  %5845 = vmatpush1.msra.mxu0 0.0
  %5846 = vmatprep.subr.mxu0 0.0
  %5847 = vmatpush1.msra.mxu0 0.0
  %5848 = vmatprep.subr.mxu0 0.0
  %5849 = vmatpush1.msra.mxu0 0.0
  %5850 = vmatprep.subr.mxu0 0.0
  %5851 = vmatpush1.msra.mxu0 0.0
  %5852 = vmatprep.subr.mxu0 0.0
  %5853 = vmatpush1.msra.mxu0 0.0
  %5854 = vmatprep.subr.mxu0 0.0
  %5855 = vmatpush1.msra.mxu0 0.0
  %5856 = vmatprep.subr.mxu0 0.0
  %5857 = vmatpush1.msra.mxu0 0.0
  %5858 = vmatprep.mubr.f32.mxu0 0.0
  %5859 = vmatmul.mubr.f32.gmra.mrb[0].mxu0 %v3501
  %v5860 = vpop.f32.mrb[0].mxu0
  %v5861 = vadd.f32 0.0, %v5860
  %v5862 = vpop.f32.mrb[0].mxu0
  %5863 = vdwg.mxu0
  %5864 = vmatprep.subr.mxu0 0.0
  %5865 = vmatpush1.msra.mxu0 %v91
  %5866 = vmatprep.subr.mxu0 0.0
  %5867 = vmatpush1.msra.mxu0 0.0
  %5868 = vmatprep.subr.mxu0 0.0
  %5869 = vmatpush1.msra.mxu0 0.0
  %5870 = vmatprep.subr.mxu0 0.0
  %5871 = vmatpush1.msra.mxu0 0.0
  %5872 = vmatprep.subr.mxu0 0.0
  %5873 = vmatpush1.msra.mxu0 0.0
  %5874 = vmatprep.subr.mxu0 0.0
  %5875 = vmatpush1.msra.mxu0 0.0
  %5876 = vmatprep.subr.mxu0 0.0
  %5877 = vmatpush1.msra.mxu0 0.0
  %5878 = vmatprep.subr.mxu0 0.0
  %5879 = vmatpush1.msra.mxu0 0.0
  %5880 = vmatprep.subr.mxu0 0.0
  %5881 = vmatpush1.msra.mxu0 0.0
  %5882 = vmatprep.subr.mxu0 0.0
  %5883 = vmatpush1.msra.mxu0 0.0
  %5884 = vmatprep.subr.mxu0 0.0
  %5885 = vmatpush1.msra.mxu0 0.0
  %5886 = vmatprep.subr.mxu0 0.0
  %5887 = vmatpush1.msra.mxu0 0.0
  %5888 = vmatprep.subr.mxu0 0.0
  %5889 = vmatpush1.msra.mxu0 0.0
  %5890 = vmatprep.subr.mxu0 0.0
  %5891 = vmatpush1.msra.mxu0 0.0
  %5892 = vmatprep.subr.mxu0 0.0
  %5893 = vmatpush1.msra.mxu0 0.0
  %5894 = vmatprep.subr.mxu0 0.0
  %5895 = vmatpush1.msra.mxu0 0.0
  %5896 = vmatprep.subr.mxu0 0.0
  %5897 = vmatpush1.msra.mxu0 0.0
  %5898 = vmatprep.subr.mxu0 0.0
  %5899 = vmatpush1.msra.mxu0 0.0
  %5900 = vmatprep.subr.mxu0 0.0
  %5901 = vmatpush1.msra.mxu0 0.0
  %5902 = vmatprep.subr.mxu0 0.0
  %5903 = vmatpush1.msra.mxu0 0.0
  %5904 = vmatprep.subr.mxu0 0.0
  %5905 = vmatpush1.msra.mxu0 0.0
  %5906 = vmatprep.subr.mxu0 0.0
  %5907 = vmatpush1.msra.mxu0 0.0
  %5908 = vmatprep.subr.mxu0 0.0
  %5909 = vmatpush1.msra.mxu0 0.0
  %5910 = vmatprep.subr.mxu0 0.0
  %5911 = vmatpush1.msra.mxu0 0.0
  %5912 = vmatprep.subr.mxu0 0.0
  %5913 = vmatpush1.msra.mxu0 0.0
  %5914 = vmatprep.subr.mxu0 0.0
  %5915 = vmatpush1.msra.mxu0 0.0
  %5916 = vmatprep.subr.mxu0 0.0
  %5917 = vmatpush1.msra.mxu0 0.0
  %5918 = vmatprep.subr.mxu0 0.0
  %5919 = vmatpush1.msra.mxu0 0.0
  %5920 = vmatprep.subr.mxu0 0.0
  %5921 = vmatpush1.msra.mxu0 0.0
  %5922 = vmatprep.subr.mxu0 0.0
  %5923 = vmatpush1.msra.mxu0 0.0
  %5924 = vmatprep.subr.mxu0 0.0
  %5925 = vmatpush1.msra.mxu0 0.0
  %5926 = vmatprep.subr.mxu0 0.0
  %5927 = vmatpush1.msra.mxu0 0.0
  %5928 = vmatprep.mubr.f32.mxu0 0.0
  %5929 = vmatmul.mubr.f32.gmra.mrb[0].mxu0 %v3574
  %v5930 = vpop.f32.mrb[0].mxu0
  %v5931 = vadd.f32 0.0, %v5930
  %v5932 = vpop.f32.mrb[0].mxu0
  %5933 = vdwg.mxu0
  %5934 = vmatprep.subr.mxu0 0.0
  %5935 = vmatpush1.msra.mxu0 %v92
  %5936 = vmatprep.subr.mxu0 0.0
  %5937 = vmatpush1.msra.mxu0 0.0
  %5938 = vmatprep.subr.mxu0 0.0
  %5939 = vmatpush1.msra.mxu0 0.0
  %5940 = vmatprep.subr.mxu0 0.0
  %5941 = vmatpush1.msra.mxu0 0.0
  %5942 = vmatprep.subr.mxu0 0.0
  %5943 = vmatpush1.msra.mxu0 0.0
  %5944 = vmatprep.subr.mxu0 0.0
  %5945 = vmatpush1.msra.mxu0 0.0
  %5946 = vmatprep.subr.mxu0 0.0
  %5947 = vmatpush1.msra.mxu0 0.0
  %5948 = vmatprep.subr.mxu0 0.0
  %5949 = vmatpush1.msra.mxu0 0.0
  %5950 = vmatprep.subr.mxu0 0.0
  %5951 = vmatpush1.msra.mxu0 0.0
  %5952 = vmatprep.subr.mxu0 0.0
  %5953 = vmatpush1.msra.mxu0 0.0
  %5954 = vmatprep.subr.mxu0 0.0
  %5955 = vmatpush1.msra.mxu0 0.0
  %5956 = vmatprep.subr.mxu0 0.0
  %5957 = vmatpush1.msra.mxu0 0.0
  %5958 = vmatprep.subr.mxu0 0.0
  %5959 = vmatpush1.msra.mxu0 0.0
  %5960 = vmatprep.subr.mxu0 0.0
  %5961 = vmatpush1.msra.mxu0 0.0
  %5962 = vmatprep.subr.mxu0 0.0
  %5963 = vmatpush1.msra.mxu0 0.0
  %5964 = vmatprep.subr.mxu0 0.0
  %5965 = vmatpush1.msra.mxu0 0.0
  %5966 = vmatprep.subr.mxu0 0.0
  %5967 = vmatpush1.msra.mxu0 0.0
  %5968 = vmatprep.subr.mxu0 0.0
  %5969 = vmatpush1.msra.mxu0 0.0
  %5970 = vmatprep.subr.mxu0 0.0
  %5971 = vmatpush1.msra.mxu0 0.0
  %5972 = vmatprep.subr.mxu0 0.0
  %5973 = vmatpush1.msra.mxu0 0.0
  %5974 = vmatprep.subr.mxu0 0.0
  %5975 = vmatpush1.msra.mxu0 0.0
  %5976 = vmatprep.subr.mxu0 0.0
  %5977 = vmatpush1.msra.mxu0 0.0
  %5978 = vmatprep.subr.mxu0 0.0
  %5979 = vmatpush1.msra.mxu0 0.0
  %5980 = vmatprep.subr.mxu0 0.0
  %5981 = vmatpush1.msra.mxu0 0.0
  %5982 = vmatprep.subr.mxu0 0.0
  %5983 = vmatpush1.msra.mxu0 0.0
  %5984 = vmatprep.subr.mxu0 0.0
  %5985 = vmatpush1.msra.mxu0 0.0
  %5986 = vmatprep.subr.mxu0 0.0
  %5987 = vmatpush1.msra.mxu0 0.0
  %5988 = vmatprep.subr.mxu0 0.0
  %5989 = vmatpush1.msra.mxu0 0.0
  %5990 = vmatprep.subr.mxu0 0.0
  %5991 = vmatpush1.msra.mxu0 0.0
  %5992 = vmatprep.subr.mxu0 0.0
  %5993 = vmatpush1.msra.mxu0 0.0
  %5994 = vmatprep.subr.mxu0 0.0
  %5995 = vmatpush1.msra.mxu0 0.0
  %5996 = vmatprep.subr.mxu0 0.0
  %5997 = vmatpush1.msra.mxu0 0.0
  %5998 = vmatprep.mubr.f32.mxu0 0.0
  %5999 = vmatmul.mubr.f32.gmra.mrb[0].mxu0 %v3647
  %v6000 = vpop.f32.mrb[0].mxu0
  %v6001 = vadd.f32 0.0, %v6000
  %v6002 = vpop.f32.mrb[0].mxu0
  %6003 = vdwg.mxu0
  %6004 = vmatprep.subr.mxu0 0.0
  %6005 = vmatpush1.msra.mxu0 %v93
  %6006 = vmatprep.subr.mxu0 0.0
  %6007 = vmatpush1.msra.mxu0 0.0
  %6008 = vmatprep.subr.mxu0 0.0
  %6009 = vmatpush1.msra.mxu0 0.0
  %6010 = vmatprep.subr.mxu0 0.0
  %6011 = vmatpush1.msra.mxu0 0.0
  %6012 = vmatprep.subr.mxu0 0.0
  %6013 = vmatpush1.msra.mxu0 0.0
  %6014 = vmatprep.subr.mxu0 0.0
  %6015 = vmatpush1.msra.mxu0 0.0
  %6016 = vmatprep.subr.mxu0 0.0
  %6017 = vmatpush1.msra.mxu0 0.0
  %6018 = vmatprep.subr.mxu0 0.0
  %6019 = vmatpush1.msra.mxu0 0.0
  %6020 = vmatprep.subr.mxu0 0.0
  %6021 = vmatpush1.msra.mxu0 0.0
  %6022 = vmatprep.subr.mxu0 0.0
  %6023 = vmatpush1.msra.mxu0 0.0
  %6024 = vmatprep.subr.mxu0 0.0
  %6025 = vmatpush1.msra.mxu0 0.0
  %6026 = vmatprep.subr.mxu0 0.0
  %6027 = vmatpush1.msra.mxu0 0.0
  %6028 = vmatprep.subr.mxu0 0.0
  %6029 = vmatpush1.msra.mxu0 0.0
  %6030 = vmatprep.subr.mxu0 0.0
  %6031 = vmatpush1.msra.mxu0 0.0
  %6032 = vmatprep.subr.mxu0 0.0
  %6033 = vmatpush1.msra.mxu0 0.0
  %6034 = vmatprep.subr.mxu0 0.0
  %6035 = vmatpush1.msra.mxu0 0.0
  %6036 = vmatprep.subr.mxu0 0.0
  %6037 = vmatpush1.msra.mxu0 0.0
  %6038 = vmatprep.subr.mxu0 0.0
  %6039 = vmatpush1.msra.mxu0 0.0
  %6040 = vmatprep.subr.mxu0 0.0
  %6041 = vmatpush1.msra.mxu0 0.0
  %6042 = vmatprep.subr.mxu0 0.0
  %6043 = vmatpush1.msra.mxu0 0.0
  %6044 = vmatprep.subr.mxu0 0.0
  %6045 = vmatpush1.msra.mxu0 0.0
  %6046 = vmatprep.subr.mxu0 0.0
  %6047 = vmatpush1.msra.mxu0 0.0
  %6048 = vmatprep.subr.mxu0 0.0
  %6049 = vmatpush1.msra.mxu0 0.0
  %6050 = vmatprep.subr.mxu0 0.0
  %6051 = vmatpush1.msra.mxu0 0.0
  %6052 = vmatprep.subr.mxu0 0.0
  %6053 = vmatpush1.msra.mxu0 0.0
  %6054 = vmatprep.subr.mxu0 0.0
  %6055 = vmatpush1.msra.mxu0 0.0
  %6056 = vmatprep.subr.mxu0 0.0
  %6057 = vmatpush1.msra.mxu0 0.0
  %6058 = vmatprep.subr.mxu0 0.0
  %6059 = vmatpush1.msra.mxu0 0.0
  %6060 = vmatprep.subr.mxu0 0.0
  %6061 = vmatpush1.msra.mxu0 0.0
  %6062 = vmatprep.subr.mxu0 0.0
  %6063 = vmatpush1.msra.mxu0 0.0
  %6064 = vmatprep.subr.mxu0 0.0
  %6065 = vmatpush1.msra.mxu0 0.0
  %6066 = vmatprep.subr.mxu0 0.0
  %6067 = vmatpush1.msra.mxu0 0.0
  %6068 = vmatprep.mubr.f32.mxu0 0.0
  %6069 = vmatmul.mubr.f32.gmra.mrb[0].mxu0 %v3720
  %v6070 = vpop.f32.mrb[0].mxu0
  %v6071 = vadd.f32 0.0, %v6070
  %v6072 = vpop.f32.mrb[0].mxu0
  %6073 = vdwg.mxu0
  %6074 = vmatprep.subr.mxu0 0.0
  %6075 = vmatpush1.msra.mxu0 %v94
  %6076 = vmatprep.subr.mxu0 0.0
  %6077 = vmatpush1.msra.mxu0 0.0
  %6078 = vmatprep.subr.mxu0 0.0
  %6079 = vmatpush1.msra.mxu0 0.0
  %6080 = vmatprep.subr.mxu0 0.0
  %6081 = vmatpush1.msra.mxu0 0.0
  %6082 = vmatprep.subr.mxu0 0.0
  %6083 = vmatpush1.msra.mxu0 0.0
  %6084 = vmatprep.subr.mxu0 0.0
  %6085 = vmatpush1.msra.mxu0 0.0
  %6086 = vmatprep.subr.mxu0 0.0
  %6087 = vmatpush1.msra.mxu0 0.0
  %6088 = vmatprep.subr.mxu0 0.0
  %6089 = vmatpush1.msra.mxu0 0.0
  %6090 = vmatprep.subr.mxu0 0.0
  %6091 = vmatpush1.msra.mxu0 0.0
  %6092 = vmatprep.subr.mxu0 0.0
  %6093 = vmatpush1.msra.mxu0 0.0
  %6094 = vmatprep.subr.mxu0 0.0
  %6095 = vmatpush1.msra.mxu0 0.0
  %6096 = vmatprep.subr.mxu0 0.0
  %6097 = vmatpush1.msra.mxu0 0.0
  %6098 = vmatprep.subr.mxu0 0.0
  %6099 = vmatpush1.msra.mxu0 0.0
  %6100 = vmatprep.subr.mxu0 0.0
  %6101 = vmatpush1.msra.mxu0 0.0
  %6102 = vmatprep.subr.mxu0 0.0
  %6103 = vmatpush1.msra.mxu0 0.0
  %6104 = vmatprep.subr.mxu0 0.0
  %6105 = vmatpush1.msra.mxu0 0.0
  %6106 = vmatprep.subr.mxu0 0.0
  %6107 = vmatpush1.msra.mxu0 0.0
  %6108 = vmatprep.subr.mxu0 0.0
  %6109 = vmatpush1.msra.mxu0 0.0
  %6110 = vmatprep.subr.mxu0 0.0
  %6111 = vmatpush1.msra.mxu0 0.0
  %6112 = vmatprep.subr.mxu0 0.0
  %6113 = vmatpush1.msra.mxu0 0.0
  %6114 = vmatprep.subr.mxu0 0.0
  %6115 = vmatpush1.msra.mxu0 0.0
  %6116 = vmatprep.subr.mxu0 0.0
  %6117 = vmatpush1.msra.mxu0 0.0
  %6118 = vmatprep.subr.mxu0 0.0
  %6119 = vmatpush1.msra.mxu0 0.0
  %6120 = vmatprep.subr.mxu0 0.0
  %6121 = vmatpush1.msra.mxu0 0.0
  %6122 = vmatprep.subr.mxu0 0.0
  %6123 = vmatpush1.msra.mxu0 0.0
  %6124 = vmatprep.subr.mxu0 0.0
  %6125 = vmatpush1.msra.mxu0 0.0
  %6126 = vmatprep.subr.mxu0 0.0
  %6127 = vmatpush1.msra.mxu0 0.0
  %6128 = vmatprep.subr.mxu0 0.0
  %6129 = vmatpush1.msra.mxu0 0.0
  %6130 = vmatprep.subr.mxu0 0.0
  %6131 = vmatpush1.msra.mxu0 0.0
  %6132 = vmatprep.subr.mxu0 0.0
  %6133 = vmatpush1.msra.mxu0 0.0
  %6134 = vmatprep.subr.mxu0 0.0
  %6135 = vmatpush1.msra.mxu0 0.0
  %6136 = vmatprep.subr.mxu0 0.0
  %6137 = vmatpush1.msra.mxu0 0.0
  %6138 = vmatprep.mubr.f32.mxu0 0.0
  %6139 = vmatmul.mubr.f32.gmra.mrb[0].mxu0 %v3793
  %v6140 = vpop.f32.mrb[0].mxu0
  %v6141 = vadd.f32 0.0, %v6140
  %v6142 = vpop.f32.mrb[0].mxu0
  %6143 = vdwg.mxu0
  %6144 = vmatprep.subr.mxu0 0.0
  %6145 = vmatpush1.msra.mxu0 %v95
  %6146 = vmatprep.subr.mxu0 0.0
  %6147 = vmatpush1.msra.mxu0 0.0
  %6148 = vmatprep.subr.mxu0 0.0
  %6149 = vmatpush1.msra.mxu0 0.0
  %6150 = vmatprep.subr.mxu0 0.0
  %6151 = vmatpush1.msra.mxu0 0.0
  %6152 = vmatprep.subr.mxu0 0.0
  %6153 = vmatpush1.msra.mxu0 0.0
  %6154 = vmatprep.subr.mxu0 0.0
  %6155 = vmatpush1.msra.mxu0 0.0
  %6156 = vmatprep.subr.mxu0 0.0
  %6157 = vmatpush1.msra.mxu0 0.0
  %6158 = vmatprep.subr.mxu0 0.0
  %6159 = vmatpush1.msra.mxu0 0.0
  %6160 = vmatprep.subr.mxu0 0.0
  %6161 = vmatpush1.msra.mxu0 0.0
  %6162 = vmatprep.subr.mxu0 0.0
  %6163 = vmatpush1.msra.mxu0 0.0
  %6164 = vmatprep.subr.mxu0 0.0
  %6165 = vmatpush1.msra.mxu0 0.0
  %6166 = vmatprep.subr.mxu0 0.0
  %6167 = vmatpush1.msra.mxu0 0.0
  %6168 = vmatprep.subr.mxu0 0.0
  %6169 = vmatpush1.msra.mxu0 0.0
  %6170 = vmatprep.subr.mxu0 0.0
  %6171 = vmatpush1.msra.mxu0 0.0
  %6172 = vmatprep.subr.mxu0 0.0
  %6173 = vmatpush1.msra.mxu0 0.0
  %6174 = vmatprep.subr.mxu0 0.0
  %6175 = vmatpush1.msra.mxu0 0.0
  %6176 = vmatprep.subr.mxu0 0.0
  %6177 = vmatpush1.msra.mxu0 0.0
  %6178 = vmatprep.subr.mxu0 0.0
  %6179 = vmatpush1.msra.mxu0 0.0
  %6180 = vmatprep.subr.mxu0 0.0
  %6181 = vmatpush1.msra.mxu0 0.0
  %6182 = vmatprep.subr.mxu0 0.0
  %6183 = vmatpush1.msra.mxu0 0.0
  %6184 = vmatprep.subr.mxu0 0.0
  %6185 = vmatpush1.msra.mxu0 0.0
  %6186 = vmatprep.subr.mxu0 0.0
  %6187 = vmatpush1.msra.mxu0 0.0
  %6188 = vmatprep.subr.mxu0 0.0
  %6189 = vmatpush1.msra.mxu0 0.0
  %6190 = vmatprep.subr.mxu0 0.0
  %6191 = vmatpush1.msra.mxu0 0.0
  %6192 = vmatprep.subr.mxu0 0.0
  %6193 = vmatpush1.msra.mxu0 0.0
  %6194 = vmatprep.subr.mxu0 0.0
  %6195 = vmatpush1.msra.mxu0 0.0
  %6196 = vmatprep.subr.mxu0 0.0
  %6197 = vmatpush1.msra.mxu0 0.0
  %6198 = vmatprep.subr.mxu0 0.0
  %6199 = vmatpush1.msra.mxu0 0.0
  %6200 = vmatprep.subr.mxu0 0.0
  %6201 = vmatpush1.msra.mxu0 0.0
  %6202 = vmatprep.subr.mxu0 0.0
  %6203 = vmatpush1.msra.mxu0 0.0
  %6204 = vmatprep.subr.mxu0 0.0
  %6205 = vmatpush1.msra.mxu0 0.0
  %6206 = vmatprep.subr.mxu0 0.0
  %6207 = vmatpush1.msra.mxu0 0.0
  %6208 = vmatprep.mubr.f32.mxu0 0.0
  %6209 = vmatmul.mubr.f32.gmra.mrb[0].mxu0 %v3866
  %v6210 = vpop.f32.mrb[0].mxu0
  %v6211 = vadd.f32 0.0, %v6210
  %v6212 = vpop.f32.mrb[0].mxu0
  %6213 = vdwg.mxu0
  %6214 = vmatprep.subr.mxu0 0.0
  %6215 = vmatpush1.msra.mxu0 %v96
  %6216 = vmatprep.subr.mxu0 0.0
  %6217 = vmatpush1.msra.mxu0 0.0
  %6218 = vmatprep.subr.mxu0 0.0
  %6219 = vmatpush1.msra.mxu0 0.0
  %6220 = vmatprep.subr.mxu0 0.0
  %6221 = vmatpush1.msra.mxu0 0.0
  %6222 = vmatprep.subr.mxu0 0.0
  %6223 = vmatpush1.msra.mxu0 0.0
  %6224 = vmatprep.subr.mxu0 0.0
  %6225 = vmatpush1.msra.mxu0 0.0
  %6226 = vmatprep.subr.mxu0 0.0
  %6227 = vmatpush1.msra.mxu0 0.0
  %6228 = vmatprep.subr.mxu0 0.0
  %6229 = vmatpush1.msra.mxu0 0.0
  %6230 = vmatprep.subr.mxu0 0.0
  %6231 = vmatpush1.msra.mxu0 0.0
  %6232 = vmatprep.subr.mxu0 0.0
  %6233 = vmatpush1.msra.mxu0 0.0
  %6234 = vmatprep.subr.mxu0 0.0
  %6235 = vmatpush1.msra.mxu0 0.0
  %6236 = vmatprep.subr.mxu0 0.0
  %6237 = vmatpush1.msra.mxu0 0.0
  %6238 = vmatprep.subr.mxu0 0.0
  %6239 = vmatpush1.msra.mxu0 0.0
  %6240 = vmatprep.subr.mxu0 0.0
  %6241 = vmatpush1.msra.mxu0 0.0
  %6242 = vmatprep.subr.mxu0 0.0
  %6243 = vmatpush1.msra.mxu0 0.0
  %6244 = vmatprep.subr.mxu0 0.0
  %6245 = vmatpush1.msra.mxu0 0.0
  %6246 = vmatprep.subr.mxu0 0.0
  %6247 = vmatpush1.msra.mxu0 0.0
  %6248 = vmatprep.subr.mxu0 0.0
  %6249 = vmatpush1.msra.mxu0 0.0
  %6250 = vmatprep.subr.mxu0 0.0
  %6251 = vmatpush1.msra.mxu0 0.0
  %6252 = vmatprep.subr.mxu0 0.0
  %6253 = vmatpush1.msra.mxu0 0.0
  %6254 = vmatprep.subr.mxu0 0.0
  %6255 = vmatpush1.msra.mxu0 0.0
  %6256 = vmatprep.subr.mxu0 0.0
  %6257 = vmatpush1.msra.mxu0 0.0
  %6258 = vmatprep.subr.mxu0 0.0
  %6259 = vmatpush1.msra.mxu0 0.0
  %6260 = vmatprep.subr.mxu0 0.0
  %6261 = vmatpush1.msra.mxu0 0.0
  %6262 = vmatprep.subr.mxu0 0.0
  %6263 = vmatpush1.msra.mxu0 0.0
  %6264 = vmatprep.subr.mxu0 0.0
  %6265 = vmatpush1.msra.mxu0 0.0
  %6266 = vmatprep.subr.mxu0 0.0
  %6267 = vmatpush1.msra.mxu0 0.0
  %6268 = vmatprep.subr.mxu0 0.0
  %6269 = vmatpush1.msra.mxu0 0.0
  %6270 = vmatprep.subr.mxu0 0.0
  %6271 = vmatpush1.msra.mxu0 0.0
  %6272 = vmatprep.subr.mxu0 0.0
  %6273 = vmatpush1.msra.mxu0 0.0
  %6274 = vmatprep.subr.mxu0 0.0
  %6275 = vmatpush1.msra.mxu0 0.0
  %6276 = vmatprep.subr.mxu0 0.0
  %6277 = vmatpush1.msra.mxu0 0.0
  %6278 = vmatprep.mubr.f32.mxu0 0.0
  %6279 = vmatmul.mubr.f32.gmra.mrb[0].mxu0 %v3939
  %v6280 = vpop.f32.mrb[0].mxu0
  %v6281 = vadd.f32 0.0, %v6280
  %v6282 = vpop.f32.mrb[0].mxu0
  %6283 = vdwg.mxu0
  %6284 = vmatprep.subr.mxu0 0.0
  %6285 = vmatpush1.msra.mxu0 %v97
  %6286 = vmatprep.subr.mxu0 0.0
  %6287 = vmatpush1.msra.mxu0 0.0
  %6288 = vmatprep.subr.mxu0 0.0
  %6289 = vmatpush1.msra.mxu0 0.0
  %6290 = vmatprep.subr.mxu0 0.0
  %6291 = vmatpush1.msra.mxu0 0.0
  %6292 = vmatprep.subr.mxu0 0.0
  %6293 = vmatpush1.msra.mxu0 0.0
  %6294 = vmatprep.subr.mxu0 0.0
  %6295 = vmatpush1.msra.mxu0 0.0
  %6296 = vmatprep.subr.mxu0 0.0
  %6297 = vmatpush1.msra.mxu0 0.0
  %6298 = vmatprep.subr.mxu0 0.0
  %6299 = vmatpush1.msra.mxu0 0.0
  %6300 = vmatprep.subr.mxu0 0.0
  %6301 = vmatpush1.msra.mxu0 0.0
  %6302 = vmatprep.subr.mxu0 0.0
  %6303 = vmatpush1.msra.mxu0 0.0
  %6304 = vmatprep.subr.mxu0 0.0
  %6305 = vmatpush1.msra.mxu0 0.0
  %6306 = vmatprep.subr.mxu0 0.0
  %6307 = vmatpush1.msra.mxu0 0.0
  %6308 = vmatprep.subr.mxu0 0.0
  %6309 = vmatpush1.msra.mxu0 0.0
  %6310 = vmatprep.subr.mxu0 0.0
  %6311 = vmatpush1.msra.mxu0 0.0
  %6312 = vmatprep.subr.mxu0 0.0
  %6313 = vmatpush1.msra.mxu0 0.0
  %6314 = vmatprep.subr.mxu0 0.0
  %6315 = vmatpush1.msra.mxu0 0.0
  %6316 = vmatprep.subr.mxu0 0.0
  %6317 = vmatpush1.msra.mxu0 0.0
  %6318 = vmatprep.subr.mxu0 0.0
  %6319 = vmatpush1.msra.mxu0 0.0
  %6320 = vmatprep.subr.mxu0 0.0
  %6321 = vmatpush1.msra.mxu0 0.0
  %6322 = vmatprep.subr.mxu0 0.0
  %6323 = vmatpush1.msra.mxu0 0.0
  %6324 = vmatprep.subr.mxu0 0.0
  %6325 = vmatpush1.msra.mxu0 0.0
  %6326 = vmatprep.subr.mxu0 0.0
  %6327 = vmatpush1.msra.mxu0 0.0
  %6328 = vmatprep.subr.mxu0 0.0
  %6329 = vmatpush1.msra.mxu0 0.0
  %6330 = vmatprep.subr.mxu0 0.0
  %6331 = vmatpush1.msra.mxu0 0.0
  %6332 = vmatprep.subr.mxu0 0.0
  %6333 = vmatpush1.msra.mxu0 0.0
  %6334 = vmatprep.subr.mxu0 0.0
  %6335 = vmatpush1.msra.mxu0 0.0
  %6336 = vmatprep.subr.mxu0 0.0
  %6337 = vmatpush1.msra.mxu0 0.0
  %6338 = vmatprep.subr.mxu0 0.0
  %6339 = vmatpush1.msra.mxu0 0.0
  %6340 = vmatprep.subr.mxu0 0.0
  %6341 = vmatpush1.msra.mxu0 0.0
  %6342 = vmatprep.subr.mxu0 0.0
  %6343 = vmatpush1.msra.mxu0 0.0
  %6344 = vmatprep.subr.mxu0 0.0
  %6345 = vmatpush1.msra.mxu0 0.0
  %6346 = vmatprep.subr.mxu0 0.0
  %6347 = vmatpush1.msra.mxu0 0.0
  %6348 = vmatprep.mubr.f32.mxu0 0.0
  %6349 = vmatmul.mubr.f32.gmra.mrb[0].mxu0 %v4012
  %v6350 = vpop.f32.mrb[0].mxu0
  %v6351 = vadd.f32 0.0, %v6350
  %v6352 = vpop.f32.mrb[0].mxu0
  %6353 = vdwg.mxu0
  %6354 = vmatprep.subr.mxu0 0.0
  %6355 = vmatpush1.msra.mxu0 %v98
  %6356 = vmatprep.subr.mxu0 0.0
  %6357 = vmatpush1.msra.mxu0 0.0
  %6358 = vmatprep.subr.mxu0 0.0
  %6359 = vmatpush1.msra.mxu0 0.0
  %6360 = vmatprep.subr.mxu0 0.0
  %6361 = vmatpush1.msra.mxu0 0.0
  %6362 = vmatprep.subr.mxu0 0.0
  %6363 = vmatpush1.msra.mxu0 0.0
  %6364 = vmatprep.subr.mxu0 0.0
  %6365 = vmatpush1.msra.mxu0 0.0
  %6366 = vmatprep.subr.mxu0 0.0
  %6367 = vmatpush1.msra.mxu0 0.0
  %6368 = vmatprep.subr.mxu0 0.0
  %6369 = vmatpush1.msra.mxu0 0.0
  %6370 = vmatprep.subr.mxu0 0.0
  %6371 = vmatpush1.msra.mxu0 0.0
  %6372 = vmatprep.subr.mxu0 0.0
  %6373 = vmatpush1.msra.mxu0 0.0
  %6374 = vmatprep.subr.mxu0 0.0
  %6375 = vmatpush1.msra.mxu0 0.0
  %6376 = vmatprep.subr.mxu0 0.0
  %6377 = vmatpush1.msra.mxu0 0.0
  %6378 = vmatprep.subr.mxu0 0.0
  %6379 = vmatpush1.msra.mxu0 0.0
  %6380 = vmatprep.subr.mxu0 0.0
  %6381 = vmatpush1.msra.mxu0 0.0
  %6382 = vmatprep.subr.mxu0 0.0
  %6383 = vmatpush1.msra.mxu0 0.0
  %6384 = vmatprep.subr.mxu0 0.0
  %6385 = vmatpush1.msra.mxu0 0.0
  %6386 = vmatprep.subr.mxu0 0.0
  %6387 = vmatpush1.msra.mxu0 0.0
  %6388 = vmatprep.subr.mxu0 0.0
  %6389 = vmatpush1.msra.mxu0 0.0
  %6390 = vmatprep.subr.mxu0 0.0
  %6391 = vmatpush1.msra.mxu0 0.0
  %6392 = vmatprep.subr.mxu0 0.0
  %6393 = vmatpush1.msra.mxu0 0.0
  %6394 = vmatprep.subr.mxu0 0.0
  %6395 = vmatpush1.msra.mxu0 0.0
  %6396 = vmatprep.subr.mxu0 0.0
  %6397 = vmatpush1.msra.mxu0 0.0
  %6398 = vmatprep.subr.mxu0 0.0
  %6399 = vmatpush1.msra.mxu0 0.0
  %6400 = vmatprep.subr.mxu0 0.0
  %6401 = vmatpush1.msra.mxu0 0.0
  %6402 = vmatprep.subr.mxu0 0.0
  %6403 = vmatpush1.msra.mxu0 0.0
  %6404 = vmatprep.subr.mxu0 0.0
  %6405 = vmatpush1.msra.mxu0 0.0
  %6406 = vmatprep.subr.mxu0 0.0
  %6407 = vmatpush1.msra.mxu0 0.0
  %6408 = vmatprep.subr.mxu0 0.0
  %6409 = vmatpush1.msra.mxu0 0.0
  %6410 = vmatprep.subr.mxu0 0.0
  %6411 = vmatpush1.msra.mxu0 0.0
  %6412 = vmatprep.subr.mxu0 0.0
  %6413 = vmatpush1.msra.mxu0 0.0
  %6414 = vmatprep.subr.mxu0 0.0
  %6415 = vmatpush1.msra.mxu0 0.0
  %6416 = vmatprep.subr.mxu0 0.0
  %6417 = vmatpush1.msra.mxu0 0.0
  %6418 = vmatprep.mubr.f32.mxu0 0.0
  %6419 = vmatmul.mubr.f32.gmra.mrb[0].mxu0 %v4085
  %v6420 = vpop.f32.mrb[0].mxu0
  %v6421 = vadd.f32 0.0, %v6420
  %v6422 = vpop.f32.mrb[0].mxu0
  %6423 = vdwg.mxu0
  %6424 = vmatprep.subr.mxu0 0.0
  %6425 = vmatpush1.msra.mxu0 %v99
  %6426 = vmatprep.subr.mxu0 0.0
  %6427 = vmatpush1.msra.mxu0 0.0
  %6428 = vmatprep.subr.mxu0 0.0
  %6429 = vmatpush1.msra.mxu0 0.0
  %6430 = vmatprep.subr.mxu0 0.0
  %6431 = vmatpush1.msra.mxu0 0.0
  %6432 = vmatprep.subr.mxu0 0.0
  %6433 = vmatpush1.msra.mxu0 0.0
  %6434 = vmatprep.subr.mxu0 0.0
  %6435 = vmatpush1.msra.mxu0 0.0
  %6436 = vmatprep.subr.mxu0 0.0
  %6437 = vmatpush1.msra.mxu0 0.0
  %6438 = vmatprep.subr.mxu0 0.0
  %6439 = vmatpush1.msra.mxu0 0.0
  %6440 = vmatprep.subr.mxu0 0.0
  %6441 = vmatpush1.msra.mxu0 0.0
  %6442 = vmatprep.subr.mxu0 0.0
  %6443 = vmatpush1.msra.mxu0 0.0
  %6444 = vmatprep.subr.mxu0 0.0
  %6445 = vmatpush1.msra.mxu0 0.0
  %6446 = vmatprep.subr.mxu0 0.0
  %6447 = vmatpush1.msra.mxu0 0.0
  %6448 = vmatprep.subr.mxu0 0.0
  %6449 = vmatpush1.msra.mxu0 0.0
  %6450 = vmatprep.subr.mxu0 0.0
  %6451 = vmatpush1.msra.mxu0 0.0
  %6452 = vmatprep.subr.mxu0 0.0
  %6453 = vmatpush1.msra.mxu0 0.0
  %6454 = vmatprep.subr.mxu0 0.0
  %6455 = vmatpush1.msra.mxu0 0.0
  %6456 = vmatprep.subr.mxu0 0.0
  %6457 = vmatpush1.msra.mxu0 0.0
  %6458 = vmatprep.subr.mxu0 0.0
  %6459 = vmatpush1.msra.mxu0 0.0
  %6460 = vmatprep.subr.mxu0 0.0
  %6461 = vmatpush1.msra.mxu0 0.0
  %6462 = vmatprep.subr.mxu0 0.0
  %6463 = vmatpush1.msra.mxu0 0.0
  %6464 = vmatprep.subr.mxu0 0.0
  %6465 = vmatpush1.msra.mxu0 0.0
  %6466 = vmatprep.subr.mxu0 0.0
  %6467 = vmatpush1.msra.mxu0 0.0
  %6468 = vmatprep.subr.mxu0 0.0
  %6469 = vmatpush1.msra.mxu0 0.0
  %6470 = vmatprep.subr.mxu0 0.0
  %6471 = vmatpush1.msra.mxu0 0.0
  %6472 = vmatprep.subr.mxu0 0.0
  %6473 = vmatpush1.msra.mxu0 0.0
  %6474 = vmatprep.subr.mxu0 0.0
  %6475 = vmatpush1.msra.mxu0 0.0
  %6476 = vmatprep.subr.mxu0 0.0
  %6477 = vmatpush1.msra.mxu0 0.0
  %6478 = vmatprep.subr.mxu0 0.0
  %6479 = vmatpush1.msra.mxu0 0.0
  %6480 = vmatprep.subr.mxu0 0.0
  %6481 = vmatpush1.msra.mxu0 0.0
  %6482 = vmatprep.subr.mxu0 0.0
  %6483 = vmatpush1.msra.mxu0 0.0
  %6484 = vmatprep.subr.mxu0 0.0
  %6485 = vmatpush1.msra.mxu0 0.0
  %6486 = vmatprep.subr.mxu0 0.0
  %6487 = vmatpush1.msra.mxu0 0.0
  %6488 = vmatprep.mubr.f32.mxu0 0.0
  %6489 = vmatmul.mubr.f32.gmra.mrb[0].mxu0 %v4158
  %v6490 = vpop.f32.mrb[0].mxu0
  %v6491 = vadd.f32 0.0, %v6490
  %v6492 = vpop.f32.mrb[0].mxu0
  %6493 = vdwg.mxu0
  %6494 = vmatprep.subr.mxu0 0.0
  %6495 = vmatpush1.msra.mxu0 %v100
  %6496 = vmatprep.subr.mxu0 0.0
  %6497 = vmatpush1.msra.mxu0 0.0
  %6498 = vmatprep.subr.mxu0 0.0
  %6499 = vmatpush1.msra.mxu0 0.0
  %6500 = vmatprep.subr.mxu0 0.0
  %6501 = vmatpush1.msra.mxu0 0.0
  %6502 = vmatprep.subr.mxu0 0.0
  %6503 = vmatpush1.msra.mxu0 0.0
  %6504 = vmatprep.subr.mxu0 0.0
  %6505 = vmatpush1.msra.mxu0 0.0
  %6506 = vmatprep.subr.mxu0 0.0
  %6507 = vmatpush1.msra.mxu0 0.0
  %6508 = vmatprep.subr.mxu0 0.0
  %6509 = vmatpush1.msra.mxu0 0.0
  %6510 = vmatprep.subr.mxu0 0.0
  %6511 = vmatpush1.msra.mxu0 0.0
  %6512 = vmatprep.subr.mxu0 0.0
  %6513 = vmatpush1.msra.mxu0 0.0
  %6514 = vmatprep.subr.mxu0 0.0
  %6515 = vmatpush1.msra.mxu0 0.0
  %6516 = vmatprep.subr.mxu0 0.0
  %6517 = vmatpush1.msra.mxu0 0.0
  %6518 = vmatprep.subr.mxu0 0.0
  %6519 = vmatpush1.msra.mxu0 0.0
  %6520 = vmatprep.subr.mxu0 0.0
  %6521 = vmatpush1.msra.mxu0 0.0
  %6522 = vmatprep.subr.mxu0 0.0
  %6523 = vmatpush1.msra.mxu0 0.0
  %6524 = vmatprep.subr.mxu0 0.0
  %6525 = vmatpush1.msra.mxu0 0.0
  %6526 = vmatprep.subr.mxu0 0.0
  %6527 = vmatpush1.msra.mxu0 0.0
  %6528 = vmatprep.subr.mxu0 0.0
  %6529 = vmatpush1.msra.mxu0 0.0
  %6530 = vmatprep.subr.mxu0 0.0
  %6531 = vmatpush1.msra.mxu0 0.0
  %6532 = vmatprep.subr.mxu0 0.0
  %6533 = vmatpush1.msra.mxu0 0.0
  %6534 = vmatprep.subr.mxu0 0.0
  %6535 = vmatpush1.msra.mxu0 0.0
  %6536 = vmatprep.subr.mxu0 0.0
  %6537 = vmatpush1.msra.mxu0 0.0
  %6538 = vmatprep.subr.mxu0 0.0
  %6539 = vmatpush1.msra.mxu0 0.0
  %6540 = vmatprep.subr.mxu0 0.0
  %6541 = vmatpush1.msra.mxu0 0.0
  %6542 = vmatprep.subr.mxu0 0.0
  %6543 = vmatpush1.msra.mxu0 0.0
  %6544 = vmatprep.subr.mxu0 0.0
  %6545 = vmatpush1.msra.mxu0 0.0
  %6546 = vmatprep.subr.mxu0 0.0
  %6547 = vmatpush1.msra.mxu0 0.0
  %6548 = vmatprep.subr.mxu0 0.0
  %6549 = vmatpush1.msra.mxu0 0.0
  %6550 = vmatprep.subr.mxu0 0.0
  %6551 = vmatpush1.msra.mxu0 0.0
  %6552 = vmatprep.subr.mxu0 0.0
  %6553 = vmatpush1.msra.mxu0 0.0
  %6554 = vmatprep.subr.mxu0 0.0
  %6555 = vmatpush1.msra.mxu0 0.0
  %6556 = vmatprep.subr.mxu0 0.0
  %6557 = vmatpush1.msra.mxu0 0.0
  %6558 = vmatprep.mubr.f32.mxu0 0.0
  %6559 = vmatmul.mubr.f32.gmra.mrb[0].mxu0 %v4231
  %v6560 = vpop.f32.mrb[0].mxu0
  %v6561 = vadd.f32 0.0, %v6560
  %v6562 = vpop.f32.mrb[0].mxu0
  %6563 = vdwg.mxu0
  %6564 = vmatprep.subr.mxu0 0.0
  %6565 = vmatpush1.msra.mxu0 %v101
  %6566 = vmatprep.subr.mxu0 0.0
  %6567 = vmatpush1.msra.mxu0 0.0
  %6568 = vmatprep.subr.mxu0 0.0
  %6569 = vmatpush1.msra.mxu0 0.0
  %6570 = vmatprep.subr.mxu0 0.0
  %6571 = vmatpush1.msra.mxu0 0.0
  %6572 = vmatprep.subr.mxu0 0.0
  %6573 = vmatpush1.msra.mxu0 0.0
  %6574 = vmatprep.subr.mxu0 0.0
  %6575 = vmatpush1.msra.mxu0 0.0
  %6576 = vmatprep.subr.mxu0 0.0
  %6577 = vmatpush1.msra.mxu0 0.0
  %6578 = vmatprep.subr.mxu0 0.0
  %6579 = vmatpush1.msra.mxu0 0.0
  %6580 = vmatprep.subr.mxu0 0.0
  %6581 = vmatpush1.msra.mxu0 0.0
  %6582 = vmatprep.subr.mxu0 0.0
  %6583 = vmatpush1.msra.mxu0 0.0
  %6584 = vmatprep.subr.mxu0 0.0
  %6585 = vmatpush1.msra.mxu0 0.0
  %6586 = vmatprep.subr.mxu0 0.0
  %6587 = vmatpush1.msra.mxu0 0.0
  %6588 = vmatprep.subr.mxu0 0.0
  %6589 = vmatpush1.msra.mxu0 0.0
  %6590 = vmatprep.subr.mxu0 0.0
  %6591 = vmatpush1.msra.mxu0 0.0
  %6592 = vmatprep.subr.mxu0 0.0
  %6593 = vmatpush1.msra.mxu0 0.0
  %6594 = vmatprep.subr.mxu0 0.0
  %6595 = vmatpush1.msra.mxu0 0.0
  %6596 = vmatprep.subr.mxu0 0.0
  %6597 = vmatpush1.msra.mxu0 0.0
  %6598 = vmatprep.subr.mxu0 0.0
  %6599 = vmatpush1.msra.mxu0 0.0
  %6600 = vmatprep.subr.mxu0 0.0
  %6601 = vmatpush1.msra.mxu0 0.0
  %6602 = vmatprep.subr.mxu0 0.0
  %6603 = vmatpush1.msra.mxu0 0.0
  %6604 = vmatprep.subr.mxu0 0.0
  %6605 = vmatpush1.msra.mxu0 0.0
  %6606 = vmatprep.subr.mxu0 0.0
  %6607 = vmatpush1.msra.mxu0 0.0
  %6608 = vmatprep.subr.mxu0 0.0
  %6609 = vmatpush1.msra.mxu0 0.0
  %6610 = vmatprep.subr.mxu0 0.0
  %6611 = vmatpush1.msra.mxu0 0.0
  %6612 = vmatprep.subr.mxu0 0.0
  %6613 = vmatpush1.msra.mxu0 0.0
  %6614 = vmatprep.subr.mxu0 0.0
  %6615 = vmatpush1.msra.mxu0 0.0
  %6616 = vmatprep.subr.mxu0 0.0
  %6617 = vmatpush1.msra.mxu0 0.0
  %6618 = vmatprep.subr.mxu0 0.0
  %6619 = vmatpush1.msra.mxu0 0.0
  %6620 = vmatprep.subr.mxu0 0.0
  %6621 = vmatpush1.msra.mxu0 0.0
  %6622 = vmatprep.subr.mxu0 0.0
  %6623 = vmatpush1.msra.mxu0 0.0
  %6624 = vmatprep.subr.mxu0 0.0
  %6625 = vmatpush1.msra.mxu0 0.0
  %6626 = vmatprep.subr.mxu0 0.0
  %6627 = vmatpush1.msra.mxu0 0.0
  %6628 = vmatprep.mubr.f32.mxu0 0.0
  %6629 = vmatmul.mubr.f32.gmra.mrb[0].mxu0 %v4304
  %v6630 = vpop.f32.mrb[0].mxu0
  %v6631 = vadd.f32 0.0, %v6630
  %v6632 = vpop.f32.mrb[0].mxu0
  %6633 = vdwg.mxu0
  %6634 = vmatprep.subr.mxu0 0.0
  %6635 = vmatpush1.msra.mxu0 %v102
  %6636 = vmatprep.subr.mxu0 0.0
  %6637 = vmatpush1.msra.mxu0 0.0
  %6638 = vmatprep.subr.mxu0 0.0
  %6639 = vmatpush1.msra.mxu0 0.0
  %6640 = vmatprep.subr.mxu0 0.0
  %6641 = vmatpush1.msra.mxu0 0.0
  %6642 = vmatprep.subr.mxu0 0.0
  %6643 = vmatpush1.msra.mxu0 0.0
  %6644 = vmatprep.subr.mxu0 0.0
  %6645 = vmatpush1.msra.mxu0 0.0
  %6646 = vmatprep.subr.mxu0 0.0
  %6647 = vmatpush1.msra.mxu0 0.0
  %6648 = vmatprep.subr.mxu0 0.0
  %6649 = vmatpush1.msra.mxu0 0.0
  %6650 = vmatprep.subr.mxu0 0.0
  %6651 = vmatpush1.msra.mxu0 0.0
  %6652 = vmatprep.subr.mxu0 0.0
  %6653 = vmatpush1.msra.mxu0 0.0
  %6654 = vmatprep.subr.mxu0 0.0
  %6655 = vmatpush1.msra.mxu0 0.0
  %6656 = vmatprep.subr.mxu0 0.0
  %6657 = vmatpush1.msra.mxu0 0.0
  %6658 = vmatprep.subr.mxu0 0.0
  %6659 = vmatpush1.msra.mxu0 0.0
  %6660 = vmatprep.subr.mxu0 0.0
  %6661 = vmatpush1.msra.mxu0 0.0
  %6662 = vmatprep.subr.mxu0 0.0
  %6663 = vmatpush1.msra.mxu0 0.0
  %6664 = vmatprep.subr.mxu0 0.0
  %6665 = vmatpush1.msra.mxu0 0.0
  %6666 = vmatprep.subr.mxu0 0.0
  %6667 = vmatpush1.msra.mxu0 0.0
  %6668 = vmatprep.subr.mxu0 0.0
  %6669 = vmatpush1.msra.mxu0 0.0
  %6670 = vmatprep.subr.mxu0 0.0
  %6671 = vmatpush1.msra.mxu0 0.0
  %6672 = vmatprep.subr.mxu0 0.0
  %6673 = vmatpush1.msra.mxu0 0.0
  %6674 = vmatprep.subr.mxu0 0.0
  %6675 = vmatpush1.msra.mxu0 0.0
  %6676 = vmatprep.subr.mxu0 0.0
  %6677 = vmatpush1.msra.mxu0 0.0
  %6678 = vmatprep.subr.mxu0 0.0
  %6679 = vmatpush1.msra.mxu0 0.0
  %6680 = vmatprep.subr.mxu0 0.0
  %6681 = vmatpush1.msra.mxu0 0.0
  %6682 = vmatprep.subr.mxu0 0.0
  %6683 = vmatpush1.msra.mxu0 0.0
  %6684 = vmatprep.subr.mxu0 0.0
  %6685 = vmatpush1.msra.mxu0 0.0
  %6686 = vmatprep.subr.mxu0 0.0
  %6687 = vmatpush1.msra.mxu0 0.0
  %6688 = vmatprep.subr.mxu0 0.0
  %6689 = vmatpush1.msra.mxu0 0.0
  %6690 = vmatprep.subr.mxu0 0.0
  %6691 = vmatpush1.msra.mxu0 0.0
  %6692 = vmatprep.subr.mxu0 0.0
  %6693 = vmatpush1.msra.mxu0 0.0
  %6694 = vmatprep.subr.mxu0 0.0
  %6695 = vmatpush1.msra.mxu0 0.0
  %6696 = vmatprep.subr.mxu0 0.0
  %6697 = vmatpush1.msra.mxu0 0.0
  %6698 = vmatprep.mubr.f32.mxu0 0.0
  %6699 = vmatmul.mubr.f32.gmra.mrb[0].mxu0 %v4377
  %v6700 = vpop.f32.mrb[0].mxu0
  %v6701 = vadd.f32 0.0, %v6700
  %v6702 = vpop.f32.mrb[0].mxu0
  %6703 = vdwg.mxu0
  %6704 = vmatprep.subr.mxu0 0.0
  %6705 = vmatpush1.msra.mxu0 %v103
  %6706 = vmatprep.subr.mxu0 0.0
  %6707 = vmatpush1.msra.mxu0 0.0
  %6708 = vmatprep.subr.mxu0 0.0
  %6709 = vmatpush1.msra.mxu0 0.0
  %6710 = vmatprep.subr.mxu0 0.0
  %6711 = vmatpush1.msra.mxu0 0.0
  %6712 = vmatprep.subr.mxu0 0.0
  %6713 = vmatpush1.msra.mxu0 0.0
  %6714 = vmatprep.subr.mxu0 0.0
  %6715 = vmatpush1.msra.mxu0 0.0
  %6716 = vmatprep.subr.mxu0 0.0
  %6717 = vmatpush1.msra.mxu0 0.0
  %6718 = vmatprep.subr.mxu0 0.0
  %6719 = vmatpush1.msra.mxu0 0.0
  %6720 = vmatprep.subr.mxu0 0.0
  %6721 = vmatpush1.msra.mxu0 0.0
  %6722 = vmatprep.subr.mxu0 0.0
  %6723 = vmatpush1.msra.mxu0 0.0
  %6724 = vmatprep.subr.mxu0 0.0
  %6725 = vmatpush1.msra.mxu0 0.0
  %6726 = vmatprep.subr.mxu0 0.0
  %6727 = vmatpush1.msra.mxu0 0.0
  %6728 = vmatprep.subr.mxu0 0.0
  %6729 = vmatpush1.msra.mxu0 0.0
  %6730 = vmatprep.subr.mxu0 0.0
  %6731 = vmatpush1.msra.mxu0 0.0
  %6732 = vmatprep.subr.mxu0 0.0
  %6733 = vmatpush1.msra.mxu0 0.0
  %6734 = vmatprep.subr.mxu0 0.0
  %6735 = vmatpush1.msra.mxu0 0.0
  %6736 = vmatprep.subr.mxu0 0.0
  %6737 = vmatpush1.msra.mxu0 0.0
  %6738 = vmatprep.subr.mxu0 0.0
  %6739 = vmatpush1.msra.mxu0 0.0
  %6740 = vmatprep.subr.mxu0 0.0
  %6741 = vmatpush1.msra.mxu0 0.0
  %6742 = vmatprep.subr.mxu0 0.0
  %6743 = vmatpush1.msra.mxu0 0.0
  %6744 = vmatprep.subr.mxu0 0.0
  %6745 = vmatpush1.msra.mxu0 0.0
  %6746 = vmatprep.subr.mxu0 0.0
  %6747 = vmatpush1.msra.mxu0 0.0
  %6748 = vmatprep.subr.mxu0 0.0
  %6749 = vmatpush1.msra.mxu0 0.0
  %6750 = vmatprep.subr.mxu0 0.0
  %6751 = vmatpush1.msra.mxu0 0.0
  %6752 = vmatprep.subr.mxu0 0.0
  %6753 = vmatpush1.msra.mxu0 0.0
  %6754 = vmatprep.subr.mxu0 0.0
  %6755 = vmatpush1.msra.mxu0 0.0
  %6756 = vmatprep.subr.mxu0 0.0
  %6757 = vmatpush1.msra.mxu0 0.0
  %6758 = vmatprep.subr.mxu0 0.0
  %6759 = vmatpush1.msra.mxu0 0.0
  %6760 = vmatprep.subr.mxu0 0.0
  %6761 = vmatpush1.msra.mxu0 0.0
  %6762 = vmatprep.subr.mxu0 0.0
  %6763 = vmatpush1.msra.mxu0 0.0
  %6764 = vmatprep.subr.mxu0 0.0
  %6765 = vmatpush1.msra.mxu0 0.0
  %6766 = vmatprep.subr.mxu0 0.0
  %6767 = vmatpush1.msra.mxu0 0.0
  %6768 = vmatprep.mubr.f32.mxu0 0.0
  %6769 = vmatmul.mubr.f32.gmra.mrb[0].mxu0 %v4450
  %v6770 = vpop.f32.mrb[0].mxu0
  %v6771 = vadd.f32 0.0, %v6770
  %v6772 = vpop.f32.mrb[0].mxu0
  %6773 = vdwg.mxu0
  %6774 = vmatprep.subr.mxu0 0.0
  %6775 = vmatpush1.msra.mxu0 %v104
  %6776 = vmatprep.subr.mxu0 0.0
  %6777 = vmatpush1.msra.mxu0 0.0
  %6778 = vmatprep.subr.mxu0 0.0
  %6779 = vmatpush1.msra.mxu0 0.0
  %6780 = vmatprep.subr.mxu0 0.0
  %6781 = vmatpush1.msra.mxu0 0.0
  %6782 = vmatprep.subr.mxu0 0.0
  %6783 = vmatpush1.msra.mxu0 0.0
  %6784 = vmatprep.subr.mxu0 0.0
  %6785 = vmatpush1.msra.mxu0 0.0
  %6786 = vmatprep.subr.mxu0 0.0
  %6787 = vmatpush1.msra.mxu0 0.0
  %6788 = vmatprep.subr.mxu0 0.0
  %6789 = vmatpush1.msra.mxu0 0.0
  %6790 = vmatprep.subr.mxu0 0.0
  %6791 = vmatpush1.msra.mxu0 0.0
  %6792 = vmatprep.subr.mxu0 0.0
  %6793 = vmatpush1.msra.mxu0 0.0
  %6794 = vmatprep.subr.mxu0 0.0
  %6795 = vmatpush1.msra.mxu0 0.0
  %6796 = vmatprep.subr.mxu0 0.0
  %6797 = vmatpush1.msra.mxu0 0.0
  %6798 = vmatprep.subr.mxu0 0.0
  %6799 = vmatpush1.msra.mxu0 0.0
  %6800 = vmatprep.subr.mxu0 0.0
  %6801 = vmatpush1.msra.mxu0 0.0
  %6802 = vmatprep.subr.mxu0 0.0
  %6803 = vmatpush1.msra.mxu0 0.0
  %6804 = vmatprep.subr.mxu0 0.0
  %6805 = vmatpush1.msra.mxu0 0.0
  %6806 = vmatprep.subr.mxu0 0.0
  %6807 = vmatpush1.msra.mxu0 0.0
  %6808 = vmatprep.subr.mxu0 0.0
  %6809 = vmatpush1.msra.mxu0 0.0
  %6810 = vmatprep.subr.mxu0 0.0
  %6811 = vmatpush1.msra.mxu0 0.0
  %6812 = vmatprep.subr.mxu0 0.0
  %6813 = vmatpush1.msra.mxu0 0.0
  %6814 = vmatprep.subr.mxu0 0.0
  %6815 = vmatpush1.msra.mxu0 0.0
  %6816 = vmatprep.subr.mxu0 0.0
  %6817 = vmatpush1.msra.mxu0 0.0
  %6818 = vmatprep.subr.mxu0 0.0
  %6819 = vmatpush1.msra.mxu0 0.0
  %6820 = vmatprep.subr.mxu0 0.0
  %6821 = vmatpush1.msra.mxu0 0.0
  %6822 = vmatprep.subr.mxu0 0.0
  %6823 = vmatpush1.msra.mxu0 0.0
  %6824 = vmatprep.subr.mxu0 0.0
  %6825 = vmatpush1.msra.mxu0 0.0
  %6826 = vmatprep.subr.mxu0 0.0
  %6827 = vmatpush1.msra.mxu0 0.0
  %6828 = vmatprep.subr.mxu0 0.0
  %6829 = vmatpush1.msra.mxu0 0.0
  %6830 = vmatprep.subr.mxu0 0.0
  %6831 = vmatpush1.msra.mxu0 0.0
  %6832 = vmatprep.subr.mxu0 0.0
  %6833 = vmatpush1.msra.mxu0 0.0
  %6834 = vmatprep.subr.mxu0 0.0
  %6835 = vmatpush1.msra.mxu0 0.0
  %6836 = vmatprep.subr.mxu0 0.0
  %6837 = vmatpush1.msra.mxu0 0.0
  %6838 = vmatprep.mubr.f32.mxu0 0.0
  %6839 = vmatmul.mubr.f32.gmra.mrb[0].mxu0 %v4523
  %v6840 = vpop.f32.mrb[0].mxu0
  %v6841 = vadd.f32 0.0, %v6840
  %v6842 = vpop.f32.mrb[0].mxu0
  %6843 = vdwg.mxu0
  %6844 = vmatprep.subr.mxu0 0.0
  %6845 = vmatpush1.msra.mxu0 %v105
  %6846 = vmatprep.subr.mxu0 0.0
  %6847 = vmatpush1.msra.mxu0 0.0
  %6848 = vmatprep.subr.mxu0 0.0
  %6849 = vmatpush1.msra.mxu0 0.0
  %6850 = vmatprep.subr.mxu0 0.0
  %6851 = vmatpush1.msra.mxu0 0.0
  %6852 = vmatprep.subr.mxu0 0.0
  %6853 = vmatpush1.msra.mxu0 0.0
  %6854 = vmatprep.subr.mxu0 0.0
  %6855 = vmatpush1.msra.mxu0 0.0
  %6856 = vmatprep.subr.mxu0 0.0
  %6857 = vmatpush1.msra.mxu0 0.0
  %6858 = vmatprep.subr.mxu0 0.0
  %6859 = vmatpush1.msra.mxu0 0.0
  %6860 = vmatprep.subr.mxu0 0.0
  %6861 = vmatpush1.msra.mxu0 0.0
  %6862 = vmatprep.subr.mxu0 0.0
  %6863 = vmatpush1.msra.mxu0 0.0
  %6864 = vmatprep.subr.mxu0 0.0
  %6865 = vmatpush1.msra.mxu0 0.0
  %6866 = vmatprep.subr.mxu0 0.0
  %6867 = vmatpush1.msra.mxu0 0.0
  %6868 = vmatprep.subr.mxu0 0.0
  %6869 = vmatpush1.msra.mxu0 0.0
  %6870 = vmatprep.subr.mxu0 0.0
  %6871 = vmatpush1.msra.mxu0 0.0
  %6872 = vmatprep.subr.mxu0 0.0
  %6873 = vmatpush1.msra.mxu0 0.0
  %6874 = vmatprep.subr.mxu0 0.0
  %6875 = vmatpush1.msra.mxu0 0.0
  %6876 = vmatprep.subr.mxu0 0.0
  %6877 = vmatpush1.msra.mxu0 0.0
  %6878 = vmatprep.subr.mxu0 0.0
  %6879 = vmatpush1.msra.mxu0 0.0
  %6880 = vmatprep.subr.mxu0 0.0
  %6881 = vmatpush1.msra.mxu0 0.0
  %6882 = vmatprep.subr.mxu0 0.0
  %6883 = vmatpush1.msra.mxu0 0.0
  %6884 = vmatprep.subr.mxu0 0.0
  %6885 = vmatpush1.msra.mxu0 0.0
  %6886 = vmatprep.subr.mxu0 0.0
  %6887 = vmatpush1.msra.mxu0 0.0
  %6888 = vmatprep.subr.mxu0 0.0
  %6889 = vmatpush1.msra.mxu0 0.0
  %6890 = vmatprep.subr.mxu0 0.0
  %6891 = vmatpush1.msra.mxu0 0.0
  %6892 = vmatprep.subr.mxu0 0.0
  %6893 = vmatpush1.msra.mxu0 0.0
  %6894 = vmatprep.subr.mxu0 0.0
  %6895 = vmatpush1.msra.mxu0 0.0
  %6896 = vmatprep.subr.mxu0 0.0
  %6897 = vmatpush1.msra.mxu0 0.0
  %6898 = vmatprep.subr.mxu0 0.0
  %6899 = vmatpush1.msra.mxu0 0.0
  %6900 = vmatprep.subr.mxu0 0.0
  %6901 = vmatpush1.msra.mxu0 0.0
  %6902 = vmatprep.subr.mxu0 0.0
  %6903 = vmatpush1.msra.mxu0 0.0
  %6904 = vmatprep.subr.mxu0 0.0
  %6905 = vmatpush1.msra.mxu0 0.0
  %6906 = vmatprep.subr.mxu0 0.0
  %6907 = vmatpush1.msra.mxu0 0.0
  %6908 = vmatprep.mubr.f32.mxu0 0.0
  %6909 = vmatmul.mubr.f32.gmra.mrb[0].mxu0 %v4596
  %v6910 = vpop.f32.mrb[0].mxu0
  %v6911 = vadd.f32 0.0, %v6910
  %v6912 = vpop.f32.mrb[0].mxu0
  %6913 = vdwg.mxu0
  %6914 = vmatprep.subr.mxu0 0.0
  %6915 = vmatpush1.msra.mxu0 %v106
  %6916 = vmatprep.subr.mxu0 0.0
  %6917 = vmatpush1.msra.mxu0 0.0
  %6918 = vmatprep.subr.mxu0 0.0
  %6919 = vmatpush1.msra.mxu0 0.0
  %6920 = vmatprep.subr.mxu0 0.0
  %6921 = vmatpush1.msra.mxu0 0.0
  %6922 = vmatprep.subr.mxu0 0.0
  %6923 = vmatpush1.msra.mxu0 0.0
  %6924 = vmatprep.subr.mxu0 0.0
  %6925 = vmatpush1.msra.mxu0 0.0
  %6926 = vmatprep.subr.mxu0 0.0
  %6927 = vmatpush1.msra.mxu0 0.0
  %6928 = vmatprep.subr.mxu0 0.0
  %6929 = vmatpush1.msra.mxu0 0.0
  %6930 = vmatprep.subr.mxu0 0.0
  %6931 = vmatpush1.msra.mxu0 0.0
  %6932 = vmatprep.subr.mxu0 0.0
  %6933 = vmatpush1.msra.mxu0 0.0
  %6934 = vmatprep.subr.mxu0 0.0
  %6935 = vmatpush1.msra.mxu0 0.0
  %6936 = vmatprep.subr.mxu0 0.0
  %6937 = vmatpush1.msra.mxu0 0.0
  %6938 = vmatprep.subr.mxu0 0.0
  %6939 = vmatpush1.msra.mxu0 0.0
  %6940 = vmatprep.subr.mxu0 0.0
  %6941 = vmatpush1.msra.mxu0 0.0
  %6942 = vmatprep.subr.mxu0 0.0
  %6943 = vmatpush1.msra.mxu0 0.0
  %6944 = vmatprep.subr.mxu0 0.0
  %6945 = vmatpush1.msra.mxu0 0.0
  %6946 = vmatprep.subr.mxu0 0.0
  %6947 = vmatpush1.msra.mxu0 0.0
  %6948 = vmatprep.subr.mxu0 0.0
  %6949 = vmatpush1.msra.mxu0 0.0
  %6950 = vmatprep.subr.mxu0 0.0
  %6951 = vmatpush1.msra.mxu0 0.0
  %6952 = vmatprep.subr.mxu0 0.0
  %6953 = vmatpush1.msra.mxu0 0.0
  %6954 = vmatprep.subr.mxu0 0.0
  %6955 = vmatpush1.msra.mxu0 0.0
  %6956 = vmatprep.subr.mxu0 0.0
  %6957 = vmatpush1.msra.mxu0 0.0
  %6958 = vmatprep.subr.mxu0 0.0
  %6959 = vmatpush1.msra.mxu0 0.0
  %6960 = vmatprep.subr.mxu0 0.0
  %6961 = vmatpush1.msra.mxu0 0.0
  %6962 = vmatprep.subr.mxu0 0.0
  %6963 = vmatpush1.msra.mxu0 0.0
  %6964 = vmatprep.subr.mxu0 0.0
  %6965 = vmatpush1.msra.mxu0 0.0
  %6966 = vmatprep.subr.mxu0 0.0
  %6967 = vmatpush1.msra.mxu0 0.0
  %6968 = vmatprep.subr.mxu0 0.0
  %6969 = vmatpush1.msra.mxu0 0.0
  %6970 = vmatprep.subr.mxu0 0.0
  %6971 = vmatpush1.msra.mxu0 0.0
  %6972 = vmatprep.subr.mxu0 0.0
  %6973 = vmatpush1.msra.mxu0 0.0
  %6974 = vmatprep.subr.mxu0 0.0
  %6975 = vmatpush1.msra.mxu0 0.0
  %6976 = vmatprep.subr.mxu0 0.0
  %6977 = vmatpush1.msra.mxu0 0.0
  %6978 = vmatprep.mubr.f32.mxu0 0.0
  %6979 = vmatmul.mubr.f32.gmra.mrb[0].mxu0 %v4669
  %v6980 = vpop.f32.mrb[0].mxu0
  %v6981 = vadd.f32 0.0, %v6980
  %v6982 = vpop.f32.mrb[0].mxu0
  %6983 = vdwg.mxu0
  %6984 = vmatprep.subr.mxu0 0.0
  %6985 = vmatpush1.msra.mxu0 %v107
  %6986 = vmatprep.subr.mxu0 0.0
  %6987 = vmatpush1.msra.mxu0 0.0
  %6988 = vmatprep.subr.mxu0 0.0
  %6989 = vmatpush1.msra.mxu0 0.0
  %6990 = vmatprep.subr.mxu0 0.0
  %6991 = vmatpush1.msra.mxu0 0.0
  %6992 = vmatprep.subr.mxu0 0.0
  %6993 = vmatpush1.msra.mxu0 0.0
  %6994 = vmatprep.subr.mxu0 0.0
  %6995 = vmatpush1.msra.mxu0 0.0
  %6996 = vmatprep.subr.mxu0 0.0
  %6997 = vmatpush1.msra.mxu0 0.0
  %6998 = vmatprep.subr.mxu0 0.0
  %6999 = vmatpush1.msra.mxu0 0.0
  %7000 = vmatprep.subr.mxu0 0.0
  %7001 = vmatpush1.msra.mxu0 0.0
  %7002 = vmatprep.subr.mxu0 0.0
  %7003 = vmatpush1.msra.mxu0 0.0
  %7004 = vmatprep.subr.mxu0 0.0
  %7005 = vmatpush1.msra.mxu0 0.0
  %7006 = vmatprep.subr.mxu0 0.0
  %7007 = vmatpush1.msra.mxu0 0.0
  %7008 = vmatprep.subr.mxu0 0.0
  %7009 = vmatpush1.msra.mxu0 0.0
  %7010 = vmatprep.subr.mxu0 0.0
  %7011 = vmatpush1.msra.mxu0 0.0
  %7012 = vmatprep.subr.mxu0 0.0
  %7013 = vmatpush1.msra.mxu0 0.0
  %7014 = vmatprep.subr.mxu0 0.0
  %7015 = vmatpush1.msra.mxu0 0.0
  %7016 = vmatprep.subr.mxu0 0.0
  %7017 = vmatpush1.msra.mxu0 0.0
  %7018 = vmatprep.subr.mxu0 0.0
  %7019 = vmatpush1.msra.mxu0 0.0
  %7020 = vmatprep.subr.mxu0 0.0
  %7021 = vmatpush1.msra.mxu0 0.0
  %7022 = vmatprep.subr.mxu0 0.0
  %7023 = vmatpush1.msra.mxu0 0.0
  %7024 = vmatprep.subr.mxu0 0.0
  %7025 = vmatpush1.msra.mxu0 0.0
  %7026 = vmatprep.subr.mxu0 0.0
  %7027 = vmatpush1.msra.mxu0 0.0
  %7028 = vmatprep.subr.mxu0 0.0
  %7029 = vmatpush1.msra.mxu0 0.0
  %7030 = vmatprep.subr.mxu0 0.0
  %7031 = vmatpush1.msra.mxu0 0.0
  %7032 = vmatprep.subr.mxu0 0.0
  %7033 = vmatpush1.msra.mxu0 0.0
  %7034 = vmatprep.subr.mxu0 0.0
  %7035 = vmatpush1.msra.mxu0 0.0
  %7036 = vmatprep.subr.mxu0 0.0
  %7037 = vmatpush1.msra.mxu0 0.0
  %7038 = vmatprep.subr.mxu0 0.0
  %7039 = vmatpush1.msra.mxu0 0.0
  %7040 = vmatprep.subr.mxu0 0.0
  %7041 = vmatpush1.msra.mxu0 0.0
  %7042 = vmatprep.subr.mxu0 0.0
  %7043 = vmatpush1.msra.mxu0 0.0
  %7044 = vmatprep.subr.mxu0 0.0
  %7045 = vmatpush1.msra.mxu0 0.0
  %7046 = vmatprep.subr.mxu0 0.0
  %7047 = vmatpush1.msra.mxu0 0.0
  %7048 = vmatprep.mubr.f32.mxu0 0.0
  %7049 = vmatmul.mubr.f32.gmra.mrb[0].mxu0 %v4742
  %v7050 = vpop.f32.mrb[0].mxu0
  %v7051 = vadd.f32 0.0, %v7050
  %v7052 = vpop.f32.mrb[0].mxu0
  %7053 = vdwg.mxu0
  %v7054 = vsub.f32 %v212, %v2548
  %v7055 = vsub.f32 %v285, %v2621
  %v7056 = vsub.f32 %v358, %v2694
  %v7057 = vsub.f32 %v431, %v2767
  %v7058 = vsub.f32 %v504, %v2840
  %v7059 = vsub.f32 %v577, %v2913
  %v7060 = vsub.f32 %v650, %v2986
  %v7061 = vsub.f32 %v723, %v3059
  %v7062 = vsub.f32 %v796, %v3132
  %v7063 = vsub.f32 %v869, %v3205
  %v7064 = vsub.f32 %v942, %v3278
  %v7065 = vsub.f32 %v1015, %v3351
  %v7066 = vsub.f32 %v1088, %v3424
  %v7067 = vsub.f32 %v1161, %v3497
  %v7068 = vsub.f32 %v1234, %v3570
  %v7069 = vsub.f32 %v1307, %v3643
  %v7070 = vsub.f32 %v1380, %v3716
  %v7071 = vsub.f32 %v1453, %v3789
  %v7072 = vsub.f32 %v1526, %v3862
  %v7073 = vsub.f32 %v1599, %v3935
  %v7074 = vsub.f32 %v1672, %v4008
  %v7075 = vsub.f32 %v1745, %v4081
  %v7076 = vsub.f32 %v1818, %v4154
  %v7077 = vsub.f32 %v1891, %v4227
  %v7078 = vsub.f32 %v1964, %v4300
  %v7079 = vsub.f32 %v2037, %v4373
  %v7080 = vsub.f32 %v2110, %v4446
  %v7081 = vsub.f32 %v2183, %v4519
  %v7082 = vsub.f32 %v2256, %v4592
  %v7083 = vsub.f32 %v2329, %v4665
  %v7084 = vsub.f32 %v2402, %v4738
  %v7085 = vsub.f32 %v2475, %v4811
  %7086 = vst.msk [vmem:[%s2] sm:$0xff] %vm141, %v7054
  %7087 = vst.msk [vmem:[%s2 + $0x8] sm:$0xff] %vm141, %v7055
  %7088 = vst.msk [vmem:[%s2 + $0x10] sm:$0xff] %vm141, %v7056
  %7089 = vst.msk [vmem:[%s2 + $0x18] sm:$0xff] %vm141, %v7057
  %7090 = vst.msk [vmem:[%s2 + $0x20] sm:$0xff] %vm141, %v7058
  %7091 = vst.msk [vmem:[%s2 + $0x28] sm:$0xff] %vm141, %v7059
  %7092 = vst.msk [vmem:[%s2 + $0x30] sm:$0xff] %vm141, %v7060
  %7093 = vst.msk [vmem:[%s2 + $0x38] sm:$0xff] %vm141, %v7061
  %7094 = vst.msk [vmem:[%s2 + $0x40] sm:$0xff] %vm141, %v7062
  %7095 = vst.msk [vmem:[%s2 + $0x48] sm:$0xff] %vm141, %v7063
  %7096 = vst.msk [vmem:[%s2 + $0x50] sm:$0xff] %vm141, %v7064
  %7097 = vst.msk [vmem:[%s2 + $0x58] sm:$0xff] %vm141, %v7065
  %7098 = vst.msk [vmem:[%s2 + $0x60] sm:$0xff] %vm141, %v7066
  %7099 = vst.msk [vmem:[%s2 + $0x68] sm:$0xff] %vm141, %v7067
  %7100 = vst.msk [vmem:[%s2 + $0x70] sm:$0xff] %vm141, %v7068
  %7101 = vst.msk [vmem:[%s2 + $0x78] sm:$0xff] %vm141, %v7069
  %7102 = vst.msk [vmem:[%s2 + $0x80] sm:$0xff] %vm141, %v7070
  %7103 = vst.msk [vmem:[%s2 + $0x88] sm:$0xff] %vm141, %v7071
  %7104 = vst.msk [vmem:[%s2 + $0x90] sm:$0xff] %vm141, %v7072
  %7105 = vst.msk [vmem:[%s2 + $0x98] sm:$0xff] %vm141, %v7073
  %7106 = vst.msk [vmem:[%s2 + $0xa0] sm:$0xff] %vm141, %v7074
  %7107 = vst.msk [vmem:[%s2 + $0xa8] sm:$0xff] %vm141, %v7075
  %7108 = vst.msk [vmem:[%s2 + $0xb0] sm:$0xff] %vm141, %v7076
  %7109 = vst.msk [vmem:[%s2 + $0xb8] sm:$0xff] %vm141, %v7077
  %7110 = vst.msk [vmem:[%s2 + $0xc0] sm:$0xff] %vm141, %v7078
  %7111 = vst.msk [vmem:[%s2 + $0xc8] sm:$0xff] %vm141, %v7079
  %7112 = vst.msk [vmem:[%s2 + $0xd0] sm:$0xff] %vm141, %v7080
  %7113 = vst.msk [vmem:[%s2 + $0xd8] sm:$0xff] %vm141, %v7081
  %7114 = vst.msk [vmem:[%s2 + $0xe0] sm:$0xff] %vm141, %v7082
  %7115 = vst.msk [vmem:[%s2 + $0xe8] sm:$0xff] %vm141, %v7083
  %7116 = vst.msk [vmem:[%s2 + $0xf0] sm:$0xff] %vm141, %v7084
  %7117 = vst.msk [vmem:[%s2 + $0xf8] sm:$0xff] %vm141, %v7085
  %7118 = vmatprep.subr.mxu0 0.0
  %7119 = vmatpush1.msra.mxu0 %v109
  %7120 = vmatprep.subr.mxu0 0.0
  %7121 = vmatpush1.msra.mxu0 0.0
  %7122 = vmatprep.subr.mxu0 0.0
  %7123 = vmatpush1.msra.mxu0 0.0
  %7124 = vmatprep.subr.mxu0 0.0
  %7125 = vmatpush1.msra.mxu0 0.0
  %7126 = vmatprep.subr.mxu0 0.0
  %7127 = vmatpush1.msra.mxu0 0.0
  %7128 = vmatprep.subr.mxu0 0.0
  %7129 = vmatpush1.msra.mxu0 0.0
  %7130 = vmatprep.subr.mxu0 0.0
  %7131 = vmatpush1.msra.mxu0 0.0
  %7132 = vmatprep.subr.mxu0 0.0
  %7133 = vmatpush1.msra.mxu0 0.0
  %7134 = vmatprep.subr.mxu0 0.0
  %7135 = vmatpush1.msra.mxu0 0.0
  %7136 = vmatprep.subr.mxu0 0.0
  %7137 = vmatpush1.msra.mxu0 0.0
  %7138 = vmatprep.subr.mxu0 0.0
  %7139 = vmatpush1.msra.mxu0 0.0
  %7140 = vmatprep.subr.mxu0 0.0
  %7141 = vmatpush1.msra.mxu0 0.0
  %7142 = vmatprep.subr.mxu0 0.0
  %7143 = vmatpush1.msra.mxu0 0.0
  %7144 = vmatprep.subr.mxu0 0.0
  %7145 = vmatpush1.msra.mxu0 0.0
  %7146 = vmatprep.subr.mxu0 0.0
  %7147 = vmatpush1.msra.mxu0 0.0
  %7148 = vmatprep.subr.mxu0 0.0
  %7149 = vmatpush1.msra.mxu0 0.0
  %7150 = vmatprep.subr.mxu0 0.0
  %7151 = vmatpush1.msra.mxu0 0.0
  %7152 = vmatprep.subr.mxu0 0.0
  %7153 = vmatpush1.msra.mxu0 0.0
  %7154 = vmatprep.subr.mxu0 0.0
  %7155 = vmatpush1.msra.mxu0 0.0
  %7156 = vmatprep.subr.mxu0 0.0
  %7157 = vmatpush1.msra.mxu0 0.0
  %7158 = vmatprep.subr.mxu0 0.0
  %7159 = vmatpush1.msra.mxu0 0.0
  %7160 = vmatprep.subr.mxu0 0.0
  %7161 = vmatpush1.msra.mxu0 0.0
  %7162 = vmatprep.subr.mxu0 0.0
  %7163 = vmatpush1.msra.mxu0 0.0
  %7164 = vmatprep.subr.mxu0 0.0
  %7165 = vmatpush1.msra.mxu0 0.0
  %7166 = vmatprep.subr.mxu0 0.0
  %7167 = vmatpush1.msra.mxu0 0.0
  %7168 = vmatprep.subr.mxu0 0.0
  %7169 = vmatpush1.msra.mxu0 0.0
  %7170 = vmatprep.subr.mxu0 0.0
  %7171 = vmatpush1.msra.mxu0 0.0
  %7172 = vmatprep.subr.mxu0 0.0
  %7173 = vmatpush1.msra.mxu0 0.0
  %7174 = vmatprep.subr.mxu0 0.0
  %7175 = vmatpush1.msra.mxu0 0.0
  %7176 = vmatprep.subr.mxu0 0.0
  %7177 = vmatpush1.msra.mxu0 0.0
  %7178 = vmatprep.subr.mxu0 0.0
  %7179 = vmatpush1.msra.mxu0 0.0
  %7180 = vmatprep.subr.mxu0 0.0
  %7181 = vmatpush1.msra.mxu0 0.0
  %7182 = vmatprep.mubr.f32.mxu0 0.0
  %7183 = vmatmul.mubr.f32.gmra.mrb[0].mxu0 %v143
  %v7184 = vpop.f32.mrb[0].mxu0
  %v7185 = vadd.f32 %v4881, %v7184
  %v7186 = vpop.f32.mrb[0].mxu0
  %7187 = vdwg.mxu0
  %7188 = vmatprep.subr.mxu0 0.0
  %7189 = vmatpush1.msra.mxu0 %v110
  %7190 = vmatprep.subr.mxu0 0.0
  %7191 = vmatpush1.msra.mxu0 0.0
  %7192 = vmatprep.subr.mxu0 0.0
  %7193 = vmatpush1.msra.mxu0 0.0
  %7194 = vmatprep.subr.mxu0 0.0
  %7195 = vmatpush1.msra.mxu0 0.0
  %7196 = vmatprep.subr.mxu0 0.0
  %7197 = vmatpush1.msra.mxu0 0.0
  %7198 = vmatprep.subr.mxu0 0.0
  %7199 = vmatpush1.msra.mxu0 0.0
  %7200 = vmatprep.subr.mxu0 0.0
  %7201 = vmatpush1.msra.mxu0 0.0
  %7202 = vmatprep.subr.mxu0 0.0
  %7203 = vmatpush1.msra.mxu0 0.0
  %7204 = vmatprep.subr.mxu0 0.0
  %7205 = vmatpush1.msra.mxu0 0.0
  %7206 = vmatprep.subr.mxu0 0.0
  %7207 = vmatpush1.msra.mxu0 0.0
  %7208 = vmatprep.subr.mxu0 0.0
  %7209 = vmatpush1.msra.mxu0 0.0
  %7210 = vmatprep.subr.mxu0 0.0
  %7211 = vmatpush1.msra.mxu0 0.0
  %7212 = vmatprep.subr.mxu0 0.0
  %7213 = vmatpush1.msra.mxu0 0.0
  %7214 = vmatprep.subr.mxu0 0.0
  %7215 = vmatpush1.msra.mxu0 0.0
  %7216 = vmatprep.subr.mxu0 0.0
  %7217 = vmatpush1.msra.mxu0 0.0
  %7218 = vmatprep.subr.mxu0 0.0
  %7219 = vmatpush1.msra.mxu0 0.0
  %7220 = vmatprep.subr.mxu0 0.0
  %7221 = vmatpush1.msra.mxu0 0.0
  %7222 = vmatprep.subr.mxu0 0.0
  %7223 = vmatpush1.msra.mxu0 0.0
  %7224 = vmatprep.subr.mxu0 0.0
  %7225 = vmatpush1.msra.mxu0 0.0
  %7226 = vmatprep.subr.mxu0 0.0
  %7227 = vmatpush1.msra.mxu0 0.0
  %7228 = vmatprep.subr.mxu0 0.0
  %7229 = vmatpush1.msra.mxu0 0.0
  %7230 = vmatprep.subr.mxu0 0.0
  %7231 = vmatpush1.msra.mxu0 0.0
  %7232 = vmatprep.subr.mxu0 0.0
  %7233 = vmatpush1.msra.mxu0 0.0
  %7234 = vmatprep.subr.mxu0 0.0
  %7235 = vmatpush1.msra.mxu0 0.0
  %7236 = vmatprep.subr.mxu0 0.0
  %7237 = vmatpush1.msra.mxu0 0.0
  %7238 = vmatprep.subr.mxu0 0.0
  %7239 = vmatpush1.msra.mxu0 0.0
  %7240 = vmatprep.subr.mxu0 0.0
  %7241 = vmatpush1.msra.mxu0 0.0
  %7242 = vmatprep.subr.mxu0 0.0
  %7243 = vmatpush1.msra.mxu0 0.0
  %7244 = vmatprep.subr.mxu0 0.0
  %7245 = vmatpush1.msra.mxu0 0.0
  %7246 = vmatprep.subr.mxu0 0.0
  %7247 = vmatpush1.msra.mxu0 0.0
  %7248 = vmatprep.subr.mxu0 0.0
  %7249 = vmatpush1.msra.mxu0 0.0
  %7250 = vmatprep.subr.mxu0 0.0
  %7251 = vmatpush1.msra.mxu0 0.0
  %7252 = vmatprep.mubr.f32.mxu0 0.0
  %7253 = vmatmul.mubr.f32.gmra.mrb[0].mxu0 %v216
  %v7254 = vpop.f32.mrb[0].mxu0
  %v7255 = vadd.f32 %v4951, %v7254
  %v7256 = vpop.f32.mrb[0].mxu0
  %7257 = vdwg.mxu0
  %7258 = vmatprep.subr.mxu0 0.0
  %7259 = vmatpush1.msra.mxu0 %v111
  %7260 = vmatprep.subr.mxu0 0.0
  %7261 = vmatpush1.msra.mxu0 0.0
  %7262 = vmatprep.subr.mxu0 0.0
  %7263 = vmatpush1.msra.mxu0 0.0
  %7264 = vmatprep.subr.mxu0 0.0
  %7265 = vmatpush1.msra.mxu0 0.0
  %7266 = vmatprep.subr.mxu0 0.0
  %7267 = vmatpush1.msra.mxu0 0.0
  %7268 = vmatprep.subr.mxu0 0.0
  %7269 = vmatpush1.msra.mxu0 0.0
  %7270 = vmatprep.subr.mxu0 0.0
  %7271 = vmatpush1.msra.mxu0 0.0
  %7272 = vmatprep.subr.mxu0 0.0
  %7273 = vmatpush1.msra.mxu0 0.0
  %7274 = vmatprep.subr.mxu0 0.0
  %7275 = vmatpush1.msra.mxu0 0.0
  %7276 = vmatprep.subr.mxu0 0.0
  %7277 = vmatpush1.msra.mxu0 0.0
  %7278 = vmatprep.subr.mxu0 0.0
  %7279 = vmatpush1.msra.mxu0 0.0
  %7280 = vmatprep.subr.mxu0 0.0
  %7281 = vmatpush1.msra.mxu0 0.0
  %7282 = vmatprep.subr.mxu0 0.0
  %7283 = vmatpush1.msra.mxu0 0.0
  %7284 = vmatprep.subr.mxu0 0.0
  %7285 = vmatpush1.msra.mxu0 0.0
  %7286 = vmatprep.subr.mxu0 0.0
  %7287 = vmatpush1.msra.mxu0 0.0
  %7288 = vmatprep.subr.mxu0 0.0
  %7289 = vmatpush1.msra.mxu0 0.0
  %7290 = vmatprep.subr.mxu0 0.0
  %7291 = vmatpush1.msra.mxu0 0.0
  %7292 = vmatprep.subr.mxu0 0.0
  %7293 = vmatpush1.msra.mxu0 0.0
  %7294 = vmatprep.subr.mxu0 0.0
  %7295 = vmatpush1.msra.mxu0 0.0
  %7296 = vmatprep.subr.mxu0 0.0
  %7297 = vmatpush1.msra.mxu0 0.0
  %7298 = vmatprep.subr.mxu0 0.0
  %7299 = vmatpush1.msra.mxu0 0.0
  %7300 = vmatprep.subr.mxu0 0.0
  %7301 = vmatpush1.msra.mxu0 0.0
  %7302 = vmatprep.subr.mxu0 0.0
  %7303 = vmatpush1.msra.mxu0 0.0
  %7304 = vmatprep.subr.mxu0 0.0
  %7305 = vmatpush1.msra.mxu0 0.0
  %7306 = vmatprep.subr.mxu0 0.0
  %7307 = vmatpush1.msra.mxu0 0.0
  %7308 = vmatprep.subr.mxu0 0.0
  %7309 = vmatpush1.msra.mxu0 0.0
  %7310 = vmatprep.subr.mxu0 0.0
  %7311 = vmatpush1.msra.mxu0 0.0
  %7312 = vmatprep.subr.mxu0 0.0
  %7313 = vmatpush1.msra.mxu0 0.0
  %7314 = vmatprep.subr.mxu0 0.0
  %7315 = vmatpush1.msra.mxu0 0.0
  %7316 = vmatprep.subr.mxu0 0.0
  %7317 = vmatpush1.msra.mxu0 0.0
  %7318 = vmatprep.subr.mxu0 0.0
  %7319 = vmatpush1.msra.mxu0 0.0
  %7320 = vmatprep.subr.mxu0 0.0
  %7321 = vmatpush1.msra.mxu0 0.0
  %7322 = vmatprep.mubr.f32.mxu0 0.0
  %7323 = vmatmul.mubr.f32.gmra.mrb[0].mxu0 %v289
  %v7324 = vpop.f32.mrb[0].mxu0
  %v7325 = vadd.f32 %v5021, %v7324
  %v7326 = vpop.f32.mrb[0].mxu0
  %7327 = vdwg.mxu0
  %7328 = vmatprep.subr.mxu0 0.0
  %7329 = vmatpush1.msra.mxu0 %v112
  %7330 = vmatprep.subr.mxu0 0.0
  %7331 = vmatpush1.msra.mxu0 0.0
  %7332 = vmatprep.subr.mxu0 0.0
  %7333 = vmatpush1.msra.mxu0 0.0
  %7334 = vmatprep.subr.mxu0 0.0
  %7335 = vmatpush1.msra.mxu0 0.0
  %7336 = vmatprep.subr.mxu0 0.0
  %7337 = vmatpush1.msra.mxu0 0.0
  %7338 = vmatprep.subr.mxu0 0.0
  %7339 = vmatpush1.msra.mxu0 0.0
  %7340 = vmatprep.subr.mxu0 0.0
  %7341 = vmatpush1.msra.mxu0 0.0
  %7342 = vmatprep.subr.mxu0 0.0
  %7343 = vmatpush1.msra.mxu0 0.0
  %7344 = vmatprep.subr.mxu0 0.0
  %7345 = vmatpush1.msra.mxu0 0.0
  %7346 = vmatprep.subr.mxu0 0.0
  %7347 = vmatpush1.msra.mxu0 0.0
  %7348 = vmatprep.subr.mxu0 0.0
  %7349 = vmatpush1.msra.mxu0 0.0
  %7350 = vmatprep.subr.mxu0 0.0
  %7351 = vmatpush1.msra.mxu0 0.0
  %7352 = vmatprep.subr.mxu0 0.0
  %7353 = vmatpush1.msra.mxu0 0.0
  %7354 = vmatprep.subr.mxu0 0.0
  %7355 = vmatpush1.msra.mxu0 0.0
  %7356 = vmatprep.subr.mxu0 0.0
  %7357 = vmatpush1.msra.mxu0 0.0
  %7358 = vmatprep.subr.mxu0 0.0
  %7359 = vmatpush1.msra.mxu0 0.0
  %7360 = vmatprep.subr.mxu0 0.0
  %7361 = vmatpush1.msra.mxu0 0.0
  %7362 = vmatprep.subr.mxu0 0.0
  %7363 = vmatpush1.msra.mxu0 0.0
  %7364 = vmatprep.subr.mxu0 0.0
  %7365 = vmatpush1.msra.mxu0 0.0
  %7366 = vmatprep.subr.mxu0 0.0
  %7367 = vmatpush1.msra.mxu0 0.0
  %7368 = vmatprep.subr.mxu0 0.0
  %7369 = vmatpush1.msra.mxu0 0.0
  %7370 = vmatprep.subr.mxu0 0.0
  %7371 = vmatpush1.msra.mxu0 0.0
  %7372 = vmatprep.subr.mxu0 0.0
  %7373 = vmatpush1.msra.mxu0 0.0
  %7374 = vmatprep.subr.mxu0 0.0
  %7375 = vmatpush1.msra.mxu0 0.0
  %7376 = vmatprep.subr.mxu0 0.0
  %7377 = vmatpush1.msra.mxu0 0.0
  %7378 = vmatprep.subr.mxu0 0.0
  %7379 = vmatpush1.msra.mxu0 0.0
  %7380 = vmatprep.subr.mxu0 0.0
  %7381 = vmatpush1.msra.mxu0 0.0
  %7382 = vmatprep.subr.mxu0 0.0
  %7383 = vmatpush1.msra.mxu0 0.0
  %7384 = vmatprep.subr.mxu0 0.0
  %7385 = vmatpush1.msra.mxu0 0.0
  %7386 = vmatprep.subr.mxu0 0.0
  %7387 = vmatpush1.msra.mxu0 0.0
  %7388 = vmatprep.subr.mxu0 0.0
  %7389 = vmatpush1.msra.mxu0 0.0
  %7390 = vmatprep.subr.mxu0 0.0
  %7391 = vmatpush1.msra.mxu0 0.0
  %7392 = vmatprep.mubr.f32.mxu0 0.0
  %7393 = vmatmul.mubr.f32.gmra.mrb[0].mxu0 %v362
  %v7394 = vpop.f32.mrb[0].mxu0
  %v7395 = vadd.f32 %v5091, %v7394
  %v7396 = vpop.f32.mrb[0].mxu0
  %7397 = vdwg.mxu0
  %7398 = vmatprep.subr.mxu0 0.0
  %7399 = vmatpush1.msra.mxu0 %v113
  %7400 = vmatprep.subr.mxu0 0.0
  %7401 = vmatpush1.msra.mxu0 0.0
  %7402 = vmatprep.subr.mxu0 0.0
  %7403 = vmatpush1.msra.mxu0 0.0
  %7404 = vmatprep.subr.mxu0 0.0
  %7405 = vmatpush1.msra.mxu0 0.0
  %7406 = vmatprep.subr.mxu0 0.0
  %7407 = vmatpush1.msra.mxu0 0.0
  %7408 = vmatprep.subr.mxu0 0.0
  %7409 = vmatpush1.msra.mxu0 0.0
  %7410 = vmatprep.subr.mxu0 0.0
  %7411 = vmatpush1.msra.mxu0 0.0
  %7412 = vmatprep.subr.mxu0 0.0
  %7413 = vmatpush1.msra.mxu0 0.0
  %7414 = vmatprep.subr.mxu0 0.0
  %7415 = vmatpush1.msra.mxu0 0.0
  %7416 = vmatprep.subr.mxu0 0.0
  %7417 = vmatpush1.msra.mxu0 0.0
  %7418 = vmatprep.subr.mxu0 0.0
  %7419 = vmatpush1.msra.mxu0 0.0
  %7420 = vmatprep.subr.mxu0 0.0
  %7421 = vmatpush1.msra.mxu0 0.0
  %7422 = vmatprep.subr.mxu0 0.0
  %7423 = vmatpush1.msra.mxu0 0.0
  %7424 = vmatprep.subr.mxu0 0.0
  %7425 = vmatpush1.msra.mxu0 0.0
  %7426 = vmatprep.subr.mxu0 0.0
  %7427 = vmatpush1.msra.mxu0 0.0
  %7428 = vmatprep.subr.mxu0 0.0
  %7429 = vmatpush1.msra.mxu0 0.0
  %7430 = vmatprep.subr.mxu0 0.0
  %7431 = vmatpush1.msra.mxu0 0.0
  %7432 = vmatprep.subr.mxu0 0.0
  %7433 = vmatpush1.msra.mxu0 0.0
  %7434 = vmatprep.subr.mxu0 0.0
  %7435 = vmatpush1.msra.mxu0 0.0
  %7436 = vmatprep.subr.mxu0 0.0
  %7437 = vmatpush1.msra.mxu0 0.0
  %7438 = vmatprep.subr.mxu0 0.0
  %7439 = vmatpush1.msra.mxu0 0.0
  %7440 = vmatprep.subr.mxu0 0.0
  %7441 = vmatpush1.msra.mxu0 0.0
  %7442 = vmatprep.subr.mxu0 0.0
  %7443 = vmatpush1.msra.mxu0 0.0
  %7444 = vmatprep.subr.mxu0 0.0
  %7445 = vmatpush1.msra.mxu0 0.0
  %7446 = vmatprep.subr.mxu0 0.0
  %7447 = vmatpush1.msra.mxu0 0.0
  %7448 = vmatprep.subr.mxu0 0.0
  %7449 = vmatpush1.msra.mxu0 0.0
  %7450 = vmatprep.subr.mxu0 0.0
  %7451 = vmatpush1.msra.mxu0 0.0
  %7452 = vmatprep.subr.mxu0 0.0
  %7453 = vmatpush1.msra.mxu0 0.0
  %7454 = vmatprep.subr.mxu0 0.0
  %7455 = vmatpush1.msra.mxu0 0.0
  %7456 = vmatprep.subr.mxu0 0.0
  %7457 = vmatpush1.msra.mxu0 0.0
  %7458 = vmatprep.subr.mxu0 0.0
  %7459 = vmatpush1.msra.mxu0 0.0
  %7460 = vmatprep.subr.mxu0 0.0
  %7461 = vmatpush1.msra.mxu0 0.0
  %7462 = vmatprep.mubr.f32.mxu0 0.0
  %7463 = vmatmul.mubr.f32.gmra.mrb[0].mxu0 %v435
  %v7464 = vpop.f32.mrb[0].mxu0
  %v7465 = vadd.f32 %v5161, %v7464
  %v7466 = vpop.f32.mrb[0].mxu0
  %7467 = vdwg.mxu0
  %7468 = vmatprep.subr.mxu0 0.0
  %7469 = vmatpush1.msra.mxu0 %v114
  %7470 = vmatprep.subr.mxu0 0.0
  %7471 = vmatpush1.msra.mxu0 0.0
  %7472 = vmatprep.subr.mxu0 0.0
  %7473 = vmatpush1.msra.mxu0 0.0
  %7474 = vmatprep.subr.mxu0 0.0
  %7475 = vmatpush1.msra.mxu0 0.0
  %7476 = vmatprep.subr.mxu0 0.0
  %7477 = vmatpush1.msra.mxu0 0.0
  %7478 = vmatprep.subr.mxu0 0.0
  %7479 = vmatpush1.msra.mxu0 0.0
  %7480 = vmatprep.subr.mxu0 0.0
  %7481 = vmatpush1.msra.mxu0 0.0
  %7482 = vmatprep.subr.mxu0 0.0
  %7483 = vmatpush1.msra.mxu0 0.0
  %7484 = vmatprep.subr.mxu0 0.0
  %7485 = vmatpush1.msra.mxu0 0.0
  %7486 = vmatprep.subr.mxu0 0.0
  %7487 = vmatpush1.msra.mxu0 0.0
  %7488 = vmatprep.subr.mxu0 0.0
  %7489 = vmatpush1.msra.mxu0 0.0
  %7490 = vmatprep.subr.mxu0 0.0
  %7491 = vmatpush1.msra.mxu0 0.0
  %7492 = vmatprep.subr.mxu0 0.0
  %7493 = vmatpush1.msra.mxu0 0.0
  %7494 = vmatprep.subr.mxu0 0.0
  %7495 = vmatpush1.msra.mxu0 0.0
  %7496 = vmatprep.subr.mxu0 0.0
  %7497 = vmatpush1.msra.mxu0 0.0
  %7498 = vmatprep.subr.mxu0 0.0
  %7499 = vmatpush1.msra.mxu0 0.0
  %7500 = vmatprep.subr.mxu0 0.0
  %7501 = vmatpush1.msra.mxu0 0.0
  %7502 = vmatprep.subr.mxu0 0.0
  %7503 = vmatpush1.msra.mxu0 0.0
  %7504 = vmatprep.subr.mxu0 0.0
  %7505 = vmatpush1.msra.mxu0 0.0
  %7506 = vmatprep.subr.mxu0 0.0
  %7507 = vmatpush1.msra.mxu0 0.0
  %7508 = vmatprep.subr.mxu0 0.0
  %7509 = vmatpush1.msra.mxu0 0.0
  %7510 = vmatprep.subr.mxu0 0.0
  %7511 = vmatpush1.msra.mxu0 0.0
  %7512 = vmatprep.subr.mxu0 0.0
  %7513 = vmatpush1.msra.mxu0 0.0
  %7514 = vmatprep.subr.mxu0 0.0
  %7515 = vmatpush1.msra.mxu0 0.0
  %7516 = vmatprep.subr.mxu0 0.0
  %7517 = vmatpush1.msra.mxu0 0.0
  %7518 = vmatprep.subr.mxu0 0.0
  %7519 = vmatpush1.msra.mxu0 0.0
  %7520 = vmatprep.subr.mxu0 0.0
  %7521 = vmatpush1.msra.mxu0 0.0
  %7522 = vmatprep.subr.mxu0 0.0
  %7523 = vmatpush1.msra.mxu0 0.0
  %7524 = vmatprep.subr.mxu0 0.0
  %7525 = vmatpush1.msra.mxu0 0.0
  %7526 = vmatprep.subr.mxu0 0.0
  %7527 = vmatpush1.msra.mxu0 0.0
  %7528 = vmatprep.subr.mxu0 0.0
  %7529 = vmatpush1.msra.mxu0 0.0
  %7530 = vmatprep.subr.mxu0 0.0
  %7531 = vmatpush1.msra.mxu0 0.0
  %7532 = vmatprep.mubr.f32.mxu0 0.0
  %7533 = vmatmul.mubr.f32.gmra.mrb[0].mxu0 %v508
  %v7534 = vpop.f32.mrb[0].mxu0
  %v7535 = vadd.f32 %v5231, %v7534
  %v7536 = vpop.f32.mrb[0].mxu0
  %7537 = vdwg.mxu0
  %7538 = vmatprep.subr.mxu0 0.0
  %7539 = vmatpush1.msra.mxu0 %v115
  %7540 = vmatprep.subr.mxu0 0.0
  %7541 = vmatpush1.msra.mxu0 0.0
  %7542 = vmatprep.subr.mxu0 0.0
  %7543 = vmatpush1.msra.mxu0 0.0
  %7544 = vmatprep.subr.mxu0 0.0
  %7545 = vmatpush1.msra.mxu0 0.0
  %7546 = vmatprep.subr.mxu0 0.0
  %7547 = vmatpush1.msra.mxu0 0.0
  %7548 = vmatprep.subr.mxu0 0.0
  %7549 = vmatpush1.msra.mxu0 0.0
  %7550 = vmatprep.subr.mxu0 0.0
  %7551 = vmatpush1.msra.mxu0 0.0
  %7552 = vmatprep.subr.mxu0 0.0
  %7553 = vmatpush1.msra.mxu0 0.0
  %7554 = vmatprep.subr.mxu0 0.0
  %7555 = vmatpush1.msra.mxu0 0.0
  %7556 = vmatprep.subr.mxu0 0.0
  %7557 = vmatpush1.msra.mxu0 0.0
  %7558 = vmatprep.subr.mxu0 0.0
  %7559 = vmatpush1.msra.mxu0 0.0
  %7560 = vmatprep.subr.mxu0 0.0
  %7561 = vmatpush1.msra.mxu0 0.0
  %7562 = vmatprep.subr.mxu0 0.0
  %7563 = vmatpush1.msra.mxu0 0.0
  %7564 = vmatprep.subr.mxu0 0.0
  %7565 = vmatpush1.msra.mxu0 0.0
  %7566 = vmatprep.subr.mxu0 0.0
  %7567 = vmatpush1.msra.mxu0 0.0
  %7568 = vmatprep.subr.mxu0 0.0
  %7569 = vmatpush1.msra.mxu0 0.0
  %7570 = vmatprep.subr.mxu0 0.0
  %7571 = vmatpush1.msra.mxu0 0.0
  %7572 = vmatprep.subr.mxu0 0.0
  %7573 = vmatpush1.msra.mxu0 0.0
  %7574 = vmatprep.subr.mxu0 0.0
  %7575 = vmatpush1.msra.mxu0 0.0
  %7576 = vmatprep.subr.mxu0 0.0
  %7577 = vmatpush1.msra.mxu0 0.0
  %7578 = vmatprep.subr.mxu0 0.0
  %7579 = vmatpush1.msra.mxu0 0.0
  %7580 = vmatprep.subr.mxu0 0.0
  %7581 = vmatpush1.msra.mxu0 0.0
  %7582 = vmatprep.subr.mxu0 0.0
  %7583 = vmatpush1.msra.mxu0 0.0
  %7584 = vmatprep.subr.mxu0 0.0
  %7585 = vmatpush1.msra.mxu0 0.0
  %7586 = vmatprep.subr.mxu0 0.0
  %7587 = vmatpush1.msra.mxu0 0.0
  %7588 = vmatprep.subr.mxu0 0.0
  %7589 = vmatpush1.msra.mxu0 0.0
  %7590 = vmatprep.subr.mxu0 0.0
  %7591 = vmatpush1.msra.mxu0 0.0
  %7592 = vmatprep.subr.mxu0 0.0
  %7593 = vmatpush1.msra.mxu0 0.0
  %7594 = vmatprep.subr.mxu0 0.0
  %7595 = vmatpush1.msra.mxu0 0.0
  %7596 = vmatprep.subr.mxu0 0.0
  %7597 = vmatpush1.msra.mxu0 0.0
  %7598 = vmatprep.subr.mxu0 0.0
  %7599 = vmatpush1.msra.mxu0 0.0
  %7600 = vmatprep.subr.mxu0 0.0
  %7601 = vmatpush1.msra.mxu0 0.0
  %7602 = vmatprep.mubr.f32.mxu0 0.0
  %7603 = vmatmul.mubr.f32.gmra.mrb[0].mxu0 %v581
  %v7604 = vpop.f32.mrb[0].mxu0
  %v7605 = vadd.f32 %v5301, %v7604
  %v7606 = vpop.f32.mrb[0].mxu0
  %7607 = vdwg.mxu0
  %7608 = vmatprep.subr.mxu0 0.0
  %7609 = vmatpush1.msra.mxu0 %v116
  %7610 = vmatprep.subr.mxu0 0.0
  %7611 = vmatpush1.msra.mxu0 0.0
  %7612 = vmatprep.subr.mxu0 0.0
  %7613 = vmatpush1.msra.mxu0 0.0
  %7614 = vmatprep.subr.mxu0 0.0
  %7615 = vmatpush1.msra.mxu0 0.0
  %7616 = vmatprep.subr.mxu0 0.0
  %7617 = vmatpush1.msra.mxu0 0.0
  %7618 = vmatprep.subr.mxu0 0.0
  %7619 = vmatpush1.msra.mxu0 0.0
  %7620 = vmatprep.subr.mxu0 0.0
  %7621 = vmatpush1.msra.mxu0 0.0
  %7622 = vmatprep.subr.mxu0 0.0
  %7623 = vmatpush1.msra.mxu0 0.0
  %7624 = vmatprep.subr.mxu0 0.0
  %7625 = vmatpush1.msra.mxu0 0.0
  %7626 = vmatprep.subr.mxu0 0.0
  %7627 = vmatpush1.msra.mxu0 0.0
  %7628 = vmatprep.subr.mxu0 0.0
  %7629 = vmatpush1.msra.mxu0 0.0
  %7630 = vmatprep.subr.mxu0 0.0
  %7631 = vmatpush1.msra.mxu0 0.0
  %7632 = vmatprep.subr.mxu0 0.0
  %7633 = vmatpush1.msra.mxu0 0.0
  %7634 = vmatprep.subr.mxu0 0.0
  %7635 = vmatpush1.msra.mxu0 0.0
  %7636 = vmatprep.subr.mxu0 0.0
  %7637 = vmatpush1.msra.mxu0 0.0
  %7638 = vmatprep.subr.mxu0 0.0
  %7639 = vmatpush1.msra.mxu0 0.0
  %7640 = vmatprep.subr.mxu0 0.0
  %7641 = vmatpush1.msra.mxu0 0.0
  %7642 = vmatprep.subr.mxu0 0.0
  %7643 = vmatpush1.msra.mxu0 0.0
  %7644 = vmatprep.subr.mxu0 0.0
  %7645 = vmatpush1.msra.mxu0 0.0
  %7646 = vmatprep.subr.mxu0 0.0
  %7647 = vmatpush1.msra.mxu0 0.0
  %7648 = vmatprep.subr.mxu0 0.0
  %7649 = vmatpush1.msra.mxu0 0.0
  %7650 = vmatprep.subr.mxu0 0.0
  %7651 = vmatpush1.msra.mxu0 0.0
  %7652 = vmatprep.subr.mxu0 0.0
  %7653 = vmatpush1.msra.mxu0 0.0
  %7654 = vmatprep.subr.mxu0 0.0
  %7655 = vmatpush1.msra.mxu0 0.0
  %7656 = vmatprep.subr.mxu0 0.0
  %7657 = vmatpush1.msra.mxu0 0.0
  %7658 = vmatprep.subr.mxu0 0.0
  %7659 = vmatpush1.msra.mxu0 0.0
  %7660 = vmatprep.subr.mxu0 0.0
  %7661 = vmatpush1.msra.mxu0 0.0
  %7662 = vmatprep.subr.mxu0 0.0
  %7663 = vmatpush1.msra.mxu0 0.0
  %7664 = vmatprep.subr.mxu0 0.0
  %7665 = vmatpush1.msra.mxu0 0.0
  %7666 = vmatprep.subr.mxu0 0.0
  %7667 = vmatpush1.msra.mxu0 0.0
  %7668 = vmatprep.subr.mxu0 0.0
  %7669 = vmatpush1.msra.mxu0 0.0
  %7670 = vmatprep.subr.mxu0 0.0
  %7671 = vmatpush1.msra.mxu0 0.0
  %7672 = vmatprep.mubr.f32.mxu0 0.0
  %7673 = vmatmul.mubr.f32.gmra.mrb[0].mxu0 %v654
  %v7674 = vpop.f32.mrb[0].mxu0
  %v7675 = vadd.f32 %v5371, %v7674
  %v7676 = vpop.f32.mrb[0].mxu0
  %7677 = vdwg.mxu0
  %7678 = vmatprep.subr.mxu0 0.0
  %7679 = vmatpush1.msra.mxu0 %v117
  %7680 = vmatprep.subr.mxu0 0.0
  %7681 = vmatpush1.msra.mxu0 0.0
  %7682 = vmatprep.subr.mxu0 0.0
  %7683 = vmatpush1.msra.mxu0 0.0
  %7684 = vmatprep.subr.mxu0 0.0
  %7685 = vmatpush1.msra.mxu0 0.0
  %7686 = vmatprep.subr.mxu0 0.0
  %7687 = vmatpush1.msra.mxu0 0.0
  %7688 = vmatprep.subr.mxu0 0.0
  %7689 = vmatpush1.msra.mxu0 0.0
  %7690 = vmatprep.subr.mxu0 0.0
  %7691 = vmatpush1.msra.mxu0 0.0
  %7692 = vmatprep.subr.mxu0 0.0
  %7693 = vmatpush1.msra.mxu0 0.0
  %7694 = vmatprep.subr.mxu0 0.0
  %7695 = vmatpush1.msra.mxu0 0.0
  %7696 = vmatprep.subr.mxu0 0.0
  %7697 = vmatpush1.msra.mxu0 0.0
  %7698 = vmatprep.subr.mxu0 0.0
  %7699 = vmatpush1.msra.mxu0 0.0
  %7700 = vmatprep.subr.mxu0 0.0
  %7701 = vmatpush1.msra.mxu0 0.0
  %7702 = vmatprep.subr.mxu0 0.0
  %7703 = vmatpush1.msra.mxu0 0.0
  %7704 = vmatprep.subr.mxu0 0.0
  %7705 = vmatpush1.msra.mxu0 0.0
  %7706 = vmatprep.subr.mxu0 0.0
  %7707 = vmatpush1.msra.mxu0 0.0
  %7708 = vmatprep.subr.mxu0 0.0
  %7709 = vmatpush1.msra.mxu0 0.0
  %7710 = vmatprep.subr.mxu0 0.0
  %7711 = vmatpush1.msra.mxu0 0.0
  %7712 = vmatprep.subr.mxu0 0.0
  %7713 = vmatpush1.msra.mxu0 0.0
  %7714 = vmatprep.subr.mxu0 0.0
  %7715 = vmatpush1.msra.mxu0 0.0
  %7716 = vmatprep.subr.mxu0 0.0
  %7717 = vmatpush1.msra.mxu0 0.0
  %7718 = vmatprep.subr.mxu0 0.0
  %7719 = vmatpush1.msra.mxu0 0.0
  %7720 = vmatprep.subr.mxu0 0.0
  %7721 = vmatpush1.msra.mxu0 0.0
  %7722 = vmatprep.subr.mxu0 0.0
  %7723 = vmatpush1.msra.mxu0 0.0
  %7724 = vmatprep.subr.mxu0 0.0
  %7725 = vmatpush1.msra.mxu0 0.0
  %7726 = vmatprep.subr.mxu0 0.0
  %7727 = vmatpush1.msra.mxu0 0.0
  %7728 = vmatprep.subr.mxu0 0.0
  %7729 = vmatpush1.msra.mxu0 0.0
  %7730 = vmatprep.subr.mxu0 0.0
  %7731 = vmatpush1.msra.mxu0 0.0
  %7732 = vmatprep.subr.mxu0 0.0
  %7733 = vmatpush1.msra.mxu0 0.0
  %7734 = vmatprep.subr.mxu0 0.0
  %7735 = vmatpush1.msra.mxu0 0.0
  %7736 = vmatprep.subr.mxu0 0.0
  %7737 = vmatpush1.msra.mxu0 0.0
  %7738 = vmatprep.subr.mxu0 0.0
  %7739 = vmatpush1.msra.mxu0 0.0
  %7740 = vmatprep.subr.mxu0 0.0
  %7741 = vmatpush1.msra.mxu0 0.0
  %7742 = vmatprep.mubr.f32.mxu0 0.0
  %7743 = vmatmul.mubr.f32.gmra.mrb[0].mxu0 %v727
  %v7744 = vpop.f32.mrb[0].mxu0
  %v7745 = vadd.f32 %v5441, %v7744
  %v7746 = vpop.f32.mrb[0].mxu0
  %7747 = vdwg.mxu0
  %7748 = vmatprep.subr.mxu0 0.0
  %7749 = vmatpush1.msra.mxu0 %v118
  %7750 = vmatprep.subr.mxu0 0.0
  %7751 = vmatpush1.msra.mxu0 0.0
  %7752 = vmatprep.subr.mxu0 0.0
  %7753 = vmatpush1.msra.mxu0 0.0
  %7754 = vmatprep.subr.mxu0 0.0
  %7755 = vmatpush1.msra.mxu0 0.0
  %7756 = vmatprep.subr.mxu0 0.0
  %7757 = vmatpush1.msra.mxu0 0.0
  %7758 = vmatprep.subr.mxu0 0.0
  %7759 = vmatpush1.msra.mxu0 0.0
  %7760 = vmatprep.subr.mxu0 0.0
  %7761 = vmatpush1.msra.mxu0 0.0
  %7762 = vmatprep.subr.mxu0 0.0
  %7763 = vmatpush1.msra.mxu0 0.0
  %7764 = vmatprep.subr.mxu0 0.0
  %7765 = vmatpush1.msra.mxu0 0.0
  %7766 = vmatprep.subr.mxu0 0.0
  %7767 = vmatpush1.msra.mxu0 0.0
  %7768 = vmatprep.subr.mxu0 0.0
  %7769 = vmatpush1.msra.mxu0 0.0
  %7770 = vmatprep.subr.mxu0 0.0
  %7771 = vmatpush1.msra.mxu0 0.0
  %7772 = vmatprep.subr.mxu0 0.0
  %7773 = vmatpush1.msra.mxu0 0.0
  %7774 = vmatprep.subr.mxu0 0.0
  %7775 = vmatpush1.msra.mxu0 0.0
  %7776 = vmatprep.subr.mxu0 0.0
  %7777 = vmatpush1.msra.mxu0 0.0
  %7778 = vmatprep.subr.mxu0 0.0
  %7779 = vmatpush1.msra.mxu0 0.0
  %7780 = vmatprep.subr.mxu0 0.0
  %7781 = vmatpush1.msra.mxu0 0.0
  %7782 = vmatprep.subr.mxu0 0.0
  %7783 = vmatpush1.msra.mxu0 0.0
  %7784 = vmatprep.subr.mxu0 0.0
  %7785 = vmatpush1.msra.mxu0 0.0
  %7786 = vmatprep.subr.mxu0 0.0
  %7787 = vmatpush1.msra.mxu0 0.0
  %7788 = vmatprep.subr.mxu0 0.0
  %7789 = vmatpush1.msra.mxu0 0.0
  %7790 = vmatprep.subr.mxu0 0.0
  %7791 = vmatpush1.msra.mxu0 0.0
  %7792 = vmatprep.subr.mxu0 0.0
  %7793 = vmatpush1.msra.mxu0 0.0
  %7794 = vmatprep.subr.mxu0 0.0
  %7795 = vmatpush1.msra.mxu0 0.0
  %7796 = vmatprep.subr.mxu0 0.0
  %7797 = vmatpush1.msra.mxu0 0.0
  %7798 = vmatprep.subr.mxu0 0.0
  %7799 = vmatpush1.msra.mxu0 0.0
  %7800 = vmatprep.subr.mxu0 0.0
  %7801 = vmatpush1.msra.mxu0 0.0
  %7802 = vmatprep.subr.mxu0 0.0
  %7803 = vmatpush1.msra.mxu0 0.0
  %7804 = vmatprep.subr.mxu0 0.0
  %7805 = vmatpush1.msra.mxu0 0.0
  %7806 = vmatprep.subr.mxu0 0.0
  %7807 = vmatpush1.msra.mxu0 0.0
  %7808 = vmatprep.subr.mxu0 0.0
  %7809 = vmatpush1.msra.mxu0 0.0
  %7810 = vmatprep.subr.mxu0 0.0
  %7811 = vmatpush1.msra.mxu0 0.0
  %7812 = vmatprep.mubr.f32.mxu0 0.0
  %7813 = vmatmul.mubr.f32.gmra.mrb[0].mxu0 %v800
  %v7814 = vpop.f32.mrb[0].mxu0
  %v7815 = vadd.f32 %v5511, %v7814
  %v7816 = vpop.f32.mrb[0].mxu0
  %7817 = vdwg.mxu0
  %7818 = vmatprep.subr.mxu0 0.0
  %7819 = vmatpush1.msra.mxu0 %v119
  %7820 = vmatprep.subr.mxu0 0.0
  %7821 = vmatpush1.msra.mxu0 0.0
  %7822 = vmatprep.subr.mxu0 0.0
  %7823 = vmatpush1.msra.mxu0 0.0
  %7824 = vmatprep.subr.mxu0 0.0
  %7825 = vmatpush1.msra.mxu0 0.0
  %7826 = vmatprep.subr.mxu0 0.0
  %7827 = vmatpush1.msra.mxu0 0.0
  %7828 = vmatprep.subr.mxu0 0.0
  %7829 = vmatpush1.msra.mxu0 0.0
  %7830 = vmatprep.subr.mxu0 0.0
  %7831 = vmatpush1.msra.mxu0 0.0
  %7832 = vmatprep.subr.mxu0 0.0
  %7833 = vmatpush1.msra.mxu0 0.0
  %7834 = vmatprep.subr.mxu0 0.0
  %7835 = vmatpush1.msra.mxu0 0.0
  %7836 = vmatprep.subr.mxu0 0.0
  %7837 = vmatpush1.msra.mxu0 0.0
  %7838 = vmatprep.subr.mxu0 0.0
  %7839 = vmatpush1.msra.mxu0 0.0
  %7840 = vmatprep.subr.mxu0 0.0
  %7841 = vmatpush1.msra.mxu0 0.0
  %7842 = vmatprep.subr.mxu0 0.0
  %7843 = vmatpush1.msra.mxu0 0.0
  %7844 = vmatprep.subr.mxu0 0.0
  %7845 = vmatpush1.msra.mxu0 0.0
  %7846 = vmatprep.subr.mxu0 0.0
  %7847 = vmatpush1.msra.mxu0 0.0
  %7848 = vmatprep.subr.mxu0 0.0
  %7849 = vmatpush1.msra.mxu0 0.0
  %7850 = vmatprep.subr.mxu0 0.0
  %7851 = vmatpush1.msra.mxu0 0.0
  %7852 = vmatprep.subr.mxu0 0.0
  %7853 = vmatpush1.msra.mxu0 0.0
  %7854 = vmatprep.subr.mxu0 0.0
  %7855 = vmatpush1.msra.mxu0 0.0
  %7856 = vmatprep.subr.mxu0 0.0
  %7857 = vmatpush1.msra.mxu0 0.0
  %7858 = vmatprep.subr.mxu0 0.0
  %7859 = vmatpush1.msra.mxu0 0.0
  %7860 = vmatprep.subr.mxu0 0.0
  %7861 = vmatpush1.msra.mxu0 0.0
  %7862 = vmatprep.subr.mxu0 0.0
  %7863 = vmatpush1.msra.mxu0 0.0
  %7864 = vmatprep.subr.mxu0 0.0
  %7865 = vmatpush1.msra.mxu0 0.0
  %7866 = vmatprep.subr.mxu0 0.0
  %7867 = vmatpush1.msra.mxu0 0.0
  %7868 = vmatprep.subr.mxu0 0.0
  %7869 = vmatpush1.msra.mxu0 0.0
  %7870 = vmatprep.subr.mxu0 0.0
  %7871 = vmatpush1.msra.mxu0 0.0
  %7872 = vmatprep.subr.mxu0 0.0
  %7873 = vmatpush1.msra.mxu0 0.0
  %7874 = vmatprep.subr.mxu0 0.0
  %7875 = vmatpush1.msra.mxu0 0.0
  %7876 = vmatprep.subr.mxu0 0.0
  %7877 = vmatpush1.msra.mxu0 0.0
  %7878 = vmatprep.subr.mxu0 0.0
  %7879 = vmatpush1.msra.mxu0 0.0
  %7880 = vmatprep.subr.mxu0 0.0
  %7881 = vmatpush1.msra.mxu0 0.0
  %7882 = vmatprep.mubr.f32.mxu0 0.0
  %7883 = vmatmul.mubr.f32.gmra.mrb[0].mxu0 %v873
  %v7884 = vpop.f32.mrb[0].mxu0
  %v7885 = vadd.f32 %v5581, %v7884
  %v7886 = vpop.f32.mrb[0].mxu0
  %7887 = vdwg.mxu0
  %7888 = vmatprep.subr.mxu0 0.0
  %7889 = vmatpush1.msra.mxu0 %v120
  %7890 = vmatprep.subr.mxu0 0.0
  %7891 = vmatpush1.msra.mxu0 0.0
  %7892 = vmatprep.subr.mxu0 0.0
  %7893 = vmatpush1.msra.mxu0 0.0
  %7894 = vmatprep.subr.mxu0 0.0
  %7895 = vmatpush1.msra.mxu0 0.0
  %7896 = vmatprep.subr.mxu0 0.0
  %7897 = vmatpush1.msra.mxu0 0.0
  %7898 = vmatprep.subr.mxu0 0.0
  %7899 = vmatpush1.msra.mxu0 0.0
  %7900 = vmatprep.subr.mxu0 0.0
  %7901 = vmatpush1.msra.mxu0 0.0
  %7902 = vmatprep.subr.mxu0 0.0
  %7903 = vmatpush1.msra.mxu0 0.0
  %7904 = vmatprep.subr.mxu0 0.0
  %7905 = vmatpush1.msra.mxu0 0.0
  %7906 = vmatprep.subr.mxu0 0.0
  %7907 = vmatpush1.msra.mxu0 0.0
  %7908 = vmatprep.subr.mxu0 0.0
  %7909 = vmatpush1.msra.mxu0 0.0
  %7910 = vmatprep.subr.mxu0 0.0
  %7911 = vmatpush1.msra.mxu0 0.0
  %7912 = vmatprep.subr.mxu0 0.0
  %7913 = vmatpush1.msra.mxu0 0.0
  %7914 = vmatprep.subr.mxu0 0.0
  %7915 = vmatpush1.msra.mxu0 0.0
  %7916 = vmatprep.subr.mxu0 0.0
  %7917 = vmatpush1.msra.mxu0 0.0
  %7918 = vmatprep.subr.mxu0 0.0
  %7919 = vmatpush1.msra.mxu0 0.0
  %7920 = vmatprep.subr.mxu0 0.0
  %7921 = vmatpush1.msra.mxu0 0.0
  %7922 = vmatprep.subr.mxu0 0.0
  %7923 = vmatpush1.msra.mxu0 0.0
  %7924 = vmatprep.subr.mxu0 0.0
  %7925 = vmatpush1.msra.mxu0 0.0
  %7926 = vmatprep.subr.mxu0 0.0
  %7927 = vmatpush1.msra.mxu0 0.0
  %7928 = vmatprep.subr.mxu0 0.0
  %7929 = vmatpush1.msra.mxu0 0.0
  %7930 = vmatprep.subr.mxu0 0.0
  %7931 = vmatpush1.msra.mxu0 0.0
  %7932 = vmatprep.subr.mxu0 0.0
  %7933 = vmatpush1.msra.mxu0 0.0
  %7934 = vmatprep.subr.mxu0 0.0
  %7935 = vmatpush1.msra.mxu0 0.0
  %7936 = vmatprep.subr.mxu0 0.0
  %7937 = vmatpush1.msra.mxu0 0.0
  %7938 = vmatprep.subr.mxu0 0.0
  %7939 = vmatpush1.msra.mxu0 0.0
  %7940 = vmatprep.subr.mxu0 0.0
  %7941 = vmatpush1.msra.mxu0 0.0
  %7942 = vmatprep.subr.mxu0 0.0
  %7943 = vmatpush1.msra.mxu0 0.0
  %7944 = vmatprep.subr.mxu0 0.0
  %7945 = vmatpush1.msra.mxu0 0.0
  %7946 = vmatprep.subr.mxu0 0.0
  %7947 = vmatpush1.msra.mxu0 0.0
  %7948 = vmatprep.subr.mxu0 0.0
  %7949 = vmatpush1.msra.mxu0 0.0
  %7950 = vmatprep.subr.mxu0 0.0
  %7951 = vmatpush1.msra.mxu0 0.0
  %7952 = vmatprep.mubr.f32.mxu0 0.0
  %7953 = vmatmul.mubr.f32.gmra.mrb[0].mxu0 %v946
  %v7954 = vpop.f32.mrb[0].mxu0
  %v7955 = vadd.f32 %v5651, %v7954
  %v7956 = vpop.f32.mrb[0].mxu0
  %7957 = vdwg.mxu0
  %7958 = vmatprep.subr.mxu0 0.0
  %7959 = vmatpush1.msra.mxu0 %v121
  %7960 = vmatprep.subr.mxu0 0.0
  %7961 = vmatpush1.msra.mxu0 0.0
  %7962 = vmatprep.subr.mxu0 0.0
  %7963 = vmatpush1.msra.mxu0 0.0
  %7964 = vmatprep.subr.mxu0 0.0
  %7965 = vmatpush1.msra.mxu0 0.0
  %7966 = vmatprep.subr.mxu0 0.0
  %7967 = vmatpush1.msra.mxu0 0.0
  %7968 = vmatprep.subr.mxu0 0.0
  %7969 = vmatpush1.msra.mxu0 0.0
  %7970 = vmatprep.subr.mxu0 0.0
  %7971 = vmatpush1.msra.mxu0 0.0
  %7972 = vmatprep.subr.mxu0 0.0
  %7973 = vmatpush1.msra.mxu0 0.0
  %7974 = vmatprep.subr.mxu0 0.0
  %7975 = vmatpush1.msra.mxu0 0.0
  %7976 = vmatprep.subr.mxu0 0.0
  %7977 = vmatpush1.msra.mxu0 0.0
  %7978 = vmatprep.subr.mxu0 0.0
  %7979 = vmatpush1.msra.mxu0 0.0
  %7980 = vmatprep.subr.mxu0 0.0
  %7981 = vmatpush1.msra.mxu0 0.0
  %7982 = vmatprep.subr.mxu0 0.0
  %7983 = vmatpush1.msra.mxu0 0.0
  %7984 = vmatprep.subr.mxu0 0.0
  %7985 = vmatpush1.msra.mxu0 0.0
  %7986 = vmatprep.subr.mxu0 0.0
  %7987 = vmatpush1.msra.mxu0 0.0
  %7988 = vmatprep.subr.mxu0 0.0
  %7989 = vmatpush1.msra.mxu0 0.0
  %7990 = vmatprep.subr.mxu0 0.0
  %7991 = vmatpush1.msra.mxu0 0.0
  %7992 = vmatprep.subr.mxu0 0.0
  %7993 = vmatpush1.msra.mxu0 0.0
  %7994 = vmatprep.subr.mxu0 0.0
  %7995 = vmatpush1.msra.mxu0 0.0
  %7996 = vmatprep.subr.mxu0 0.0
  %7997 = vmatpush1.msra.mxu0 0.0
  %7998 = vmatprep.subr.mxu0 0.0
  %7999 = vmatpush1.msra.mxu0 0.0
  %8000 = vmatprep.subr.mxu0 0.0
  %8001 = vmatpush1.msra.mxu0 0.0
  %8002 = vmatprep.subr.mxu0 0.0
  %8003 = vmatpush1.msra.mxu0 0.0
  %8004 = vmatprep.subr.mxu0 0.0
  %8005 = vmatpush1.msra.mxu0 0.0
  %8006 = vmatprep.subr.mxu0 0.0
  %8007 = vmatpush1.msra.mxu0 0.0
  %8008 = vmatprep.subr.mxu0 0.0
  %8009 = vmatpush1.msra.mxu0 0.0
  %8010 = vmatprep.subr.mxu0 0.0
  %8011 = vmatpush1.msra.mxu0 0.0
  %8012 = vmatprep.subr.mxu0 0.0
  %8013 = vmatpush1.msra.mxu0 0.0
  %8014 = vmatprep.subr.mxu0 0.0
  %8015 = vmatpush1.msra.mxu0 0.0
  %8016 = vmatprep.subr.mxu0 0.0
  %8017 = vmatpush1.msra.mxu0 0.0
  %8018 = vmatprep.subr.mxu0 0.0
  %8019 = vmatpush1.msra.mxu0 0.0
  %8020 = vmatprep.subr.mxu0 0.0
  %8021 = vmatpush1.msra.mxu0 0.0
  %8022 = vmatprep.mubr.f32.mxu0 0.0
  %8023 = vmatmul.mubr.f32.gmra.mrb[0].mxu0 %v1019
  %v8024 = vpop.f32.mrb[0].mxu0
  %v8025 = vadd.f32 %v5721, %v8024
  %v8026 = vpop.f32.mrb[0].mxu0
  %8027 = vdwg.mxu0
  %8028 = vmatprep.subr.mxu0 0.0
  %8029 = vmatpush1.msra.mxu0 %v122
  %8030 = vmatprep.subr.mxu0 0.0
  %8031 = vmatpush1.msra.mxu0 0.0
  %8032 = vmatprep.subr.mxu0 0.0
  %8033 = vmatpush1.msra.mxu0 0.0
  %8034 = vmatprep.subr.mxu0 0.0
  %8035 = vmatpush1.msra.mxu0 0.0
  %8036 = vmatprep.subr.mxu0 0.0
  %8037 = vmatpush1.msra.mxu0 0.0
  %8038 = vmatprep.subr.mxu0 0.0
  %8039 = vmatpush1.msra.mxu0 0.0
  %8040 = vmatprep.subr.mxu0 0.0
  %8041 = vmatpush1.msra.mxu0 0.0
  %8042 = vmatprep.subr.mxu0 0.0
  %8043 = vmatpush1.msra.mxu0 0.0
  %8044 = vmatprep.subr.mxu0 0.0
  %8045 = vmatpush1.msra.mxu0 0.0
  %8046 = vmatprep.subr.mxu0 0.0
  %8047 = vmatpush1.msra.mxu0 0.0
  %8048 = vmatprep.subr.mxu0 0.0
  %8049 = vmatpush1.msra.mxu0 0.0
  %8050 = vmatprep.subr.mxu0 0.0
  %8051 = vmatpush1.msra.mxu0 0.0
  %8052 = vmatprep.subr.mxu0 0.0
  %8053 = vmatpush1.msra.mxu0 0.0
  %8054 = vmatprep.subr.mxu0 0.0
  %8055 = vmatpush1.msra.mxu0 0.0
  %8056 = vmatprep.subr.mxu0 0.0
  %8057 = vmatpush1.msra.mxu0 0.0
  %8058 = vmatprep.subr.mxu0 0.0
  %8059 = vmatpush1.msra.mxu0 0.0
  %8060 = vmatprep.subr.mxu0 0.0
  %8061 = vmatpush1.msra.mxu0 0.0
  %8062 = vmatprep.subr.mxu0 0.0
  %8063 = vmatpush1.msra.mxu0 0.0
  %8064 = vmatprep.subr.mxu0 0.0
  %8065 = vmatpush1.msra.mxu0 0.0
  %8066 = vmatprep.subr.mxu0 0.0
  %8067 = vmatpush1.msra.mxu0 0.0
  %8068 = vmatprep.subr.mxu0 0.0
  %8069 = vmatpush1.msra.mxu0 0.0
  %8070 = vmatprep.subr.mxu0 0.0
  %8071 = vmatpush1.msra.mxu0 0.0
  %8072 = vmatprep.subr.mxu0 0.0
  %8073 = vmatpush1.msra.mxu0 0.0
  %8074 = vmatprep.subr.mxu0 0.0
  %8075 = vmatpush1.msra.mxu0 0.0
  %8076 = vmatprep.subr.mxu0 0.0
  %8077 = vmatpush1.msra.mxu0 0.0
  %8078 = vmatprep.subr.mxu0 0.0
  %8079 = vmatpush1.msra.mxu0 0.0
  %8080 = vmatprep.subr.mxu0 0.0
  %8081 = vmatpush1.msra.mxu0 0.0
  %8082 = vmatprep.subr.mxu0 0.0
  %8083 = vmatpush1.msra.mxu0 0.0
  %8084 = vmatprep.subr.mxu0 0.0
  %8085 = vmatpush1.msra.mxu0 0.0
  %8086 = vmatprep.subr.mxu0 0.0
  %8087 = vmatpush1.msra.mxu0 0.0
  %8088 = vmatprep.subr.mxu0 0.0
  %8089 = vmatpush1.msra.mxu0 0.0
  %8090 = vmatprep.subr.mxu0 0.0
  %8091 = vmatpush1.msra.mxu0 0.0
  %8092 = vmatprep.mubr.f32.mxu0 0.0
  %8093 = vmatmul.mubr.f32.gmra.mrb[0].mxu0 %v1092
  %v8094 = vpop.f32.mrb[0].mxu0
  %v8095 = vadd.f32 %v5791, %v8094
  %v8096 = vpop.f32.mrb[0].mxu0
  %8097 = vdwg.mxu0
  %8098 = vmatprep.subr.mxu0 0.0
  %8099 = vmatpush1.msra.mxu0 %v123
  %8100 = vmatprep.subr.mxu0 0.0
  %8101 = vmatpush1.msra.mxu0 0.0
  %8102 = vmatprep.subr.mxu0 0.0
  %8103 = vmatpush1.msra.mxu0 0.0
  %8104 = vmatprep.subr.mxu0 0.0
  %8105 = vmatpush1.msra.mxu0 0.0
  %8106 = vmatprep.subr.mxu0 0.0
  %8107 = vmatpush1.msra.mxu0 0.0
  %8108 = vmatprep.subr.mxu0 0.0
  %8109 = vmatpush1.msra.mxu0 0.0
  %8110 = vmatprep.subr.mxu0 0.0
  %8111 = vmatpush1.msra.mxu0 0.0
  %8112 = vmatprep.subr.mxu0 0.0
  %8113 = vmatpush1.msra.mxu0 0.0
  %8114 = vmatprep.subr.mxu0 0.0
  %8115 = vmatpush1.msra.mxu0 0.0
  %8116 = vmatprep.subr.mxu0 0.0
  %8117 = vmatpush1.msra.mxu0 0.0
  %8118 = vmatprep.subr.mxu0 0.0
  %8119 = vmatpush1.msra.mxu0 0.0
  %8120 = vmatprep.subr.mxu0 0.0
  %8121 = vmatpush1.msra.mxu0 0.0
  %8122 = vmatprep.subr.mxu0 0.0
  %8123 = vmatpush1.msra.mxu0 0.0
  %8124 = vmatprep.subr.mxu0 0.0
  %8125 = vmatpush1.msra.mxu0 0.0
  %8126 = vmatprep.subr.mxu0 0.0
  %8127 = vmatpush1.msra.mxu0 0.0
  %8128 = vmatprep.subr.mxu0 0.0
  %8129 = vmatpush1.msra.mxu0 0.0
  %8130 = vmatprep.subr.mxu0 0.0
  %8131 = vmatpush1.msra.mxu0 0.0
  %8132 = vmatprep.subr.mxu0 0.0
  %8133 = vmatpush1.msra.mxu0 0.0
  %8134 = vmatprep.subr.mxu0 0.0
  %8135 = vmatpush1.msra.mxu0 0.0
  %8136 = vmatprep.subr.mxu0 0.0
  %8137 = vmatpush1.msra.mxu0 0.0
  %8138 = vmatprep.subr.mxu0 0.0
  %8139 = vmatpush1.msra.mxu0 0.0
  %8140 = vmatprep.subr.mxu0 0.0
  %8141 = vmatpush1.msra.mxu0 0.0
  %8142 = vmatprep.subr.mxu0 0.0
  %8143 = vmatpush1.msra.mxu0 0.0
  %8144 = vmatprep.subr.mxu0 0.0
  %8145 = vmatpush1.msra.mxu0 0.0
  %8146 = vmatprep.subr.mxu0 0.0
  %8147 = vmatpush1.msra.mxu0 0.0
  %8148 = vmatprep.subr.mxu0 0.0
  %8149 = vmatpush1.msra.mxu0 0.0
  %8150 = vmatprep.subr.mxu0 0.0
  %8151 = vmatpush1.msra.mxu0 0.0
  %8152 = vmatprep.subr.mxu0 0.0
  %8153 = vmatpush1.msra.mxu0 0.0
  %8154 = vmatprep.subr.mxu0 0.0
  %8155 = vmatpush1.msra.mxu0 0.0
  %8156 = vmatprep.subr.mxu0 0.0
  %8157 = vmatpush1.msra.mxu0 0.0
  %8158 = vmatprep.subr.mxu0 0.0
  %8159 = vmatpush1.msra.mxu0 0.0
  %8160 = vmatprep.subr.mxu0 0.0
  %8161 = vmatpush1.msra.mxu0 0.0
  %8162 = vmatprep.mubr.f32.mxu0 0.0
  %8163 = vmatmul.mubr.f32.gmra.mrb[0].mxu0 %v1165
  %v8164 = vpop.f32.mrb[0].mxu0
  %v8165 = vadd.f32 %v5861, %v8164
  %v8166 = vpop.f32.mrb[0].mxu0
  %8167 = vdwg.mxu0
  %8168 = vmatprep.subr.mxu0 0.0
  %8169 = vmatpush1.msra.mxu0 %v124
  %8170 = vmatprep.subr.mxu0 0.0
  %8171 = vmatpush1.msra.mxu0 0.0
  %8172 = vmatprep.subr.mxu0 0.0
  %8173 = vmatpush1.msra.mxu0 0.0
  %8174 = vmatprep.subr.mxu0 0.0
  %8175 = vmatpush1.msra.mxu0 0.0
  %8176 = vmatprep.subr.mxu0 0.0
  %8177 = vmatpush1.msra.mxu0 0.0
  %8178 = vmatprep.subr.mxu0 0.0
  %8179 = vmatpush1.msra.mxu0 0.0
  %8180 = vmatprep.subr.mxu0 0.0
  %8181 = vmatpush1.msra.mxu0 0.0
  %8182 = vmatprep.subr.mxu0 0.0
  %8183 = vmatpush1.msra.mxu0 0.0
  %8184 = vmatprep.subr.mxu0 0.0
  %8185 = vmatpush1.msra.mxu0 0.0
  %8186 = vmatprep.subr.mxu0 0.0
  %8187 = vmatpush1.msra.mxu0 0.0
  %8188 = vmatprep.subr.mxu0 0.0
  %8189 = vmatpush1.msra.mxu0 0.0
  %8190 = vmatprep.subr.mxu0 0.0
  %8191 = vmatpush1.msra.mxu0 0.0
  %8192 = vmatprep.subr.mxu0 0.0
  %8193 = vmatpush1.msra.mxu0 0.0
  %8194 = vmatprep.subr.mxu0 0.0
  %8195 = vmatpush1.msra.mxu0 0.0
  %8196 = vmatprep.subr.mxu0 0.0
  %8197 = vmatpush1.msra.mxu0 0.0
  %8198 = vmatprep.subr.mxu0 0.0
  %8199 = vmatpush1.msra.mxu0 0.0
  %8200 = vmatprep.subr.mxu0 0.0
  %8201 = vmatpush1.msra.mxu0 0.0
  %8202 = vmatprep.subr.mxu0 0.0
  %8203 = vmatpush1.msra.mxu0 0.0
  %8204 = vmatprep.subr.mxu0 0.0
  %8205 = vmatpush1.msra.mxu0 0.0
  %8206 = vmatprep.subr.mxu0 0.0
  %8207 = vmatpush1.msra.mxu0 0.0
  %8208 = vmatprep.subr.mxu0 0.0
  %8209 = vmatpush1.msra.mxu0 0.0
  %8210 = vmatprep.subr.mxu0 0.0
  %8211 = vmatpush1.msra.mxu0 0.0
  %8212 = vmatprep.subr.mxu0 0.0
  %8213 = vmatpush1.msra.mxu0 0.0
  %8214 = vmatprep.subr.mxu0 0.0
  %8215 = vmatpush1.msra.mxu0 0.0
  %8216 = vmatprep.subr.mxu0 0.0
  %8217 = vmatpush1.msra.mxu0 0.0
  %8218 = vmatprep.subr.mxu0 0.0
  %8219 = vmatpush1.msra.mxu0 0.0
  %8220 = vmatprep.subr.mxu0 0.0
  %8221 = vmatpush1.msra.mxu0 0.0
  %8222 = vmatprep.subr.mxu0 0.0
  %8223 = vmatpush1.msra.mxu0 0.0
  %8224 = vmatprep.subr.mxu0 0.0
  %8225 = vmatpush1.msra.mxu0 0.0
  %8226 = vmatprep.subr.mxu0 0.0
  %8227 = vmatpush1.msra.mxu0 0.0
  %8228 = vmatprep.subr.mxu0 0.0
  %8229 = vmatpush1.msra.mxu0 0.0
  %8230 = vmatprep.subr.mxu0 0.0
  %8231 = vmatpush1.msra.mxu0 0.0
  %8232 = vmatprep.mubr.f32.mxu0 0.0
  %8233 = vmatmul.mubr.f32.gmra.mrb[0].mxu0 %v1238
  %v8234 = vpop.f32.mrb[0].mxu0
  %v8235 = vadd.f32 %v5931, %v8234
  %v8236 = vpop.f32.mrb[0].mxu0
  %8237 = vdwg.mxu0
  %8238 = vmatprep.subr.mxu0 0.0
  %8239 = vmatpush1.msra.mxu0 %v125
  %8240 = vmatprep.subr.mxu0 0.0
  %8241 = vmatpush1.msra.mxu0 0.0
  %8242 = vmatprep.subr.mxu0 0.0
  %8243 = vmatpush1.msra.mxu0 0.0
  %8244 = vmatprep.subr.mxu0 0.0
  %8245 = vmatpush1.msra.mxu0 0.0
  %8246 = vmatprep.subr.mxu0 0.0
  %8247 = vmatpush1.msra.mxu0 0.0
  %8248 = vmatprep.subr.mxu0 0.0
  %8249 = vmatpush1.msra.mxu0 0.0
  %8250 = vmatprep.subr.mxu0 0.0
  %8251 = vmatpush1.msra.mxu0 0.0
  %8252 = vmatprep.subr.mxu0 0.0
  %8253 = vmatpush1.msra.mxu0 0.0
  %8254 = vmatprep.subr.mxu0 0.0
  %8255 = vmatpush1.msra.mxu0 0.0
  %8256 = vmatprep.subr.mxu0 0.0
  %8257 = vmatpush1.msra.mxu0 0.0
  %8258 = vmatprep.subr.mxu0 0.0
  %8259 = vmatpush1.msra.mxu0 0.0
  %8260 = vmatprep.subr.mxu0 0.0
  %8261 = vmatpush1.msra.mxu0 0.0
  %8262 = vmatprep.subr.mxu0 0.0
  %8263 = vmatpush1.msra.mxu0 0.0
  %8264 = vmatprep.subr.mxu0 0.0
  %8265 = vmatpush1.msra.mxu0 0.0
  %8266 = vmatprep.subr.mxu0 0.0
  %8267 = vmatpush1.msra.mxu0 0.0
  %8268 = vmatprep.subr.mxu0 0.0
  %8269 = vmatpush1.msra.mxu0 0.0
  %8270 = vmatprep.subr.mxu0 0.0
  %8271 = vmatpush1.msra.mxu0 0.0
  %8272 = vmatprep.subr.mxu0 0.0
  %8273 = vmatpush1.msra.mxu0 0.0
  %8274 = vmatprep.subr.mxu0 0.0
  %8275 = vmatpush1.msra.mxu0 0.0
  %8276 = vmatprep.subr.mxu0 0.0
  %8277 = vmatpush1.msra.mxu0 0.0
  %8278 = vmatprep.subr.mxu0 0.0
  %8279 = vmatpush1.msra.mxu0 0.0
  %8280 = vmatprep.subr.mxu0 0.0
  %8281 = vmatpush1.msra.mxu0 0.0
  %8282 = vmatprep.subr.mxu0 0.0
  %8283 = vmatpush1.msra.mxu0 0.0
  %8284 = vmatprep.subr.mxu0 0.0
  %8285 = vmatpush1.msra.mxu0 0.0
  %8286 = vmatprep.subr.mxu0 0.0
  %8287 = vmatpush1.msra.mxu0 0.0
  %8288 = vmatprep.subr.mxu0 0.0
  %8289 = vmatpush1.msra.mxu0 0.0
  %8290 = vmatprep.subr.mxu0 0.0
  %8291 = vmatpush1.msra.mxu0 0.0
  %8292 = vmatprep.subr.mxu0 0.0
  %8293 = vmatpush1.msra.mxu0 0.0
  %8294 = vmatprep.subr.mxu0 0.0
  %8295 = vmatpush1.msra.mxu0 0.0
  %8296 = vmatprep.subr.mxu0 0.0
  %8297 = vmatpush1.msra.mxu0 0.0
  %8298 = vmatprep.subr.mxu0 0.0
  %8299 = vmatpush1.msra.mxu0 0.0
  %8300 = vmatprep.subr.mxu0 0.0
  %8301 = vmatpush1.msra.mxu0 0.0
  %8302 = vmatprep.mubr.f32.mxu0 0.0
  %8303 = vmatmul.mubr.f32.gmra.mrb[0].mxu0 %v1311
  %v8304 = vpop.f32.mrb[0].mxu0
  %v8305 = vadd.f32 %v6001, %v8304
  %v8306 = vpop.f32.mrb[0].mxu0
  %8307 = vdwg.mxu0
  %8308 = vmatprep.subr.mxu0 0.0
  %8309 = vmatpush1.msra.mxu0 %v126
  %8310 = vmatprep.subr.mxu0 0.0
  %8311 = vmatpush1.msra.mxu0 0.0
  %8312 = vmatprep.subr.mxu0 0.0
  %8313 = vmatpush1.msra.mxu0 0.0
  %8314 = vmatprep.subr.mxu0 0.0
  %8315 = vmatpush1.msra.mxu0 0.0
  %8316 = vmatprep.subr.mxu0 0.0
  %8317 = vmatpush1.msra.mxu0 0.0
  %8318 = vmatprep.subr.mxu0 0.0
  %8319 = vmatpush1.msra.mxu0 0.0
  %8320 = vmatprep.subr.mxu0 0.0
  %8321 = vmatpush1.msra.mxu0 0.0
  %8322 = vmatprep.subr.mxu0 0.0
  %8323 = vmatpush1.msra.mxu0 0.0
  %8324 = vmatprep.subr.mxu0 0.0
  %8325 = vmatpush1.msra.mxu0 0.0
  %8326 = vmatprep.subr.mxu0 0.0
  %8327 = vmatpush1.msra.mxu0 0.0
  %8328 = vmatprep.subr.mxu0 0.0
  %8329 = vmatpush1.msra.mxu0 0.0
  %8330 = vmatprep.subr.mxu0 0.0
  %8331 = vmatpush1.msra.mxu0 0.0
  %8332 = vmatprep.subr.mxu0 0.0
  %8333 = vmatpush1.msra.mxu0 0.0
  %8334 = vmatprep.subr.mxu0 0.0
  %8335 = vmatpush1.msra.mxu0 0.0
  %8336 = vmatprep.subr.mxu0 0.0
  %8337 = vmatpush1.msra.mxu0 0.0
  %8338 = vmatprep.subr.mxu0 0.0
  %8339 = vmatpush1.msra.mxu0 0.0
  %8340 = vmatprep.subr.mxu0 0.0
  %8341 = vmatpush1.msra.mxu0 0.0
  %8342 = vmatprep.subr.mxu0 0.0
  %8343 = vmatpush1.msra.mxu0 0.0
  %8344 = vmatprep.subr.mxu0 0.0
  %8345 = vmatpush1.msra.mxu0 0.0
  %8346 = vmatprep.subr.mxu0 0.0
  %8347 = vmatpush1.msra.mxu0 0.0
  %8348 = vmatprep.subr.mxu0 0.0
  %8349 = vmatpush1.msra.mxu0 0.0
  %8350 = vmatprep.subr.mxu0 0.0
  %8351 = vmatpush1.msra.mxu0 0.0
  %8352 = vmatprep.subr.mxu0 0.0
  %8353 = vmatpush1.msra.mxu0 0.0
  %8354 = vmatprep.subr.mxu0 0.0
  %8355 = vmatpush1.msra.mxu0 0.0
  %8356 = vmatprep.subr.mxu0 0.0
  %8357 = vmatpush1.msra.mxu0 0.0
  %8358 = vmatprep.subr.mxu0 0.0
  %8359 = vmatpush1.msra.mxu0 0.0
  %8360 = vmatprep.subr.mxu0 0.0
  %8361 = vmatpush1.msra.mxu0 0.0
  %8362 = vmatprep.subr.mxu0 0.0
  %8363 = vmatpush1.msra.mxu0 0.0
  %8364 = vmatprep.subr.mxu0 0.0
  %8365 = vmatpush1.msra.mxu0 0.0
  %8366 = vmatprep.subr.mxu0 0.0
  %8367 = vmatpush1.msra.mxu0 0.0
  %8368 = vmatprep.subr.mxu0 0.0
  %8369 = vmatpush1.msra.mxu0 0.0
  %8370 = vmatprep.subr.mxu0 0.0
  %8371 = vmatpush1.msra.mxu0 0.0
  %8372 = vmatprep.mubr.f32.mxu0 0.0
  %8373 = vmatmul.mubr.f32.gmra.mrb[0].mxu0 %v1384
  %v8374 = vpop.f32.mrb[0].mxu0
  %v8375 = vadd.f32 %v6071, %v8374
  %v8376 = vpop.f32.mrb[0].mxu0
  %8377 = vdwg.mxu0
  %8378 = vmatprep.subr.mxu0 0.0
  %8379 = vmatpush1.msra.mxu0 %v127
  %8380 = vmatprep.subr.mxu0 0.0
  %8381 = vmatpush1.msra.mxu0 0.0
  %8382 = vmatprep.subr.mxu0 0.0
  %8383 = vmatpush1.msra.mxu0 0.0
  %8384 = vmatprep.subr.mxu0 0.0
  %8385 = vmatpush1.msra.mxu0 0.0
  %8386 = vmatprep.subr.mxu0 0.0
  %8387 = vmatpush1.msra.mxu0 0.0
  %8388 = vmatprep.subr.mxu0 0.0
  %8389 = vmatpush1.msra.mxu0 0.0
  %8390 = vmatprep.subr.mxu0 0.0
  %8391 = vmatpush1.msra.mxu0 0.0
  %8392 = vmatprep.subr.mxu0 0.0
  %8393 = vmatpush1.msra.mxu0 0.0
  %8394 = vmatprep.subr.mxu0 0.0
  %8395 = vmatpush1.msra.mxu0 0.0
  %8396 = vmatprep.subr.mxu0 0.0
  %8397 = vmatpush1.msra.mxu0 0.0
  %8398 = vmatprep.subr.mxu0 0.0
  %8399 = vmatpush1.msra.mxu0 0.0
  %8400 = vmatprep.subr.mxu0 0.0
  %8401 = vmatpush1.msra.mxu0 0.0
  %8402 = vmatprep.subr.mxu0 0.0
  %8403 = vmatpush1.msra.mxu0 0.0
  %8404 = vmatprep.subr.mxu0 0.0
  %8405 = vmatpush1.msra.mxu0 0.0
  %8406 = vmatprep.subr.mxu0 0.0
  %8407 = vmatpush1.msra.mxu0 0.0
  %8408 = vmatprep.subr.mxu0 0.0
  %8409 = vmatpush1.msra.mxu0 0.0
  %8410 = vmatprep.subr.mxu0 0.0
  %8411 = vmatpush1.msra.mxu0 0.0
  %8412 = vmatprep.subr.mxu0 0.0
  %8413 = vmatpush1.msra.mxu0 0.0
  %8414 = vmatprep.subr.mxu0 0.0
  %8415 = vmatpush1.msra.mxu0 0.0
  %8416 = vmatprep.subr.mxu0 0.0
  %8417 = vmatpush1.msra.mxu0 0.0
  %8418 = vmatprep.subr.mxu0 0.0
  %8419 = vmatpush1.msra.mxu0 0.0
  %8420 = vmatprep.subr.mxu0 0.0
  %8421 = vmatpush1.msra.mxu0 0.0
  %8422 = vmatprep.subr.mxu0 0.0
  %8423 = vmatpush1.msra.mxu0 0.0
  %8424 = vmatprep.subr.mxu0 0.0
  %8425 = vmatpush1.msra.mxu0 0.0
  %8426 = vmatprep.subr.mxu0 0.0
  %8427 = vmatpush1.msra.mxu0 0.0
  %8428 = vmatprep.subr.mxu0 0.0
  %8429 = vmatpush1.msra.mxu0 0.0
  %8430 = vmatprep.subr.mxu0 0.0
  %8431 = vmatpush1.msra.mxu0 0.0
  %8432 = vmatprep.subr.mxu0 0.0
  %8433 = vmatpush1.msra.mxu0 0.0
  %8434 = vmatprep.subr.mxu0 0.0
  %8435 = vmatpush1.msra.mxu0 0.0
  %8436 = vmatprep.subr.mxu0 0.0
  %8437 = vmatpush1.msra.mxu0 0.0
  %8438 = vmatprep.subr.mxu0 0.0
  %8439 = vmatpush1.msra.mxu0 0.0
  %8440 = vmatprep.subr.mxu0 0.0
  %8441 = vmatpush1.msra.mxu0 0.0
  %8442 = vmatprep.mubr.f32.mxu0 0.0
  %8443 = vmatmul.mubr.f32.gmra.mrb[0].mxu0 %v1457
  %v8444 = vpop.f32.mrb[0].mxu0
  %v8445 = vadd.f32 %v6141, %v8444
  %v8446 = vpop.f32.mrb[0].mxu0
  %8447 = vdwg.mxu0
  %8448 = vmatprep.subr.mxu0 0.0
  %8449 = vmatpush1.msra.mxu0 %v128
  %8450 = vmatprep.subr.mxu0 0.0
  %8451 = vmatpush1.msra.mxu0 0.0
  %8452 = vmatprep.subr.mxu0 0.0
  %8453 = vmatpush1.msra.mxu0 0.0
  %8454 = vmatprep.subr.mxu0 0.0
  %8455 = vmatpush1.msra.mxu0 0.0
  %8456 = vmatprep.subr.mxu0 0.0
  %8457 = vmatpush1.msra.mxu0 0.0
  %8458 = vmatprep.subr.mxu0 0.0
  %8459 = vmatpush1.msra.mxu0 0.0
  %8460 = vmatprep.subr.mxu0 0.0
  %8461 = vmatpush1.msra.mxu0 0.0
  %8462 = vmatprep.subr.mxu0 0.0
  %8463 = vmatpush1.msra.mxu0 0.0
  %8464 = vmatprep.subr.mxu0 0.0
  %8465 = vmatpush1.msra.mxu0 0.0
  %8466 = vmatprep.subr.mxu0 0.0
  %8467 = vmatpush1.msra.mxu0 0.0
  %8468 = vmatprep.subr.mxu0 0.0
  %8469 = vmatpush1.msra.mxu0 0.0
  %8470 = vmatprep.subr.mxu0 0.0
  %8471 = vmatpush1.msra.mxu0 0.0
  %8472 = vmatprep.subr.mxu0 0.0
  %8473 = vmatpush1.msra.mxu0 0.0
  %8474 = vmatprep.subr.mxu0 0.0
  %8475 = vmatpush1.msra.mxu0 0.0
  %8476 = vmatprep.subr.mxu0 0.0
  %8477 = vmatpush1.msra.mxu0 0.0
  %8478 = vmatprep.subr.mxu0 0.0
  %8479 = vmatpush1.msra.mxu0 0.0
  %8480 = vmatprep.subr.mxu0 0.0
  %8481 = vmatpush1.msra.mxu0 0.0
  %8482 = vmatprep.subr.mxu0 0.0
  %8483 = vmatpush1.msra.mxu0 0.0
  %8484 = vmatprep.subr.mxu0 0.0
  %8485 = vmatpush1.msra.mxu0 0.0
  %8486 = vmatprep.subr.mxu0 0.0
  %8487 = vmatpush1.msra.mxu0 0.0
  %8488 = vmatprep.subr.mxu0 0.0
  %8489 = vmatpush1.msra.mxu0 0.0
  %8490 = vmatprep.subr.mxu0 0.0
  %8491 = vmatpush1.msra.mxu0 0.0
  %8492 = vmatprep.subr.mxu0 0.0
  %8493 = vmatpush1.msra.mxu0 0.0
  %8494 = vmatprep.subr.mxu0 0.0
  %8495 = vmatpush1.msra.mxu0 0.0
  %8496 = vmatprep.subr.mxu0 0.0
  %8497 = vmatpush1.msra.mxu0 0.0
  %8498 = vmatprep.subr.mxu0 0.0
  %8499 = vmatpush1.msra.mxu0 0.0
  %8500 = vmatprep.subr.mxu0 0.0
  %8501 = vmatpush1.msra.mxu0 0.0
  %8502 = vmatprep.subr.mxu0 0.0
  %8503 = vmatpush1.msra.mxu0 0.0
  %8504 = vmatprep.subr.mxu0 0.0
  %8505 = vmatpush1.msra.mxu0 0.0
  %8506 = vmatprep.subr.mxu0 0.0
  %8507 = vmatpush1.msra.mxu0 0.0
  %8508 = vmatprep.subr.mxu0 0.0
  %8509 = vmatpush1.msra.mxu0 0.0
  %8510 = vmatprep.subr.mxu0 0.0
  %8511 = vmatpush1.msra.mxu0 0.0
  %8512 = vmatprep.mubr.f32.mxu0 0.0
  %8513 = vmatmul.mubr.f32.gmra.mrb[0].mxu0 %v1530
  %v8514 = vpop.f32.mrb[0].mxu0
  %v8515 = vadd.f32 %v6211, %v8514
  %v8516 = vpop.f32.mrb[0].mxu0
  %8517 = vdwg.mxu0
  %8518 = vmatprep.subr.mxu0 0.0
  %8519 = vmatpush1.msra.mxu0 %v129
  %8520 = vmatprep.subr.mxu0 0.0
  %8521 = vmatpush1.msra.mxu0 0.0
  %8522 = vmatprep.subr.mxu0 0.0
  %8523 = vmatpush1.msra.mxu0 0.0
  %8524 = vmatprep.subr.mxu0 0.0
  %8525 = vmatpush1.msra.mxu0 0.0
  %8526 = vmatprep.subr.mxu0 0.0
  %8527 = vmatpush1.msra.mxu0 0.0
  %8528 = vmatprep.subr.mxu0 0.0
  %8529 = vmatpush1.msra.mxu0 0.0
  %8530 = vmatprep.subr.mxu0 0.0
  %8531 = vmatpush1.msra.mxu0 0.0
  %8532 = vmatprep.subr.mxu0 0.0
  %8533 = vmatpush1.msra.mxu0 0.0
  %8534 = vmatprep.subr.mxu0 0.0
  %8535 = vmatpush1.msra.mxu0 0.0
  %8536 = vmatprep.subr.mxu0 0.0
  %8537 = vmatpush1.msra.mxu0 0.0
  %8538 = vmatprep.subr.mxu0 0.0
  %8539 = vmatpush1.msra.mxu0 0.0
  %8540 = vmatprep.subr.mxu0 0.0
  %8541 = vmatpush1.msra.mxu0 0.0
  %8542 = vmatprep.subr.mxu0 0.0
  %8543 = vmatpush1.msra.mxu0 0.0
  %8544 = vmatprep.subr.mxu0 0.0
  %8545 = vmatpush1.msra.mxu0 0.0
  %8546 = vmatprep.subr.mxu0 0.0
  %8547 = vmatpush1.msra.mxu0 0.0
  %8548 = vmatprep.subr.mxu0 0.0
  %8549 = vmatpush1.msra.mxu0 0.0
  %8550 = vmatprep.subr.mxu0 0.0
  %8551 = vmatpush1.msra.mxu0 0.0
  %8552 = vmatprep.subr.mxu0 0.0
  %8553 = vmatpush1.msra.mxu0 0.0
  %8554 = vmatprep.subr.mxu0 0.0
  %8555 = vmatpush1.msra.mxu0 0.0
  %8556 = vmatprep.subr.mxu0 0.0
  %8557 = vmatpush1.msra.mxu0 0.0
  %8558 = vmatprep.subr.mxu0 0.0
  %8559 = vmatpush1.msra.mxu0 0.0
  %8560 = vmatprep.subr.mxu0 0.0
  %8561 = vmatpush1.msra.mxu0 0.0
  %8562 = vmatprep.subr.mxu0 0.0
  %8563 = vmatpush1.msra.mxu0 0.0
  %8564 = vmatprep.subr.mxu0 0.0
  %8565 = vmatpush1.msra.mxu0 0.0
  %8566 = vmatprep.subr.mxu0 0.0
  %8567 = vmatpush1.msra.mxu0 0.0
  %8568 = vmatprep.subr.mxu0 0.0
  %8569 = vmatpush1.msra.mxu0 0.0
  %8570 = vmatprep.subr.mxu0 0.0
  %8571 = vmatpush1.msra.mxu0 0.0
  %8572 = vmatprep.subr.mxu0 0.0
  %8573 = vmatpush1.msra.mxu0 0.0
  %8574 = vmatprep.subr.mxu0 0.0
  %8575 = vmatpush1.msra.mxu0 0.0
  %8576 = vmatprep.subr.mxu0 0.0
  %8577 = vmatpush1.msra.mxu0 0.0
  %8578 = vmatprep.subr.mxu0 0.0
  %8579 = vmatpush1.msra.mxu0 0.0
  %8580 = vmatprep.subr.mxu0 0.0
  %8581 = vmatpush1.msra.mxu0 0.0
  %8582 = vmatprep.mubr.f32.mxu0 0.0
  %8583 = vmatmul.mubr.f32.gmra.mrb[0].mxu0 %v1603
  %v8584 = vpop.f32.mrb[0].mxu0
  %v8585 = vadd.f32 %v6281, %v8584
  %v8586 = vpop.f32.mrb[0].mxu0
  %8587 = vdwg.mxu0
  %8588 = vmatprep.subr.mxu0 0.0
  %8589 = vmatpush1.msra.mxu0 %v130
  %8590 = vmatprep.subr.mxu0 0.0
  %8591 = vmatpush1.msra.mxu0 0.0
  %8592 = vmatprep.subr.mxu0 0.0
  %8593 = vmatpush1.msra.mxu0 0.0
  %8594 = vmatprep.subr.mxu0 0.0
  %8595 = vmatpush1.msra.mxu0 0.0
  %8596 = vmatprep.subr.mxu0 0.0
  %8597 = vmatpush1.msra.mxu0 0.0
  %8598 = vmatprep.subr.mxu0 0.0
  %8599 = vmatpush1.msra.mxu0 0.0
  %8600 = vmatprep.subr.mxu0 0.0
  %8601 = vmatpush1.msra.mxu0 0.0
  %8602 = vmatprep.subr.mxu0 0.0
  %8603 = vmatpush1.msra.mxu0 0.0
  %8604 = vmatprep.subr.mxu0 0.0
  %8605 = vmatpush1.msra.mxu0 0.0
  %8606 = vmatprep.subr.mxu0 0.0
  %8607 = vmatpush1.msra.mxu0 0.0
  %8608 = vmatprep.subr.mxu0 0.0
  %8609 = vmatpush1.msra.mxu0 0.0
  %8610 = vmatprep.subr.mxu0 0.0
  %8611 = vmatpush1.msra.mxu0 0.0
  %8612 = vmatprep.subr.mxu0 0.0
  %8613 = vmatpush1.msra.mxu0 0.0
  %8614 = vmatprep.subr.mxu0 0.0
  %8615 = vmatpush1.msra.mxu0 0.0
  %8616 = vmatprep.subr.mxu0 0.0
  %8617 = vmatpush1.msra.mxu0 0.0
  %8618 = vmatprep.subr.mxu0 0.0
  %8619 = vmatpush1.msra.mxu0 0.0
  %8620 = vmatprep.subr.mxu0 0.0
  %8621 = vmatpush1.msra.mxu0 0.0
  %8622 = vmatprep.subr.mxu0 0.0
  %8623 = vmatpush1.msra.mxu0 0.0
  %8624 = vmatprep.subr.mxu0 0.0
  %8625 = vmatpush1.msra.mxu0 0.0
  %8626 = vmatprep.subr.mxu0 0.0
  %8627 = vmatpush1.msra.mxu0 0.0
  %8628 = vmatprep.subr.mxu0 0.0
  %8629 = vmatpush1.msra.mxu0 0.0
  %8630 = vmatprep.subr.mxu0 0.0
  %8631 = vmatpush1.msra.mxu0 0.0
  %8632 = vmatprep.subr.mxu0 0.0
  %8633 = vmatpush1.msra.mxu0 0.0
  %8634 = vmatprep.subr.mxu0 0.0
  %8635 = vmatpush1.msra.mxu0 0.0
  %8636 = vmatprep.subr.mxu0 0.0
  %8637 = vmatpush1.msra.mxu0 0.0
  %8638 = vmatprep.subr.mxu0 0.0
  %8639 = vmatpush1.msra.mxu0 0.0
  %8640 = vmatprep.subr.mxu0 0.0
  %8641 = vmatpush1.msra.mxu0 0.0
  %8642 = vmatprep.subr.mxu0 0.0
  %8643 = vmatpush1.msra.mxu0 0.0
  %8644 = vmatprep.subr.mxu0 0.0
  %8645 = vmatpush1.msra.mxu0 0.0
  %8646 = vmatprep.subr.mxu0 0.0
  %8647 = vmatpush1.msra.mxu0 0.0
  %8648 = vmatprep.subr.mxu0 0.0
  %8649 = vmatpush1.msra.mxu0 0.0
  %8650 = vmatprep.subr.mxu0 0.0
  %8651 = vmatpush1.msra.mxu0 0.0
  %8652 = vmatprep.mubr.f32.mxu0 0.0
  %8653 = vmatmul.mubr.f32.gmra.mrb[0].mxu0 %v1676
  %v8654 = vpop.f32.mrb[0].mxu0
  %v8655 = vadd.f32 %v6351, %v8654
  %v8656 = vpop.f32.mrb[0].mxu0
  %8657 = vdwg.mxu0
  %8658 = vmatprep.subr.mxu0 0.0
  %8659 = vmatpush1.msra.mxu0 %v131
  %8660 = vmatprep.subr.mxu0 0.0
  %8661 = vmatpush1.msra.mxu0 0.0
  %8662 = vmatprep.subr.mxu0 0.0
  %8663 = vmatpush1.msra.mxu0 0.0
  %8664 = vmatprep.subr.mxu0 0.0
  %8665 = vmatpush1.msra.mxu0 0.0
  %8666 = vmatprep.subr.mxu0 0.0
  %8667 = vmatpush1.msra.mxu0 0.0
  %8668 = vmatprep.subr.mxu0 0.0
  %8669 = vmatpush1.msra.mxu0 0.0
  %8670 = vmatprep.subr.mxu0 0.0
  %8671 = vmatpush1.msra.mxu0 0.0
  %8672 = vmatprep.subr.mxu0 0.0
  %8673 = vmatpush1.msra.mxu0 0.0
  %8674 = vmatprep.subr.mxu0 0.0
  %8675 = vmatpush1.msra.mxu0 0.0
  %8676 = vmatprep.subr.mxu0 0.0
  %8677 = vmatpush1.msra.mxu0 0.0
  %8678 = vmatprep.subr.mxu0 0.0
  %8679 = vmatpush1.msra.mxu0 0.0
  %8680 = vmatprep.subr.mxu0 0.0
  %8681 = vmatpush1.msra.mxu0 0.0
  %8682 = vmatprep.subr.mxu0 0.0
  %8683 = vmatpush1.msra.mxu0 0.0
  %8684 = vmatprep.subr.mxu0 0.0
  %8685 = vmatpush1.msra.mxu0 0.0
  %8686 = vmatprep.subr.mxu0 0.0
  %8687 = vmatpush1.msra.mxu0 0.0
  %8688 = vmatprep.subr.mxu0 0.0
  %8689 = vmatpush1.msra.mxu0 0.0
  %8690 = vmatprep.subr.mxu0 0.0
  %8691 = vmatpush1.msra.mxu0 0.0
  %8692 = vmatprep.subr.mxu0 0.0
  %8693 = vmatpush1.msra.mxu0 0.0
  %8694 = vmatprep.subr.mxu0 0.0
  %8695 = vmatpush1.msra.mxu0 0.0
  %8696 = vmatprep.subr.mxu0 0.0
  %8697 = vmatpush1.msra.mxu0 0.0
  %8698 = vmatprep.subr.mxu0 0.0
  %8699 = vmatpush1.msra.mxu0 0.0
  %8700 = vmatprep.subr.mxu0 0.0
  %8701 = vmatpush1.msra.mxu0 0.0
  %8702 = vmatprep.subr.mxu0 0.0
  %8703 = vmatpush1.msra.mxu0 0.0
  %8704 = vmatprep.subr.mxu0 0.0
  %8705 = vmatpush1.msra.mxu0 0.0
  %8706 = vmatprep.subr.mxu0 0.0
  %8707 = vmatpush1.msra.mxu0 0.0
  %8708 = vmatprep.subr.mxu0 0.0
  %8709 = vmatpush1.msra.mxu0 0.0
  %8710 = vmatprep.subr.mxu0 0.0
  %8711 = vmatpush1.msra.mxu0 0.0
  %8712 = vmatprep.subr.mxu0 0.0
  %8713 = vmatpush1.msra.mxu0 0.0
  %8714 = vmatprep.subr.mxu0 0.0
  %8715 = vmatpush1.msra.mxu0 0.0
  %8716 = vmatprep.subr.mxu0 0.0
  %8717 = vmatpush1.msra.mxu0 0.0
  %8718 = vmatprep.subr.mxu0 0.0
  %8719 = vmatpush1.msra.mxu0 0.0
  %8720 = vmatprep.subr.mxu0 0.0
  %8721 = vmatpush1.msra.mxu0 0.0
  %8722 = vmatprep.mubr.f32.mxu0 0.0
  %8723 = vmatmul.mubr.f32.gmra.mrb[0].mxu0 %v1749
  %v8724 = vpop.f32.mrb[0].mxu0
  %v8725 = vadd.f32 %v6421, %v8724
  %v8726 = vpop.f32.mrb[0].mxu0
  %8727 = vdwg.mxu0
  %8728 = vmatprep.subr.mxu0 0.0
  %8729 = vmatpush1.msra.mxu0 %v132
  %8730 = vmatprep.subr.mxu0 0.0
  %8731 = vmatpush1.msra.mxu0 0.0
  %8732 = vmatprep.subr.mxu0 0.0
  %8733 = vmatpush1.msra.mxu0 0.0
  %8734 = vmatprep.subr.mxu0 0.0
  %8735 = vmatpush1.msra.mxu0 0.0
  %8736 = vmatprep.subr.mxu0 0.0
  %8737 = vmatpush1.msra.mxu0 0.0
  %8738 = vmatprep.subr.mxu0 0.0
  %8739 = vmatpush1.msra.mxu0 0.0
  %8740 = vmatprep.subr.mxu0 0.0
  %8741 = vmatpush1.msra.mxu0 0.0
  %8742 = vmatprep.subr.mxu0 0.0
  %8743 = vmatpush1.msra.mxu0 0.0
  %8744 = vmatprep.subr.mxu0 0.0
  %8745 = vmatpush1.msra.mxu0 0.0
  %8746 = vmatprep.subr.mxu0 0.0
  %8747 = vmatpush1.msra.mxu0 0.0
  %8748 = vmatprep.subr.mxu0 0.0
  %8749 = vmatpush1.msra.mxu0 0.0
  %8750 = vmatprep.subr.mxu0 0.0
  %8751 = vmatpush1.msra.mxu0 0.0
  %8752 = vmatprep.subr.mxu0 0.0
  %8753 = vmatpush1.msra.mxu0 0.0
  %8754 = vmatprep.subr.mxu0 0.0
  %8755 = vmatpush1.msra.mxu0 0.0
  %8756 = vmatprep.subr.mxu0 0.0
  %8757 = vmatpush1.msra.mxu0 0.0
  %8758 = vmatprep.subr.mxu0 0.0
  %8759 = vmatpush1.msra.mxu0 0.0
  %8760 = vmatprep.subr.mxu0 0.0
  %8761 = vmatpush1.msra.mxu0 0.0
  %8762 = vmatprep.subr.mxu0 0.0
  %8763 = vmatpush1.msra.mxu0 0.0
  %8764 = vmatprep.subr.mxu0 0.0
  %8765 = vmatpush1.msra.mxu0 0.0
  %8766 = vmatprep.subr.mxu0 0.0
  %8767 = vmatpush1.msra.mxu0 0.0
  %8768 = vmatprep.subr.mxu0 0.0
  %8769 = vmatpush1.msra.mxu0 0.0
  %8770 = vmatprep.subr.mxu0 0.0
  %8771 = vmatpush1.msra.mxu0 0.0
  %8772 = vmatprep.subr.mxu0 0.0
  %8773 = vmatpush1.msra.mxu0 0.0
  %8774 = vmatprep.subr.mxu0 0.0
  %8775 = vmatpush1.msra.mxu0 0.0
  %8776 = vmatprep.subr.mxu0 0.0
  %8777 = vmatpush1.msra.mxu0 0.0
  %8778 = vmatprep.subr.mxu0 0.0
  %8779 = vmatpush1.msra.mxu0 0.0
  %8780 = vmatprep.subr.mxu0 0.0
  %8781 = vmatpush1.msra.mxu0 0.0
  %8782 = vmatprep.subr.mxu0 0.0
  %8783 = vmatpush1.msra.mxu0 0.0
  %8784 = vmatprep.subr.mxu0 0.0
  %8785 = vmatpush1.msra.mxu0 0.0
  %8786 = vmatprep.subr.mxu0 0.0
  %8787 = vmatpush1.msra.mxu0 0.0
  %8788 = vmatprep.subr.mxu0 0.0
  %8789 = vmatpush1.msra.mxu0 0.0
  %8790 = vmatprep.subr.mxu0 0.0
  %8791 = vmatpush1.msra.mxu0 0.0
  %8792 = vmatprep.mubr.f32.mxu0 0.0
  %8793 = vmatmul.mubr.f32.gmra.mrb[0].mxu0 %v1822
  %v8794 = vpop.f32.mrb[0].mxu0
  %v8795 = vadd.f32 %v6491, %v8794
  %v8796 = vpop.f32.mrb[0].mxu0
  %8797 = vdwg.mxu0
  %8798 = vmatprep.subr.mxu0 0.0
  %8799 = vmatpush1.msra.mxu0 %v133
  %8800 = vmatprep.subr.mxu0 0.0
  %8801 = vmatpush1.msra.mxu0 0.0
  %8802 = vmatprep.subr.mxu0 0.0
  %8803 = vmatpush1.msra.mxu0 0.0
  %8804 = vmatprep.subr.mxu0 0.0
  %8805 = vmatpush1.msra.mxu0 0.0
  %8806 = vmatprep.subr.mxu0 0.0
  %8807 = vmatpush1.msra.mxu0 0.0
  %8808 = vmatprep.subr.mxu0 0.0
  %8809 = vmatpush1.msra.mxu0 0.0
  %8810 = vmatprep.subr.mxu0 0.0
  %8811 = vmatpush1.msra.mxu0 0.0
  %8812 = vmatprep.subr.mxu0 0.0
  %8813 = vmatpush1.msra.mxu0 0.0
  %8814 = vmatprep.subr.mxu0 0.0
  %8815 = vmatpush1.msra.mxu0 0.0
  %8816 = vmatprep.subr.mxu0 0.0
  %8817 = vmatpush1.msra.mxu0 0.0
  %8818 = vmatprep.subr.mxu0 0.0
  %8819 = vmatpush1.msra.mxu0 0.0
  %8820 = vmatprep.subr.mxu0 0.0
  %8821 = vmatpush1.msra.mxu0 0.0
  %8822 = vmatprep.subr.mxu0 0.0
  %8823 = vmatpush1.msra.mxu0 0.0
  %8824 = vmatprep.subr.mxu0 0.0
  %8825 = vmatpush1.msra.mxu0 0.0
  %8826 = vmatprep.subr.mxu0 0.0
  %8827 = vmatpush1.msra.mxu0 0.0
  %8828 = vmatprep.subr.mxu0 0.0
  %8829 = vmatpush1.msra.mxu0 0.0
  %8830 = vmatprep.subr.mxu0 0.0
  %8831 = vmatpush1.msra.mxu0 0.0
  %8832 = vmatprep.subr.mxu0 0.0
  %8833 = vmatpush1.msra.mxu0 0.0
  %8834 = vmatprep.subr.mxu0 0.0
  %8835 = vmatpush1.msra.mxu0 0.0
  %8836 = vmatprep.subr.mxu0 0.0
  %8837 = vmatpush1.msra.mxu0 0.0
  %8838 = vmatprep.subr.mxu0 0.0
  %8839 = vmatpush1.msra.mxu0 0.0
  %8840 = vmatprep.subr.mxu0 0.0
  %8841 = vmatpush1.msra.mxu0 0.0
  %8842 = vmatprep.subr.mxu0 0.0
  %8843 = vmatpush1.msra.mxu0 0.0
  %8844 = vmatprep.subr.mxu0 0.0
  %8845 = vmatpush1.msra.mxu0 0.0
  %8846 = vmatprep.subr.mxu0 0.0
  %8847 = vmatpush1.msra.mxu0 0.0
  %8848 = vmatprep.subr.mxu0 0.0
  %8849 = vmatpush1.msra.mxu0 0.0
  %8850 = vmatprep.subr.mxu0 0.0
  %8851 = vmatpush1.msra.mxu0 0.0
  %8852 = vmatprep.subr.mxu0 0.0
  %8853 = vmatpush1.msra.mxu0 0.0
  %8854 = vmatprep.subr.mxu0 0.0
  %8855 = vmatpush1.msra.mxu0 0.0
  %8856 = vmatprep.subr.mxu0 0.0
  %8857 = vmatpush1.msra.mxu0 0.0
  %8858 = vmatprep.subr.mxu0 0.0
  %8859 = vmatpush1.msra.mxu0 0.0
  %8860 = vmatprep.subr.mxu0 0.0
  %8861 = vmatpush1.msra.mxu0 0.0
  %8862 = vmatprep.mubr.f32.mxu0 0.0
  %8863 = vmatmul.mubr.f32.gmra.mrb[0].mxu0 %v1895
  %v8864 = vpop.f32.mrb[0].mxu0
  %v8865 = vadd.f32 %v6561, %v8864
  %v8866 = vpop.f32.mrb[0].mxu0
  %8867 = vdwg.mxu0
  %8868 = vmatprep.subr.mxu0 0.0
  %8869 = vmatpush1.msra.mxu0 %v134
  %8870 = vmatprep.subr.mxu0 0.0
  %8871 = vmatpush1.msra.mxu0 0.0
  %8872 = vmatprep.subr.mxu0 0.0
  %8873 = vmatpush1.msra.mxu0 0.0
  %8874 = vmatprep.subr.mxu0 0.0
  %8875 = vmatpush1.msra.mxu0 0.0
  %8876 = vmatprep.subr.mxu0 0.0
  %8877 = vmatpush1.msra.mxu0 0.0
  %8878 = vmatprep.subr.mxu0 0.0
  %8879 = vmatpush1.msra.mxu0 0.0
  %8880 = vmatprep.subr.mxu0 0.0
  %8881 = vmatpush1.msra.mxu0 0.0
  %8882 = vmatprep.subr.mxu0 0.0
  %8883 = vmatpush1.msra.mxu0 0.0
  %8884 = vmatprep.subr.mxu0 0.0
  %8885 = vmatpush1.msra.mxu0 0.0
  %8886 = vmatprep.subr.mxu0 0.0
  %8887 = vmatpush1.msra.mxu0 0.0
  %8888 = vmatprep.subr.mxu0 0.0
  %8889 = vmatpush1.msra.mxu0 0.0
  %8890 = vmatprep.subr.mxu0 0.0
  %8891 = vmatpush1.msra.mxu0 0.0
  %8892 = vmatprep.subr.mxu0 0.0
  %8893 = vmatpush1.msra.mxu0 0.0
  %8894 = vmatprep.subr.mxu0 0.0
  %8895 = vmatpush1.msra.mxu0 0.0
  %8896 = vmatprep.subr.mxu0 0.0
  %8897 = vmatpush1.msra.mxu0 0.0
  %8898 = vmatprep.subr.mxu0 0.0
  %8899 = vmatpush1.msra.mxu0 0.0
  %8900 = vmatprep.subr.mxu0 0.0
  %8901 = vmatpush1.msra.mxu0 0.0
  %8902 = vmatprep.subr.mxu0 0.0
  %8903 = vmatpush1.msra.mxu0 0.0
  %8904 = vmatprep.subr.mxu0 0.0
  %8905 = vmatpush1.msra.mxu0 0.0
  %8906 = vmatprep.subr.mxu0 0.0
  %8907 = vmatpush1.msra.mxu0 0.0
  %8908 = vmatprep.subr.mxu0 0.0
  %8909 = vmatpush1.msra.mxu0 0.0
  %8910 = vmatprep.subr.mxu0 0.0
  %8911 = vmatpush1.msra.mxu0 0.0
  %8912 = vmatprep.subr.mxu0 0.0
  %8913 = vmatpush1.msra.mxu0 0.0
  %8914 = vmatprep.subr.mxu0 0.0
  %8915 = vmatpush1.msra.mxu0 0.0
  %8916 = vmatprep.subr.mxu0 0.0
  %8917 = vmatpush1.msra.mxu0 0.0
  %8918 = vmatprep.subr.mxu0 0.0
  %8919 = vmatpush1.msra.mxu0 0.0
  %8920 = vmatprep.subr.mxu0 0.0
  %8921 = vmatpush1.msra.mxu0 0.0
  %8922 = vmatprep.subr.mxu0 0.0
  %8923 = vmatpush1.msra.mxu0 0.0
  %8924 = vmatprep.subr.mxu0 0.0
  %8925 = vmatpush1.msra.mxu0 0.0
  %8926 = vmatprep.subr.mxu0 0.0
  %8927 = vmatpush1.msra.mxu0 0.0
  %8928 = vmatprep.subr.mxu0 0.0
  %8929 = vmatpush1.msra.mxu0 0.0
  %8930 = vmatprep.subr.mxu0 0.0
  %8931 = vmatpush1.msra.mxu0 0.0
  %8932 = vmatprep.mubr.f32.mxu0 0.0
  %8933 = vmatmul.mubr.f32.gmra.mrb[0].mxu0 %v1968
  %v8934 = vpop.f32.mrb[0].mxu0
  %v8935 = vadd.f32 %v6631, %v8934
  %v8936 = vpop.f32.mrb[0].mxu0
  %8937 = vdwg.mxu0
  %8938 = vmatprep.subr.mxu0 0.0
  %8939 = vmatpush1.msra.mxu0 %v135
  %8940 = vmatprep.subr.mxu0 0.0
  %8941 = vmatpush1.msra.mxu0 0.0
  %8942 = vmatprep.subr.mxu0 0.0
  %8943 = vmatpush1.msra.mxu0 0.0
  %8944 = vmatprep.subr.mxu0 0.0
  %8945 = vmatpush1.msra.mxu0 0.0
  %8946 = vmatprep.subr.mxu0 0.0
  %8947 = vmatpush1.msra.mxu0 0.0
  %8948 = vmatprep.subr.mxu0 0.0
  %8949 = vmatpush1.msra.mxu0 0.0
  %8950 = vmatprep.subr.mxu0 0.0
  %8951 = vmatpush1.msra.mxu0 0.0
  %8952 = vmatprep.subr.mxu0 0.0
  %8953 = vmatpush1.msra.mxu0 0.0
  %8954 = vmatprep.subr.mxu0 0.0
  %8955 = vmatpush1.msra.mxu0 0.0
  %8956 = vmatprep.subr.mxu0 0.0
  %8957 = vmatpush1.msra.mxu0 0.0
  %8958 = vmatprep.subr.mxu0 0.0
  %8959 = vmatpush1.msra.mxu0 0.0
  %8960 = vmatprep.subr.mxu0 0.0
  %8961 = vmatpush1.msra.mxu0 0.0
  %8962 = vmatprep.subr.mxu0 0.0
  %8963 = vmatpush1.msra.mxu0 0.0
  %8964 = vmatprep.subr.mxu0 0.0
  %8965 = vmatpush1.msra.mxu0 0.0
  %8966 = vmatprep.subr.mxu0 0.0
  %8967 = vmatpush1.msra.mxu0 0.0
  %8968 = vmatprep.subr.mxu0 0.0
  %8969 = vmatpush1.msra.mxu0 0.0
  %8970 = vmatprep.subr.mxu0 0.0
  %8971 = vmatpush1.msra.mxu0 0.0
  %8972 = vmatprep.subr.mxu0 0.0
  %8973 = vmatpush1.msra.mxu0 0.0
  %8974 = vmatprep.subr.mxu0 0.0
  %8975 = vmatpush1.msra.mxu0 0.0
  %8976 = vmatprep.subr.mxu0 0.0
  %8977 = vmatpush1.msra.mxu0 0.0
  %8978 = vmatprep.subr.mxu0 0.0
  %8979 = vmatpush1.msra.mxu0 0.0
  %8980 = vmatprep.subr.mxu0 0.0
  %8981 = vmatpush1.msra.mxu0 0.0
  %8982 = vmatprep.subr.mxu0 0.0
  %8983 = vmatpush1.msra.mxu0 0.0
  %8984 = vmatprep.subr.mxu0 0.0
  %8985 = vmatpush1.msra.mxu0 0.0
  %8986 = vmatprep.subr.mxu0 0.0
  %8987 = vmatpush1.msra.mxu0 0.0
  %8988 = vmatprep.subr.mxu0 0.0
  %8989 = vmatpush1.msra.mxu0 0.0
  %8990 = vmatprep.subr.mxu0 0.0
  %8991 = vmatpush1.msra.mxu0 0.0
  %8992 = vmatprep.subr.mxu0 0.0
  %8993 = vmatpush1.msra.mxu0 0.0
  %8994 = vmatprep.subr.mxu0 0.0
  %8995 = vmatpush1.msra.mxu0 0.0
  %8996 = vmatprep.subr.mxu0 0.0
  %8997 = vmatpush1.msra.mxu0 0.0
  %8998 = vmatprep.subr.mxu0 0.0
  %8999 = vmatpush1.msra.mxu0 0.0
  %9000 = vmatprep.subr.mxu0 0.0
  %9001 = vmatpush1.msra.mxu0 0.0
  %9002 = vmatprep.mubr.f32.mxu0 0.0
  %9003 = vmatmul.mubr.f32.gmra.mrb[0].mxu0 %v2041
  %v9004 = vpop.f32.mrb[0].mxu0
  %v9005 = vadd.f32 %v6701, %v9004
  %v9006 = vpop.f32.mrb[0].mxu0
  %9007 = vdwg.mxu0
  %9008 = vmatprep.subr.mxu0 0.0
  %9009 = vmatpush1.msra.mxu0 %v136
  %9010 = vmatprep.subr.mxu0 0.0
  %9011 = vmatpush1.msra.mxu0 0.0
  %9012 = vmatprep.subr.mxu0 0.0
  %9013 = vmatpush1.msra.mxu0 0.0
  %9014 = vmatprep.subr.mxu0 0.0
  %9015 = vmatpush1.msra.mxu0 0.0
  %9016 = vmatprep.subr.mxu0 0.0
  %9017 = vmatpush1.msra.mxu0 0.0
  %9018 = vmatprep.subr.mxu0 0.0
  %9019 = vmatpush1.msra.mxu0 0.0
  %9020 = vmatprep.subr.mxu0 0.0
  %9021 = vmatpush1.msra.mxu0 0.0
  %9022 = vmatprep.subr.mxu0 0.0
  %9023 = vmatpush1.msra.mxu0 0.0
  %9024 = vmatprep.subr.mxu0 0.0
  %9025 = vmatpush1.msra.mxu0 0.0
  %9026 = vmatprep.subr.mxu0 0.0
  %9027 = vmatpush1.msra.mxu0 0.0
  %9028 = vmatprep.subr.mxu0 0.0
  %9029 = vmatpush1.msra.mxu0 0.0
  %9030 = vmatprep.subr.mxu0 0.0
  %9031 = vmatpush1.msra.mxu0 0.0
  %9032 = vmatprep.subr.mxu0 0.0
  %9033 = vmatpush1.msra.mxu0 0.0
  %9034 = vmatprep.subr.mxu0 0.0
  %9035 = vmatpush1.msra.mxu0 0.0
  %9036 = vmatprep.subr.mxu0 0.0
  %9037 = vmatpush1.msra.mxu0 0.0
  %9038 = vmatprep.subr.mxu0 0.0
  %9039 = vmatpush1.msra.mxu0 0.0
  %9040 = vmatprep.subr.mxu0 0.0
  %9041 = vmatpush1.msra.mxu0 0.0
  %9042 = vmatprep.subr.mxu0 0.0
  %9043 = vmatpush1.msra.mxu0 0.0
  %9044 = vmatprep.subr.mxu0 0.0
  %9045 = vmatpush1.msra.mxu0 0.0
  %9046 = vmatprep.subr.mxu0 0.0
  %9047 = vmatpush1.msra.mxu0 0.0
  %9048 = vmatprep.subr.mxu0 0.0
  %9049 = vmatpush1.msra.mxu0 0.0
  %9050 = vmatprep.subr.mxu0 0.0
  %9051 = vmatpush1.msra.mxu0 0.0
  %9052 = vmatprep.subr.mxu0 0.0
  %9053 = vmatpush1.msra.mxu0 0.0
  %9054 = vmatprep.subr.mxu0 0.0
  %9055 = vmatpush1.msra.mxu0 0.0
  %9056 = vmatprep.subr.mxu0 0.0
  %9057 = vmatpush1.msra.mxu0 0.0
  %9058 = vmatprep.subr.mxu0 0.0
  %9059 = vmatpush1.msra.mxu0 0.0
  %9060 = vmatprep.subr.mxu0 0.0
  %9061 = vmatpush1.msra.mxu0 0.0
  %9062 = vmatprep.subr.mxu0 0.0
  %9063 = vmatpush1.msra.mxu0 0.0
  %9064 = vmatprep.subr.mxu0 0.0
  %9065 = vmatpush1.msra.mxu0 0.0
  %9066 = vmatprep.subr.mxu0 0.0
  %9067 = vmatpush1.msra.mxu0 0.0
  %9068 = vmatprep.subr.mxu0 0.0
  %9069 = vmatpush1.msra.mxu0 0.0
  %9070 = vmatprep.subr.mxu0 0.0
  %9071 = vmatpush1.msra.mxu0 0.0
  %9072 = vmatprep.mubr.f32.mxu0 0.0
  %9073 = vmatmul.mubr.f32.gmra.mrb[0].mxu0 %v2114
  %v9074 = vpop.f32.mrb[0].mxu0
  %v9075 = vadd.f32 %v6771, %v9074
  %v9076 = vpop.f32.mrb[0].mxu0
  %9077 = vdwg.mxu0
  %9078 = vmatprep.subr.mxu0 0.0
  %9079 = vmatpush1.msra.mxu0 %v137
  %9080 = vmatprep.subr.mxu0 0.0
  %9081 = vmatpush1.msra.mxu0 0.0
  %9082 = vmatprep.subr.mxu0 0.0
  %9083 = vmatpush1.msra.mxu0 0.0
  %9084 = vmatprep.subr.mxu0 0.0
  %9085 = vmatpush1.msra.mxu0 0.0
  %9086 = vmatprep.subr.mxu0 0.0
  %9087 = vmatpush1.msra.mxu0 0.0
  %9088 = vmatprep.subr.mxu0 0.0
  %9089 = vmatpush1.msra.mxu0 0.0
  %9090 = vmatprep.subr.mxu0 0.0
  %9091 = vmatpush1.msra.mxu0 0.0
  %9092 = vmatprep.subr.mxu0 0.0
  %9093 = vmatpush1.msra.mxu0 0.0
  %9094 = vmatprep.subr.mxu0 0.0
  %9095 = vmatpush1.msra.mxu0 0.0
  %9096 = vmatprep.subr.mxu0 0.0
  %9097 = vmatpush1.msra.mxu0 0.0
  %9098 = vmatprep.subr.mxu0 0.0
  %9099 = vmatpush1.msra.mxu0 0.0
  %9100 = vmatprep.subr.mxu0 0.0
  %9101 = vmatpush1.msra.mxu0 0.0
  %9102 = vmatprep.subr.mxu0 0.0
  %9103 = vmatpush1.msra.mxu0 0.0
  %9104 = vmatprep.subr.mxu0 0.0
  %9105 = vmatpush1.msra.mxu0 0.0
  %9106 = vmatprep.subr.mxu0 0.0
  %9107 = vmatpush1.msra.mxu0 0.0
  %9108 = vmatprep.subr.mxu0 0.0
  %9109 = vmatpush1.msra.mxu0 0.0
  %9110 = vmatprep.subr.mxu0 0.0
  %9111 = vmatpush1.msra.mxu0 0.0
  %9112 = vmatprep.subr.mxu0 0.0
  %9113 = vmatpush1.msra.mxu0 0.0
  %9114 = vmatprep.subr.mxu0 0.0
  %9115 = vmatpush1.msra.mxu0 0.0
  %9116 = vmatprep.subr.mxu0 0.0
  %9117 = vmatpush1.msra.mxu0 0.0
  %9118 = vmatprep.subr.mxu0 0.0
  %9119 = vmatpush1.msra.mxu0 0.0
  %9120 = vmatprep.subr.mxu0 0.0
  %9121 = vmatpush1.msra.mxu0 0.0
  %9122 = vmatprep.subr.mxu0 0.0
  %9123 = vmatpush1.msra.mxu0 0.0
  %9124 = vmatprep.subr.mxu0 0.0
  %9125 = vmatpush1.msra.mxu0 0.0
  %9126 = vmatprep.subr.mxu0 0.0
  %9127 = vmatpush1.msra.mxu0 0.0
  %9128 = vmatprep.subr.mxu0 0.0
  %9129 = vmatpush1.msra.mxu0 0.0
  %9130 = vmatprep.subr.mxu0 0.0
  %9131 = vmatpush1.msra.mxu0 0.0
  %9132 = vmatprep.subr.mxu0 0.0
  %9133 = vmatpush1.msra.mxu0 0.0
  %9134 = vmatprep.subr.mxu0 0.0
  %9135 = vmatpush1.msra.mxu0 0.0
  %9136 = vmatprep.subr.mxu0 0.0
  %9137 = vmatpush1.msra.mxu0 0.0
  %9138 = vmatprep.subr.mxu0 0.0
  %9139 = vmatpush1.msra.mxu0 0.0
  %9140 = vmatprep.subr.mxu0 0.0
  %9141 = vmatpush1.msra.mxu0 0.0
  %9142 = vmatprep.mubr.f32.mxu0 0.0
  %9143 = vmatmul.mubr.f32.gmra.mrb[0].mxu0 %v2187
  %v9144 = vpop.f32.mrb[0].mxu0
  %v9145 = vadd.f32 %v6841, %v9144
  %v9146 = vpop.f32.mrb[0].mxu0
  %9147 = vdwg.mxu0
  %9148 = vmatprep.subr.mxu0 0.0
  %9149 = vmatpush1.msra.mxu0 %v138
  %9150 = vmatprep.subr.mxu0 0.0
  %9151 = vmatpush1.msra.mxu0 0.0
  %9152 = vmatprep.subr.mxu0 0.0
  %9153 = vmatpush1.msra.mxu0 0.0
  %9154 = vmatprep.subr.mxu0 0.0
  %9155 = vmatpush1.msra.mxu0 0.0
  %9156 = vmatprep.subr.mxu0 0.0
  %9157 = vmatpush1.msra.mxu0 0.0
  %9158 = vmatprep.subr.mxu0 0.0
  %9159 = vmatpush1.msra.mxu0 0.0
  %9160 = vmatprep.subr.mxu0 0.0
  %9161 = vmatpush1.msra.mxu0 0.0
  %9162 = vmatprep.subr.mxu0 0.0
  %9163 = vmatpush1.msra.mxu0 0.0
  %9164 = vmatprep.subr.mxu0 0.0
  %9165 = vmatpush1.msra.mxu0 0.0
  %9166 = vmatprep.subr.mxu0 0.0
  %9167 = vmatpush1.msra.mxu0 0.0
  %9168 = vmatprep.subr.mxu0 0.0
  %9169 = vmatpush1.msra.mxu0 0.0
  %9170 = vmatprep.subr.mxu0 0.0
  %9171 = vmatpush1.msra.mxu0 0.0
  %9172 = vmatprep.subr.mxu0 0.0
  %9173 = vmatpush1.msra.mxu0 0.0
  %9174 = vmatprep.subr.mxu0 0.0
  %9175 = vmatpush1.msra.mxu0 0.0
  %9176 = vmatprep.subr.mxu0 0.0
  %9177 = vmatpush1.msra.mxu0 0.0
  %9178 = vmatprep.subr.mxu0 0.0
  %9179 = vmatpush1.msra.mxu0 0.0
  %9180 = vmatprep.subr.mxu0 0.0
  %9181 = vmatpush1.msra.mxu0 0.0
  %9182 = vmatprep.subr.mxu0 0.0
  %9183 = vmatpush1.msra.mxu0 0.0
  %9184 = vmatprep.subr.mxu0 0.0
  %9185 = vmatpush1.msra.mxu0 0.0
  %9186 = vmatprep.subr.mxu0 0.0
  %9187 = vmatpush1.msra.mxu0 0.0
  %9188 = vmatprep.subr.mxu0 0.0
  %9189 = vmatpush1.msra.mxu0 0.0
  %9190 = vmatprep.subr.mxu0 0.0
  %9191 = vmatpush1.msra.mxu0 0.0
  %9192 = vmatprep.subr.mxu0 0.0
  %9193 = vmatpush1.msra.mxu0 0.0
  %9194 = vmatprep.subr.mxu0 0.0
  %9195 = vmatpush1.msra.mxu0 0.0
  %9196 = vmatprep.subr.mxu0 0.0
  %9197 = vmatpush1.msra.mxu0 0.0
  %9198 = vmatprep.subr.mxu0 0.0
  %9199 = vmatpush1.msra.mxu0 0.0
  %9200 = vmatprep.subr.mxu0 0.0
  %9201 = vmatpush1.msra.mxu0 0.0
  %9202 = vmatprep.subr.mxu0 0.0
  %9203 = vmatpush1.msra.mxu0 0.0
  %9204 = vmatprep.subr.mxu0 0.0
  %9205 = vmatpush1.msra.mxu0 0.0
  %9206 = vmatprep.subr.mxu0 0.0
  %9207 = vmatpush1.msra.mxu0 0.0
  %9208 = vmatprep.subr.mxu0 0.0
  %9209 = vmatpush1.msra.mxu0 0.0
  %9210 = vmatprep.subr.mxu0 0.0
  %9211 = vmatpush1.msra.mxu0 0.0
  %9212 = vmatprep.mubr.f32.mxu0 0.0
  %9213 = vmatmul.mubr.f32.gmra.mrb[0].mxu0 %v2260
  %v9214 = vpop.f32.mrb[0].mxu0
  %v9215 = vadd.f32 %v6911, %v9214
  %v9216 = vpop.f32.mrb[0].mxu0
  %9217 = vdwg.mxu0
  %9218 = vmatprep.subr.mxu0 0.0
  %9219 = vmatpush1.msra.mxu0 %v139
  %9220 = vmatprep.subr.mxu0 0.0
  %9221 = vmatpush1.msra.mxu0 0.0
  %9222 = vmatprep.subr.mxu0 0.0
  %9223 = vmatpush1.msra.mxu0 0.0
  %9224 = vmatprep.subr.mxu0 0.0
  %9225 = vmatpush1.msra.mxu0 0.0
  %9226 = vmatprep.subr.mxu0 0.0
  %9227 = vmatpush1.msra.mxu0 0.0
  %9228 = vmatprep.subr.mxu0 0.0
  %9229 = vmatpush1.msra.mxu0 0.0
  %9230 = vmatprep.subr.mxu0 0.0
  %9231 = vmatpush1.msra.mxu0 0.0
  %9232 = vmatprep.subr.mxu0 0.0
  %9233 = vmatpush1.msra.mxu0 0.0
  %9234 = vmatprep.subr.mxu0 0.0
  %9235 = vmatpush1.msra.mxu0 0.0
  %9236 = vmatprep.subr.mxu0 0.0
  %9237 = vmatpush1.msra.mxu0 0.0
  %9238 = vmatprep.subr.mxu0 0.0
  %9239 = vmatpush1.msra.mxu0 0.0
  %9240 = vmatprep.subr.mxu0 0.0
  %9241 = vmatpush1.msra.mxu0 0.0
  %9242 = vmatprep.subr.mxu0 0.0
  %9243 = vmatpush1.msra.mxu0 0.0
  %9244 = vmatprep.subr.mxu0 0.0
  %9245 = vmatpush1.msra.mxu0 0.0
  %9246 = vmatprep.subr.mxu0 0.0
  %9247 = vmatpush1.msra.mxu0 0.0
  %9248 = vmatprep.subr.mxu0 0.0
  %9249 = vmatpush1.msra.mxu0 0.0
  %9250 = vmatprep.subr.mxu0 0.0
  %9251 = vmatpush1.msra.mxu0 0.0
  %9252 = vmatprep.subr.mxu0 0.0
  %9253 = vmatpush1.msra.mxu0 0.0
  %9254 = vmatprep.subr.mxu0 0.0
  %9255 = vmatpush1.msra.mxu0 0.0
  %9256 = vmatprep.subr.mxu0 0.0
  %9257 = vmatpush1.msra.mxu0 0.0
  %9258 = vmatprep.subr.mxu0 0.0
  %9259 = vmatpush1.msra.mxu0 0.0
  %9260 = vmatprep.subr.mxu0 0.0
  %9261 = vmatpush1.msra.mxu0 0.0
  %9262 = vmatprep.subr.mxu0 0.0
  %9263 = vmatpush1.msra.mxu0 0.0
  %9264 = vmatprep.subr.mxu0 0.0
  %9265 = vmatpush1.msra.mxu0 0.0
  %9266 = vmatprep.subr.mxu0 0.0
  %9267 = vmatpush1.msra.mxu0 0.0
  %9268 = vmatprep.subr.mxu0 0.0
  %9269 = vmatpush1.msra.mxu0 0.0
  %9270 = vmatprep.subr.mxu0 0.0
  %9271 = vmatpush1.msra.mxu0 0.0
  %9272 = vmatprep.subr.mxu0 0.0
  %9273 = vmatpush1.msra.mxu0 0.0
  %9274 = vmatprep.subr.mxu0 0.0
  %9275 = vmatpush1.msra.mxu0 0.0
  %9276 = vmatprep.subr.mxu0 0.0
  %9277 = vmatpush1.msra.mxu0 0.0
  %9278 = vmatprep.subr.mxu0 0.0
  %9279 = vmatpush1.msra.mxu0 0.0
  %9280 = vmatprep.subr.mxu0 0.0
  %9281 = vmatpush1.msra.mxu0 0.0
  %9282 = vmatprep.mubr.f32.mxu0 0.0
  %9283 = vmatmul.mubr.f32.gmra.mrb[0].mxu0 %v2333
  %v9284 = vpop.f32.mrb[0].mxu0
  %v9285 = vadd.f32 %v6981, %v9284
  %v9286 = vpop.f32.mrb[0].mxu0
  %9287 = vdwg.mxu0
  %9288 = vmatprep.subr.mxu0 0.0
  %9289 = vmatpush1.msra.mxu0 %v140
  %9290 = vmatprep.subr.mxu0 0.0
  %9291 = vmatpush1.msra.mxu0 0.0
  %9292 = vmatprep.subr.mxu0 0.0
  %9293 = vmatpush1.msra.mxu0 0.0
  %9294 = vmatprep.subr.mxu0 0.0
  %9295 = vmatpush1.msra.mxu0 0.0
  %9296 = vmatprep.subr.mxu0 0.0
  %9297 = vmatpush1.msra.mxu0 0.0
  %9298 = vmatprep.subr.mxu0 0.0
  %9299 = vmatpush1.msra.mxu0 0.0
  %9300 = vmatprep.subr.mxu0 0.0
  %9301 = vmatpush1.msra.mxu0 0.0
  %9302 = vmatprep.subr.mxu0 0.0
  %9303 = vmatpush1.msra.mxu0 0.0
  %9304 = vmatprep.subr.mxu0 0.0
  %9305 = vmatpush1.msra.mxu0 0.0
  %9306 = vmatprep.subr.mxu0 0.0
  %9307 = vmatpush1.msra.mxu0 0.0
  %9308 = vmatprep.subr.mxu0 0.0
  %9309 = vmatpush1.msra.mxu0 0.0
  %9310 = vmatprep.subr.mxu0 0.0
  %9311 = vmatpush1.msra.mxu0 0.0
  %9312 = vmatprep.subr.mxu0 0.0
  %9313 = vmatpush1.msra.mxu0 0.0
  %9314 = vmatprep.subr.mxu0 0.0
  %9315 = vmatpush1.msra.mxu0 0.0
  %9316 = vmatprep.subr.mxu0 0.0
  %9317 = vmatpush1.msra.mxu0 0.0
  %9318 = vmatprep.subr.mxu0 0.0
  %9319 = vmatpush1.msra.mxu0 0.0
  %9320 = vmatprep.subr.mxu0 0.0
  %9321 = vmatpush1.msra.mxu0 0.0
  %9322 = vmatprep.subr.mxu0 0.0
  %9323 = vmatpush1.msra.mxu0 0.0
  %9324 = vmatprep.subr.mxu0 0.0
  %9325 = vmatpush1.msra.mxu0 0.0
  %9326 = vmatprep.subr.mxu0 0.0
  %9327 = vmatpush1.msra.mxu0 0.0
  %9328 = vmatprep.subr.mxu0 0.0
  %9329 = vmatpush1.msra.mxu0 0.0
  %9330 = vmatprep.subr.mxu0 0.0
  %9331 = vmatpush1.msra.mxu0 0.0
  %9332 = vmatprep.subr.mxu0 0.0
  %9333 = vmatpush1.msra.mxu0 0.0
  %9334 = vmatprep.subr.mxu0 0.0
  %9335 = vmatpush1.msra.mxu0 0.0
  %9336 = vmatprep.subr.mxu0 0.0
  %9337 = vmatpush1.msra.mxu0 0.0
  %9338 = vmatprep.subr.mxu0 0.0
  %9339 = vmatpush1.msra.mxu0 0.0
  %9340 = vmatprep.subr.mxu0 0.0
  %9341 = vmatpush1.msra.mxu0 0.0
  %9342 = vmatprep.subr.mxu0 0.0
  %9343 = vmatpush1.msra.mxu0 0.0
  %9344 = vmatprep.subr.mxu0 0.0
  %9345 = vmatpush1.msra.mxu0 0.0
  %9346 = vmatprep.subr.mxu0 0.0
  %9347 = vmatpush1.msra.mxu0 0.0
  %9348 = vmatprep.subr.mxu0 0.0
  %9349 = vmatpush1.msra.mxu0 0.0
  %9350 = vmatprep.subr.mxu0 0.0
  %9351 = vmatpush1.msra.mxu0 0.0
  %9352 = vmatprep.mubr.f32.mxu0 0.0
  %9353 = vmatmul.mubr.f32.gmra.mrb[0].mxu0 %v2406
  %v9354 = vpop.f32.mrb[0].mxu0
  %v9355 = vadd.f32 %v7051, %v9354
  %v9356 = vpop.f32.mrb[0].mxu0
  %9357 = vdwg.mxu0
  %s9358 = scalar_lea.vmem %s2, 256
  %9359 = vst.msk [vmem:[%s9358] sm:$0xff] %vm141, %v7185
  %9360 = vst.msk [vmem:[%s9358 + $0x8] sm:$0xff] %vm141, %v7255
  %9361 = vst.msk [vmem:[%s9358 + $0x10] sm:$0xff] %vm141, %v7325
  %9362 = vst.msk [vmem:[%s9358 + $0x18] sm:$0xff] %vm141, %v7395
  %9363 = vst.msk [vmem:[%s9358 + $0x20] sm:$0xff] %vm141, %v7465
  %9364 = vst.msk [vmem:[%s9358 + $0x28] sm:$0xff] %vm141, %v7535
  %9365 = vst.msk [vmem:[%s9358 + $0x30] sm:$0xff] %vm141, %v7605
  %9366 = vst.msk [vmem:[%s9358 + $0x38] sm:$0xff] %vm141, %v7675
  %9367 = vst.msk [vmem:[%s9358 + $0x40] sm:$0xff] %vm141, %v7745
  %9368 = vst.msk [vmem:[%s9358 + $0x48] sm:$0xff] %vm141, %v7815
  %9369 = vst.msk [vmem:[%s9358 + $0x50] sm:$0xff] %vm141, %v7885
  %9370 = vst.msk [vmem:[%s9358 + $0x58] sm:$0xff] %vm141, %v7955
  %9371 = vst.msk [vmem:[%s9358 + $0x60] sm:$0xff] %vm141, %v8025
  %9372 = vst.msk [vmem:[%s9358 + $0x68] sm:$0xff] %vm141, %v8095
  %9373 = vst.msk [vmem:[%s9358 + $0x70] sm:$0xff] %vm141, %v8165
  %9374 = vst.msk [vmem:[%s9358 + $0x78] sm:$0xff] %vm141, %v8235
  %9375 = vst.msk [vmem:[%s9358 + $0x80] sm:$0xff] %vm141, %v8305
  %9376 = vst.msk [vmem:[%s9358 + $0x88] sm:$0xff] %vm141, %v8375
  %9377 = vst.msk [vmem:[%s9358 + $0x90] sm:$0xff] %vm141, %v8445
  %9378 = vst.msk [vmem:[%s9358 + $0x98] sm:$0xff] %vm141, %v8515
  %9379 = vst.msk [vmem:[%s9358 + $0xa0] sm:$0xff] %vm141, %v8585
  %9380 = vst.msk [vmem:[%s9358 + $0xa8] sm:$0xff] %vm141, %v8655
  %9381 = vst.msk [vmem:[%s9358 + $0xb0] sm:$0xff] %vm141, %v8725
  %9382 = vst.msk [vmem:[%s9358 + $0xb8] sm:$0xff] %vm141, %v8795
  %9383 = vst.msk [vmem:[%s9358 + $0xc0] sm:$0xff] %vm141, %v8865
  %9384 = vst.msk [vmem:[%s9358 + $0xc8] sm:$0xff] %vm141, %v8935
  %9385 = vst.msk [vmem:[%s9358 + $0xd0] sm:$0xff] %vm141, %v9005
  %9386 = vst.msk [vmem:[%s9358 + $0xd8] sm:$0xff] %vm141, %v9075
  %9387 = vst.msk [vmem:[%s9358 + $0xe0] sm:$0xff] %vm141, %v9145
  %9388 = vst.msk [vmem:[%s9358 + $0xe8] sm:$0xff] %vm141, %v9215
  %9389 = vst.msk [vmem:[%s9358 + $0xf0] sm:$0xff] %vm141, %v9285
  %9390 = vst.msk [vmem:[%s9358 + $0xf8] sm:$0xff] %vm141, %v9355
  // Predicated region
  $region10: #{_lambda_.1} parent=0 // pred_check
    _
  $region11: #{_lambda_.1} parent=0 // pred_check_branch
    %9392 = sbr.rel (0) target = $region13
  $region12: #{_lambda_.1} parent=0 // pred_region
    _
  $region13: #{_lambda_.1} parent=0 // pred_fallthru
    _
  // Predicated region
  $region14: #{_lambda_.1} parent=0 // pred_check
    _
  $region15: #{_lambda_.1} parent=0 // pred_check_branch
    %9394 = sbr.rel (0) target = $region17
  $region16: #{_lambda_.1} parent=0 // pred_region
    _
  $region17: #{_lambda_.1} parent=0 // pred_fallthru
    _

</llo_original>
